<compile_context>
chip_gen: v7x
topology: tpu7x:2x2x1
jax: 0.10.0
libtpu: 0.0.40
codegen_flags: <defaults>
</compile_context>

<pallas_src>
import jax
import jax.numpy as jnp
from jax.experimental import pallas as pl
from jax.experimental.pallas import tpu as pltpu

EPS = 1e-5  # PyTorch LayerNorm default eps


# ----------------------------- small helpers -----------------------------

def _round_up(x, m):
    return (x + m - 1) // m * m


def _take(it, n):
    return [next(it) for _ in range(n)]


# Fixed ordering of the packed weight arrays passed to the kernel.
_WEIGHT_ORDER = (
    # fused first layer of the three x-heads (feature_importance | intervention_sel | encoder)
    "head_w1", "head_b1",
    "fi_g1", "fi_be1", "is_g1", "is_be1", "enc_g1", "enc_be1",
    # three separate second layers (no zero-padded block-diagonal matmul)
    "fi_w2", "fi_b2", "is_w2", "is_b2", "enc_w2", "enc_b2",
    # counterfactual generator (x-half of first weight; condition-half passed only with query)
    "g_w1x", "g_b1", "g_g1", "g_be1", "g_w2", "g_b2", "g_g2", "g_be2", "g_w3", "g_b3",
    # outcome predictor
    "op_w1", "op_b1", "op_g1", "op_be1", "op_w2", "op_b2",
    # scenario generator + decoder
    "gen_w1", "gen_b1", "gen_g1", "gen_be1", "gen_w2", "gen_b2",
    "dec_w1", "dec_b1", "dec_g1", "dec_be1", "dec_w2", "dec_b2",
    # probability estimator (pe_w2 pre-transposed to [1, H//2]; applied as a lane reduction)
    "pe_w1", "pe_b1", "pe_w2t", "pe_b2",
)
_QUERY_EXTRA = ("g_w1c",)


# ----------------------------- fused kernel -----------------------------

def make_fused_kernel(D, H, K, TB, has_query, compute_dtype):
    """One kernel = whole CounterfactualReasoning.forward for a tile of TB batch rows."""
    cdt = compute_dtype
    exact = (cdt == jnp.float32)

    def dot(a, w):
        # MXU matmul: operands in compute_dtype, f32 accumulation.
        return jnp.dot(a.astype(cdt), w, preferred_element_type=jnp.float32)

    def ln(h, g, b):
        # One-pass LayerNorm: var = E[h^2] - mu^2 (half the XLU reductions).
        mu = jnp.mean(h, axis=-1, keepdims=True)
        ms = jnp.mean(h * h, axis=-1, keepdims=True)
        var = jnp.maximum(ms - mu * mu, 0.0)
        return (h - mu) * jax.lax.rsqrt(var + EPS) * g + b

    def relu(v):
        return jnp.maximum(v, 0.0)

    def kernel(*refs):
        it = iter(refs)
        x_ref = next(it)
        q_ref = next(it) if has_query else None
        (head_w1, head_b1,
         fi_g1, fi_be1, is_g1, is_be1, enc_g1, enc_be1,
         fi_w2, fi_b2, is_w2, is_b2, enc_w2, enc_b2) = _take(it, 14)
        (g_w1x, g_b1, g_g1, g_be1, g_w2, g_b2, g_g2, g_be2, g_w3, g_b3) = _take(it, 10)
        (op_w1, op_b1, op_g1, op_be1, op_w2, op_b2) = _take(it, 6)
        (gen_w1, gen_b1, gen_g1, gen_be1, gen_w2, gen_b2) = _take(it, 6)
        (dec_w1, dec_b1, dec_g1, dec_be1, dec_w2, dec_b2) = _take(it, 6)
        (pe_w1, pe_b1, pe_w2t, pe_b2) = _take(it, 4)
        g_w1c = next(it) if has_query else None
        (o_mask, o_cf, o_cfout, o_scen, o_prob) = _take(it, 5)

        x = x_ref[...]                                     # [TB, D] f32
        q = q_ref[...] if has_query else None

        # ---- three x-heads: one fused [D,3H] first matmul, per-head LN/ReLU,
        #      then three separate (dense) second matmuls.
        h = dot(x, head_w1[...]) + head_b1[...]            # [TB, 3H]
        h0 = relu(ln(h[:, 0:H],         fi_g1[...],  fi_be1[...]))
        h1 = relu(ln(h[:, H:2 * H],     is_g1[...],  is_be1[...]))
        h2 = relu(ln(h[:, 2 * H:3 * H], enc_g1[...], enc_be1[...]))
        importance = jax.nn.sigmoid(dot(h0, fi_w2[...]) + fi_b2[...])     # [TB, D]
        o_mask[...] = jax.nn.sigmoid(dot(h1, is_w2[...]) + is_b2[...])    # intervention mask
        encoded = dot(h2, enc_w2[...]) + enc_b2[...]                      # [TB, H]

        if has_query:
            # scenario encoder over the query; reuse encoder weights embedded in
            # head_w1 / enc_w2 (no duplicated VMEM-resident copies).
            hq = relu(ln(dot(q, head_w1[:, 2 * H:3 * H]) + head_b1[:, 2 * H:3 * H],
                         enc_g1[...], enc_be1[...]))
            encoded = encoded + dot(hq, enc_w2[...]) + enc_b2[...]

        # ---- counterfactual generator MLP (zero condition-half skipped when no query)
        gh = dot(x, g_w1x[...]) + g_b1[...]
        if has_query:
            gh = gh + dot(q, g_w1c[...])
        gh = relu(ln(gh, g_g1[...], g_be1[...]))
        gh = relu(ln(dot(gh, g_w2[...]) + g_b2[...], g_g2[...], g_be2[...]))
        deltas = dot(gh, g_w3[...]) + g_b3[...]                           # [TB, K*D]

        # counterfactual_k = x + importance * delta_k, written straight into the
        # (K, TB, D) output block (no [TB, K*D] lane concat).
        cf_list = []
        for k in range(K):
            cf_k = x + importance * deltas[:, k * D:(k + 1) * D]
            o_cf[k] = cf_k
            cf_list.append(cf_k)
        cf_rows = jnp.concatenate(cf_list, axis=0)                        # [K*TB, D]

        # outcome predictor over all K counterfactuals at once (row-stacked)
        oh = relu(ln(dot(cf_rows, op_w1[...]) + op_b1[...], op_g1[...], op_be1[...]))
        out_rows = dot(oh, op_w2[...]) + op_b2[...]                       # [K*TB, D]
        for k in range(K):
            o_cfout[k] = out_rows[k * TB:(k + 1) * TB, :]

        # ---- scenario generator / decoder / probability estimator
        sh = relu(ln(dot(encoded, gen_w1[...]) + gen_b1[...], gen_g1[...], gen_be1[...]))
        scen_emb = dot(sh, gen_w2[...]) + gen_b2[...]                     # [TB, K*H]
        emb_rows = jnp.concatenate(
            [scen_emb[:, k * H:(k + 1) * H] for k in range(K)], axis=0)   # [K*TB, H]

        dh = relu(ln(dot(emb_rows, dec_w1[...]) + dec_b1[...], dec_g1[...], dec_be1[...]))
        scen_rows = dot(dh, dec_w2[...]) + dec_b2[...]                    # [K*TB, D]
        for k in range(K):
            o_scen[k] = scen_rows[k * TB:(k + 1) * TB, :]

        ph = relu(dot(emb_rows, pe_w1[...]) + pe_b1[...])                 # [K*TB, H//2]
        p_rows = jax.nn.sigmoid(
            jnp.sum(ph * pe_w2t[...], axis=-1, keepdims=True) + pe_b2[...])  # [K*TB, 1]
        p = jnp.concatenate(
            [p_rows[k * TB:(k + 1) * TB, :] for k in range(K)], axis=-1)  # [TB, K]
        s = jnp.sum(p, axis=-1, keepdims=True)
        if exact:
            o_prob[...] = p / s
        else:
            o_prob[...] = p * pl.reciprocal(s, approx=True)               # EUP slot

    return kernel


# ----------------------------- parameters -----------------------------

def init_params(key, input_dim, hidden_dim, num_cf=5, num_scen=5):
    keys = iter(jax.random.split(key, 64))

    def lin(fin, fout):
        kw, kb = jax.random.split(next(keys))
        w = jax.random.normal(kw, (fin, fout), jnp.float32) / jnp.sqrt(float(fin))
        b = jax.random.normal(kb, (1, fout), jnp.float32) * 0.01
        return w, b

    def ln(fout):
        return jnp.ones((1, fout), jnp.float32), jnp.zeros((1, fout), jnp.float32)

    D, H = input_dim, hidden_dim
    p = {"input_dim": D, "hidden_dim": H, "num_cf": num_cf, "num_scen": num_scen}

    cg = {}
    cg["fi_w1"], cg["fi_b1"] = lin(D, H); cg["fi_g1"], cg["fi_be1"] = ln(H)
    cg["fi_w2"], cg["fi_b2"] = lin(H, D)
    cg["g_w1"], cg["g_b1"] = lin(2 * D, H); cg["g_g1"], cg["g_be1"] = ln(H)
    cg["g_w2"], cg["g_b2"] = lin(H, H);     cg["g_g2"], cg["g_be2"] = ln(H)
    cg["g_w3"], cg["g_b3"] = lin(H, D * num_cf)
    cg["op_w1"], cg["op_b1"] = lin(D, H); cg["op_g1"], cg["op_be1"] = ln(H)
    cg["op_w2"], cg["op_b2"] = lin(H, D)
    p["cg"] = cg

    sg = {}
    sg["enc_w1"], sg["enc_b1"] = lin(D, H); sg["enc_g1"], sg["enc_be1"] = ln(H)
    sg["enc_w2"], sg["enc_b2"] = lin(H, H)
    sg["gen_w1"], sg["gen_b1"] = lin(H, H); sg["gen_g1"], sg["gen_be1"] = ln(H)
    sg["gen_w2"], sg["gen_b2"] = lin(H, H * num_scen)
    sg["dec_w1"], sg["dec_b1"] = lin(H, H); sg["dec_g1"], sg["dec_be1"] = ln(H)
    sg["dec_w2"], sg["dec_b2"] = lin(H, D)
    sg["pe_w1"], sg["pe_b1"] = lin(H, H // 2)
    sg["pe_w2"], sg["pe_b2"] = lin(H // 2, 1)
    p["sg"] = sg

    isel = {}
    isel["w1"], isel["b1"] = lin(D, H); isel["g1"], isel["be1"] = ln(H)
    isel["w2"], isel["b2"] = lin(H, D)
    p["is"] = isel
    return p


def pack_params(params, compute_dtype=jnp.bfloat16):
    """Build fused/packed weights for the kernel.  Matmul weights are cast to
    compute_dtype; biases / LayerNorm params stay f32 (added after f32-accumulated dots)."""
    D = params["input_dim"]
    cg, sg, isel = params["cg"], params["sg"], params["is"]
    wdt = compute_dtype
    # NOTE: for best performance use D, H that are multiples of 128 (lane-dense slices).
    packed = {
        "head_w1": jnp.concatenate([cg["fi_w1"], isel["w1"], sg["enc_w1"]], axis=1).astype(wdt),
        "head_b1": jnp.concatenate([cg["fi_b1"], isel["b1"], sg["enc_b1"]], axis=1),
        "fi_g1": cg["fi_g1"], "fi_be1": cg["fi_be1"],
        "is_g1": isel["g1"], "is_be1": isel["be1"],
        "enc_g1": sg["enc_g1"], "enc_be1": sg["enc_be1"],
        "fi_w2": cg["fi_w2"].astype(wdt), "fi_b2": cg["fi_b2"],
        "is_w2": isel["w2"].astype(wdt), "is_b2": isel["b2"],
        "enc_w2": sg["enc_w2"].astype(wdt), "enc_b2": sg["enc_b2"],
        "g_w1x": cg["g_w1"][:D].astype(wdt), "g_w1c": cg["g_w1"][D:].astype(wdt),
        "g_b1": cg["g_b1"], "g_g1": cg["g_g1"], "g_be1": cg["g_be1"],
        "g_w2": cg["g_w2"].astype(wdt), "g_b2": cg["g_b2"],
        "g_g2": cg["g_g2"], "g_be2": cg["g_be2"],
        "g_w3": cg["g_w3"].astype(wdt), "g_b3": cg["g_b3"],
        "op_w1": cg["op_w1"].astype(wdt), "op_b1": cg["op_b1"],
        "op_g1": cg["op_g1"], "op_be1": cg["op_be1"],
        "op_w2": cg["op_w2"].astype(wdt), "op_b2": cg["op_b2"],
        "gen_w1": sg["gen_w1"].astype(wdt), "gen_b1": sg["gen_b1"],
        "gen_g1": sg["gen_g1"], "gen_be1": sg["gen_be1"],
        "gen_w2": sg["gen_w2"].astype(wdt), "gen_b2": sg["gen_b2"],
        "dec_w1": sg["dec_w1"].astype(wdt), "dec_b1": sg["dec_b1"],
        "dec_g1": sg["dec_g1"], "dec_be1": sg["dec_be1"],
        "dec_w2": sg["dec_w2"].astype(wdt), "dec_b2": sg["dec_b2"],
        "pe_w1": sg["pe_w1"].astype(wdt), "pe_b1": sg["pe_b1"],
        "pe_w2t": sg["pe_w2"].T, "pe_b2": sg["pe_b2"],
    }
    return packed


# ----------------------------- forward pass -----------------------------

def counterfactual_reasoning_forward(params, x, query=None, *,
                                     compute_dtype=jnp.bfloat16, block_b=256,
                                     packed=None, vmem_limit_bytes=None):
    D = params["input_dim"]
    H = params["hidden_dim"]
    K = params["num_cf"]            # == num_scenarios == 5
    B = x.shape[0]
    has_query = query is not None
    if packed is None:
        packed = pack_params(params, compute_dtype)

    # Batch-row tile (multiple of 8 sublanes); cap so the grid has >= 2 steps whenever
    # B > 8 so ("parallel",) keeps both TensorCores busy on v7x / megacore parts.
    if B > 8:
        TB = min(block_b, _round_up((B + 1) // 2, 8))
    else:
        TB = _round_up(max(B, 1), 8)
    Bp = _round_up(B, TB)
    if Bp != B:
        x = jnp.pad(x, ((0, Bp - B), (0, 0)))
        if has_query:
            query = jnp.pad(query, ((0, Bp - B), (0, 0)))

    names = _WEIGHT_ORDER + (_QUERY_EXTRA if has_query else ())
    weights = [packed[n] for n in names]
    inputs = [x] + ([query] if has_query else [])

    kernel = make_fused_kernel(D, H, K, TB, has_query, compute_dtype)

    act_spec = pl.BlockSpec((TB, D), lambda i: (i, 0))
    out_shape = (
        jax.ShapeDtypeStruct((Bp, D), jnp.float32),      # intervention_mask
        jax.ShapeDtypeStruct((K, Bp, D), jnp.float32),   # counterfactuals (K-major)
        jax.ShapeDtypeStruct((K, Bp, D), jnp.float32),   # counterfactual outcomes (K-major)
        jax.ShapeDtypeStruct((K, Bp, D), jnp.float32),   # scenarios (K-major)
        jax.ShapeDtypeStruct((Bp, K), jnp.float32),      # normalized scenario probabilities
    )
    out_specs = (
        pl.BlockSpec((TB, D), lambda i: (i, 0)),
        pl.BlockSpec((K, TB, D), lambda i: (0, i, 0)),
        pl.BlockSpec((K, TB, D), lambda i: (0, i, 0)),
        pl.BlockSpec((K, TB, D), lambda i: (0, i, 0)),
        pl.BlockSpec((TB, K), lambda i: (i, 0)),
    )

    # VMEM budget derived from the actual footprint (weights resident once, double-buffered
    # activation/output blocks, headroom for in-kernel intermediates), clamped to a range
    # valid on v5e / v6e / v7x.
    if vmem_limit_bytes is None:
        w_bytes = sum(int(w.size) * w.dtype.itemsize for w in weights)
        io_bytes = (len(inputs) * TB * D + TB * D + 3 * K * TB * D + TB * K) * 4
        vmem_limit_bytes = int(min(max(2 * w_bytes + 4 * io_bytes + (8 << 20), 32 << 20),
                                   96 << 20))
    # TODO(synk): at production D/H on v7x (64 MiB VMEM), additionally tile the g_w3 /
    # gen_w2 matmuls over K (extra "arbitrary" grid axis) instead of keeping them resident.

    def run(single_buffer_weights):
        if single_buffer_weights:
            # Constant-index weight blocks only need a single VMEM buffer.
            w_specs = [pl.BlockSpec(w.shape, lambda i: (0, 0),
                                    pipeline_mode=pl.Buffered(1)) for w in weights]
        else:
            w_specs = [pl.BlockSpec(w.shape, lambda i: (0, 0)) for w in weights]
        return pl.pallas_call(
            kernel,
            grid=(Bp // TB,),
            in_specs=[act_spec] * len(inputs) + w_specs,
            out_specs=out_specs,
            out_shape=out_shape,
            compiler_params=pltpu.CompilerParams(
                dimension_semantics=("parallel",),
                vmem_limit_bytes=vmem_limit_bytes,
            ),
        )(*inputs, *weights)

    try:
        mask_p, cf_p, cfo_p, scen_p, prob_p = run(single_buffer_weights=True)
    except Exception:
        # pl.Buffered(1) not supported by this jax version -> default double-buffering.
        mask_p, cf_p, cfo_p, scen_p, prob_p = run(single_buffer_weights=False)

    def to_bkd(a):  # (K, Bp, D) -> (B, K, D): cheap XLA transpose on HBM
        return jnp.transpose(a[:, :B, :], (1, 0, 2))

    return {
        "counterfactuals": to_bkd(cf_p),
        "counterfactual_outcomes": to_bkd(cfo_p),
        "scenarios": to_bkd(scen_p),
        "scenario_probabilities": prob_p[:B],
        "intervention_mask": mask_p[:B],
    }


# ----------------------------- pure-JAX reference -----------------------------

def _ref_lin(x, w, b):
    return x @ w + b


def _ref_ln(h, g, be):
    mu = h.mean(-1, keepdims=True)
    var = ((h - mu) ** 2).mean(-1, keepdims=True)
    return (h - mu) / jnp.sqrt(var + EPS) * g + be


def _ref_mlp2(x, w1, b1, g1, be1, w2, b2, sig):
    h = jnp.maximum(_ref_ln(_ref_lin(x, w1, b1), g1, be1), 0.0)
    y = _ref_lin(h, w2, b2)
    return jax.nn.sigmoid(y) if sig else y


def ref_forward(params, x, query=None):
    D, H, K = params["input_dim"], params["hidden_dim"], params["num_cf"]
    B = x.shape[0]
    cg, sg, isel = params["cg"], params["sg"], params["is"]

    importance = _ref_mlp2(x, cg["fi_w1"], cg["fi_b1"], cg["fi_g1"], cg["fi_be1"],
                           cg["fi_w2"], cg["fi_b2"], True)
    condition = jnp.zeros_like(x) if query is None else query
    gi = jnp.concatenate([x, condition], axis=-1)
    h = jnp.maximum(_ref_ln(_ref_lin(gi, cg["g_w1"], cg["g_b1"]), cg["g_g1"], cg["g_be1"]), 0.0)
    h = jnp.maximum(_ref_ln(_ref_lin(h, cg["g_w2"], cg["g_b2"]), cg["g_g2"], cg["g_be2"]), 0.0)
    deltas = _ref_lin(h, cg["g_w3"], cg["g_b3"]).reshape(B, K, D)
    counterfactuals = x[:, None, :] + importance[:, None, :] * deltas
    outcomes = _ref_mlp2(counterfactuals.reshape(B * K, D),
                         cg["op_w1"], cg["op_b1"], cg["op_g1"], cg["op_be1"],
                         cg["op_w2"], cg["op_b2"], False).reshape(B, K, D)

    encoded = _ref_mlp2(x, sg["enc_w1"], sg["enc_b1"], sg["enc_g1"], sg["enc_be1"],
                        sg["enc_w2"], sg["enc_b2"], False)
    if query is not None:
        encoded = encoded + _ref_mlp2(query, sg["enc_w1"], sg["enc_b1"], sg["enc_g1"],
                                      sg["enc_be1"], sg["enc_w2"], sg["enc_b2"], False)
    emb = _ref_mlp2(encoded, sg["gen_w1"], sg["gen_b1"], sg["gen_g1"], sg["gen_be1"],
                    sg["gen_w2"], sg["gen_b2"], False).reshape(B * K, H)
    scenarios = _ref_mlp2(emb, sg["dec_w1"], sg["dec_b1"], sg["dec_g1"], sg["dec_be1"],
                          sg["dec_w2"], sg["dec_b2"], False).reshape(B, K, D)
    p = jax.nn.sigmoid(_ref_lin(jnp.maximum(_ref_lin(emb, sg["pe_w1"], sg["pe_b1"]), 0.0),
                                sg["pe_w2"], sg["pe_b2"])).reshape(B, K)
    p = p / p.sum(-1, keepdims=True)
    mask = _ref_mlp2(x, isel["w1"], isel["b1"], isel["g1"], isel["be1"],
                     isel["w2"], isel["b2"], True)
    return {"counterfactuals": counterfactuals, "counterfactual_outcomes": outcomes,
            "scenarios": scenarios, "scenario_probabilities": p, "intervention_mask": mask}


# ----------------------------- main -----------------------------

if __name__ == "__main__":
    B, D, H = 8, 32, 64  # small test shapes (production: D, H multiples of 128)
    key = jax.random.PRNGKey(0)
    kp, kx, kq = jax.random.split(key, 3)
    params = init_params(kp, D, H)
    x = jax.random.normal(kx, (B, D), jnp.float32)
    q = jax.random.normal(kq, (B, D), jnp.float32)

    ref = jax.block_until_ready(ref_forward(params, x))
    ref_q = jax.block_until_ready(ref_forward(params, x, q))

    # exact-parity check (f32 matmul operands), query=None path
    out = jax.block_until_ready(
        counterfactual_reasoning_forward(params, x, compute_dtype=jnp.float32))
    for name in ref:
        assert out[name].shape == ref[name].shape, name
        err = float(jnp.max(jnp.abs(out[name] - ref[name])))
        assert err < 2e-3, (name, err)

    # default perf path (bf16 matmul operands, f32 accumulation), query path
    out_q = jax.block_until_ready(
        counterfactual_reasoning_forward(params, x, q, compute_dtype=jnp.bfloat16))
    for name in ref_q:
        assert out_q[name].shape == ref_q[name].shape, name
        err = float(jnp.max(jnp.abs(out_q[name] - ref_q[name])))
        assert err < 1e-1, (name, err)

    print("KERNEL_OK")
</pallas_src>

<mosaic_0001>
module attributes {stable_mosaic.version = 11 : i64} {
  func.func @kernel(%arg0: i32, %arg1: memref<8x32xf32, #tpu.memory_space<vmem>>, %arg2: memref<32x192xf32, #tpu.memory_space<vmem>>, %arg3: memref<1x192xf32, #tpu.memory_space<vmem>>, %arg4: memref<1x64xf32, #tpu.memory_space<vmem>>, %arg5: memref<1x64xf32, #tpu.memory_space<vmem>>, %arg6: memref<1x64xf32, #tpu.memory_space<vmem>>, %arg7: memref<1x64xf32, #tpu.memory_space<vmem>>, %arg8: memref<1x64xf32, #tpu.memory_space<vmem>>, %arg9: memref<1x64xf32, #tpu.memory_space<vmem>>, %arg10: memref<64x32xf32, #tpu.memory_space<vmem>>, %arg11: memref<1x32xf32, #tpu.memory_space<vmem>>, %arg12: memref<64x32xf32, #tpu.memory_space<vmem>>, %arg13: memref<1x32xf32, #tpu.memory_space<vmem>>, %arg14: memref<64x64xf32, #tpu.memory_space<vmem>>, %arg15: memref<1x64xf32, #tpu.memory_space<vmem>>, %arg16: memref<32x64xf32, #tpu.memory_space<vmem>>, %arg17: memref<1x64xf32, #tpu.memory_space<vmem>>, %arg18: memref<1x64xf32, #tpu.memory_space<vmem>>, %arg19: memref<1x64xf32, #tpu.memory_space<vmem>>, %arg20: memref<64x64xf32, #tpu.memory_space<vmem>>, %arg21: memref<1x64xf32, #tpu.memory_space<vmem>>, %arg22: memref<1x64xf32, #tpu.memory_space<vmem>>, %arg23: memref<1x64xf32, #tpu.memory_space<vmem>>, %arg24: memref<64x160xf32, #tpu.memory_space<vmem>>, %arg25: memref<1x160xf32, #tpu.memory_space<vmem>>, %arg26: memref<32x64xf32, #tpu.memory_space<vmem>>, %arg27: memref<1x64xf32, #tpu.memory_space<vmem>>, %arg28: memref<1x64xf32, #tpu.memory_space<vmem>>, %arg29: memref<1x64xf32, #tpu.memory_space<vmem>>, %arg30: memref<64x32xf32, #tpu.memory_space<vmem>>, %arg31: memref<1x32xf32, #tpu.memory_space<vmem>>, %arg32: memref<64x64xf32, #tpu.memory_space<vmem>>, %arg33: memref<1x64xf32, #tpu.memory_space<vmem>>, %arg34: memref<1x64xf32, #tpu.memory_space<vmem>>, %arg35: memref<1x64xf32, #tpu.memory_space<vmem>>, %arg36: memref<64x320xf32, #tpu.memory_space<vmem>>, %arg37: memref<1x320xf32, #tpu.memory_space<vmem>>, %arg38: memref<64x64xf32, #tpu.memory_space<vmem>>, %arg39: memref<1x64xf32, #tpu.memory_space<vmem>>, %arg40: memref<1x64xf32, #tpu.memory_space<vmem>>, %arg41: memref<1x64xf32, #tpu.memory_space<vmem>>, %arg42: memref<64x32xf32, #tpu.memory_space<vmem>>, %arg43: memref<1x32xf32, #tpu.memory_space<vmem>>, %arg44: memref<64x32xf32, #tpu.memory_space<vmem>>, %arg45: memref<1x32xf32, #tpu.memory_space<vmem>>, %arg46: memref<1x32xf32, #tpu.memory_space<vmem>>, %arg47: memref<1x1xf32, #tpu.memory_space<vmem>>, %arg48: memref<8x32xf32, #tpu.memory_space<vmem>>, %arg49: memref<5x8x32xf32, #tpu.memory_space<vmem>>, %arg50: memref<5x8x32xf32, #tpu.memory_space<vmem>>, %arg51: memref<5x8x32xf32, #tpu.memory_space<vmem>>, %arg52: memref<8x5xf32, #tpu.memory_space<vmem>>) attributes {dimension_semantics = [#tpu.dimension_semantics<parallel>], iteration_bounds = array<i64: 1>, scalar_prefetch = 0 : i64, scratch_operands = 0 : i64, tpu.core_type = #tpu.core_type<tc>, window_params = [{transform_indices = @transform_0, window_bounds = array<i64: 8, 32>}, {pipeline_mode = #tpu.pipeline_mode<synchronous>, transform_indices = @transform_1, window_bounds = array<i64: 32, 192>}, {pipeline_mode = #tpu.pipeline_mode<synchronous>, transform_indices = @transform_2, window_bounds = array<i64: 1, 192>}, {pipeline_mode = #tpu.pipeline_mode<synchronous>, transform_indices = @transform_3, window_bounds = array<i64: 1, 64>}, {pipeline_mode = #tpu.pipeline_mode<synchronous>, transform_indices = @transform_4, window_bounds = array<i64: 1, 64>}, {pipeline_mode = #tpu.pipeline_mode<synchronous>, transform_indices = @transform_5, window_bounds = array<i64: 1, 64>}, {pipeline_mode = #tpu.pipeline_mode<synchronous>, transform_indices = @transform_6, window_bounds = array<i64: 1, 64>}, {pipeline_mode = #tpu.pipeline_mode<synchronous>, transform_indices = @transform_7, window_bounds = array<i64: 1, 64>}, {pipeline_mode = #tpu.pipeline_mode<synchronous>, transform_indices = @transform_8, window_bounds = array<i64: 1, 64>}, {pipeline_mode = #tpu.pipeline_mode<synchronous>, transform_indices = @transform_9, window_bounds = array<i64: 64, 32>}, {pipeline_mode = #tpu.pipeline_mode<synchronous>, transform_indices = @transform_10, window_bounds = array<i64: 1, 32>}, {pipeline_mode = #tpu.pipeline_mode<synchronous>, transform_indices = @transform_11, window_bounds = array<i64: 64, 32>}, {pipeline_mode = #tpu.pipeline_mode<synchronous>, transform_indices = @transform_12, window_bounds = array<i64: 1, 32>}, {pipeline_mode = #tpu.pipeline_mode<synchronous>, transform_indices = @transform_13, window_bounds = array<i64: 64, 64>}, {pipeline_mode = #tpu.pipeline_mode<synchronous>, transform_indices = @transform_14, window_bounds = array<i64: 1, 64>}, {pipeline_mode = #tpu.pipeline_mode<synchronous>, transform_indices = @transform_15, window_bounds = array<i64: 32, 64>}, {pipeline_mode = #tpu.pipeline_mode<synchronous>, transform_indices = @transform_16, window_bounds = array<i64: 1, 64>}, {pipeline_mode = #tpu.pipeline_mode<synchronous>, transform_indices = @transform_17, window_bounds = array<i64: 1, 64>}, {pipeline_mode = #tpu.pipeline_mode<synchronous>, transform_indices = @transform_18, window_bounds = array<i64: 1, 64>}, {pipeline_mode = #tpu.pipeline_mode<synchronous>, transform_indices = @transform_19, window_bounds = array<i64: 64, 64>}, {pipeline_mode = #tpu.pipeline_mode<synchronous>, transform_indices = @transform_20, window_bounds = array<i64: 1, 64>}, {pipeline_mode = #tpu.pipeline_mode<synchronous>, transform_indices = @transform_21, window_bounds = array<i64: 1, 64>}, {pipeline_mode = #tpu.pipeline_mode<synchronous>, transform_indices = @transform_22, window_bounds = array<i64: 1, 64>}, {pipeline_mode = #tpu.pipeline_mode<synchronous>, transform_indices = @transform_23, window_bounds = array<i64: 64, 160>}, {pipeline_mode = #tpu.pipeline_mode<synchronous>, transform_indices = @transform_24, window_bounds = array<i64: 1, 160>}, {pipeline_mode = #tpu.pipeline_mode<synchronous>, transform_indices = @transform_25, window_bounds = array<i64: 32, 64>}, {pipeline_mode = #tpu.pipeline_mode<synchronous>, transform_indices = @transform_26, window_bounds = array<i64: 1, 64>}, {pipeline_mode = #tpu.pipeline_mode<synchronous>, transform_indices = @transform_27, window_bounds = array<i64: 1, 64>}, {pipeline_mode = #tpu.pipeline_mode<synchronous>, transform_indices = @transform_28, window_bounds = array<i64: 1, 64>}, {pipeline_mode = #tpu.pipeline_mode<synchronous>, transform_indices = @transform_29, window_bounds = array<i64: 64, 32>}, {pipeline_mode = #tpu.pipeline_mode<synchronous>, transform_indices = @transform_30, window_bounds = array<i64: 1, 32>}, {pipeline_mode = #tpu.pipeline_mode<synchronous>, transform_indices = @transform_31, window_bounds = array<i64: 64, 64>}, {pipeline_mode = #tpu.pipeline_mode<synchronous>, transform_indices = @transform_32, window_bounds = array<i64: 1, 64>}, {pipeline_mode = #tpu.pipeline_mode<synchronous>, transform_indices = @transform_33, window_bounds = array<i64: 1, 64>}, {pipeline_mode = #tpu.pipeline_mode<synchronous>, transform_indices = @transform_34, window_bounds = array<i64: 1, 64>}, {pipeline_mode = #tpu.pipeline_mode<synchronous>, transform_indices = @transform_35, window_bounds = array<i64: 64, 320>}, {pipeline_mode = #tpu.pipeline_mode<synchronous>, transform_indices = @transform_36, window_bounds = array<i64: 1, 320>}, {pipeline_mode = #tpu.pipeline_mode<synchronous>, transform_indices = @transform_37, window_bounds = array<i64: 64, 64>}, {pipeline_mode = #tpu.pipeline_mode<synchronous>, transform_indices = @transform_38, window_bounds = array<i64: 1, 64>}, {pipeline_mode = #tpu.pipeline_mode<synchronous>, transform_indices = @transform_39, window_bounds = array<i64: 1, 64>}, {pipeline_mode = #tpu.pipeline_mode<synchronous>, transform_indices = @transform_40, window_bounds = array<i64: 1, 64>}, {pipeline_mode = #tpu.pipeline_mode<synchronous>, transform_indices = @transform_41, window_bounds = array<i64: 64, 32>}, {pipeline_mode = #tpu.pipeline_mode<synchronous>, transform_indices = @transform_42, window_bounds = array<i64: 1, 32>}, {pipeline_mode = #tpu.pipeline_mode<synchronous>, transform_indices = @transform_43, window_bounds = array<i64: 64, 32>}, {pipeline_mode = #tpu.pipeline_mode<synchronous>, transform_indices = @transform_44, window_bounds = array<i64: 1, 32>}, {pipeline_mode = #tpu.pipeline_mode<synchronous>, transform_indices = @transform_45, window_bounds = array<i64: 1, 32>}, {pipeline_mode = #tpu.pipeline_mode<synchronous>, transform_indices = @transform_46, window_bounds = array<i64: 1, 1>}, {transform_indices = @transform_47, window_bounds = array<i64: 8, 32>}, {transform_indices = @transform_48, window_bounds = array<i64: 5, 8, 32>}, {transform_indices = @transform_49, window_bounds = array<i64: 5, 8, 32>}, {transform_indices = @transform_50, window_bounds = array<i64: 5, 8, 32>}, {transform_indices = @transform_51, window_bounds = array<i64: 8, 5>}]} {
    %c0 = arith.constant 0 : index
    %c0_0 = arith.constant 0 : index
    %0 = vector.load %arg1[%c0, %c0_0] : memref<8x32xf32, #tpu.memory_space<vmem>>, vector<8x32xf32>
    %c0_1 = arith.constant 0 : index
    %c0_2 = arith.constant 0 : index
    %1 = vector.load %arg2[%c0_1, %c0_2] : memref<32x192xf32, #tpu.memory_space<vmem>>, vector<32x192xf32>
    %cst = arith.constant dense<0.000000e+00> : vector<8x192xf32>
    %2 = tpu.matmul %0, %1, %cst {dimension_numbers = #tpu.dot_dimension_numbers<[1], [0], [0], [1], [0, 0, 1, 1], [], []>} : vector<8x32xf32>, vector<32x192xf32>, vector<8x192xf32> -> vector<8x192xf32>
    %c0_3 = arith.constant 0 : index
    %c0_4 = arith.constant 0 : index
    %3 = vector.load %arg3[%c0_3, %c0_4] : memref<1x192xf32, #tpu.memory_space<vmem>>, vector<1x192xf32>
    %4 = vector.broadcast %3 : vector<1x192xf32> to vector<8x192xf32>
    %5 = arith.addf %2, %4 : vector<8x192xf32>
    %6 = vector.extract_strided_slice %5 {offsets = [0, 0], sizes = [8, 64], strides = [1, 1]} : vector<8x192xf32> to vector<8x64xf32>
    %c0_5 = arith.constant 0 : index
    %c0_6 = arith.constant 0 : index
    %7 = vector.load %arg4[%c0_5, %c0_6] : memref<1x64xf32, #tpu.memory_space<vmem>>, vector<1x64xf32>
    %c0_7 = arith.constant 0 : index
    %c0_8 = arith.constant 0 : index
    %8 = vector.load %arg5[%c0_7, %c0_8] : memref<1x64xf32, #tpu.memory_space<vmem>>, vector<1x64xf32>
    %cst_9 = arith.constant dense<0.000000e+00> : vector<8xf32>
    %9 = vector.multi_reduction <add>, %6, %cst_9 [1] : vector<8x64xf32> to vector<8xf32>
    %10 = vector.shape_cast %9 : vector<8xf32> to vector<8x1xf32>
    %cst_10 = arith.constant 6.400000e+01 : f32
    %11 = vector.broadcast %cst_10 : f32 to vector<8x1xf32>
    %12 = arith.divf %10, %11 : vector<8x1xf32>
    %13 = arith.mulf %6, %6 : vector<8x64xf32>
    %cst_11 = arith.constant dense<0.000000e+00> : vector<8xf32>
    %14 = vector.multi_reduction <add>, %13, %cst_11 [1] : vector<8x64xf32> to vector<8xf32>
    %15 = vector.shape_cast %14 : vector<8xf32> to vector<8x1xf32>
    %cst_12 = arith.constant 6.400000e+01 : f32
    %16 = vector.broadcast %cst_12 : f32 to vector<8x1xf32>
    %17 = arith.divf %15, %16 : vector<8x1xf32>
    %18 = arith.mulf %12, %12 : vector<8x1xf32>
    %19 = arith.subf %17, %18 : vector<8x1xf32>
    %cst_13 = arith.constant 0.000000e+00 : f32
    %20 = vector.broadcast %cst_13 : f32 to vector<8x1xf32>
    %21 = arith.maximumf %19, %20 : vector<8x1xf32>
    %22 = vector.broadcast %12 : vector<8x1xf32> to vector<8x64xf32>
    %23 = arith.subf %6, %22 : vector<8x64xf32>
    %cst_14 = arith.constant 9.99999974E-6 : f32
    %24 = vector.broadcast %cst_14 : f32 to vector<8x1xf32>
    %25 = arith.addf %21, %24 : vector<8x1xf32>
    %26 = math.rsqrt %25 : vector<8x1xf32>
    %27 = vector.broadcast %26 : vector<8x1xf32> to vector<8x64xf32>
    %28 = arith.mulf %23, %27 : vector<8x64xf32>
    %29 = vector.broadcast %7 : vector<1x64xf32> to vector<8x64xf32>
    %30 = arith.mulf %28, %29 : vector<8x64xf32>
    %31 = vector.broadcast %8 : vector<1x64xf32> to vector<8x64xf32>
    %32 = arith.addf %30, %31 : vector<8x64xf32>
    %cst_15 = arith.constant 0.000000e+00 : f32
    %33 = vector.broadcast %cst_15 : f32 to vector<8x64xf32>
    %34 = arith.maximumf %32, %33 : vector<8x64xf32>
    %35 = vector.extract_strided_slice %5 {offsets = [0, 64], sizes = [8, 64], strides = [1, 1]} : vector<8x192xf32> to vector<8x64xf32>
    %c0_16 = arith.constant 0 : index
    %c0_17 = arith.constant 0 : index
    %36 = vector.load %arg6[%c0_16, %c0_17] : memref<1x64xf32, #tpu.memory_space<vmem>>, vector<1x64xf32>
    %c0_18 = arith.constant 0 : index
    %c0_19 = arith.constant 0 : index
    %37 = vector.load %arg7[%c0_18, %c0_19] : memref<1x64xf32, #tpu.memory_space<vmem>>, vector<1x64xf32>
    %cst_20 = arith.constant dense<0.000000e+00> : vector<8xf32>
    %38 = vector.multi_reduction <add>, %35, %cst_20 [1] : vector<8x64xf32> to vector<8xf32>
    %39 = vector.shape_cast %38 : vector<8xf32> to vector<8x1xf32>
    %cst_21 = arith.constant 6.400000e+01 : f32
    %40 = vector.broadcast %cst_21 : f32 to vector<8x1xf32>
    %41 = arith.divf %39, %40 : vector<8x1xf32>
    %42 = arith.mulf %35, %35 : vector<8x64xf32>
    %cst_22 = arith.constant dense<0.000000e+00> : vector<8xf32>
    %43 = vector.multi_reduction <add>, %42, %cst_22 [1] : vector<8x64xf32> to vector<8xf32>
    %44 = vector.shape_cast %43 : vector<8xf32> to vector<8x1xf32>
    %cst_23 = arith.constant 6.400000e+01 : f32
    %45 = vector.broadcast %cst_23 : f32 to vector<8x1xf32>
    %46 = arith.divf %44, %45 : vector<8x1xf32>
    %47 = arith.mulf %41, %41 : vector<8x1xf32>
    %48 = arith.subf %46, %47 : vector<8x1xf32>
    %cst_24 = arith.constant 0.000000e+00 : f32
    %49 = vector.broadcast %cst_24 : f32 to vector<8x1xf32>
    %50 = arith.maximumf %48, %49 : vector<8x1xf32>
    %51 = vector.broadcast %41 : vector<8x1xf32> to vector<8x64xf32>
    %52 = arith.subf %35, %51 : vector<8x64xf32>
    %cst_25 = arith.constant 9.99999974E-6 : f32
    %53 = vector.broadcast %cst_25 : f32 to vector<8x1xf32>
    %54 = arith.addf %50, %53 : vector<8x1xf32>
    %55 = math.rsqrt %54 : vector<8x1xf32>
    %56 = vector.broadcast %55 : vector<8x1xf32> to vector<8x64xf32>
    %57 = arith.mulf %52, %56 : vector<8x64xf32>
    %58 = vector.broadcast %36 : vector<1x64xf32> to vector<8x64xf32>
    %59 = arith.mulf %57, %58 : vector<8x64xf32>
    %60 = vector.broadcast %37 : vector<1x64xf32> to vector<8x64xf32>
    %61 = arith.addf %59, %60 : vector<8x64xf32>
    %cst_26 = arith.constant 0.000000e+00 : f32
    %62 = vector.broadcast %cst_26 : f32 to vector<8x64xf32>
    %63 = arith.maximumf %61, %62 : vector<8x64xf32>
    %64 = vector.extract_strided_slice %5 {offsets = [0, 128], sizes = [8, 64], strides = [1, 1]} : vector<8x192xf32> to vector<8x64xf32>
    %c0_27 = arith.constant 0 : index
    %c0_28 = arith.constant 0 : index
    %65 = vector.load %arg8[%c0_27, %c0_28] : memref<1x64xf32, #tpu.memory_space<vmem>>, vector<1x64xf32>
    %c0_29 = arith.constant 0 : index
    %c0_30 = arith.constant 0 : index
    %66 = vector.load %arg9[%c0_29, %c0_30] : memref<1x64xf32, #tpu.memory_space<vmem>>, vector<1x64xf32>
    %cst_31 = arith.constant dense<0.000000e+00> : vector<8xf32>
    %67 = vector.multi_reduction <add>, %64, %cst_31 [1] : vector<8x64xf32> to vector<8xf32>
    %68 = vector.shape_cast %67 : vector<8xf32> to vector<8x1xf32>
    %cst_32 = arith.constant 6.400000e+01 : f32
    %69 = vector.broadcast %cst_32 : f32 to vector<8x1xf32>
    %70 = arith.divf %68, %69 : vector<8x1xf32>
    %71 = arith.mulf %64, %64 : vector<8x64xf32>
    %cst_33 = arith.constant dense<0.000000e+00> : vector<8xf32>
    %72 = vector.multi_reduction <add>, %71, %cst_33 [1] : vector<8x64xf32> to vector<8xf32>
    %73 = vector.shape_cast %72 : vector<8xf32> to vector<8x1xf32>
    %cst_34 = arith.constant 6.400000e+01 : f32
    %74 = vector.broadcast %cst_34 : f32 to vector<8x1xf32>
    %75 = arith.divf %73, %74 : vector<8x1xf32>
    %76 = arith.mulf %70, %70 : vector<8x1xf32>
    %77 = arith.subf %75, %76 : vector<8x1xf32>
    %cst_35 = arith.constant 0.000000e+00 : f32
    %78 = vector.broadcast %cst_35 : f32 to vector<8x1xf32>
    %79 = arith.maximumf %77, %78 : vector<8x1xf32>
    %80 = vector.broadcast %70 : vector<8x1xf32> to vector<8x64xf32>
    %81 = arith.subf %64, %80 : vector<8x64xf32>
    %cst_36 = arith.constant 9.99999974E-6 : f32
    %82 = vector.broadcast %cst_36 : f32 to vector<8x1xf32>
    %83 = arith.addf %79, %82 : vector<8x1xf32>
    %84 = math.rsqrt %83 : vector<8x1xf32>
    %85 = vector.broadcast %84 : vector<8x1xf32> to vector<8x64xf32>
    %86 = arith.mulf %81, %85 : vector<8x64xf32>
    %87 = vector.broadcast %65 : vector<1x64xf32> to vector<8x64xf32>
    %88 = arith.mulf %86, %87 : vector<8x64xf32>
    %89 = vector.broadcast %66 : vector<1x64xf32> to vector<8x64xf32>
    %90 = arith.addf %88, %89 : vector<8x64xf32>
    %cst_37 = arith.constant 0.000000e+00 : f32
    %91 = vector.broadcast %cst_37 : f32 to vector<8x64xf32>
    %92 = arith.maximumf %90, %91 : vector<8x64xf32>
    %c0_38 = arith.constant 0 : index
    %c0_39 = arith.constant 0 : index
    %93 = vector.load %arg10[%c0_38, %c0_39] : memref<64x32xf32, #tpu.memory_space<vmem>>, vector<64x32xf32>
    %cst_40 = arith.constant dense<0.000000e+00> : vector<8x32xf32>
    %94 = tpu.matmul %34, %93, %cst_40 {dimension_numbers = #tpu.dot_dimension_numbers<[1], [0], [0], [1], [0, 0, 1, 1], [], []>} : vector<8x64xf32>, vector<64x32xf32>, vector<8x32xf32> -> vector<8x32xf32>
    %c0_41 = arith.constant 0 : index
    %c0_42 = arith.constant 0 : index
    %95 = vector.load %arg11[%c0_41, %c0_42] : memref<1x32xf32, #tpu.memory_space<vmem>>, vector<1x32xf32>
    %96 = vector.broadcast %95 : vector<1x32xf32> to vector<8x32xf32>
    %97 = arith.addf %94, %96 : vector<8x32xf32>
    %98 = arith.negf %97 : vector<8x32xf32>
    %99 = math.exp %98 : vector<8x32xf32>
    %cst_43 = arith.constant 1.000000e+00 : f32
    %100 = vector.broadcast %cst_43 : f32 to vector<8x32xf32>
    %101 = arith.addf %100, %99 : vector<8x32xf32>
    %102 = arith.divf %100, %101 : vector<8x32xf32>
    %c0_44 = arith.constant 0 : index
    %c0_45 = arith.constant 0 : index
    %103 = vector.load %arg12[%c0_44, %c0_45] : memref<64x32xf32, #tpu.memory_space<vmem>>, vector<64x32xf32>
    %cst_46 = arith.constant dense<0.000000e+00> : vector<8x32xf32>
    %104 = tpu.matmul %63, %103, %cst_46 {dimension_numbers = #tpu.dot_dimension_numbers<[1], [0], [0], [1], [0, 0, 1, 1], [], []>} : vector<8x64xf32>, vector<64x32xf32>, vector<8x32xf32> -> vector<8x32xf32>
    %c0_47 = arith.constant 0 : index
    %c0_48 = arith.constant 0 : index
    %105 = vector.load %arg13[%c0_47, %c0_48] : memref<1x32xf32, #tpu.memory_space<vmem>>, vector<1x32xf32>
    %106 = vector.broadcast %105 : vector<1x32xf32> to vector<8x32xf32>
    %107 = arith.addf %104, %106 : vector<8x32xf32>
    %108 = arith.negf %107 : vector<8x32xf32>
    %109 = math.exp %108 : vector<8x32xf32>
    %cst_49 = arith.constant 1.000000e+00 : f32
    %110 = vector.broadcast %cst_49 : f32 to vector<8x32xf32>
    %111 = arith.addf %110, %109 : vector<8x32xf32>
    %112 = arith.divf %110, %111 : vector<8x32xf32>
    %c0_50 = arith.constant 0 : index
    %c0_51 = arith.constant 0 : index
    %113 = vector.load %arg48[%c0_50, %c0_51] : memref<8x32xf32, #tpu.memory_space<vmem>>, vector<8x32xf32>
    tpu.vector_store %arg48[%c0_50, %c0_51], %112 {strides = array<i32>} : memref<8x32xf32, #tpu.memory_space<vmem>>, vector<8x32xf32>,
    %c0_52 = arith.constant 0 : index
    %c0_53 = arith.constant 0 : index
    %114 = vector.load %arg14[%c0_52, %c0_53] : memref<64x64xf32, #tpu.memory_space<vmem>>, vector<64x64xf32>
    %cst_54 = arith.constant dense<0.000000e+00> : vector<8x64xf32>
    %115 = tpu.matmul %92, %114, %cst_54 {dimension_numbers = #tpu.dot_dimension_numbers<[1], [0], [0], [1], [0, 0, 1, 1], [], []>} : vector<8x64xf32>, vector<64x64xf32>, vector<8x64xf32> -> vector<8x64xf32>
    %c0_55 = arith.constant 0 : index
    %c0_56 = arith.constant 0 : index
    %116 = vector.load %arg15[%c0_55, %c0_56] : memref<1x64xf32, #tpu.memory_space<vmem>>, vector<1x64xf32>
    %117 = vector.broadcast %116 : vector<1x64xf32> to vector<8x64xf32>
    %118 = arith.addf %115, %117 : vector<8x64xf32>
    %c0_57 = arith.constant 0 : index
    %c0_58 = arith.constant 0 : index
    %119 = vector.load %arg16[%c0_57, %c0_58] : memref<32x64xf32, #tpu.memory_space<vmem>>, vector<32x64xf32>
    %cst_59 = arith.constant dense<0.000000e+00> : vector<8x64xf32>
    %120 = tpu.matmul %0, %119, %cst_59 {dimension_numbers = #tpu.dot_dimension_numbers<[1], [0], [0], [1], [0, 0, 1, 1], [], []>} : vector<8x32xf32>, vector<32x64xf32>, vector<8x64xf32> -> vector<8x64xf32>
    %c0_60 = arith.constant 0 : index
    %c0_61 = arith.constant 0 : index
    %121 = vector.load %arg17[%c0_60, %c0_61] : memref<1x64xf32, #tpu.memory_space<vmem>>, vector<1x64xf32>
    %122 = vector.broadcast %121 : vector<1x64xf32> to vector<8x64xf32>
    %123 = arith.addf %120, %122 : vector<8x64xf32>
    %c0_62 = arith.constant 0 : index
    %c0_63 = arith.constant 0 : index
    %124 = vector.load %arg18[%c0_62, %c0_63] : memref<1x64xf32, #tpu.memory_space<vmem>>, vector<1x64xf32>
    %c0_64 = arith.constant 0 : index
    %c0_65 = arith.constant 0 : index
    %125 = vector.load %arg19[%c0_64, %c0_65] : memref<1x64xf32, #tpu.memory_space<vmem>>, vector<1x64xf32>
    %cst_66 = arith.constant dense<0.000000e+00> : vector<8xf32>
    %126 = vector.multi_reduction <add>, %123, %cst_66 [1] : vector<8x64xf32> to vector<8xf32>
    %127 = vector.shape_cast %126 : vector<8xf32> to vector<8x1xf32>
    %cst_67 = arith.constant 6.400000e+01 : f32
    %128 = vector.broadcast %cst_67 : f32 to vector<8x1xf32>
    %129 = arith.divf %127, %128 : vector<8x1xf32>
    %130 = arith.mulf %123, %123 : vector<8x64xf32>
    %cst_68 = arith.constant dense<0.000000e+00> : vector<8xf32>
    %131 = vector.multi_reduction <add>, %130, %cst_68 [1] : vector<8x64xf32> to vector<8xf32>
    %132 = vector.shape_cast %131 : vector<8xf32> to vector<8x1xf32>
    %cst_69 = arith.constant 6.400000e+01 : f32
    %133 = vector.broadcast %cst_69 : f32 to vector<8x1xf32>
    %134 = arith.divf %132, %133 : vector<8x1xf32>
    %135 = arith.mulf %129, %129 : vector<8x1xf32>
    %136 = arith.subf %134, %135 : vector<8x1xf32>
    %cst_70 = arith.constant 0.000000e+00 : f32
    %137 = vector.broadcast %cst_70 : f32 to vector<8x1xf32>
    %138 = arith.maximumf %136, %137 : vector<8x1xf32>
    %139 = vector.broadcast %129 : vector<8x1xf32> to vector<8x64xf32>
    %140 = arith.subf %123, %139 : vector<8x64xf32>
    %cst_71 = arith.constant 9.99999974E-6 : f32
    %141 = vector.broadcast %cst_71 : f32 to vector<8x1xf32>
    %142 = arith.addf %138, %141 : vector<8x1xf32>
    %143 = math.rsqrt %142 : vector<8x1xf32>
    %144 = vector.broadcast %143 : vector<8x1xf32> to vector<8x64xf32>
    %145 = arith.mulf %140, %144 : vector<8x64xf32>
    %146 = vector.broadcast %124 : vector<1x64xf32> to vector<8x64xf32>
    %147 = arith.mulf %145, %146 : vector<8x64xf32>
    %148 = vector.broadcast %125 : vector<1x64xf32> to vector<8x64xf32>
    %149 = arith.addf %147, %148 : vector<8x64xf32>
    %cst_72 = arith.constant 0.000000e+00 : f32
    %150 = vector.broadcast %cst_72 : f32 to vector<8x64xf32>
    %151 = arith.maximumf %149, %150 : vector<8x64xf32>
    %c0_73 = arith.constant 0 : index
    %c0_74 = arith.constant 0 : index
    %152 = vector.load %arg20[%c0_73, %c0_74] : memref<64x64xf32, #tpu.memory_space<vmem>>, vector<64x64xf32>
    %cst_75 = arith.constant dense<0.000000e+00> : vector<8x64xf32>
    %153 = tpu.matmul %151, %152, %cst_75 {dimension_numbers = #tpu.dot_dimension_numbers<[1], [0], [0], [1], [0, 0, 1, 1], [], []>} : vector<8x64xf32>, vector<64x64xf32>, vector<8x64xf32> -> vector<8x64xf32>
    %c0_76 = arith.constant 0 : index
    %c0_77 = arith.constant 0 : index
    %154 = vector.load %arg21[%c0_76, %c0_77] : memref<1x64xf32, #tpu.memory_space<vmem>>, vector<1x64xf32>
    %155 = vector.broadcast %154 : vector<1x64xf32> to vector<8x64xf32>
    %156 = arith.addf %153, %155 : vector<8x64xf32>
    %c0_78 = arith.constant 0 : index
    %c0_79 = arith.constant 0 : index
    %157 = vector.load %arg22[%c0_78, %c0_79] : memref<1x64xf32, #tpu.memory_space<vmem>>, vector<1x64xf32>
    %c0_80 = arith.constant 0 : index
    %c0_81 = arith.constant 0 : index
    %158 = vector.load %arg23[%c0_80, %c0_81] : memref<1x64xf32, #tpu.memory_space<vmem>>, vector<1x64xf32>
    %cst_82 = arith.constant dense<0.000000e+00> : vector<8xf32>
    %159 = vector.multi_reduction <add>, %156, %cst_82 [1] : vector<8x64xf32> to vector<8xf32>
    %160 = vector.shape_cast %159 : vector<8xf32> to vector<8x1xf32>
    %cst_83 = arith.constant 6.400000e+01 : f32
    %161 = vector.broadcast %cst_83 : f32 to vector<8x1xf32>
    %162 = arith.divf %160, %161 : vector<8x1xf32>
    %163 = arith.mulf %156, %156 : vector<8x64xf32>
    %cst_84 = arith.constant dense<0.000000e+00> : vector<8xf32>
    %164 = vector.multi_reduction <add>, %163, %cst_84 [1] : vector<8x64xf32> to vector<8xf32>
    %165 = vector.shape_cast %164 : vector<8xf32> to vector<8x1xf32>
    %cst_85 = arith.constant 6.400000e+01 : f32
    %166 = vector.broadcast %cst_85 : f32 to vector<8x1xf32>
    %167 = arith.divf %165, %166 : vector<8x1xf32>
    %168 = arith.mulf %162, %162 : vector<8x1xf32>
    %169 = arith.subf %167, %168 : vector<8x1xf32>
    %cst_86 = arith.constant 0.000000e+00 : f32
    %170 = vector.broadcast %cst_86 : f32 to vector<8x1xf32>
    %171 = arith.maximumf %169, %170 : vector<8x1xf32>
    %172 = vector.broadcast %162 : vector<8x1xf32> to vector<8x64xf32>
    %173 = arith.subf %156, %172 : vector<8x64xf32>
    %cst_87 = arith.constant 9.99999974E-6 : f32
    %174 = vector.broadcast %cst_87 : f32 to vector<8x1xf32>
    %175 = arith.addf %171, %174 : vector<8x1xf32>
    %176 = math.rsqrt %175 : vector<8x1xf32>
    %177 = vector.broadcast %176 : vector<8x1xf32> to vector<8x64xf32>
    %178 = arith.mulf %173, %177 : vector<8x64xf32>
    %179 = vector.broadcast %157 : vector<1x64xf32> to vector<8x64xf32>
    %180 = arith.mulf %178, %179 : vector<8x64xf32>
    %181 = vector.broadcast %158 : vector<1x64xf32> to vector<8x64xf32>
    %182 = arith.addf %180, %181 : vector<8x64xf32>
    %cst_88 = arith.constant 0.000000e+00 : f32
    %183 = vector.broadcast %cst_88 : f32 to vector<8x64xf32>
    %184 = arith.maximumf %182, %183 : vector<8x64xf32>
    %c0_89 = arith.constant 0 : index
    %c0_90 = arith.constant 0 : index
    %185 = vector.load %arg24[%c0_89, %c0_90] : memref<64x160xf32, #tpu.memory_space<vmem>>, vector<64x160xf32>
    %cst_91 = arith.constant dense<0.000000e+00> : vector<8x160xf32>
    %186 = tpu.matmul %184, %185, %cst_91 {dimension_numbers = #tpu.dot_dimension_numbers<[1], [0], [0], [1], [0, 0, 1, 1], [], []>} : vector<8x64xf32>, vector<64x160xf32>, vector<8x160xf32> -> vector<8x160xf32>
    %c0_92 = arith.constant 0 : index
    %c0_93 = arith.constant 0 : index
    %187 = vector.load %arg25[%c0_92, %c0_93] : memref<1x160xf32, #tpu.memory_space<vmem>>, vector<1x160xf32>
    %188 = vector.broadcast %187 : vector<1x160xf32> to vector<8x160xf32>
    %189 = arith.addf %186, %188 : vector<8x160xf32>
    %190 = vector.extract_strided_slice %189 {offsets = [0, 0], sizes = [8, 32], strides = [1, 1]} : vector<8x160xf32> to vector<8x32xf32>
    %191 = arith.mulf %102, %190 : vector<8x32xf32>
    %192 = arith.addf %0, %191 : vector<8x32xf32>
    %c0_94 = arith.constant 0 : index
    %c0_95 = arith.constant 0 : index
    %c0_96 = arith.constant 0 : index
    %193 = vector.load %arg49[%c0_94, %c0_95, %c0_96] : memref<5x8x32xf32, #tpu.memory_space<vmem>>, vector<1x8x32xf32>
    %194 = vector.shape_cast %193 : vector<1x8x32xf32> to vector<8x32xf32>
    %195 = vector.shape_cast %192 : vector<8x32xf32> to vector<1x8x32xf32>
    tpu.vector_store %arg49[%c0_94, %c0_95, %c0_96], %195 {strides = array<i32>} : memref<5x8x32xf32, #tpu.memory_space<vmem>>, vector<1x8x32xf32>,
    %196 = vector.extract_strided_slice %189 {offsets = [0, 32], sizes = [8, 32], strides = [1, 1]} : vector<8x160xf32> to vector<8x32xf32>
    %197 = arith.mulf %102, %196 : vector<8x32xf32>
    %198 = arith.addf %0, %197 : vector<8x32xf32>
    %c1 = arith.constant 1 : index
    %c0_97 = arith.constant 0 : index
    %c0_98 = arith.constant 0 : index
    %199 = vector.load %arg49[%c1, %c0_97, %c0_98] : memref<5x8x32xf32, #tpu.memory_space<vmem>>, vector<1x8x32xf32>
    %200 = vector.shape_cast %199 : vector<1x8x32xf32> to vector<8x32xf32>
    %201 = vector.shape_cast %198 : vector<8x32xf32> to vector<1x8x32xf32>
    tpu.vector_store %arg49[%c1, %c0_97, %c0_98], %201 {strides = array<i32>} : memref<5x8x32xf32, #tpu.memory_space<vmem>>, vector<1x8x32xf32>,
    %202 = vector.extract_strided_slice %189 {offsets = [0, 64], sizes = [8, 32], strides = [1, 1]} : vector<8x160xf32> to vector<8x32xf32>
    %203 = arith.mulf %102, %202 : vector<8x32xf32>
    %204 = arith.addf %0, %203 : vector<8x32xf32>
    %c2 = arith.constant 2 : index
    %c0_99 = arith.constant 0 : index
    %c0_100 = arith.constant 0 : index
    %205 = vector.load %arg49[%c2, %c0_99, %c0_100] : memref<5x8x32xf32, #tpu.memory_space<vmem>>, vector<1x8x32xf32>
    %206 = vector.shape_cast %205 : vector<1x8x32xf32> to vector<8x32xf32>
    %207 = vector.shape_cast %204 : vector<8x32xf32> to vector<1x8x32xf32>
    tpu.vector_store %arg49[%c2, %c0_99, %c0_100], %207 {strides = array<i32>} : memref<5x8x32xf32, #tpu.memory_space<vmem>>, vector<1x8x32xf32>,
    %208 = vector.extract_strided_slice %189 {offsets = [0, 96], sizes = [8, 32], strides = [1, 1]} : vector<8x160xf32> to vector<8x32xf32>
    %209 = arith.mulf %102, %208 : vector<8x32xf32>
    %210 = arith.addf %0, %209 : vector<8x32xf32>
    %c3 = arith.constant 3 : index
    %c0_101 = arith.constant 0 : index
    %c0_102 = arith.constant 0 : index
    %211 = vector.load %arg49[%c3, %c0_101, %c0_102] : memref<5x8x32xf32, #tpu.memory_space<vmem>>, vector<1x8x32xf32>
    %212 = vector.shape_cast %211 : vector<1x8x32xf32> to vector<8x32xf32>
    %213 = vector.shape_cast %210 : vector<8x32xf32> to vector<1x8x32xf32>
    tpu.vector_store %arg49[%c3, %c0_101, %c0_102], %213 {strides = array<i32>} : memref<5x8x32xf32, #tpu.memory_space<vmem>>, vector<1x8x32xf32>,
    %214 = vector.extract_strided_slice %189 {offsets = [0, 128], sizes = [8, 32], strides = [1, 1]} : vector<8x160xf32> to vector<8x32xf32>
    %215 = arith.mulf %102, %214 : vector<8x32xf32>
    %216 = arith.addf %0, %215 : vector<8x32xf32>
    %c4 = arith.constant 4 : index
    %c0_103 = arith.constant 0 : index
    %c0_104 = arith.constant 0 : index
    %217 = vector.load %arg49[%c4, %c0_103, %c0_104] : memref<5x8x32xf32, #tpu.memory_space<vmem>>, vector<1x8x32xf32>
    %218 = vector.shape_cast %217 : vector<1x8x32xf32> to vector<8x32xf32>
    %219 = vector.shape_cast %216 : vector<8x32xf32> to vector<1x8x32xf32>
    tpu.vector_store %arg49[%c4, %c0_103, %c0_104], %219 {strides = array<i32>} : memref<5x8x32xf32, #tpu.memory_space<vmem>>, vector<1x8x32xf32>,
    %220 = tpu.concatenate %192, %198, %204, %210, %216 in 0 : vector<8x32xf32>, vector<8x32xf32>, vector<8x32xf32>, vector<8x32xf32>, vector<8x32xf32> -> vector<40x32xf32>
    %c0_105 = arith.constant 0 : index
    %c0_106 = arith.constant 0 : index
    %221 = vector.load %arg26[%c0_105, %c0_106] : memref<32x64xf32, #tpu.memory_space<vmem>>, vector<32x64xf32>
    %cst_107 = arith.constant dense<0.000000e+00> : vector<40x64xf32>
    %222 = tpu.matmul %220, %221, %cst_107 {dimension_numbers = #tpu.dot_dimension_numbers<[1], [0], [0], [1], [0, 0, 1, 1], [], []>} : vector<40x32xf32>, vector<32x64xf32>, vector<40x64xf32> -> vector<40x64xf32>
    %c0_108 = arith.constant 0 : index
    %c0_109 = arith.constant 0 : index
    %223 = vector.load %arg27[%c0_108, %c0_109] : memref<1x64xf32, #tpu.memory_space<vmem>>, vector<1x64xf32>
    %224 = vector.broadcast %223 : vector<1x64xf32> to vector<40x64xf32>
    %225 = arith.addf %222, %224 : vector<40x64xf32>
    %c0_110 = arith.constant 0 : index
    %c0_111 = arith.constant 0 : index
    %226 = vector.load %arg28[%c0_110, %c0_111] : memref<1x64xf32, #tpu.memory_space<vmem>>, vector<1x64xf32>
    %c0_112 = arith.constant 0 : index
    %c0_113 = arith.constant 0 : index
    %227 = vector.load %arg29[%c0_112, %c0_113] : memref<1x64xf32, #tpu.memory_space<vmem>>, vector<1x64xf32>
    %cst_114 = arith.constant dense<0.000000e+00> : vector<40xf32>
    %228 = vector.multi_reduction <add>, %225, %cst_114 [1] : vector<40x64xf32> to vector<40xf32>
    %229 = vector.shape_cast %228 : vector<40xf32> to vector<40x1xf32>
    %cst_115 = arith.constant 6.400000e+01 : f32
    %230 = vector.broadcast %cst_115 : f32 to vector<40x1xf32>
    %231 = arith.divf %229, %230 : vector<40x1xf32>
    %232 = arith.mulf %225, %225 : vector<40x64xf32>
    %cst_116 = arith.constant dense<0.000000e+00> : vector<40xf32>
    %233 = vector.multi_reduction <add>, %232, %cst_116 [1] : vector<40x64xf32> to vector<40xf32>
    %234 = vector.shape_cast %233 : vector<40xf32> to vector<40x1xf32>
    %cst_117 = arith.constant 6.400000e+01 : f32
    %235 = vector.broadcast %cst_117 : f32 to vector<40x1xf32>
    %236 = arith.divf %234, %235 : vector<40x1xf32>
    %237 = arith.mulf %231, %231 : vector<40x1xf32>
    %238 = arith.subf %236, %237 : vector<40x1xf32>
    %cst_118 = arith.constant 0.000000e+00 : f32
    %239 = vector.broadcast %cst_118 : f32 to vector<40x1xf32>
    %240 = arith.maximumf %238, %239 : vector<40x1xf32>
    %241 = vector.broadcast %231 : vector<40x1xf32> to vector<40x64xf32>
    %242 = arith.subf %225, %241 : vector<40x64xf32>
    %cst_119 = arith.constant 9.99999974E-6 : f32
    %243 = vector.broadcast %cst_119 : f32 to vector<40x1xf32>
    %244 = arith.addf %240, %243 : vector<40x1xf32>
    %245 = math.rsqrt %244 : vector<40x1xf32>
    %246 = vector.broadcast %245 : vector<40x1xf32> to vector<40x64xf32>
    %247 = arith.mulf %242, %246 : vector<40x64xf32>
    %248 = vector.broadcast %226 : vector<1x64xf32> to vector<40x64xf32>
    %249 = arith.mulf %247, %248 : vector<40x64xf32>
    %250 = vector.broadcast %227 : vector<1x64xf32> to vector<40x64xf32>
    %251 = arith.addf %249, %250 : vector<40x64xf32>
    %cst_120 = arith.constant 0.000000e+00 : f32
    %252 = vector.broadcast %cst_120 : f32 to vector<40x64xf32>
    %253 = arith.maximumf %251, %252 : vector<40x64xf32>
    %c0_121 = arith.constant 0 : index
    %c0_122 = arith.constant 0 : index
    %254 = vector.load %arg30[%c0_121, %c0_122] : memref<64x32xf32, #tpu.memory_space<vmem>>, vector<64x32xf32>
    %cst_123 = arith.constant dense<0.000000e+00> : vector<40x32xf32>
    %255 = tpu.matmul %253, %254, %cst_123 {dimension_numbers = #tpu.dot_dimension_numbers<[1], [0], [0], [1], [0, 0, 1, 1], [], []>} : vector<40x64xf32>, vector<64x32xf32>, vector<40x32xf32> -> vector<40x32xf32>
    %c0_124 = arith.constant 0 : index
    %c0_125 = arith.constant 0 : index
    %256 = vector.load %arg31[%c0_124, %c0_125] : memref<1x32xf32, #tpu.memory_space<vmem>>, vector<1x32xf32>
    %257 = vector.broadcast %256 : vector<1x32xf32> to vector<40x32xf32>
    %258 = arith.addf %255, %257 : vector<40x32xf32>
    %259 = vector.extract_strided_slice %258 {offsets = [0, 0], sizes = [8, 32], strides = [1, 1]} : vector<40x32xf32> to vector<8x32xf32>
    %c0_126 = arith.constant 0 : index
    %c0_127 = arith.constant 0 : index
    %c0_128 = arith.constant 0 : index
    %260 = vector.load %arg50[%c0_126, %c0_127, %c0_128] : memref<5x8x32xf32, #tpu.memory_space<vmem>>, vector<1x8x32xf32>
    %261 = vector.shape_cast %260 : vector<1x8x32xf32> to vector<8x32xf32>
    %262 = vector.shape_cast %259 : vector<8x32xf32> to vector<1x8x32xf32>
    tpu.vector_store %arg50[%c0_126, %c0_127, %c0_128], %262 {strides = array<i32>} : memref<5x8x32xf32, #tpu.memory_space<vmem>>, vector<1x8x32xf32>,
    %263 = vector.extract_strided_slice %258 {offsets = [8, 0], sizes = [8, 32], strides = [1, 1]} : vector<40x32xf32> to vector<8x32xf32>
    %c1_129 = arith.constant 1 : index
    %c0_130 = arith.constant 0 : index
    %c0_131 = arith.constant 0 : index
    %264 = vector.load %arg50[%c1_129, %c0_130, %c0_131] : memref<5x8x32xf32, #tpu.memory_space<vmem>>, vector<1x8x32xf32>
    %265 = vector.shape_cast %264 : vector<1x8x32xf32> to vector<8x32xf32>
    %266 = vector.shape_cast %263 : vector<8x32xf32> to vector<1x8x32xf32>
    tpu.vector_store %arg50[%c1_129, %c0_130, %c0_131], %266 {strides = array<i32>} : memref<5x8x32xf32, #tpu.memory_space<vmem>>, vector<1x8x32xf32>,
    %267 = vector.extract_strided_slice %258 {offsets = [16, 0], sizes = [8, 32], strides = [1, 1]} : vector<40x32xf32> to vector<8x32xf32>
    %c2_132 = arith.constant 2 : index
    %c0_133 = arith.constant 0 : index
    %c0_134 = arith.constant 0 : index
    %268 = vector.load %arg50[%c2_132, %c0_133, %c0_134] : memref<5x8x32xf32, #tpu.memory_space<vmem>>, vector<1x8x32xf32>
    %269 = vector.shape_cast %268 : vector<1x8x32xf32> to vector<8x32xf32>
    %270 = vector.shape_cast %267 : vector<8x32xf32> to vector<1x8x32xf32>
    tpu.vector_store %arg50[%c2_132, %c0_133, %c0_134], %270 {strides = array<i32>} : memref<5x8x32xf32, #tpu.memory_space<vmem>>, vector<1x8x32xf32>,
    %271 = vector.extract_strided_slice %258 {offsets = [24, 0], sizes = [8, 32], strides = [1, 1]} : vector<40x32xf32> to vector<8x32xf32>
    %c3_135 = arith.constant 3 : index
    %c0_136 = arith.constant 0 : index
    %c0_137 = arith.constant 0 : index
    %272 = vector.load %arg50[%c3_135, %c0_136, %c0_137] : memref<5x8x32xf32, #tpu.memory_space<vmem>>, vector<1x8x32xf32>
    %273 = vector.shape_cast %272 : vector<1x8x32xf32> to vector<8x32xf32>
    %274 = vector.shape_cast %271 : vector<8x32xf32> to vector<1x8x32xf32>
    tpu.vector_store %arg50[%c3_135, %c0_136, %c0_137], %274 {strides = array<i32>} : memref<5x8x32xf32, #tpu.memory_space<vmem>>, vector<1x8x32xf32>,
    %275 = vector.extract_strided_slice %258 {offsets = [32, 0], sizes = [8, 32], strides = [1, 1]} : vector<40x32xf32> to vector<8x32xf32>
    %c4_138 = arith.constant 4 : index
    %c0_139 = arith.constant 0 : index
    %c0_140 = arith.constant 0 : index
    %276 = vector.load %arg50[%c4_138, %c0_139, %c0_140] : memref<5x8x32xf32, #tpu.memory_space<vmem>>, vector<1x8x32xf32>
    %277 = vector.shape_cast %276 : vector<1x8x32xf32> to vector<8x32xf32>
    %278 = vector.shape_cast %275 : vector<8x32xf32> to vector<1x8x32xf32>
    tpu.vector_store %arg50[%c4_138, %c0_139, %c0_140], %278 {strides = array<i32>} : memref<5x8x32xf32, #tpu.memory_space<vmem>>, vector<1x8x32xf32>,
    %c0_141 = arith.constant 0 : index
    %c0_142 = arith.constant 0 : index
    %279 = vector.load %arg32[%c0_141, %c0_142] : memref<64x64xf32, #tpu.memory_space<vmem>>, vector<64x64xf32>
    %cst_143 = arith.constant dense<0.000000e+00> : vector<8x64xf32>
    %280 = tpu.matmul %118, %279, %cst_143 {dimension_numbers = #tpu.dot_dimension_numbers<[1], [0], [0], [1], [0, 0, 1, 1], [], []>} : vector<8x64xf32>, vector<64x64xf32>, vector<8x64xf32> -> vector<8x64xf32>
    %c0_144 = arith.constant 0 : index
    %c0_145 = arith.constant 0 : index
    %281 = vector.load %arg33[%c0_144, %c0_145] : memref<1x64xf32, #tpu.memory_space<vmem>>, vector<1x64xf32>
    %282 = vector.broadcast %281 : vector<1x64xf32> to vector<8x64xf32>
    %283 = arith.addf %280, %282 : vector<8x64xf32>
    %c0_146 = arith.constant 0 : index
    %c0_147 = arith.constant 0 : index
    %284 = vector.load %arg34[%c0_146, %c0_147] : memref<1x64xf32, #tpu.memory_space<vmem>>, vector<1x64xf32>
    %c0_148 = arith.constant 0 : index
    %c0_149 = arith.constant 0 : index
    %285 = vector.load %arg35[%c0_148, %c0_149] : memref<1x64xf32, #tpu.memory_space<vmem>>, vector<1x64xf32>
    %cst_150 = arith.constant dense<0.000000e+00> : vector<8xf32>
    %286 = vector.multi_reduction <add>, %283, %cst_150 [1] : vector<8x64xf32> to vector<8xf32>
    %287 = vector.shape_cast %286 : vector<8xf32> to vector<8x1xf32>
    %cst_151 = arith.constant 6.400000e+01 : f32
    %288 = vector.broadcast %cst_151 : f32 to vector<8x1xf32>
    %289 = arith.divf %287, %288 : vector<8x1xf32>
    %290 = arith.mulf %283, %283 : vector<8x64xf32>
    %cst_152 = arith.constant dense<0.000000e+00> : vector<8xf32>
    %291 = vector.multi_reduction <add>, %290, %cst_152 [1] : vector<8x64xf32> to vector<8xf32>
    %292 = vector.shape_cast %291 : vector<8xf32> to vector<8x1xf32>
    %cst_153 = arith.constant 6.400000e+01 : f32
    %293 = vector.broadcast %cst_153 : f32 to vector<8x1xf32>
    %294 = arith.divf %292, %293 : vector<8x1xf32>
    %295 = arith.mulf %289, %289 : vector<8x1xf32>
    %296 = arith.subf %294, %295 : vector<8x1xf32>
    %cst_154 = arith.constant 0.000000e+00 : f32
    %297 = vector.broadcast %cst_154 : f32 to vector<8x1xf32>
    %298 = arith.maximumf %296, %297 : vector<8x1xf32>
    %299 = vector.broadcast %289 : vector<8x1xf32> to vector<8x64xf32>
    %300 = arith.subf %283, %299 : vector<8x64xf32>
    %cst_155 = arith.constant 9.99999974E-6 : f32
    %301 = vector.broadcast %cst_155 : f32 to vector<8x1xf32>
    %302 = arith.addf %298, %301 : vector<8x1xf32>
    %303 = math.rsqrt %302 : vector<8x1xf32>
    %304 = vector.broadcast %303 : vector<8x1xf32> to vector<8x64xf32>
    %305 = arith.mulf %300, %304 : vector<8x64xf32>
    %306 = vector.broadcast %284 : vector<1x64xf32> to vector<8x64xf32>
    %307 = arith.mulf %305, %306 : vector<8x64xf32>
    %308 = vector.broadcast %285 : vector<1x64xf32> to vector<8x64xf32>
    %309 = arith.addf %307, %308 : vector<8x64xf32>
    %cst_156 = arith.constant 0.000000e+00 : f32
    %310 = vector.broadcast %cst_156 : f32 to vector<8x64xf32>
    %311 = arith.maximumf %309, %310 : vector<8x64xf32>
    %c0_157 = arith.constant 0 : index
    %c0_158 = arith.constant 0 : index
    %312 = vector.load %arg36[%c0_157, %c0_158] : memref<64x320xf32, #tpu.memory_space<vmem>>, vector<64x320xf32>
    %cst_159 = arith.constant dense<0.000000e+00> : vector<8x320xf32>
    %313 = tpu.matmul %311, %312, %cst_159 {dimension_numbers = #tpu.dot_dimension_numbers<[1], [0], [0], [1], [0, 0, 1, 1], [], []>} : vector<8x64xf32>, vector<64x320xf32>, vector<8x320xf32> -> vector<8x320xf32>
    %c0_160 = arith.constant 0 : index
    %c0_161 = arith.constant 0 : index
    %314 = vector.load %arg37[%c0_160, %c0_161] : memref<1x320xf32, #tpu.memory_space<vmem>>, vector<1x320xf32>
    %315 = vector.broadcast %314 : vector<1x320xf32> to vector<8x320xf32>
    %316 = arith.addf %313, %315 : vector<8x320xf32>
    %317 = vector.extract_strided_slice %316 {offsets = [0, 0], sizes = [8, 64], strides = [1, 1]} : vector<8x320xf32> to vector<8x64xf32>
    %318 = vector.extract_strided_slice %316 {offsets = [0, 64], sizes = [8, 64], strides = [1, 1]} : vector<8x320xf32> to vector<8x64xf32>
    %319 = vector.extract_strided_slice %316 {offsets = [0, 128], sizes = [8, 64], strides = [1, 1]} : vector<8x320xf32> to vector<8x64xf32>
    %320 = vector.extract_strided_slice %316 {offsets = [0, 192], sizes = [8, 64], strides = [1, 1]} : vector<8x320xf32> to vector<8x64xf32>
    %321 = vector.extract_strided_slice %316 {offsets = [0, 256], sizes = [8, 64], strides = [1, 1]} : vector<8x320xf32> to vector<8x64xf32>
    %322 = tpu.concatenate %317, %318, %319, %320, %321 in 0 : vector<8x64xf32>, vector<8x64xf32>, vector<8x64xf32>, vector<8x64xf32>, vector<8x64xf32> -> vector<40x64xf32>
    %c0_162 = arith.constant 0 : index
    %c0_163 = arith.constant 0 : index
    %323 = vector.load %arg38[%c0_162, %c0_163] : memref<64x64xf32, #tpu.memory_space<vmem>>, vector<64x64xf32>
    %cst_164 = arith.constant dense<0.000000e+00> : vector<40x64xf32>
    %324 = tpu.matmul %322, %323, %cst_164 {dimension_numbers = #tpu.dot_dimension_numbers<[1], [0], [0], [1], [0, 0, 1, 1], [], []>} : vector<40x64xf32>, vector<64x64xf32>, vector<40x64xf32> -> vector<40x64xf32>
    %c0_165 = arith.constant 0 : index
    %c0_166 = arith.constant 0 : index
    %325 = vector.load %arg39[%c0_165, %c0_166] : memref<1x64xf32, #tpu.memory_space<vmem>>, vector<1x64xf32>
    %326 = vector.broadcast %325 : vector<1x64xf32> to vector<40x64xf32>
    %327 = arith.addf %324, %326 : vector<40x64xf32>
    %c0_167 = arith.constant 0 : index
    %c0_168 = arith.constant 0 : index
    %328 = vector.load %arg40[%c0_167, %c0_168] : memref<1x64xf32, #tpu.memory_space<vmem>>, vector<1x64xf32>
    %c0_169 = arith.constant 0 : index
    %c0_170 = arith.constant 0 : index
    %329 = vector.load %arg41[%c0_169, %c0_170] : memref<1x64xf32, #tpu.memory_space<vmem>>, vector<1x64xf32>
    %cst_171 = arith.constant dense<0.000000e+00> : vector<40xf32>
    %330 = vector.multi_reduction <add>, %327, %cst_171 [1] : vector<40x64xf32> to vector<40xf32>
    %331 = vector.shape_cast %330 : vector<40xf32> to vector<40x1xf32>
    %cst_172 = arith.constant 6.400000e+01 : f32
    %332 = vector.broadcast %cst_172 : f32 to vector<40x1xf32>
    %333 = arith.divf %331, %332 : vector<40x1xf32>
    %334 = arith.mulf %327, %327 : vector<40x64xf32>
    %cst_173 = arith.constant dense<0.000000e+00> : vector<40xf32>
    %335 = vector.multi_reduction <add>, %334, %cst_173 [1] : vector<40x64xf32> to vector<40xf32>
    %336 = vector.shape_cast %335 : vector<40xf32> to vector<40x1xf32>
    %cst_174 = arith.constant 6.400000e+01 : f32
    %337 = vector.broadcast %cst_174 : f32 to vector<40x1xf32>
    %338 = arith.divf %336, %337 : vector<40x1xf32>
    %339 = arith.mulf %333, %333 : vector<40x1xf32>
    %340 = arith.subf %338, %339 : vector<40x1xf32>
    %cst_175 = arith.constant 0.000000e+00 : f32
    %341 = vector.broadcast %cst_175 : f32 to vector<40x1xf32>
    %342 = arith.maximumf %340, %341 : vector<40x1xf32>
    %343 = vector.broadcast %333 : vector<40x1xf32> to vector<40x64xf32>
    %344 = arith.subf %327, %343 : vector<40x64xf32>
    %cst_176 = arith.constant 9.99999974E-6 : f32
    %345 = vector.broadcast %cst_176 : f32 to vector<40x1xf32>
    %346 = arith.addf %342, %345 : vector<40x1xf32>
    %347 = math.rsqrt %346 : vector<40x1xf32>
    %348 = vector.broadcast %347 : vector<40x1xf32> to vector<40x64xf32>
    %349 = arith.mulf %344, %348 : vector<40x64xf32>
    %350 = vector.broadcast %328 : vector<1x64xf32> to vector<40x64xf32>
    %351 = arith.mulf %349, %350 : vector<40x64xf32>
    %352 = vector.broadcast %329 : vector<1x64xf32> to vector<40x64xf32>
    %353 = arith.addf %351, %352 : vector<40x64xf32>
    %cst_177 = arith.constant 0.000000e+00 : f32
    %354 = vector.broadcast %cst_177 : f32 to vector<40x64xf32>
    %355 = arith.maximumf %353, %354 : vector<40x64xf32>
    %c0_178 = arith.constant 0 : index
    %c0_179 = arith.constant 0 : index
    %356 = vector.load %arg42[%c0_178, %c0_179] : memref<64x32xf32, #tpu.memory_space<vmem>>, vector<64x32xf32>
    %cst_180 = arith.constant dense<0.000000e+00> : vector<40x32xf32>
    %357 = tpu.matmul %355, %356, %cst_180 {dimension_numbers = #tpu.dot_dimension_numbers<[1], [0], [0], [1], [0, 0, 1, 1], [], []>} : vector<40x64xf32>, vector<64x32xf32>, vector<40x32xf32> -> vector<40x32xf32>
    %c0_181 = arith.constant 0 : index
    %c0_182 = arith.constant 0 : index
    %358 = vector.load %arg43[%c0_181, %c0_182] : memref<1x32xf32, #tpu.memory_space<vmem>>, vector<1x32xf32>
    %359 = vector.broadcast %358 : vector<1x32xf32> to vector<40x32xf32>
    %360 = arith.addf %357, %359 : vector<40x32xf32>
    %361 = vector.extract_strided_slice %360 {offsets = [0, 0], sizes = [8, 32], strides = [1, 1]} : vector<40x32xf32> to vector<8x32xf32>
    %c0_183 = arith.constant 0 : index
    %c0_184 = arith.constant 0 : index
    %c0_185 = arith.constant 0 : index
    %362 = vector.load %arg51[%c0_183, %c0_184, %c0_185] : memref<5x8x32xf32, #tpu.memory_space<vmem>>, vector<1x8x32xf32>
    %363 = vector.shape_cast %362 : vector<1x8x32xf32> to vector<8x32xf32>
    %364 = vector.shape_cast %361 : vector<8x32xf32> to vector<1x8x32xf32>
    tpu.vector_store %arg51[%c0_183, %c0_184, %c0_185], %364 {strides = array<i32>} : memref<5x8x32xf32, #tpu.memory_space<vmem>>, vector<1x8x32xf32>,
    %365 = vector.extract_strided_slice %360 {offsets = [8, 0], sizes = [8, 32], strides = [1, 1]} : vector<40x32xf32> to vector<8x32xf32>
    %c1_186 = arith.constant 1 : index
    %c0_187 = arith.constant 0 : index
    %c0_188 = arith.constant 0 : index
    %366 = vector.load %arg51[%c1_186, %c0_187, %c0_188] : memref<5x8x32xf32, #tpu.memory_space<vmem>>, vector<1x8x32xf32>
    %367 = vector.shape_cast %366 : vector<1x8x32xf32> to vector<8x32xf32>
    %368 = vector.shape_cast %365 : vector<8x32xf32> to vector<1x8x32xf32>
    tpu.vector_store %arg51[%c1_186, %c0_187, %c0_188], %368 {strides = array<i32>} : memref<5x8x32xf32, #tpu.memory_space<vmem>>, vector<1x8x32xf32>,
    %369 = vector.extract_strided_slice %360 {offsets = [16, 0], sizes = [8, 32], strides = [1, 1]} : vector<40x32xf32> to vector<8x32xf32>
    %c2_189 = arith.constant 2 : index
    %c0_190 = arith.constant 0 : index
    %c0_191 = arith.constant 0 : index
    %370 = vector.load %arg51[%c2_189, %c0_190, %c0_191] : memref<5x8x32xf32, #tpu.memory_space<vmem>>, vector<1x8x32xf32>
    %371 = vector.shape_cast %370 : vector<1x8x32xf32> to vector<8x32xf32>
    %372 = vector.shape_cast %369 : vector<8x32xf32> to vector<1x8x32xf32>
    tpu.vector_store %arg51[%c2_189, %c0_190, %c0_191], %372 {strides = array<i32>} : memref<5x8x32xf32, #tpu.memory_space<vmem>>, vector<1x8x32xf32>,
    %373 = vector.extract_strided_slice %360 {offsets = [24, 0], sizes = [8, 32], strides = [1, 1]} : vector<40x32xf32> to vector<8x32xf32>
    %c3_192 = arith.constant 3 : index
    %c0_193 = arith.constant 0 : index
    %c0_194 = arith.constant 0 : index
    %374 = vector.load %arg51[%c3_192, %c0_193, %c0_194] : memref<5x8x32xf32, #tpu.memory_space<vmem>>, vector<1x8x32xf32>
    %375 = vector.shape_cast %374 : vector<1x8x32xf32> to vector<8x32xf32>
    %376 = vector.shape_cast %373 : vector<8x32xf32> to vector<1x8x32xf32>
    tpu.vector_store %arg51[%c3_192, %c0_193, %c0_194], %376 {strides = array<i32>} : memref<5x8x32xf32, #tpu.memory_space<vmem>>, vector<1x8x32xf32>,
    %377 = vector.extract_strided_slice %360 {offsets = [32, 0], sizes = [8, 32], strides = [1, 1]} : vector<40x32xf32> to vector<8x32xf32>
    %c4_195 = arith.constant 4 : index
    %c0_196 = arith.constant 0 : index
    %c0_197 = arith.constant 0 : index
    %378 = vector.load %arg51[%c4_195, %c0_196, %c0_197] : memref<5x8x32xf32, #tpu.memory_space<vmem>>, vector<1x8x32xf32>
    %379 = vector.shape_cast %378 : vector<1x8x32xf32> to vector<8x32xf32>
    %380 = vector.shape_cast %377 : vector<8x32xf32> to vector<1x8x32xf32>
    tpu.vector_store %arg51[%c4_195, %c0_196, %c0_197], %380 {strides = array<i32>} : memref<5x8x32xf32, #tpu.memory_space<vmem>>, vector<1x8x32xf32>,
    %c0_198 = arith.constant 0 : index
    %c0_199 = arith.constant 0 : index
    %381 = vector.load %arg44[%c0_198, %c0_199] : memref<64x32xf32, #tpu.memory_space<vmem>>, vector<64x32xf32>
    %cst_200 = arith.constant dense<0.000000e+00> : vector<40x32xf32>
    %382 = tpu.matmul %322, %381, %cst_200 {dimension_numbers = #tpu.dot_dimension_numbers<[1], [0], [0], [1], [0, 0, 1, 1], [], []>} : vector<40x64xf32>, vector<64x32xf32>, vector<40x32xf32> -> vector<40x32xf32>
    %c0_201 = arith.constant 0 : index
    %c0_202 = arith.constant 0 : index
    %383 = vector.load %arg45[%c0_201, %c0_202] : memref<1x32xf32, #tpu.memory_space<vmem>>, vector<1x32xf32>
    %384 = vector.broadcast %383 : vector<1x32xf32> to vector<40x32xf32>
    %385 = arith.addf %382, %384 : vector<40x32xf32>
    %cst_203 = arith.constant 0.000000e+00 : f32
    %386 = vector.broadcast %cst_203 : f32 to vector<40x32xf32>
    %387 = arith.maximumf %385, %386 : vector<40x32xf32>
    %c0_204 = arith.constant 0 : index
    %c0_205 = arith.constant 0 : index
    %388 = vector.load %arg46[%c0_204, %c0_205] : memref<1x32xf32, #tpu.memory_space<vmem>>, vector<1x32xf32>
    %389 = vector.broadcast %388 : vector<1x32xf32> to vector<40x32xf32>
    %390 = arith.mulf %387, %389 : vector<40x32xf32>
    %cst_206 = arith.constant dense<0.000000e+00> : vector<40xf32>
    %391 = vector.multi_reduction <add>, %390, %cst_206 [1] : vector<40x32xf32> to vector<40xf32>
    %392 = vector.shape_cast %391 : vector<40xf32> to vector<40x1xf32>
    %c0_207 = arith.constant 0 : index
    %c0_208 = arith.constant 0 : index
    %393 = vector.load %arg47[%c0_207, %c0_208] : memref<1x1xf32, #tpu.memory_space<vmem>>, vector<1x1xf32>
    %394 = vector.broadcast %393 : vector<1x1xf32> to vector<40x1xf32>
    %395 = arith.addf %392, %394 : vector<40x1xf32>
    %396 = arith.negf %395 : vector<40x1xf32>
    %397 = math.exp %396 : vector<40x1xf32>
    %cst_209 = arith.constant 1.000000e+00 : f32
    %398 = vector.broadcast %cst_209 : f32 to vector<40x1xf32>
    %399 = arith.addf %398, %397 : vector<40x1xf32>
    %400 = arith.divf %398, %399 : vector<40x1xf32>
    %401 = vector.extract_strided_slice %400 {offsets = [0, 0], sizes = [8, 1], strides = [1, 1]} : vector<40x1xf32> to vector<8x1xf32>
    %402 = vector.extract_strided_slice %400 {offsets = [8, 0], sizes = [8, 1], strides = [1, 1]} : vector<40x1xf32> to vector<8x1xf32>
    %403 = vector.extract_strided_slice %400 {offsets = [16, 0], sizes = [8, 1], strides = [1, 1]} : vector<40x1xf32> to vector<8x1xf32>
    %404 = vector.extract_strided_slice %400 {offsets = [24, 0], sizes = [8, 1], strides = [1, 1]} : vector<40x1xf32> to vector<8x1xf32>
    %405 = vector.extract_strided_slice %400 {offsets = [32, 0], sizes = [8, 1], strides = [1, 1]} : vector<40x1xf32> to vector<8x1xf32>
    %406 = tpu.concatenate %401, %402, %403, %404, %405 in 1 : vector<8x1xf32>, vector<8x1xf32>, vector<8x1xf32>, vector<8x1xf32>, vector<8x1xf32> -> vector<8x5xf32>
    %cst_210 = arith.constant dense<0.000000e+00> : vector<8xf32>
    %407 = vector.multi_reduction <add>, %406, %cst_210 [1] : vector<8x5xf32> to vector<8xf32>
    %408 = vector.shape_cast %407 : vector<8xf32> to vector<8x1xf32>
    %409 = vector.broadcast %408 : vector<8x1xf32> to vector<8x5xf32>
    %410 = arith.divf %406, %409 : vector<8x5xf32>
    %c0_211 = arith.constant 0 : index
    %c0_212 = arith.constant 0 : index
    %411 = vector.load %arg52[%c0_211, %c0_212] : memref<8x5xf32, #tpu.memory_space<vmem>>, vector<8x5xf32>
    tpu.vector_store %arg52[%c0_211, %c0_212], %410 {strides = array<i32>} : memref<8x5xf32, #tpu.memory_space<vmem>>, vector<8x5xf32>,
    return
  }
  func.func @transform_0(%arg0: i32) -> (i32, i32) {
    %c0_i32 = arith.constant 0 : i32
    %c0_i32_0 = arith.constant 0 : i32
    return %arg0, %c0_i32 : i32, i32
  }
  func.func @transform_1(%arg0: i32) -> (i32, i32) {
    %c0_i32 = arith.constant 0 : i32
    %c0_i32_0 = arith.constant 0 : i32
    %c0_i32_1 = arith.constant 0 : i32
    return %c0_i32, %c0_i32_0 : i32, i32
  }
  func.func @transform_2(%arg0: i32) -> (i32, i32) {
    %c0_i32 = arith.constant 0 : i32
    %c0_i32_0 = arith.constant 0 : i32
    %c0_i32_1 = arith.constant 0 : i32
    return %c0_i32, %c0_i32_0 : i32, i32
  }
  func.func @transform_3(%arg0: i32) -> (i32, i32) {
    %c0_i32 = arith.constant 0 : i32
    %c0_i32_0 = arith.constant 0 : i32
    %c0_i32_1 = arith.constant 0 : i32
    return %c0_i32, %c0_i32_0 : i32, i32
  }
  func.func @transform_4(%arg0: i32) -> (i32, i32) {
    %c0_i32 = arith.constant 0 : i32
    %c0_i32_0 = arith.constant 0 : i32
    %c0_i32_1 = arith.constant 0 : i32
    return %c0_i32, %c0_i32_0 : i32, i32
  }
  func.func @transform_5(%arg0: i32) -> (i32, i32) {
    %c0_i32 = arith.constant 0 : i32
    %c0_i32_0 = arith.constant 0 : i32
    %c0_i32_1 = arith.constant 0 : i32
    return %c0_i32, %c0_i32_0 : i32, i32
  }
  func.func @transform_6(%arg0: i32) -> (i32, i32) {
    %c0_i32 = arith.constant 0 : i32
    %c0_i32_0 = arith.constant 0 : i32
    %c0_i32_1 = arith.constant 0 : i32
    return %c0_i32, %c0_i32_0 : i32, i32
  }
  func.func @transform_7(%arg0: i32) -> (i32, i32) {
    %c0_i32 = arith.constant 0 : i32
    %c0_i32_0 = arith.constant 0 : i32
    %c0_i32_1 = arith.constant 0 : i32
    return %c0_i32, %c0_i32_0 : i32, i32
  }
  func.func @transform_8(%arg0: i32) -> (i32, i32) {
    %c0_i32 = arith.constant 0 : i32
    %c0_i32_0 = arith.constant 0 : i32
    %c0_i32_1 = arith.constant 0 : i32
    return %c0_i32, %c0_i32_0 : i32, i32
  }
  func.func @transform_9(%arg0: i32) -> (i32, i32) {
    %c0_i32 = arith.constant 0 : i32
    %c0_i32_0 = arith.constant 0 : i32
    %c0_i32_1 = arith.constant 0 : i32
    return %c0_i32, %c0_i32_0 : i32, i32
  }
  func.func @transform_10(%arg0: i32) -> (i32, i32) {
    %c0_i32 = arith.constant 0 : i32
    %c0_i32_0 = arith.constant 0 : i32
    %c0_i32_1 = arith.constant 0 : i32
    return %c0_i32, %c0_i32_0 : i32, i32
  }
  func.func @transform_11(%arg0: i32) -> (i32, i32) {
    %c0_i32 = arith.constant 0 : i32
    %c0_i32_0 = arith.constant 0 : i32
    %c0_i32_1 = arith.constant 0 : i32
    return %c0_i32, %c0_i32_0 : i32, i32
  }
  func.func @transform_12(%arg0: i32) -> (i32, i32) {
    %c0_i32 = arith.constant 0 : i32
    %c0_i32_0 = arith.constant 0 : i32
    %c0_i32_1 = arith.constant 0 : i32
    return %c0_i32, %c0_i32_0 : i32, i32
  }
  func.func @transform_13(%arg0: i32) -> (i32, i32) {
    %c0_i32 = arith.constant 0 : i32
    %c0_i32_0 = arith.constant 0 : i32
    %c0_i32_1 = arith.constant 0 : i32
    return %c0_i32, %c0_i32_0 : i32, i32
  }
  func.func @transform_14(%arg0: i32) -> (i32, i32) {
    %c0_i32 = arith.constant 0 : i32
    %c0_i32_0 = arith.constant 0 : i32
    %c0_i32_1 = arith.constant 0 : i32
    return %c0_i32, %c0_i32_0 : i32, i32
  }
  func.func @transform_15(%arg0: i32) -> (i32, i32) {
    %c0_i32 = arith.constant 0 : i32
    %c0_i32_0 = arith.constant 0 : i32
    %c0_i32_1 = arith.constant 0 : i32
    return %c0_i32, %c0_i32_0 : i32, i32
  }
  func.func @transform_16(%arg0: i32) -> (i32, i32) {
    %c0_i32 = arith.constant 0 : i32
    %c0_i32_0 = arith.constant 0 : i32
    %c0_i32_1 = arith.constant 0 : i32
    return %c0_i32, %c0_i32_0 : i32, i32
  }
  func.func @transform_17(%arg0: i32) -> (i32, i32) {
    %c0_i32 = arith.constant 0 : i32
    %c0_i32_0 = arith.constant 0 : i32
    %c0_i32_1 = arith.constant 0 : i32
    return %c0_i32, %c0_i32_0 : i32, i32
  }
  func.func @transform_18(%arg0: i32) -> (i32, i32) {
    %c0_i32 = arith.constant 0 : i32
    %c0_i32_0 = arith.constant 0 : i32
    %c0_i32_1 = arith.constant 0 : i32
    return %c0_i32, %c0_i32_0 : i32, i32
  }
  func.func @transform_19(%arg0: i32) -> (i32, i32) {
    %c0_i32 = arith.constant 0 : i32
    %c0_i32_0 = arith.constant 0 : i32
    %c0_i32_1 = arith.constant 0 : i32
    return %c0_i32, %c0_i32_0 : i32, i32
  }
  func.func @transform_20(%arg0: i32) -> (i32, i32) {
    %c0_i32 = arith.constant 0 : i32
    %c0_i32_0 = arith.constant 0 : i32
    %c0_i32_1 = arith.constant 0 : i32
    return %c0_i32, %c0_i32_0 : i32, i32
  }
  func.func @transform_21(%arg0: i32) -> (i32, i32) {
    %c0_i32 = arith.constant 0 : i32
    %c0_i32_0 = arith.constant 0 : i32
    %c0_i32_1 = arith.constant 0 : i32
    return %c0_i32, %c0_i32_0 : i32, i32
  }
  func.func @transform_22(%arg0: i32) -> (i32, i32) {
    %c0_i32 = arith.constant 0 : i32
    %c0_i32_0 = arith.constant 0 : i32
    %c0_i32_1 = arith.constant 0 : i32
    return %c0_i32, %c0_i32_0 : i32, i32
  }
  func.func @transform_23(%arg0: i32) -> (i32, i32) {
    %c0_i32 = arith.constant 0 : i32
    %c0_i32_0 = arith.constant 0 : i32
    %c0_i32_1 = arith.constant 0 : i32
    return %c0_i32, %c0_i32_0 : i32, i32
  }
  func.func @transform_24(%arg0: i32) -> (i32, i32) {
    %c0_i32 = arith.constant 0 : i32
    %c0_i32_0 = arith.constant 0 : i32
    %c0_i32_1 = arith.constant 0 : i32
    return %c0_i32, %c0_i32_0 : i32, i32
  }
  func.func @transform_25(%arg0: i32) -> (i32, i32) {
    %c0_i32 = arith.constant 0 : i32
    %c0_i32_0 = arith.constant 0 : i32
    %c0_i32_1 = arith.constant 0 : i32
    return %c0_i32, %c0_i32_0 : i32, i32
  }
  func.func @transform_26(%arg0: i32) -> (i32, i32) {
    %c0_i32 = arith.constant 0 : i32
    %c0_i32_0 = arith.constant 0 : i32
    %c0_i32_1 = arith.constant 0 : i32
    return %c0_i32, %c0_i32_0 : i32, i32
  }
  func.func @transform_27(%arg0: i32) -> (i32, i32) {
    %c0_i32 = arith.constant 0 : i32
    %c0_i32_0 = arith.constant 0 : i32
    %c0_i32_1 = arith.constant 0 : i32
    return %c0_i32, %c0_i32_0 : i32, i32
  }
  func.func @transform_28(%arg0: i32) -> (i32, i32) {
    %c0_i32 = arith.constant 0 : i32
    %c0_i32_0 = arith.constant 0 : i32
    %c0_i32_1 = arith.constant 0 : i32
    return %c0_i32, %c0_i32_0 : i32, i32
  }
  func.func @transform_29(%arg0: i32) -> (i32, i32) {
    %c0_i32 = arith.constant 0 : i32
    %c0_i32_0 = arith.constant 0 : i32
    %c0_i32_1 = arith.constant 0 : i32
    return %c0_i32, %c0_i32_0 : i32, i32
  }
  func.func @transform_30(%arg0: i32) -> (i32, i32) {
    %c0_i32 = arith.constant 0 : i32
    %c0_i32_0 = arith.constant 0 : i32
    %c0_i32_1 = arith.constant 0 : i32
    return %c0_i32, %c0_i32_0 : i32, i32
  }
  func.func @transform_31(%arg0: i32) -> (i32, i32) {
    %c0_i32 = arith.constant 0 : i32
    %c0_i32_0 = arith.constant 0 : i32
    %c0_i32_1 = arith.constant 0 : i32
    return %c0_i32, %c0_i32_0 : i32, i32
  }
  func.func @transform_32(%arg0: i32) -> (i32, i32) {
    %c0_i32 = arith.constant 0 : i32
    %c0_i32_0 = arith.constant 0 : i32
    %c0_i32_1 = arith.constant 0 : i32
    return %c0_i32, %c0_i32_0 : i32, i32
  }
  func.func @transform_33(%arg0: i32) -> (i32, i32) {
    %c0_i32 = arith.constant 0 : i32
    %c0_i32_0 = arith.constant 0 : i32
    %c0_i32_1 = arith.constant 0 : i32
    return %c0_i32, %c0_i32_0 : i32, i32
  }
  func.func @transform_34(%arg0: i32) -> (i32, i32) {
    %c0_i32 = arith.constant 0 : i32
    %c0_i32_0 = arith.constant 0 : i32
    %c0_i32_1 = arith.constant 0 : i32
    return %c0_i32, %c0_i32_0 : i32, i32
  }
  func.func @transform_35(%arg0: i32) -> (i32, i32) {
    %c0_i32 = arith.constant 0 : i32
    %c0_i32_0 = arith.constant 0 : i32
    %c0_i32_1 = arith.constant 0 : i32
    return %c0_i32, %c0_i32_0 : i32, i32
  }
  func.func @transform_36(%arg0: i32) -> (i32, i32) {
    %c0_i32 = arith.constant 0 : i32
    %c0_i32_0 = arith.constant 0 : i32
    %c0_i32_1 = arith.constant 0 : i32
    return %c0_i32, %c0_i32_0 : i32, i32
  }
  func.func @transform_37(%arg0: i32) -> (i32, i32) {
    %c0_i32 = arith.constant 0 : i32
    %c0_i32_0 = arith.constant 0 : i32
    %c0_i32_1 = arith.constant 0 : i32
    return %c0_i32, %c0_i32_0 : i32, i32
  }
  func.func @transform_38(%arg0: i32) -> (i32, i32) {
    %c0_i32 = arith.constant 0 : i32
    %c0_i32_0 = arith.constant 0 : i32
    %c0_i32_1 = arith.constant 0 : i32
    return %c0_i32, %c0_i32_0 : i32, i32
  }
  func.func @transform_39(%arg0: i32) -> (i32, i32) {
    %c0_i32 = arith.constant 0 : i32
    %c0_i32_0 = arith.constant 0 : i32
    %c0_i32_1 = arith.constant 0 : i32
    return %c0_i32, %c0_i32_0 : i32, i32
  }
  func.func @transform_40(%arg0: i32) -> (i32, i32) {
    %c0_i32 = arith.constant 0 : i32
    %c0_i32_0 = arith.constant 0 : i32
    %c0_i32_1 = arith.constant 0 : i32
    return %c0_i32, %c0_i32_0 : i32, i32
  }
  func.func @transform_41(%arg0: i32) -> (i32, i32) {
    %c0_i32 = arith.constant 0 : i32
    %c0_i32_0 = arith.constant 0 : i32
    %c0_i32_1 = arith.constant 0 : i32
    return %c0_i32, %c0_i32_0 : i32, i32
  }
  func.func @transform_42(%arg0: i32) -> (i32, i32) {
    %c0_i32 = arith.constant 0 : i32
    %c0_i32_0 = arith.constant 0 : i32
    %c0_i32_1 = arith.constant 0 : i32
    return %c0_i32, %c0_i32_0 : i32, i32
  }
  func.func @transform_43(%arg0: i32) -> (i32, i32) {
    %c0_i32 = arith.constant 0 : i32
    %c0_i32_0 = arith.constant 0 : i32
    %c0_i32_1 = arith.constant 0 : i32
    return %c0_i32, %c0_i32_0 : i32, i32
  }
  func.func @transform_44(%arg0: i32) -> (i32, i32) {
    %c0_i32 = arith.constant 0 : i32
    %c0_i32_0 = arith.constant 0 : i32
    %c0_i32_1 = arith.constant 0 : i32
    return %c0_i32, %c0_i32_0 : i32, i32
  }
  func.func @transform_45(%arg0: i32) -> (i32, i32) {
    %c0_i32 = arith.constant 0 : i32
    %c0_i32_0 = arith.constant 0 : i32
    %c0_i32_1 = arith.constant 0 : i32
    return %c0_i32, %c0_i32_0 : i32, i32
  }
  func.func @transform_46(%arg0: i32) -> (i32, i32) {
    %c0_i32 = arith.constant 0 : i32
    %c0_i32_0 = arith.constant 0 : i32
    %c0_i32_1 = arith.constant 0 : i32
    return %c0_i32, %c0_i32_0 : i32, i32
  }
  func.func @transform_47(%arg0: i32) -> (i32, i32) {
    %c0_i32 = arith.constant 0 : i32
    %c0_i32_0 = arith.constant 0 : i32
    return %arg0, %c0_i32 : i32, i32
  }
  func.func @transform_48(%arg0: i32) -> (i32, i32, i32) {
    %c0_i32 = arith.constant 0 : i32
    %c0_i32_0 = arith.constant 0 : i32
    %c0_i32_1 = arith.constant 0 : i32
    return %c0_i32, %arg0, %c0_i32_0 : i32, i32, i32
  }
  func.func @transform_49(%arg0: i32) -> (i32, i32, i32) {
    %c0_i32 = arith.constant 0 : i32
    %c0_i32_0 = arith.constant 0 : i32
    %c0_i32_1 = arith.constant 0 : i32
    return %c0_i32, %arg0, %c0_i32_0 : i32, i32, i32
  }
  func.func @transform_50(%arg0: i32) -> (i32, i32, i32) {
    %c0_i32 = arith.constant 0 : i32
    %c0_i32_0 = arith.constant 0 : i32
    %c0_i32_1 = arith.constant 0 : i32
    return %c0_i32, %arg0, %c0_i32_0 : i32, i32, i32
  }
  func.func @transform_51(%arg0: i32) -> (i32, i32) {
    %c0_i32 = arith.constant 0 : i32
    %c0_i32_0 = arith.constant 0 : i32
    return %arg0, %c0_i32 : i32, i32
  }
}

module attributes {stable_mosaic.version = 11 : i64} {
  func.func @kernel(%arg0: i32, %arg1: memref<8x32xf32, #tpu.memory_space<vmem>>, %arg2: memref<32x192xf32, #tpu.memory_space<vmem>>, %arg3: memref<1x192xf32, #tpu.memory_space<vmem>>, %arg4: memref<1x64xf32, #tpu.memory_space<vmem>>, %arg5: memref<1x64xf32, #tpu.memory_space<vmem>>, %arg6: memref<1x64xf32, #tpu.memory_space<vmem>>, %arg7: memref<1x64xf32, #tpu.memory_space<vmem>>, %arg8: memref<1x64xf32, #tpu.memory_space<vmem>>, %arg9: memref<1x64xf32, #tpu.memory_space<vmem>>, %arg10: memref<64x32xf32, #tpu.memory_space<vmem>>, %arg11: memref<1x32xf32, #tpu.memory_space<vmem>>, %arg12: memref<64x32xf32, #tpu.memory_space<vmem>>, %arg13: memref<1x32xf32, #tpu.memory_space<vmem>>, %arg14: memref<64x64xf32, #tpu.memory_space<vmem>>, %arg15: memref<1x64xf32, #tpu.memory_space<vmem>>, %arg16: memref<32x64xf32, #tpu.memory_space<vmem>>, %arg17: memref<1x64xf32, #tpu.memory_space<vmem>>, %arg18: memref<1x64xf32, #tpu.memory_space<vmem>>, %arg19: memref<1x64xf32, #tpu.memory_space<vmem>>, %arg20: memref<64x64xf32, #tpu.memory_space<vmem>>, %arg21: memref<1x64xf32, #tpu.memory_space<vmem>>, %arg22: memref<1x64xf32, #tpu.memory_space<vmem>>, %arg23: memref<1x64xf32, #tpu.memory_space<vmem>>, %arg24: memref<64x160xf32, #tpu.memory_space<vmem>>, %arg25: memref<1x160xf32, #tpu.memory_space<vmem>>, %arg26: memref<32x64xf32, #tpu.memory_space<vmem>>, %arg27: memref<1x64xf32, #tpu.memory_space<vmem>>, %arg28: memref<1x64xf32, #tpu.memory_space<vmem>>, %arg29: memref<1x64xf32, #tpu.memory_space<vmem>>, %arg30: memref<64x32xf32, #tpu.memory_space<vmem>>, %arg31: memref<1x32xf32, #tpu.memory_space<vmem>>, %arg32: memref<64x64xf32, #tpu.memory_space<vmem>>, %arg33: memref<1x64xf32, #tpu.memory_space<vmem>>, %arg34: memref<1x64xf32, #tpu.memory_space<vmem>>, %arg35: memref<1x64xf32, #tpu.memory_space<vmem>>, %arg36: memref<64x320xf32, #tpu.memory_space<vmem>>, %arg37: memref<1x320xf32, #tpu.memory_space<vmem>>, %arg38: memref<64x64xf32, #tpu.memory_space<vmem>>, %arg39: memref<1x64xf32, #tpu.memory_space<vmem>>, %arg40: memref<1x64xf32, #tpu.memory_space<vmem>>, %arg41: memref<1x64xf32, #tpu.memory_space<vmem>>, %arg42: memref<64x32xf32, #tpu.memory_space<vmem>>, %arg43: memref<1x32xf32, #tpu.memory_space<vmem>>, %arg44: memref<64x32xf32, #tpu.memory_space<vmem>>, %arg45: memref<1x32xf32, #tpu.memory_space<vmem>>, %arg46: memref<1x32xf32, #tpu.memory_space<vmem>>, %arg47: memref<1x1xf32, #tpu.memory_space<vmem>>, %arg48: memref<8x32xf32, #tpu.memory_space<vmem>>, %arg49: memref<5x8x32xf32, #tpu.memory_space<vmem>>, %arg50: memref<5x8x32xf32, #tpu.memory_space<vmem>>, %arg51: memref<5x8x32xf32, #tpu.memory_space<vmem>>, %arg52: memref<8x5xf32, #tpu.memory_space<vmem>>) attributes {dimension_semantics = [#tpu.dimension_semantics<parallel>], iteration_bounds = array<i64: 1>, scalar_prefetch = 0 : i64, scratch_operands = 0 : i64, tpu.core_type = #tpu.core_type<tc>, window_params = [{transform_indices = @transform_0, window_bounds = array<i64: 8, 32>}, {pipeline_mode = #tpu.pipeline_mode<synchronous>, transform_indices = @transform_1, window_bounds = array<i64: 32, 192>}, {pipeline_mode = #tpu.pipeline_mode<synchronous>, transform_indices = @transform_2, window_bounds = array<i64: 1, 192>}, {pipeline_mode = #tpu.pipeline_mode<synchronous>, transform_indices = @transform_3, window_bounds = array<i64: 1, 64>}, {pipeline_mode = #tpu.pipeline_mode<synchronous>, transform_indices = @transform_4, window_bounds = array<i64: 1, 64>}, {pipeline_mode = #tpu.pipeline_mode<synchronous>, transform_indices = @transform_5, window_bounds = array<i64: 1, 64>}, {pipeline_mode = #tpu.pipeline_mode<synchronous>, transform_indices = @transform_6, window_bounds = array<i64: 1, 64>}, {pipeline_mode = #tpu.pipeline_mode<synchronous>, transform_indices = @transform_7, window_bounds = array<i64: 1, 64>}, {pipeline_mode = #tpu.pipeline_mode<synchronous>, transform_indices = @transform_8, window_bounds = array<i64: 1, 64>}, {pipeline_mode = #tpu.pipeline_mode<synchronous>, transform_indices = @transform_9, window_bounds = array<i64: 64, 32>}, {pipeline_mode = #tpu.pipeline_mode<synchronous>, transform_indices = @transform_10, window_bounds = array<i64: 1, 32>}, {pipeline_mode = #tpu.pipeline_mode<synchronous>, transform_indices = @transform_11, window_bounds = array<i64: 64, 32>}, {pipeline_mode = #tpu.pipeline_mode<synchronous>, transform_indices = @transform_12, window_bounds = array<i64: 1, 32>}, {pipeline_mode = #tpu.pipeline_mode<synchronous>, transform_indices = @transform_13, window_bounds = array<i64: 64, 64>}, {pipeline_mode = #tpu.pipeline_mode<synchronous>, transform_indices = @transform_14, window_bounds = array<i64: 1, 64>}, {pipeline_mode = #tpu.pipeline_mode<synchronous>, transform_indices = @transform_15, window_bounds = array<i64: 32, 64>}, {pipeline_mode = #tpu.pipeline_mode<synchronous>, transform_indices = @transform_16, window_bounds = array<i64: 1, 64>}, {pipeline_mode = #tpu.pipeline_mode<synchronous>, transform_indices = @transform_17, window_bounds = array<i64: 1, 64>}, {pipeline_mode = #tpu.pipeline_mode<synchronous>, transform_indices = @transform_18, window_bounds = array<i64: 1, 64>}, {pipeline_mode = #tpu.pipeline_mode<synchronous>, transform_indices = @transform_19, window_bounds = array<i64: 64, 64>}, {pipeline_mode = #tpu.pipeline_mode<synchronous>, transform_indices = @transform_20, window_bounds = array<i64: 1, 64>}, {pipeline_mode = #tpu.pipeline_mode<synchronous>, transform_indices = @transform_21, window_bounds = array<i64: 1, 64>}, {pipeline_mode = #tpu.pipeline_mode<synchronous>, transform_indices = @transform_22, window_bounds = array<i64: 1, 64>}, {pipeline_mode = #tpu.pipeline_mode<synchronous>, transform_indices = @transform_23, window_bounds = array<i64: 64, 160>}, {pipeline_mode = #tpu.pipeline_mode<synchronous>, transform_indices = @transform_24, window_bounds = array<i64: 1, 160>}, {pipeline_mode = #tpu.pipeline_mode<synchronous>, transform_indices = @transform_25, window_bounds = array<i64: 32, 64>}, {pipeline_mode = #tpu.pipeline_mode<synchronous>, transform_indices = @transform_26, window_bounds = array<i64: 1, 64>}, {pipeline_mode = #tpu.pipeline_mode<synchronous>, transform_indices = @transform_27, window_bounds = array<i64: 1, 64>}, {pipeline_mode = #tpu.pipeline_mode<synchronous>, transform_indices = @transform_28, window_bounds = array<i64: 1, 64>}, {pipeline_mode = #tpu.pipeline_mode<synchronous>, transform_indices = @transform_29, window_bounds = array<i64: 64, 32>}, {pipeline_mode = #tpu.pipeline_mode<synchronous>, transform_indices = @transform_30, window_bounds = array<i64: 1, 32>}, {pipeline_mode = #tpu.pipeline_mode<synchronous>, transform_indices = @transform_31, window_bounds = array<i64: 64, 64>}, {pipeline_mode = #tpu.pipeline_mode<synchronous>, transform_indices = @transform_32, window_bounds = array<i64: 1, 64>}, {pipeline_mode = #tpu.pipeline_mode<synchronous>, transform_indices = @transform_33, window_bounds = array<i64: 1, 64>}, {pipeline_mode = #tpu.pipeline_mode<synchronous>, transform_indices = @transform_34, window_bounds = array<i64: 1, 64>}, {pipeline_mode = #tpu.pipeline_mode<synchronous>, transform_indices = @transform_35, window_bounds = array<i64: 64, 320>}, {pipeline_mode = #tpu.pipeline_mode<synchronous>, transform_indices = @transform_36, window_bounds = array<i64: 1, 320>}, {pipeline_mode = #tpu.pipeline_mode<synchronous>, transform_indices = @transform_37, window_bounds = array<i64: 64, 64>}, {pipeline_mode = #tpu.pipeline_mode<synchronous>, transform_indices = @transform_38, window_bounds = array<i64: 1, 64>}, {pipeline_mode = #tpu.pipeline_mode<synchronous>, transform_indices = @transform_39, window_bounds = array<i64: 1, 64>}, {pipeline_mode = #tpu.pipeline_mode<synchronous>, transform_indices = @transform_40, window_bounds = array<i64: 1, 64>}, {pipeline_mode = #tpu.pipeline_mode<synchronous>, transform_indices = @transform_41, window_bounds = array<i64: 64, 32>}, {pipeline_mode = #tpu.pipeline_mode<synchronous>, transform_indices = @transform_42, window_bounds = array<i64: 1, 32>}, {pipeline_mode = #tpu.pipeline_mode<synchronous>, transform_indices = @transform_43, window_bounds = array<i64: 64, 32>}, {pipeline_mode = #tpu.pipeline_mode<synchronous>, transform_indices = @transform_44, window_bounds = array<i64: 1, 32>}, {pipeline_mode = #tpu.pipeline_mode<synchronous>, transform_indices = @transform_45, window_bounds = array<i64: 1, 32>}, {pipeline_mode = #tpu.pipeline_mode<synchronous>, transform_indices = @transform_46, window_bounds = array<i64: 1, 1>}, {transform_indices = @transform_47, window_bounds = array<i64: 8, 32>}, {transform_indices = @transform_48, window_bounds = array<i64: 5, 8, 32>}, {transform_indices = @transform_49, window_bounds = array<i64: 5, 8, 32>}, {transform_indices = @transform_50, window_bounds = array<i64: 5, 8, 32>}, {transform_indices = @transform_51, window_bounds = array<i64: 8, 5>}]} {
    %c0 = arith.constant 0 : index
    %c0_0 = arith.constant 0 : index
    %0 = vector.load %arg1[%c0, %c0_0] : memref<8x32xf32, #tpu.memory_space<vmem>>, vector<8x32xf32>
    %c0_1 = arith.constant 0 : index
    %c0_2 = arith.constant 0 : index
    %1 = vector.load %arg2[%c0_1, %c0_2] : memref<32x192xf32, #tpu.memory_space<vmem>>, vector<32x192xf32>
    %cst = arith.constant dense<0.000000e+00> : vector<8x192xf32>
    %2 = tpu.matmul %0, %1, %cst {dimension_numbers = #tpu.dot_dimension_numbers<[1], [0], [0], [1], [0, 0, 1, 1], [], []>} : vector<8x32xf32>, vector<32x192xf32>, vector<8x192xf32> -> vector<8x192xf32>
    %c0_3 = arith.constant 0 : index
    %c0_4 = arith.constant 0 : index
    %3 = vector.load %arg3[%c0_3, %c0_4] : memref<1x192xf32, #tpu.memory_space<vmem>>, vector<1x192xf32>
    %4 = vector.broadcast %3 : vector<1x192xf32> to vector<8x192xf32>
    %5 = arith.addf %2, %4 : vector<8x192xf32>
    %6 = vector.extract_strided_slice %5 {offsets = [0, 0], sizes = [8, 64], strides = [1, 1]} : vector<8x192xf32> to vector<8x64xf32>
    %c0_5 = arith.constant 0 : index
    %c0_6 = arith.constant 0 : index
    %7 = vector.load %arg4[%c0_5, %c0_6] : memref<1x64xf32, #tpu.memory_space<vmem>>, vector<1x64xf32>
    %c0_7 = arith.constant 0 : index
    %c0_8 = arith.constant 0 : index
    %8 = vector.load %arg5[%c0_7, %c0_8] : memref<1x64xf32, #tpu.memory_space<vmem>>, vector<1x64xf32>
    %cst_9 = arith.constant dense<0.000000e+00> : vector<8xf32>
    %9 = vector.multi_reduction <add>, %6, %cst_9 [1] : vector<8x64xf32> to vector<8xf32>
    %10 = vector.shape_cast %9 : vector<8xf32> to vector<8x1xf32>
    %cst_10 = arith.constant 6.400000e+01 : f32
    %11 = vector.broadcast %cst_10 : f32 to vector<8x1xf32>
    %12 = arith.divf %10, %11 : vector<8x1xf32>
    %13 = arith.mulf %6, %6 : vector<8x64xf32>
    %cst_11 = arith.constant dense<0.000000e+00> : vector<8xf32>
    %14 = vector.multi_reduction <add>, %13, %cst_11 [1] : vector<8x64xf32> to vector<8xf32>
    %15 = vector.shape_cast %14 : vector<8xf32> to vector<8x1xf32>
    %cst_12 = arith.constant 6.400000e+01 : f32
    %16 = vector.broadcast %cst_12 : f32 to vector<8x1xf32>
    %17 = arith.divf %15, %16 : vector<8x1xf32>
    %18 = arith.mulf %12, %12 : vector<8x1xf32>
    %19 = arith.subf %17, %18 : vector<8x1xf32>
    %cst_13 = arith.constant 0.000000e+00 : f32
    %20 = vector.broadcast %cst_13 : f32 to vector<8x1xf32>
    %21 = arith.maximumf %19, %20 : vector<8x1xf32>
    %22 = vector.broadcast %12 : vector<8x1xf32> to vector<8x64xf32>
    %23 = arith.subf %6, %22 : vector<8x64xf32>
    %cst_14 = arith.constant 9.99999974E-6 : f32
    %24 = vector.broadcast %cst_14 : f32 to vector<8x1xf32>
    %25 = arith.addf %21, %24 : vector<8x1xf32>
    %26 = math.rsqrt %25 : vector<8x1xf32>
    %27 = vector.broadcast %26 : vector<8x1xf32> to vector<8x64xf32>
    %28 = arith.mulf %23, %27 : vector<8x64xf32>
    %29 = vector.broadcast %7 : vector<1x64xf32> to vector<8x64xf32>
    %30 = arith.mulf %28, %29 : vector<8x64xf32>
    %31 = vector.broadcast %8 : vector<1x64xf32> to vector<8x64xf32>
    %32 = arith.addf %30, %31 : vector<8x64xf32>
    %cst_15 = arith.constant 0.000000e+00 : f32
    %33 = vector.broadcast %cst_15 : f32 to vector<8x64xf32>
    %34 = arith.maximumf %32, %33 : vector<8x64xf32>
    %35 = vector.extract_strided_slice %5 {offsets = [0, 64], sizes = [8, 64], strides = [1, 1]} : vector<8x192xf32> to vector<8x64xf32>
    %c0_16 = arith.constant 0 : index
    %c0_17 = arith.constant 0 : index
    %36 = vector.load %arg6[%c0_16, %c0_17] : memref<1x64xf32, #tpu.memory_space<vmem>>, vector<1x64xf32>
    %c0_18 = arith.constant 0 : index
    %c0_19 = arith.constant 0 : index
    %37 = vector.load %arg7[%c0_18, %c0_19] : memref<1x64xf32, #tpu.memory_space<vmem>>, vector<1x64xf32>
    %cst_20 = arith.constant dense<0.000000e+00> : vector<8xf32>
    %38 = vector.multi_reduction <add>, %35, %cst_20 [1] : vector<8x64xf32> to vector<8xf32>
    %39 = vector.shape_cast %38 : vector<8xf32> to vector<8x1xf32>
    %cst_21 = arith.constant 6.400000e+01 : f32
    %40 = vector.broadcast %cst_21 : f32 to vector<8x1xf32>
    %41 = arith.divf %39, %40 : vector<8x1xf32>
    %42 = arith.mulf %35, %35 : vector<8x64xf32>
    %cst_22 = arith.constant dense<0.000000e+00> : vector<8xf32>
    %43 = vector.multi_reduction <add>, %42, %cst_22 [1] : vector<8x64xf32> to vector<8xf32>
    %44 = vector.shape_cast %43 : vector<8xf32> to vector<8x1xf32>
    %cst_23 = arith.constant 6.400000e+01 : f32
    %45 = vector.broadcast %cst_23 : f32 to vector<8x1xf32>
    %46 = arith.divf %44, %45 : vector<8x1xf32>
    %47 = arith.mulf %41, %41 : vector<8x1xf32>
    %48 = arith.subf %46, %47 : vector<8x1xf32>
    %cst_24 = arith.constant 0.000000e+00 : f32
    %49 = vector.broadcast %cst_24 : f32 to vector<8x1xf32>
    %50 = arith.maximumf %48, %49 : vector<8x1xf32>
    %51 = vector.broadcast %41 : vector<8x1xf32> to vector<8x64xf32>
    %52 = arith.subf %35, %51 : vector<8x64xf32>
    %cst_25 = arith.constant 9.99999974E-6 : f32
    %53 = vector.broadcast %cst_25 : f32 to vector<8x1xf32>
    %54 = arith.addf %50, %53 : vector<8x1xf32>
    %55 = math.rsqrt %54 : vector<8x1xf32>
    %56 = vector.broadcast %55 : vector<8x1xf32> to vector<8x64xf32>
    %57 = arith.mulf %52, %56 : vector<8x64xf32>
    %58 = vector.broadcast %36 : vector<1x64xf32> to vector<8x64xf32>
    %59 = arith.mulf %57, %58 : vector<8x64xf32>
    %60 = vector.broadcast %37 : vector<1x64xf32> to vector<8x64xf32>
    %61 = arith.addf %59, %60 : vector<8x64xf32>
    %cst_26 = arith.constant 0.000000e+00 : f32
    %62 = vector.broadcast %cst_26 : f32 to vector<8x64xf32>
    %63 = arith.maximumf %61, %62 : vector<8x64xf32>
    %64 = vector.extract_strided_slice %5 {offsets = [0, 128], sizes = [8, 64], strides = [1, 1]} : vector<8x192xf32> to vector<8x64xf32>
    %c0_27 = arith.constant 0 : index
    %c0_28 = arith.constant 0 : index
    %65 = vector.load %arg8[%c0_27, %c0_28] : memref<1x64xf32, #tpu.memory_space<vmem>>, vector<1x64xf32>
    %c0_29 = arith.constant 0 : index
    %c0_30 = arith.constant 0 : index
    %66 = vector.load %arg9[%c0_29, %c0_30] : memref<1x64xf32, #tpu.memory_space<vmem>>, vector<1x64xf32>
    %cst_31 = arith.constant dense<0.000000e+00> : vector<8xf32>
    %67 = vector.multi_reduction <add>, %64, %cst_31 [1] : vector<8x64xf32> to vector<8xf32>
    %68 = vector.shape_cast %67 : vector<8xf32> to vector<8x1xf32>
    %cst_32 = arith.constant 6.400000e+01 : f32
    %69 = vector.broadcast %cst_32 : f32 to vector<8x1xf32>
    %70 = arith.divf %68, %69 : vector<8x1xf32>
    %71 = arith.mulf %64, %64 : vector<8x64xf32>
    %cst_33 = arith.constant dense<0.000000e+00> : vector<8xf32>
    %72 = vector.multi_reduction <add>, %71, %cst_33 [1] : vector<8x64xf32> to vector<8xf32>
    %73 = vector.shape_cast %72 : vector<8xf32> to vector<8x1xf32>
    %cst_34 = arith.constant 6.400000e+01 : f32
    %74 = vector.broadcast %cst_34 : f32 to vector<8x1xf32>
    %75 = arith.divf %73, %74 : vector<8x1xf32>
    %76 = arith.mulf %70, %70 : vector<8x1xf32>
    %77 = arith.subf %75, %76 : vector<8x1xf32>
    %cst_35 = arith.constant 0.000000e+00 : f32
    %78 = vector.broadcast %cst_35 : f32 to vector<8x1xf32>
    %79 = arith.maximumf %77, %78 : vector<8x1xf32>
    %80 = vector.broadcast %70 : vector<8x1xf32> to vector<8x64xf32>
    %81 = arith.subf %64, %80 : vector<8x64xf32>
    %cst_36 = arith.constant 9.99999974E-6 : f32
    %82 = vector.broadcast %cst_36 : f32 to vector<8x1xf32>
    %83 = arith.addf %79, %82 : vector<8x1xf32>
    %84 = math.rsqrt %83 : vector<8x1xf32>
    %85 = vector.broadcast %84 : vector<8x1xf32> to vector<8x64xf32>
    %86 = arith.mulf %81, %85 : vector<8x64xf32>
    %87 = vector.broadcast %65 : vector<1x64xf32> to vector<8x64xf32>
    %88 = arith.mulf %86, %87 : vector<8x64xf32>
    %89 = vector.broadcast %66 : vector<1x64xf32> to vector<8x64xf32>
    %90 = arith.addf %88, %89 : vector<8x64xf32>
    %cst_37 = arith.constant 0.000000e+00 : f32
    %91 = vector.broadcast %cst_37 : f32 to vector<8x64xf32>
    %92 = arith.maximumf %90, %91 : vector<8x64xf32>
    %c0_38 = arith.constant 0 : index
    %c0_39 = arith.constant 0 : index
    %93 = vector.load %arg10[%c0_38, %c0_39] : memref<64x32xf32, #tpu.memory_space<vmem>>, vector<64x32xf32>
    %cst_40 = arith.constant dense<0.000000e+00> : vector<8x32xf32>
    %94 = tpu.matmul %34, %93, %cst_40 {dimension_numbers = #tpu.dot_dimension_numbers<[1], [0], [0], [1], [0, 0, 1, 1], [], []>} : vector<8x64xf32>, vector<64x32xf32>, vector<8x32xf32> -> vector<8x32xf32>
    %c0_41 = arith.constant 0 : index
    %c0_42 = arith.constant 0 : index
    %95 = vector.load %arg11[%c0_41, %c0_42] : memref<1x32xf32, #tpu.memory_space<vmem>>, vector<1x32xf32>
    %96 = vector.broadcast %95 : vector<1x32xf32> to vector<8x32xf32>
    %97 = arith.addf %94, %96 : vector<8x32xf32>
    %98 = arith.negf %97 : vector<8x32xf32>
    %99 = math.exp %98 : vector<8x32xf32>
    %cst_43 = arith.constant 1.000000e+00 : f32
    %100 = vector.broadcast %cst_43 : f32 to vector<8x32xf32>
    %101 = arith.addf %100, %99 : vector<8x32xf32>
    %102 = arith.divf %100, %101 : vector<8x32xf32>
    %c0_44 = arith.constant 0 : index
    %c0_45 = arith.constant 0 : index
    %103 = vector.load %arg12[%c0_44, %c0_45] : memref<64x32xf32, #tpu.memory_space<vmem>>, vector<64x32xf32>
    %cst_46 = arith.constant dense<0.000000e+00> : vector<8x32xf32>
    %104 = tpu.matmul %63, %103, %cst_46 {dimension_numbers = #tpu.dot_dimension_numbers<[1], [0], [0], [1], [0, 0, 1, 1], [], []>} : vector<8x64xf32>, vector<64x32xf32>, vector<8x32xf32> -> vector<8x32xf32>
    %c0_47 = arith.constant 0 : index
    %c0_48 = arith.constant 0 : index
    %105 = vector.load %arg13[%c0_47, %c0_48] : memref<1x32xf32, #tpu.memory_space<vmem>>, vector<1x32xf32>
    %106 = vector.broadcast %105 : vector<1x32xf32> to vector<8x32xf32>
    %107 = arith.addf %104, %106 : vector<8x32xf32>
    %108 = arith.negf %107 : vector<8x32xf32>
    %109 = math.exp %108 : vector<8x32xf32>
    %cst_49 = arith.constant 1.000000e+00 : f32
    %110 = vector.broadcast %cst_49 : f32 to vector<8x32xf32>
    %111 = arith.addf %110, %109 : vector<8x32xf32>
    %112 = arith.divf %110, %111 : vector<8x32xf32>
    %c0_50 = arith.constant 0 : index
    %c0_51 = arith.constant 0 : index
    %113 = vector.load %arg48[%c0_50, %c0_51] : memref<8x32xf32, #tpu.memory_space<vmem>>, vector<8x32xf32>
    tpu.vector_store %arg48[%c0_50, %c0_51], %112 {strides = array<i32>} : memref<8x32xf32, #tpu.memory_space<vmem>>, vector<8x32xf32>,
    %c0_52 = arith.constant 0 : index
    %c0_53 = arith.constant 0 : index
    %114 = vector.load %arg14[%c0_52, %c0_53] : memref<64x64xf32, #tpu.memory_space<vmem>>, vector<64x64xf32>
    %cst_54 = arith.constant dense<0.000000e+00> : vector<8x64xf32>
    %115 = tpu.matmul %92, %114, %cst_54 {dimension_numbers = #tpu.dot_dimension_numbers<[1], [0], [0], [1], [0, 0, 1, 1], [], []>} : vector<8x64xf32>, vector<64x64xf32>, vector<8x64xf32> -> vector<8x64xf32>
    %c0_55 = arith.constant 0 : index
    %c0_56 = arith.constant 0 : index
    %116 = vector.load %arg15[%c0_55, %c0_56] : memref<1x64xf32, #tpu.memory_space<vmem>>, vector<1x64xf32>
    %117 = vector.broadcast %116 : vector<1x64xf32> to vector<8x64xf32>
    %118 = arith.addf %115, %117 : vector<8x64xf32>
    %c0_57 = arith.constant 0 : index
    %c0_58 = arith.constant 0 : index
    %119 = vector.load %arg16[%c0_57, %c0_58] : memref<32x64xf32, #tpu.memory_space<vmem>>, vector<32x64xf32>
    %cst_59 = arith.constant dense<0.000000e+00> : vector<8x64xf32>
    %120 = tpu.matmul %0, %119, %cst_59 {dimension_numbers = #tpu.dot_dimension_numbers<[1], [0], [0], [1], [0, 0, 1, 1], [], []>} : vector<8x32xf32>, vector<32x64xf32>, vector<8x64xf32> -> vector<8x64xf32>
    %c0_60 = arith.constant 0 : index
    %c0_61 = arith.constant 0 : index
    %121 = vector.load %arg17[%c0_60, %c0_61] : memref<1x64xf32, #tpu.memory_space<vmem>>, vector<1x64xf32>
    %122 = vector.broadcast %121 : vector<1x64xf32> to vector<8x64xf32>
    %123 = arith.addf %120, %122 : vector<8x64xf32>
    %c0_62 = arith.constant 0 : index
    %c0_63 = arith.constant 0 : index
    %124 = vector.load %arg18[%c0_62, %c0_63] : memref<1x64xf32, #tpu.memory_space<vmem>>, vector<1x64xf32>
    %c0_64 = arith.constant 0 : index
    %c0_65 = arith.constant 0 : index
    %125 = vector.load %arg19[%c0_64, %c0_65] : memref<1x64xf32, #tpu.memory_space<vmem>>, vector<1x64xf32>
    %cst_66 = arith.constant dense<0.000000e+00> : vector<8xf32>
    %126 = vector.multi_reduction <add>, %123, %cst_66 [1] : vector<8x64xf32> to vector<8xf32>
    %127 = vector.shape_cast %126 : vector<8xf32> to vector<8x1xf32>
    %cst_67 = arith.constant 6.400000e+01 : f32
    %128 = vector.broadcast %cst_67 : f32 to vector<8x1xf32>
    %129 = arith.divf %127, %128 : vector<8x1xf32>
    %130 = arith.mulf %123, %123 : vector<8x64xf32>
    %cst_68 = arith.constant dense<0.000000e+00> : vector<8xf32>
    %131 = vector.multi_reduction <add>, %130, %cst_68 [1] : vector<8x64xf32> to vector<8xf32>
    %132 = vector.shape_cast %131 : vector<8xf32> to vector<8x1xf32>
    %cst_69 = arith.constant 6.400000e+01 : f32
    %133 = vector.broadcast %cst_69 : f32 to vector<8x1xf32>
    %134 = arith.divf %132, %133 : vector<8x1xf32>
    %135 = arith.mulf %129, %129 : vector<8x1xf32>
    %136 = arith.subf %134, %135 : vector<8x1xf32>
    %cst_70 = arith.constant 0.000000e+00 : f32
    %137 = vector.broadcast %cst_70 : f32 to vector<8x1xf32>
    %138 = arith.maximumf %136, %137 : vector<8x1xf32>
    %139 = vector.broadcast %129 : vector<8x1xf32> to vector<8x64xf32>
    %140 = arith.subf %123, %139 : vector<8x64xf32>
    %cst_71 = arith.constant 9.99999974E-6 : f32
    %141 = vector.broadcast %cst_71 : f32 to vector<8x1xf32>
    %142 = arith.addf %138, %141 : vector<8x1xf32>
    %143 = math.rsqrt %142 : vector<8x1xf32>
    %144 = vector.broadcast %143 : vector<8x1xf32> to vector<8x64xf32>
    %145 = arith.mulf %140, %144 : vector<8x64xf32>
    %146 = vector.broadcast %124 : vector<1x64xf32> to vector<8x64xf32>
    %147 = arith.mulf %145, %146 : vector<8x64xf32>
    %148 = vector.broadcast %125 : vector<1x64xf32> to vector<8x64xf32>
    %149 = arith.addf %147, %148 : vector<8x64xf32>
    %cst_72 = arith.constant 0.000000e+00 : f32
    %150 = vector.broadcast %cst_72 : f32 to vector<8x64xf32>
    %151 = arith.maximumf %149, %150 : vector<8x64xf32>
    %c0_73 = arith.constant 0 : index
    %c0_74 = arith.constant 0 : index
    %152 = vector.load %arg20[%c0_73, %c0_74] : memref<64x64xf32, #tpu.memory_space<vmem>>, vector<64x64xf32>
    %cst_75 = arith.constant dense<0.000000e+00> : vector<8x64xf32>
    %153 = tpu.matmul %151, %152, %cst_75 {dimension_numbers = #tpu.dot_dimension_numbers<[1], [0], [0], [1], [0, 0, 1, 1], [], []>} : vector<8x64xf32>, vector<64x64xf32>, vector<8x64xf32> -> vector<8x64xf32>
    %c0_76 = arith.constant 0 : index
    %c0_77 = arith.constant 0 : index
    %154 = vector.load %arg21[%c0_76, %c0_77] : memref<1x64xf32, #tpu.memory_space<vmem>>, vector<1x64xf32>
    %155 = vector.broadcast %154 : vector<1x64xf32> to vector<8x64xf32>
    %156 = arith.addf %153, %155 : vector<8x64xf32>
    %c0_78 = arith.constant 0 : index
    %c0_79 = arith.constant 0 : index
    %157 = vector.load %arg22[%c0_78, %c0_79] : memref<1x64xf32, #tpu.memory_space<vmem>>, vector<1x64xf32>
    %c0_80 = arith.constant 0 : index
    %c0_81 = arith.constant 0 : index
    %158 = vector.load %arg23[%c0_80, %c0_81] : memref<1x64xf32, #tpu.memory_space<vmem>>, vector<1x64xf32>
    %cst_82 = arith.constant dense<0.000000e+00> : vector<8xf32>
    %159 = vector.multi_reduction <add>, %156, %cst_82 [1] : vector<8x64xf32> to vector<8xf32>
    %160 = vector.shape_cast %159 : vector<8xf32> to vector<8x1xf32>
    %cst_83 = arith.constant 6.400000e+01 : f32
    %161 = vector.broadcast %cst_83 : f32 to vector<8x1xf32>
    %162 = arith.divf %160, %161 : vector<8x1xf32>
    %163 = arith.mulf %156, %156 : vector<8x64xf32>
    %cst_84 = arith.constant dense<0.000000e+00> : vector<8xf32>
    %164 = vector.multi_reduction <add>, %163, %cst_84 [1] : vector<8x64xf32> to vector<8xf32>
    %165 = vector.shape_cast %164 : vector<8xf32> to vector<8x1xf32>
    %cst_85 = arith.constant 6.400000e+01 : f32
    %166 = vector.broadcast %cst_85 : f32 to vector<8x1xf32>
    %167 = arith.divf %165, %166 : vector<8x1xf32>
    %168 = arith.mulf %162, %162 : vector<8x1xf32>
    %169 = arith.subf %167, %168 : vector<8x1xf32>
    %cst_86 = arith.constant 0.000000e+00 : f32
    %170 = vector.broadcast %cst_86 : f32 to vector<8x1xf32>
    %171 = arith.maximumf %169, %170 : vector<8x1xf32>
    %172 = vector.broadcast %162 : vector<8x1xf32> to vector<8x64xf32>
    %173 = arith.subf %156, %172 : vector<8x64xf32>
    %cst_87 = arith.constant 9.99999974E-6 : f32
    %174 = vector.broadcast %cst_87 : f32 to vector<8x1xf32>
    %175 = arith.addf %171, %174 : vector<8x1xf32>
    %176 = math.rsqrt %175 : vector<8x1xf32>
    %177 = vector.broadcast %176 : vector<8x1xf32> to vector<8x64xf32>
    %178 = arith.mulf %173, %177 : vector<8x64xf32>
    %179 = vector.broadcast %157 : vector<1x64xf32> to vector<8x64xf32>
    %180 = arith.mulf %178, %179 : vector<8x64xf32>
    %181 = vector.broadcast %158 : vector<1x64xf32> to vector<8x64xf32>
    %182 = arith.addf %180, %181 : vector<8x64xf32>
    %cst_88 = arith.constant 0.000000e+00 : f32
    %183 = vector.broadcast %cst_88 : f32 to vector<8x64xf32>
    %184 = arith.maximumf %182, %183 : vector<8x64xf32>
    %c0_89 = arith.constant 0 : index
    %c0_90 = arith.constant 0 : index
    %185 = vector.load %arg24[%c0_89, %c0_90] : memref<64x160xf32, #tpu.memory_space<vmem>>, vector<64x160xf32>
    %cst_91 = arith.constant dense<0.000000e+00> : vector<8x160xf32>
    %186 = tpu.matmul %184, %185, %cst_91 {dimension_numbers = #tpu.dot_dimension_numbers<[1], [0], [0], [1], [0, 0, 1, 1], [], []>} : vector<8x64xf32>, vector<64x160xf32>, vector<8x160xf32> -> vector<8x160xf32>
    %c0_92 = arith.constant 0 : index
    %c0_93 = arith.constant 0 : index
    %187 = vector.load %arg25[%c0_92, %c0_93] : memref<1x160xf32, #tpu.memory_space<vmem>>, vector<1x160xf32>
    %188 = vector.broadcast %187 : vector<1x160xf32> to vector<8x160xf32>
    %189 = arith.addf %186, %188 : vector<8x160xf32>
    %190 = vector.extract_strided_slice %189 {offsets = [0, 0], sizes = [8, 32], strides = [1, 1]} : vector<8x160xf32> to vector<8x32xf32>
    %191 = arith.mulf %102, %190 : vector<8x32xf32>
    %192 = arith.addf %0, %191 : vector<8x32xf32>
    %c0_94 = arith.constant 0 : index
    %c0_95 = arith.constant 0 : index
    %c0_96 = arith.constant 0 : index
    %193 = vector.load %arg49[%c0_94, %c0_95, %c0_96] : memref<5x8x32xf32, #tpu.memory_space<vmem>>, vector<1x8x32xf32>
    %194 = vector.shape_cast %193 : vector<1x8x32xf32> to vector<8x32xf32>
    %195 = vector.shape_cast %192 : vector<8x32xf32> to vector<1x8x32xf32>
    tpu.vector_store %arg49[%c0_94, %c0_95, %c0_96], %195 {strides = array<i32>} : memref<5x8x32xf32, #tpu.memory_space<vmem>>, vector<1x8x32xf32>,
    %196 = vector.extract_strided_slice %189 {offsets = [0, 32], sizes = [8, 32], strides = [1, 1]} : vector<8x160xf32> to vector<8x32xf32>
    %197 = arith.mulf %102, %196 : vector<8x32xf32>
    %198 = arith.addf %0, %197 : vector<8x32xf32>
    %c1 = arith.constant 1 : index
    %c0_97 = arith.constant 0 : index
    %c0_98 = arith.constant 0 : index
    %199 = vector.load %arg49[%c1, %c0_97, %c0_98] : memref<5x8x32xf32, #tpu.memory_space<vmem>>, vector<1x8x32xf32>
    %200 = vector.shape_cast %199 : vector<1x8x32xf32> to vector<8x32xf32>
    %201 = vector.shape_cast %198 : vector<8x32xf32> to vector<1x8x32xf32>
    tpu.vector_store %arg49[%c1, %c0_97, %c0_98], %201 {strides = array<i32>} : memref<5x8x32xf32, #tpu.memory_space<vmem>>, vector<1x8x32xf32>,
    %202 = vector.extract_strided_slice %189 {offsets = [0, 64], sizes = [8, 32], strides = [1, 1]} : vector<8x160xf32> to vector<8x32xf32>
    %203 = arith.mulf %102, %202 : vector<8x32xf32>
    %204 = arith.addf %0, %203 : vector<8x32xf32>
    %c2 = arith.constant 2 : index
    %c0_99 = arith.constant 0 : index
    %c0_100 = arith.constant 0 : index
    %205 = vector.load %arg49[%c2, %c0_99, %c0_100] : memref<5x8x32xf32, #tpu.memory_space<vmem>>, vector<1x8x32xf32>
    %206 = vector.shape_cast %205 : vector<1x8x32xf32> to vector<8x32xf32>
    %207 = vector.shape_cast %204 : vector<8x32xf32> to vector<1x8x32xf32>
    tpu.vector_store %arg49[%c2, %c0_99, %c0_100], %207 {strides = array<i32>} : memref<5x8x32xf32, #tpu.memory_space<vmem>>, vector<1x8x32xf32>,
    %208 = vector.extract_strided_slice %189 {offsets = [0, 96], sizes = [8, 32], strides = [1, 1]} : vector<8x160xf32> to vector<8x32xf32>
    %209 = arith.mulf %102, %208 : vector<8x32xf32>
    %210 = arith.addf %0, %209 : vector<8x32xf32>
    %c3 = arith.constant 3 : index
    %c0_101 = arith.constant 0 : index
    %c0_102 = arith.constant 0 : index
    %211 = vector.load %arg49[%c3, %c0_101, %c0_102] : memref<5x8x32xf32, #tpu.memory_space<vmem>>, vector<1x8x32xf32>
    %212 = vector.shape_cast %211 : vector<1x8x32xf32> to vector<8x32xf32>
    %213 = vector.shape_cast %210 : vector<8x32xf32> to vector<1x8x32xf32>
    tpu.vector_store %arg49[%c3, %c0_101, %c0_102], %213 {strides = array<i32>} : memref<5x8x32xf32, #tpu.memory_space<vmem>>, vector<1x8x32xf32>,
    %214 = vector.extract_strided_slice %189 {offsets = [0, 128], sizes = [8, 32], strides = [1, 1]} : vector<8x160xf32> to vector<8x32xf32>
    %215 = arith.mulf %102, %214 : vector<8x32xf32>
    %216 = arith.addf %0, %215 : vector<8x32xf32>
    %c4 = arith.constant 4 : index
    %c0_103 = arith.constant 0 : index
    %c0_104 = arith.constant 0 : index
    %217 = vector.load %arg49[%c4, %c0_103, %c0_104] : memref<5x8x32xf32, #tpu.memory_space<vmem>>, vector<1x8x32xf32>
    %218 = vector.shape_cast %217 : vector<1x8x32xf32> to vector<8x32xf32>
    %219 = vector.shape_cast %216 : vector<8x32xf32> to vector<1x8x32xf32>
    tpu.vector_store %arg49[%c4, %c0_103, %c0_104], %219 {strides = array<i32>} : memref<5x8x32xf32, #tpu.memory_space<vmem>>, vector<1x8x32xf32>,
    %220 = tpu.concatenate %192, %198, %204, %210, %216 in 0 : vector<8x32xf32>, vector<8x32xf32>, vector<8x32xf32>, vector<8x32xf32>, vector<8x32xf32> -> vector<40x32xf32>
    %c0_105 = arith.constant 0 : index
    %c0_106 = arith.constant 0 : index
    %221 = vector.load %arg26[%c0_105, %c0_106] : memref<32x64xf32, #tpu.memory_space<vmem>>, vector<32x64xf32>
    %cst_107 = arith.constant dense<0.000000e+00> : vector<40x64xf32>
    %222 = tpu.matmul %220, %221, %cst_107 {dimension_numbers = #tpu.dot_dimension_numbers<[1], [0], [0], [1], [0, 0, 1, 1], [], []>} : vector<40x32xf32>, vector<32x64xf32>, vector<40x64xf32> -> vector<40x64xf32>
    %c0_108 = arith.constant 0 : index
    %c0_109 = arith.constant 0 : index
    %223 = vector.load %arg27[%c0_108, %c0_109] : memref<1x64xf32, #tpu.memory_space<vmem>>, vector<1x64xf32>
    %224 = vector.broadcast %223 : vector<1x64xf32> to vector<40x64xf32>
    %225 = arith.addf %222, %224 : vector<40x64xf32>
    %c0_110 = arith.constant 0 : index
    %c0_111 = arith.constant 0 : index
    %226 = vector.load %arg28[%c0_110, %c0_111] : memref<1x64xf32, #tpu.memory_space<vmem>>, vector<1x64xf32>
    %c0_112 = arith.constant 0 : index
    %c0_113 = arith.constant 0 : index
    %227 = vector.load %arg29[%c0_112, %c0_113] : memref<1x64xf32, #tpu.memory_space<vmem>>, vector<1x64xf32>
    %cst_114 = arith.constant dense<0.000000e+00> : vector<40xf32>
    %228 = vector.multi_reduction <add>, %225, %cst_114 [1] : vector<40x64xf32> to vector<40xf32>
    %229 = vector.shape_cast %228 : vector<40xf32> to vector<40x1xf32>
    %cst_115 = arith.constant 6.400000e+01 : f32
    %230 = vector.broadcast %cst_115 : f32 to vector<40x1xf32>
    %231 = arith.divf %229, %230 : vector<40x1xf32>
    %232 = arith.mulf %225, %225 : vector<40x64xf32>
    %cst_116 = arith.constant dense<0.000000e+00> : vector<40xf32>
    %233 = vector.multi_reduction <add>, %232, %cst_116 [1] : vector<40x64xf32> to vector<40xf32>
    %234 = vector.shape_cast %233 : vector<40xf32> to vector<40x1xf32>
    %cst_117 = arith.constant 6.400000e+01 : f32
    %235 = vector.broadcast %cst_117 : f32 to vector<40x1xf32>
    %236 = arith.divf %234, %235 : vector<40x1xf32>
    %237 = arith.mulf %231, %231 : vector<40x1xf32>
    %238 = arith.subf %236, %237 : vector<40x1xf32>
    %cst_118 = arith.constant 0.000000e+00 : f32
    %239 = vector.broadcast %cst_118 : f32 to vector<40x1xf32>
    %240 = arith.maximumf %238, %239 : vector<40x1xf32>
    %241 = vector.broadcast %231 : vector<40x1xf32> to vector<40x64xf32>
    %242 = arith.subf %225, %241 : vector<40x64xf32>
    %cst_119 = arith.constant 9.99999974E-6 : f32
    %243 = vector.broadcast %cst_119 : f32 to vector<40x1xf32>
    %244 = arith.addf %240, %243 : vector<40x1xf32>
    %245 = math.rsqrt %244 : vector<40x1xf32>
    %246 = vector.broadcast %245 : vector<40x1xf32> to vector<40x64xf32>
    %247 = arith.mulf %242, %246 : vector<40x64xf32>
    %248 = vector.broadcast %226 : vector<1x64xf32> to vector<40x64xf32>
    %249 = arith.mulf %247, %248 : vector<40x64xf32>
    %250 = vector.broadcast %227 : vector<1x64xf32> to vector<40x64xf32>
    %251 = arith.addf %249, %250 : vector<40x64xf32>
    %cst_120 = arith.constant 0.000000e+00 : f32
    %252 = vector.broadcast %cst_120 : f32 to vector<40x64xf32>
    %253 = arith.maximumf %251, %252 : vector<40x64xf32>
    %c0_121 = arith.constant 0 : index
    %c0_122 = arith.constant 0 : index
    %254 = vector.load %arg30[%c0_121, %c0_122] : memref<64x32xf32, #tpu.memory_space<vmem>>, vector<64x32xf32>
    %cst_123 = arith.constant dense<0.000000e+00> : vector<40x32xf32>
    %255 = tpu.matmul %253, %254, %cst_123 {dimension_numbers = #tpu.dot_dimension_numbers<[1], [0], [0], [1], [0, 0, 1, 1], [], []>} : vector<40x64xf32>, vector<64x32xf32>, vector<40x32xf32> -> vector<40x32xf32>
    %c0_124 = arith.constant 0 : index
    %c0_125 = arith.constant 0 : index
    %256 = vector.load %arg31[%c0_124, %c0_125] : memref<1x32xf32, #tpu.memory_space<vmem>>, vector<1x32xf32>
    %257 = vector.broadcast %256 : vector<1x32xf32> to vector<40x32xf32>
    %258 = arith.addf %255, %257 : vector<40x32xf32>
    %259 = vector.extract_strided_slice %258 {offsets = [0, 0], sizes = [8, 32], strides = [1, 1]} : vector<40x32xf32> to vector<8x32xf32>
    %c0_126 = arith.constant 0 : index
    %c0_127 = arith.constant 0 : index
    %c0_128 = arith.constant 0 : index
    %260 = vector.load %arg50[%c0_126, %c0_127, %c0_128] : memref<5x8x32xf32, #tpu.memory_space<vmem>>, vector<1x8x32xf32>
    %261 = vector.shape_cast %260 : vector<1x8x32xf32> to vector<8x32xf32>
    %262 = vector.shape_cast %259 : vector<8x32xf32> to vector<1x8x32xf32>
    tpu.vector_store %arg50[%c0_126, %c0_127, %c0_128], %262 {strides = array<i32>} : memref<5x8x32xf32, #tpu.memory_space<vmem>>, vector<1x8x32xf32>,
    %263 = vector.extract_strided_slice %258 {offsets = [8, 0], sizes = [8, 32], strides = [1, 1]} : vector<40x32xf32> to vector<8x32xf32>
    %c1_129 = arith.constant 1 : index
    %c0_130 = arith.constant 0 : index
    %c0_131 = arith.constant 0 : index
    %264 = vector.load %arg50[%c1_129, %c0_130, %c0_131] : memref<5x8x32xf32, #tpu.memory_space<vmem>>, vector<1x8x32xf32>
    %265 = vector.shape_cast %264 : vector<1x8x32xf32> to vector<8x32xf32>
    %266 = vector.shape_cast %263 : vector<8x32xf32> to vector<1x8x32xf32>
    tpu.vector_store %arg50[%c1_129, %c0_130, %c0_131], %266 {strides = array<i32>} : memref<5x8x32xf32, #tpu.memory_space<vmem>>, vector<1x8x32xf32>,
    %267 = vector.extract_strided_slice %258 {offsets = [16, 0], sizes = [8, 32], strides = [1, 1]} : vector<40x32xf32> to vector<8x32xf32>
    %c2_132 = arith.constant 2 : index
    %c0_133 = arith.constant 0 : index
    %c0_134 = arith.constant 0 : index
    %268 = vector.load %arg50[%c2_132, %c0_133, %c0_134] : memref<5x8x32xf32, #tpu.memory_space<vmem>>, vector<1x8x32xf32>
    %269 = vector.shape_cast %268 : vector<1x8x32xf32> to vector<8x32xf32>
    %270 = vector.shape_cast %267 : vector<8x32xf32> to vector<1x8x32xf32>
    tpu.vector_store %arg50[%c2_132, %c0_133, %c0_134], %270 {strides = array<i32>} : memref<5x8x32xf32, #tpu.memory_space<vmem>>, vector<1x8x32xf32>,
    %271 = vector.extract_strided_slice %258 {offsets = [24, 0], sizes = [8, 32], strides = [1, 1]} : vector<40x32xf32> to vector<8x32xf32>
    %c3_135 = arith.constant 3 : index
    %c0_136 = arith.constant 0 : index
    %c0_137 = arith.constant 0 : index
    %272 = vector.load %arg50[%c3_135, %c0_136, %c0_137] : memref<5x8x32xf32, #tpu.memory_space<vmem>>, vector<1x8x32xf32>
    %273 = vector.shape_cast %272 : vector<1x8x32xf32> to vector<8x32xf32>
    %274 = vector.shape_cast %271 : vector<8x32xf32> to vector<1x8x32xf32>
    tpu.vector_store %arg50[%c3_135, %c0_136, %c0_137], %274 {strides = array<i32>} : memref<5x8x32xf32, #tpu.memory_space<vmem>>, vector<1x8x32xf32>,
    %275 = vector.extract_strided_slice %258 {offsets = [32, 0], sizes = [8, 32], strides = [1, 1]} : vector<40x32xf32> to vector<8x32xf32>
    %c4_138 = arith.constant 4 : index
    %c0_139 = arith.constant 0 : index
    %c0_140 = arith.constant 0 : index
    %276 = vector.load %arg50[%c4_138, %c0_139, %c0_140] : memref<5x8x32xf32, #tpu.memory_space<vmem>>, vector<1x8x32xf32>
    %277 = vector.shape_cast %276 : vector<1x8x32xf32> to vector<8x32xf32>
    %278 = vector.shape_cast %275 : vector<8x32xf32> to vector<1x8x32xf32>
    tpu.vector_store %arg50[%c4_138, %c0_139, %c0_140], %278 {strides = array<i32>} : memref<5x8x32xf32, #tpu.memory_space<vmem>>, vector<1x8x32xf32>,
    %c0_141 = arith.constant 0 : index
    %c0_142 = arith.constant 0 : index
    %279 = vector.load %arg32[%c0_141, %c0_142] : memref<64x64xf32, #tpu.memory_space<vmem>>, vector<64x64xf32>
    %cst_143 = arith.constant dense<0.000000e+00> : vector<8x64xf32>
    %280 = tpu.matmul %118, %279, %cst_143 {dimension_numbers = #tpu.dot_dimension_numbers<[1], [0], [0], [1], [0, 0, 1, 1], [], []>} : vector<8x64xf32>, vector<64x64xf32>, vector<8x64xf32> -> vector<8x64xf32>
    %c0_144 = arith.constant 0 : index
    %c0_145 = arith.constant 0 : index
    %281 = vector.load %arg33[%c0_144, %c0_145] : memref<1x64xf32, #tpu.memory_space<vmem>>, vector<1x64xf32>
    %282 = vector.broadcast %281 : vector<1x64xf32> to vector<8x64xf32>
    %283 = arith.addf %280, %282 : vector<8x64xf32>
    %c0_146 = arith.constant 0 : index
    %c0_147 = arith.constant 0 : index
    %284 = vector.load %arg34[%c0_146, %c0_147] : memref<1x64xf32, #tpu.memory_space<vmem>>, vector<1x64xf32>
    %c0_148 = arith.constant 0 : index
    %c0_149 = arith.constant 0 : index
    %285 = vector.load %arg35[%c0_148, %c0_149] : memref<1x64xf32, #tpu.memory_space<vmem>>, vector<1x64xf32>
    %cst_150 = arith.constant dense<0.000000e+00> : vector<8xf32>
    %286 = vector.multi_reduction <add>, %283, %cst_150 [1] : vector<8x64xf32> to vector<8xf32>
    %287 = vector.shape_cast %286 : vector<8xf32> to vector<8x1xf32>
    %cst_151 = arith.constant 6.400000e+01 : f32
    %288 = vector.broadcast %cst_151 : f32 to vector<8x1xf32>
    %289 = arith.divf %287, %288 : vector<8x1xf32>
    %290 = arith.mulf %283, %283 : vector<8x64xf32>
    %cst_152 = arith.constant dense<0.000000e+00> : vector<8xf32>
    %291 = vector.multi_reduction <add>, %290, %cst_152 [1] : vector<8x64xf32> to vector<8xf32>
    %292 = vector.shape_cast %291 : vector<8xf32> to vector<8x1xf32>
    %cst_153 = arith.constant 6.400000e+01 : f32
    %293 = vector.broadcast %cst_153 : f32 to vector<8x1xf32>
    %294 = arith.divf %292, %293 : vector<8x1xf32>
    %295 = arith.mulf %289, %289 : vector<8x1xf32>
    %296 = arith.subf %294, %295 : vector<8x1xf32>
    %cst_154 = arith.constant 0.000000e+00 : f32
    %297 = vector.broadcast %cst_154 : f32 to vector<8x1xf32>
    %298 = arith.maximumf %296, %297 : vector<8x1xf32>
    %299 = vector.broadcast %289 : vector<8x1xf32> to vector<8x64xf32>
    %300 = arith.subf %283, %299 : vector<8x64xf32>
    %cst_155 = arith.constant 9.99999974E-6 : f32
    %301 = vector.broadcast %cst_155 : f32 to vector<8x1xf32>
    %302 = arith.addf %298, %301 : vector<8x1xf32>
    %303 = math.rsqrt %302 : vector<8x1xf32>
    %304 = vector.broadcast %303 : vector<8x1xf32> to vector<8x64xf32>
    %305 = arith.mulf %300, %304 : vector<8x64xf32>
    %306 = vector.broadcast %284 : vector<1x64xf32> to vector<8x64xf32>
    %307 = arith.mulf %305, %306 : vector<8x64xf32>
    %308 = vector.broadcast %285 : vector<1x64xf32> to vector<8x64xf32>
    %309 = arith.addf %307, %308 : vector<8x64xf32>
    %cst_156 = arith.constant 0.000000e+00 : f32
    %310 = vector.broadcast %cst_156 : f32 to vector<8x64xf32>
    %311 = arith.maximumf %309, %310 : vector<8x64xf32>
    %c0_157 = arith.constant 0 : index
    %c0_158 = arith.constant 0 : index
    %312 = vector.load %arg36[%c0_157, %c0_158] : memref<64x320xf32, #tpu.memory_space<vmem>>, vector<64x320xf32>
    %cst_159 = arith.constant dense<0.000000e+00> : vector<8x320xf32>
    %313 = tpu.matmul %311, %312, %cst_159 {dimension_numbers = #tpu.dot_dimension_numbers<[1], [0], [0], [1], [0, 0, 1, 1], [], []>} : vector<8x64xf32>, vector<64x320xf32>, vector<8x320xf32> -> vector<8x320xf32>
    %c0_160 = arith.constant 0 : index
    %c0_161 = arith.constant 0 : index
    %314 = vector.load %arg37[%c0_160, %c0_161] : memref<1x320xf32, #tpu.memory_space<vmem>>, vector<1x320xf32>
    %315 = vector.broadcast %314 : vector<1x320xf32> to vector<8x320xf32>
    %316 = arith.addf %313, %315 : vector<8x320xf32>
    %317 = vector.extract_strided_slice %316 {offsets = [0, 0], sizes = [8, 64], strides = [1, 1]} : vector<8x320xf32> to vector<8x64xf32>
    %318 = vector.extract_strided_slice %316 {offsets = [0, 64], sizes = [8, 64], strides = [1, 1]} : vector<8x320xf32> to vector<8x64xf32>
    %319 = vector.extract_strided_slice %316 {offsets = [0, 128], sizes = [8, 64], strides = [1, 1]} : vector<8x320xf32> to vector<8x64xf32>
    %320 = vector.extract_strided_slice %316 {offsets = [0, 192], sizes = [8, 64], strides = [1, 1]} : vector<8x320xf32> to vector<8x64xf32>
    %321 = vector.extract_strided_slice %316 {offsets = [0, 256], sizes = [8, 64], strides = [1, 1]} : vector<8x320xf32> to vector<8x64xf32>
    %322 = tpu.concatenate %317, %318, %319, %320, %321 in 0 : vector<8x64xf32>, vector<8x64xf32>, vector<8x64xf32>, vector<8x64xf32>, vector<8x64xf32> -> vector<40x64xf32>
    %c0_162 = arith.constant 0 : index
    %c0_163 = arith.constant 0 : index
    %323 = vector.load %arg38[%c0_162, %c0_163] : memref<64x64xf32, #tpu.memory_space<vmem>>, vector<64x64xf32>
    %cst_164 = arith.constant dense<0.000000e+00> : vector<40x64xf32>
    %324 = tpu.matmul %322, %323, %cst_164 {dimension_numbers = #tpu.dot_dimension_numbers<[1], [0], [0], [1], [0, 0, 1, 1], [], []>} : vector<40x64xf32>, vector<64x64xf32>, vector<40x64xf32> -> vector<40x64xf32>
    %c0_165 = arith.constant 0 : index
    %c0_166 = arith.constant 0 : index
    %325 = vector.load %arg39[%c0_165, %c0_166] : memref<1x64xf32, #tpu.memory_space<vmem>>, vector<1x64xf32>
    %326 = vector.broadcast %325 : vector<1x64xf32> to vector<40x64xf32>
    %327 = arith.addf %324, %326 : vector<40x64xf32>
    %c0_167 = arith.constant 0 : index
    %c0_168 = arith.constant 0 : index
    %328 = vector.load %arg40[%c0_167, %c0_168] : memref<1x64xf32, #tpu.memory_space<vmem>>, vector<1x64xf32>
    %c0_169 = arith.constant 0 : index
    %c0_170 = arith.constant 0 : index
    %329 = vector.load %arg41[%c0_169, %c0_170] : memref<1x64xf32, #tpu.memory_space<vmem>>, vector<1x64xf32>
    %cst_171 = arith.constant dense<0.000000e+00> : vector<40xf32>
    %330 = vector.multi_reduction <add>, %327, %cst_171 [1] : vector<40x64xf32> to vector<40xf32>
    %331 = vector.shape_cast %330 : vector<40xf32> to vector<40x1xf32>
    %cst_172 = arith.constant 6.400000e+01 : f32
    %332 = vector.broadcast %cst_172 : f32 to vector<40x1xf32>
    %333 = arith.divf %331, %332 : vector<40x1xf32>
    %334 = arith.mulf %327, %327 : vector<40x64xf32>
    %cst_173 = arith.constant dense<0.000000e+00> : vector<40xf32>
    %335 = vector.multi_reduction <add>, %334, %cst_173 [1] : vector<40x64xf32> to vector<40xf32>
    %336 = vector.shape_cast %335 : vector<40xf32> to vector<40x1xf32>
    %cst_174 = arith.constant 6.400000e+01 : f32
    %337 = vector.broadcast %cst_174 : f32 to vector<40x1xf32>
    %338 = arith.divf %336, %337 : vector<40x1xf32>
    %339 = arith.mulf %333, %333 : vector<40x1xf32>
    %340 = arith.subf %338, %339 : vector<40x1xf32>
    %cst_175 = arith.constant 0.000000e+00 : f32
    %341 = vector.broadcast %cst_175 : f32 to vector<40x1xf32>
    %342 = arith.maximumf %340, %341 : vector<40x1xf32>
    %343 = vector.broadcast %333 : vector<40x1xf32> to vector<40x64xf32>
    %344 = arith.subf %327, %343 : vector<40x64xf32>
    %cst_176 = arith.constant 9.99999974E-6 : f32
    %345 = vector.broadcast %cst_176 : f32 to vector<40x1xf32>
    %346 = arith.addf %342, %345 : vector<40x1xf32>
    %347 = math.rsqrt %346 : vector<40x1xf32>
    %348 = vector.broadcast %347 : vector<40x1xf32> to vector<40x64xf32>
    %349 = arith.mulf %344, %348 : vector<40x64xf32>
    %350 = vector.broadcast %328 : vector<1x64xf32> to vector<40x64xf32>
    %351 = arith.mulf %349, %350 : vector<40x64xf32>
    %352 = vector.broadcast %329 : vector<1x64xf32> to vector<40x64xf32>
    %353 = arith.addf %351, %352 : vector<40x64xf32>
    %cst_177 = arith.constant 0.000000e+00 : f32
    %354 = vector.broadcast %cst_177 : f32 to vector<40x64xf32>
    %355 = arith.maximumf %353, %354 : vector<40x64xf32>
    %c0_178 = arith.constant 0 : index
    %c0_179 = arith.constant 0 : index
    %356 = vector.load %arg42[%c0_178, %c0_179] : memref<64x32xf32, #tpu.memory_space<vmem>>, vector<64x32xf32>
    %cst_180 = arith.constant dense<0.000000e+00> : vector<40x32xf32>
    %357 = tpu.matmul %355, %356, %cst_180 {dimension_numbers = #tpu.dot_dimension_numbers<[1], [0], [0], [1], [0, 0, 1, 1], [], []>} : vector<40x64xf32>, vector<64x32xf32>, vector<40x32xf32> -> vector<40x32xf32>
    %c0_181 = arith.constant 0 : index
    %c0_182 = arith.constant 0 : index
    %358 = vector.load %arg43[%c0_181, %c0_182] : memref<1x32xf32, #tpu.memory_space<vmem>>, vector<1x32xf32>
    %359 = vector.broadcast %358 : vector<1x32xf32> to vector<40x32xf32>
    %360 = arith.addf %357, %359 : vector<40x32xf32>
    %361 = vector.extract_strided_slice %360 {offsets = [0, 0], sizes = [8, 32], strides = [1, 1]} : vector<40x32xf32> to vector<8x32xf32>
    %c0_183 = arith.constant 0 : index
    %c0_184 = arith.constant 0 : index
    %c0_185 = arith.constant 0 : index
    %362 = vector.load %arg51[%c0_183, %c0_184, %c0_185] : memref<5x8x32xf32, #tpu.memory_space<vmem>>, vector<1x8x32xf32>
    %363 = vector.shape_cast %362 : vector<1x8x32xf32> to vector<8x32xf32>
    %364 = vector.shape_cast %361 : vector<8x32xf32> to vector<1x8x32xf32>
    tpu.vector_store %arg51[%c0_183, %c0_184, %c0_185], %364 {strides = array<i32>} : memref<5x8x32xf32, #tpu.memory_space<vmem>>, vector<1x8x32xf32>,
    %365 = vector.extract_strided_slice %360 {offsets = [8, 0], sizes = [8, 32], strides = [1, 1]} : vector<40x32xf32> to vector<8x32xf32>
    %c1_186 = arith.constant 1 : index
    %c0_187 = arith.constant 0 : index
    %c0_188 = arith.constant 0 : index
    %366 = vector.load %arg51[%c1_186, %c0_187, %c0_188] : memref<5x8x32xf32, #tpu.memory_space<vmem>>, vector<1x8x32xf32>
    %367 = vector.shape_cast %366 : vector<1x8x32xf32> to vector<8x32xf32>
    %368 = vector.shape_cast %365 : vector<8x32xf32> to vector<1x8x32xf32>
    tpu.vector_store %arg51[%c1_186, %c0_187, %c0_188], %368 {strides = array<i32>} : memref<5x8x32xf32, #tpu.memory_space<vmem>>, vector<1x8x32xf32>,
    %369 = vector.extract_strided_slice %360 {offsets = [16, 0], sizes = [8, 32], strides = [1, 1]} : vector<40x32xf32> to vector<8x32xf32>
    %c2_189 = arith.constant 2 : index
    %c0_190 = arith.constant 0 : index
    %c0_191 = arith.constant 0 : index
    %370 = vector.load %arg51[%c2_189, %c0_190, %c0_191] : memref<5x8x32xf32, #tpu.memory_space<vmem>>, vector<1x8x32xf32>
    %371 = vector.shape_cast %370 : vector<1x8x32xf32> to vector<8x32xf32>
    %372 = vector.shape_cast %369 : vector<8x32xf32> to vector<1x8x32xf32>
    tpu.vector_store %arg51[%c2_189, %c0_190, %c0_191], %372 {strides = array<i32>} : memref<5x8x32xf32, #tpu.memory_space<vmem>>, vector<1x8x32xf32>,
    %373 = vector.extract_strided_slice %360 {offsets = [24, 0], sizes = [8, 32], strides = [1, 1]} : vector<40x32xf32> to vector<8x32xf32>
    %c3_192 = arith.constant 3 : index
    %c0_193 = arith.constant 0 : index
    %c0_194 = arith.constant 0 : index
    %374 = vector.load %arg51[%c3_192, %c0_193, %c0_194] : memref<5x8x32xf32, #tpu.memory_space<vmem>>, vector<1x8x32xf32>
    %375 = vector.shape_cast %374 : vector<1x8x32xf32> to vector<8x32xf32>
    %376 = vector.shape_cast %373 : vector<8x32xf32> to vector<1x8x32xf32>
    tpu.vector_store %arg51[%c3_192, %c0_193, %c0_194], %376 {strides = array<i32>} : memref<5x8x32xf32, #tpu.memory_space<vmem>>, vector<1x8x32xf32>,
    %377 = vector.extract_strided_slice %360 {offsets = [32, 0], sizes = [8, 32], strides = [1, 1]} : vector<40x32xf32> to vector<8x32xf32>
    %c4_195 = arith.constant 4 : index
    %c0_196 = arith.constant 0 : index
    %c0_197 = arith.constant 0 : index
    %378 = vector.load %arg51[%c4_195, %c0_196, %c0_197] : memref<5x8x32xf32, #tpu.memory_space<vmem>>, vector<1x8x32xf32>
    %379 = vector.shape_cast %378 : vector<1x8x32xf32> to vector<8x32xf32>
    %380 = vector.shape_cast %377 : vector<8x32xf32> to vector<1x8x32xf32>
    tpu.vector_store %arg51[%c4_195, %c0_196, %c0_197], %380 {strides = array<i32>} : memref<5x8x32xf32, #tpu.memory_space<vmem>>, vector<1x8x32xf32>,
    %c0_198 = arith.constant 0 : index
    %c0_199 = arith.constant 0 : index
    %381 = vector.load %arg44[%c0_198, %c0_199] : memref<64x32xf32, #tpu.memory_space<vmem>>, vector<64x32xf32>
    %cst_200 = arith.constant dense<0.000000e+00> : vector<40x32xf32>
    %382 = tpu.matmul %322, %381, %cst_200 {dimension_numbers = #tpu.dot_dimension_numbers<[1], [0], [0], [1], [0, 0, 1, 1], [], []>} : vector<40x64xf32>, vector<64x32xf32>, vector<40x32xf32> -> vector<40x32xf32>
    %c0_201 = arith.constant 0 : index
    %c0_202 = arith.constant 0 : index
    %383 = vector.load %arg45[%c0_201, %c0_202] : memref<1x32xf32, #tpu.memory_space<vmem>>, vector<1x32xf32>
    %384 = vector.broadcast %383 : vector<1x32xf32> to vector<40x32xf32>
    %385 = arith.addf %382, %384 : vector<40x32xf32>
    %cst_203 = arith.constant 0.000000e+00 : f32
    %386 = vector.broadcast %cst_203 : f32 to vector<40x32xf32>
    %387 = arith.maximumf %385, %386 : vector<40x32xf32>
    %c0_204 = arith.constant 0 : index
    %c0_205 = arith.constant 0 : index
    %388 = vector.load %arg46[%c0_204, %c0_205] : memref<1x32xf32, #tpu.memory_space<vmem>>, vector<1x32xf32>
    %389 = vector.broadcast %388 : vector<1x32xf32> to vector<40x32xf32>
    %390 = arith.mulf %387, %389 : vector<40x32xf32>
    %cst_206 = arith.constant dense<0.000000e+00> : vector<40xf32>
    %391 = vector.multi_reduction <add>, %390, %cst_206 [1] : vector<40x32xf32> to vector<40xf32>
    %392 = vector.shape_cast %391 : vector<40xf32> to vector<40x1xf32>
    %c0_207 = arith.constant 0 : index
    %c0_208 = arith.constant 0 : index
    %393 = vector.load %arg47[%c0_207, %c0_208] : memref<1x1xf32, #tpu.memory_space<vmem>>, vector<1x1xf32>
    %394 = vector.broadcast %393 : vector<1x1xf32> to vector<40x1xf32>
    %395 = arith.addf %392, %394 : vector<40x1xf32>
    %396 = arith.negf %395 : vector<40x1xf32>
    %397 = math.exp %396 : vector<40x1xf32>
    %cst_209 = arith.constant 1.000000e+00 : f32
    %398 = vector.broadcast %cst_209 : f32 to vector<40x1xf32>
    %399 = arith.addf %398, %397 : vector<40x1xf32>
    %400 = arith.divf %398, %399 : vector<40x1xf32>
    %401 = vector.extract_strided_slice %400 {offsets = [0, 0], sizes = [8, 1], strides = [1, 1]} : vector<40x1xf32> to vector<8x1xf32>
    %402 = vector.extract_strided_slice %400 {offsets = [8, 0], sizes = [8, 1], strides = [1, 1]} : vector<40x1xf32> to vector<8x1xf32>
    %403 = vector.extract_strided_slice %400 {offsets = [16, 0], sizes = [8, 1], strides = [1, 1]} : vector<40x1xf32> to vector<8x1xf32>
    %404 = vector.extract_strided_slice %400 {offsets = [24, 0], sizes = [8, 1], strides = [1, 1]} : vector<40x1xf32> to vector<8x1xf32>
    %405 = vector.extract_strided_slice %400 {offsets = [32, 0], sizes = [8, 1], strides = [1, 1]} : vector<40x1xf32> to vector<8x1xf32>
    %406 = tpu.concatenate %401, %402, %403, %404, %405 in 1 : vector<8x1xf32>, vector<8x1xf32>, vector<8x1xf32>, vector<8x1xf32>, vector<8x1xf32> -> vector<8x5xf32>
    %cst_210 = arith.constant dense<0.000000e+00> : vector<8xf32>
    %407 = vector.multi_reduction <add>, %406, %cst_210 [1] : vector<8x5xf32> to vector<8xf32>
    %408 = vector.shape_cast %407 : vector<8xf32> to vector<8x1xf32>
    %409 = vector.broadcast %408 : vector<8x1xf32> to vector<8x5xf32>
    %410 = arith.divf %406, %409 : vector<8x5xf32>
    %c0_211 = arith.constant 0 : index
    %c0_212 = arith.constant 0 : index
    %411 = vector.load %arg52[%c0_211, %c0_212] : memref<8x5xf32, #tpu.memory_space<vmem>>, vector<8x5xf32>
    tpu.vector_store %arg52[%c0_211, %c0_212], %410 {strides = array<i32>} : memref<8x5xf32, #tpu.memory_space<vmem>>, vector<8x5xf32>,
    return
  }
  func.func @transform_0(%arg0: i32) -> (i32, i32) {
    %c0_i32 = arith.constant 0 : i32
    %c0_i32_0 = arith.constant 0 : i32
    return %arg0, %c0_i32 : i32, i32
  }
  func.func @transform_1(%arg0: i32) -> (i32, i32) {
    %c0_i32 = arith.constant 0 : i32
    %c0_i32_0 = arith.constant 0 : i32
    %c0_i32_1 = arith.constant 0 : i32
    return %c0_i32, %c0_i32_0 : i32, i32
  }
  func.func @transform_2(%arg0: i32) -> (i32, i32) {
    %c0_i32 = arith.constant 0 : i32
    %c0_i32_0 = arith.constant 0 : i32
    %c0_i32_1 = arith.constant 0 : i32
    return %c0_i32, %c0_i32_0 : i32, i32
  }
  func.func @transform_3(%arg0: i32) -> (i32, i32) {
    %c0_i32 = arith.constant 0 : i32
    %c0_i32_0 = arith.constant 0 : i32
    %c0_i32_1 = arith.constant 0 : i32
    return %c0_i32, %c0_i32_0 : i32, i32
  }
  func.func @transform_4(%arg0: i32) -> (i32, i32) {
    %c0_i32 = arith.constant 0 : i32
    %c0_i32_0 = arith.constant 0 : i32
    %c0_i32_1 = arith.constant 0 : i32
    return %c0_i32, %c0_i32_0 : i32, i32
  }
  func.func @transform_5(%arg0: i32) -> (i32, i32) {
    %c0_i32 = arith.constant 0 : i32
    %c0_i32_0 = arith.constant 0 : i32
    %c0_i32_1 = arith.constant 0 : i32
    return %c0_i32, %c0_i32_0 : i32, i32
  }
  func.func @transform_6(%arg0: i32) -> (i32, i32) {
    %c0_i32 = arith.constant 0 : i32
    %c0_i32_0 = arith.constant 0 : i32
    %c0_i32_1 = arith.constant 0 : i32
    return %c0_i32, %c0_i32_0 : i32, i32
  }
  func.func @transform_7(%arg0: i32) -> (i32, i32) {
    %c0_i32 = arith.constant 0 : i32
    %c0_i32_0 = arith.constant 0 : i32
    %c0_i32_1 = arith.constant 0 : i32
    return %c0_i32, %c0_i32_0 : i32, i32
  }
  func.func @transform_8(%arg0: i32) -> (i32, i32) {
    %c0_i32 = arith.constant 0 : i32
    %c0_i32_0 = arith.constant 0 : i32
    %c0_i32_1 = arith.constant 0 : i32
    return %c0_i32, %c0_i32_0 : i32, i32
  }
  func.func @transform_9(%arg0: i32) -> (i32, i32) {
    %c0_i32 = arith.constant 0 : i32
    %c0_i32_0 = arith.constant 0 : i32
    %c0_i32_1 = arith.constant 0 : i32
    return %c0_i32, %c0_i32_0 : i32, i32
  }
  func.func @transform_10(%arg0: i32) -> (i32, i32) {
    %c0_i32 = arith.constant 0 : i32
    %c0_i32_0 = arith.constant 0 : i32
    %c0_i32_1 = arith.constant 0 : i32
    return %c0_i32, %c0_i32_0 : i32, i32
  }
  func.func @transform_11(%arg0: i32) -> (i32, i32) {
    %c0_i32 = arith.constant 0 : i32
    %c0_i32_0 = arith.constant 0 : i32
    %c0_i32_1 = arith.constant 0 : i32
    return %c0_i32, %c0_i32_0 : i32, i32
  }
  func.func @transform_12(%arg0: i32) -> (i32, i32) {
    %c0_i32 = arith.constant 0 : i32
    %c0_i32_0 = arith.constant 0 : i32
    %c0_i32_1 = arith.constant 0 : i32
    return %c0_i32, %c0_i32_0 : i32, i32
  }
  func.func @transform_13(%arg0: i32) -> (i32, i32) {
    %c0_i32 = arith.constant 0 : i32
    %c0_i32_0 = arith.constant 0 : i32
    %c0_i32_1 = arith.constant 0 : i32
    return %c0_i32, %c0_i32_0 : i32, i32
  }
  func.func @transform_14(%arg0: i32) -> (i32, i32) {
    %c0_i32 = arith.constant 0 : i32
    %c0_i32_0 = arith.constant 0 : i32
    %c0_i32_1 = arith.constant 0 : i32
    return %c0_i32, %c0_i32_0 : i32, i32
  }
  func.func @transform_15(%arg0: i32) -> (i32, i32) {
    %c0_i32 = arith.constant 0 : i32
    %c0_i32_0 = arith.constant 0 : i32
    %c0_i32_1 = arith.constant 0 : i32
    return %c0_i32, %c0_i32_0 : i32, i32
  }
  func.func @transform_16(%arg0: i32) -> (i32, i32) {
    %c0_i32 = arith.constant 0 : i32
    %c0_i32_0 = arith.constant 0 : i32
    %c0_i32_1 = arith.constant 0 : i32
    return %c0_i32, %c0_i32_0 : i32, i32
  }
  func.func @transform_17(%arg0: i32) -> (i32, i32) {
    %c0_i32 = arith.constant 0 : i32
    %c0_i32_0 = arith.constant 0 : i32
    %c0_i32_1 = arith.constant 0 : i32
    return %c0_i32, %c0_i32_0 : i32, i32
  }
  func.func @transform_18(%arg0: i32) -> (i32, i32) {
    %c0_i32 = arith.constant 0 : i32
    %c0_i32_0 = arith.constant 0 : i32
    %c0_i32_1 = arith.constant 0 : i32
    return %c0_i32, %c0_i32_0 : i32, i32
  }
  func.func @transform_19(%arg0: i32) -> (i32, i32) {
    %c0_i32 = arith.constant 0 : i32
    %c0_i32_0 = arith.constant 0 : i32
    %c0_i32_1 = arith.constant 0 : i32
    return %c0_i32, %c0_i32_0 : i32, i32
  }
  func.func @transform_20(%arg0: i32) -> (i32, i32) {
    %c0_i32 = arith.constant 0 : i32
    %c0_i32_0 = arith.constant 0 : i32
    %c0_i32_1 = arith.constant 0 : i32
    return %c0_i32, %c0_i32_0 : i32, i32
  }
  func.func @transform_21(%arg0: i32) -> (i32, i32) {
    %c0_i32 = arith.constant 0 : i32
    %c0_i32_0 = arith.constant 0 : i32
    %c0_i32_1 = arith.constant 0 : i32
    return %c0_i32, %c0_i32_0 : i32, i32
  }
  func.func @transform_22(%arg0: i32) -> (i32, i32) {
    %c0_i32 = arith.constant 0 : i32
    %c0_i32_0 = arith.constant 0 : i32
    %c0_i32_1 = arith.constant 0 : i32
    return %c0_i32, %c0_i32_0 : i32, i32
  }
  func.func @transform_23(%arg0: i32) -> (i32, i32) {
    %c0_i32 = arith.constant 0 : i32
    %c0_i32_0 = arith.constant 0 : i32
    %c0_i32_1 = arith.constant 0 : i32
    return %c0_i32, %c0_i32_0 : i32, i32
  }
  func.func @transform_24(%arg0: i32) -> (i32, i32) {
    %c0_i32 = arith.constant 0 : i32
    %c0_i32_0 = arith.constant 0 : i32
    %c0_i32_1 = arith.constant 0 : i32
    return %c0_i32, %c0_i32_0 : i32, i32
  }
  func.func @transform_25(%arg0: i32) -> (i32, i32) {
    %c0_i32 = arith.constant 0 : i32
    %c0_i32_0 = arith.constant 0 : i32
    %c0_i32_1 = arith.constant 0 : i32
    return %c0_i32, %c0_i32_0 : i32, i32
  }
  func.func @transform_26(%arg0: i32) -> (i32, i32) {
    %c0_i32 = arith.constant 0 : i32
    %c0_i32_0 = arith.constant 0 : i32
    %c0_i32_1 = arith.constant 0 : i32
    return %c0_i32, %c0_i32_0 : i32, i32
  }
  func.func @transform_27(%arg0: i32) -> (i32, i32) {
    %c0_i32 = arith.constant 0 : i32
    %c0_i32_0 = arith.constant 0 : i32
    %c0_i32_1 = arith.constant 0 : i32
    return %c0_i32, %c0_i32_0 : i32, i32
  }
  func.func @transform_28(%arg0: i32) -> (i32, i32) {
    %c0_i32 = arith.constant 0 : i32
    %c0_i32_0 = arith.constant 0 : i32
    %c0_i32_1 = arith.constant 0 : i32
    return %c0_i32, %c0_i32_0 : i32, i32
  }
  func.func @transform_29(%arg0: i32) -> (i32, i32) {
    %c0_i32 = arith.constant 0 : i32
    %c0_i32_0 = arith.constant 0 : i32
    %c0_i32_1 = arith.constant 0 : i32
    return %c0_i32, %c0_i32_0 : i32, i32
  }
  func.func @transform_30(%arg0: i32) -> (i32, i32) {
    %c0_i32 = arith.constant 0 : i32
    %c0_i32_0 = arith.constant 0 : i32
    %c0_i32_1 = arith.constant 0 : i32
    return %c0_i32, %c0_i32_0 : i32, i32
  }
  func.func @transform_31(%arg0: i32) -> (i32, i32) {
    %c0_i32 = arith.constant 0 : i32
    %c0_i32_0 = arith.constant 0 : i32
    %c0_i32_1 = arith.constant 0 : i32
    return %c0_i32, %c0_i32_0 : i32, i32
  }
  func.func @transform_32(%arg0: i32) -> (i32, i32) {
    %c0_i32 = arith.constant 0 : i32
    %c0_i32_0 = arith.constant 0 : i32
    %c0_i32_1 = arith.constant 0 : i32
    return %c0_i32, %c0_i32_0 : i32, i32
  }
  func.func @transform_33(%arg0: i32) -> (i32, i32) {
    %c0_i32 = arith.constant 0 : i32
    %c0_i32_0 = arith.constant 0 : i32
    %c0_i32_1 = arith.constant 0 : i32
    return %c0_i32, %c0_i32_0 : i32, i32
  }
  func.func @transform_34(%arg0: i32) -> (i32, i32) {
    %c0_i32 = arith.constant 0 : i32
    %c0_i32_0 = arith.constant 0 : i32
    %c0_i32_1 = arith.constant 0 : i32
    return %c0_i32, %c0_i32_0 : i32, i32
  }
  func.func @transform_35(%arg0: i32) -> (i32, i32) {
    %c0_i32 = arith.constant 0 : i32
    %c0_i32_0 = arith.constant 0 : i32
    %c0_i32_1 = arith.constant 0 : i32
    return %c0_i32, %c0_i32_0 : i32, i32
  }
  func.func @transform_36(%arg0: i32) -> (i32, i32) {
    %c0_i32 = arith.constant 0 : i32
    %c0_i32_0 = arith.constant 0 : i32
    %c0_i32_1 = arith.constant 0 : i32
    return %c0_i32, %c0_i32_0 : i32, i32
  }
  func.func @transform_37(%arg0: i32) -> (i32, i32) {
    %c0_i32 = arith.constant 0 : i32
    %c0_i32_0 = arith.constant 0 : i32
    %c0_i32_1 = arith.constant 0 : i32
    return %c0_i32, %c0_i32_0 : i32, i32
  }
  func.func @transform_38(%arg0: i32) -> (i32, i32) {
    %c0_i32 = arith.constant 0 : i32
    %c0_i32_0 = arith.constant 0 : i32
    %c0_i32_1 = arith.constant 0 : i32
    return %c0_i32, %c0_i32_0 : i32, i32
  }
  func.func @transform_39(%arg0: i32) -> (i32, i32) {
    %c0_i32 = arith.constant 0 : i32
    %c0_i32_0 = arith.constant 0 : i32
    %c0_i32_1 = arith.constant 0 : i32
    return %c0_i32, %c0_i32_0 : i32, i32
  }
  func.func @transform_40(%arg0: i32) -> (i32, i32) {
    %c0_i32 = arith.constant 0 : i32
    %c0_i32_0 = arith.constant 0 : i32
    %c0_i32_1 = arith.constant 0 : i32
    return %c0_i32, %c0_i32_0 : i32, i32
  }
  func.func @transform_41(%arg0: i32) -> (i32, i32) {
    %c0_i32 = arith.constant 0 : i32
    %c0_i32_0 = arith.constant 0 : i32
    %c0_i32_1 = arith.constant 0 : i32
    return %c0_i32, %c0_i32_0 : i32, i32
  }
  func.func @transform_42(%arg0: i32) -> (i32, i32) {
    %c0_i32 = arith.constant 0 : i32
    %c0_i32_0 = arith.constant 0 : i32
    %c0_i32_1 = arith.constant 0 : i32
    return %c0_i32, %c0_i32_0 : i32, i32
  }
  func.func @transform_43(%arg0: i32) -> (i32, i32) {
    %c0_i32 = arith.constant 0 : i32
    %c0_i32_0 = arith.constant 0 : i32
    %c0_i32_1 = arith.constant 0 : i32
    return %c0_i32, %c0_i32_0 : i32, i32
  }
  func.func @transform_44(%arg0: i32) -> (i32, i32) {
    %c0_i32 = arith.constant 0 : i32
    %c0_i32_0 = arith.constant 0 : i32
    %c0_i32_1 = arith.constant 0 : i32
    return %c0_i32, %c0_i32_0 : i32, i32
  }
  func.func @transform_45(%arg0: i32) -> (i32, i32) {
    %c0_i32 = arith.constant 0 : i32
    %c0_i32_0 = arith.constant 0 : i32
    %c0_i32_1 = arith.constant 0 : i32
    return %c0_i32, %c0_i32_0 : i32, i32
  }
  func.func @transform_46(%arg0: i32) -> (i32, i32) {
    %c0_i32 = arith.constant 0 : i32
    %c0_i32_0 = arith.constant 0 : i32
    %c0_i32_1 = arith.constant 0 : i32
    return %c0_i32, %c0_i32_0 : i32, i32
  }
  func.func @transform_47(%arg0: i32) -> (i32, i32) {
    %c0_i32 = arith.constant 0 : i32
    %c0_i32_0 = arith.constant 0 : i32
    return %arg0, %c0_i32 : i32, i32
  }
  func.func @transform_48(%arg0: i32) -> (i32, i32, i32) {
    %c0_i32 = arith.constant 0 : i32
    %c0_i32_0 = arith.constant 0 : i32
    %c0_i32_1 = arith.constant 0 : i32
    return %c0_i32, %arg0, %c0_i32_0 : i32, i32, i32
  }
  func.func @transform_49(%arg0: i32) -> (i32, i32, i32) {
    %c0_i32 = arith.constant 0 : i32
    %c0_i32_0 = arith.constant 0 : i32
    %c0_i32_1 = arith.constant 0 : i32
    return %c0_i32, %arg0, %c0_i32_0 : i32, i32, i32
  }
  func.func @transform_50(%arg0: i32) -> (i32, i32, i32) {
    %c0_i32 = arith.constant 0 : i32
    %c0_i32_0 = arith.constant 0 : i32
    %c0_i32_1 = arith.constant 0 : i32
    return %c0_i32, %arg0, %c0_i32_0 : i32, i32, i32
  }
  func.func @transform_51(%arg0: i32) -> (i32, i32) {
    %c0_i32 = arith.constant 0 : i32
    %c0_i32_0 = arith.constant 0 : i32
    return %arg0, %c0_i32 : i32, i32
  }
}

</mosaic_0001>

<llo_original>
// kernel: tpu_custom_call.1
$region0: #{tpu_custom_call.1}
  #allocation0 [shape = 'u32[]', space=smem, size = 0x4, offset = 0x4, fixed_abs, tag = 'smem constant byte address 0x4 - core index']
  #allocation1 [shape = 'u32[144,128]{1,0:T(1,128)}', space=vmem, size = 0x12000, scoped, tag = 'internal scratch']
  #allocation2 [shape = 'f32[1,1]{1,0:T(1,128)S(1)}', space=vmem, size = 0x200, scoped, tag = 'scoped memory for tpu_custom_call.1']
  %s0 = inlined_call_operand.smem [shape: u32[52], index: -1, kind: input, shape index: {}]
  %s1 = sld [smem:[%s0]]
  %s2 = scalar_lea.smem %s0, 1
  %s3 = sld [smem:[%s2]]
  %s4 = scalar_lea.smem %s0, 2
  %s5 = sld [smem:[%s4]]
  %s6 = scalar_lea.smem %s0, 3
  %s7 = sld [smem:[%s6]]
  %s8 = scalar_lea.smem %s0, 4
  %s9 = sld [smem:[%s8]]
  %s10 = scalar_lea.smem %s0, 5
  %s11 = sld [smem:[%s10]]
  %s12 = scalar_lea.smem %s0, 6
  %s13 = sld [smem:[%s12]]
  %s14 = scalar_lea.smem %s0, 7
  %s15 = sld [smem:[%s14]]
  %s16 = scalar_lea.smem %s0, 8
  %s17 = sld [smem:[%s16]]
  %s18 = scalar_lea.smem %s0, 9
  %s19 = sld [smem:[%s18]]
  %s20 = scalar_lea.smem %s0, 10
  %s21 = sld [smem:[%s20]]
  %s22 = scalar_lea.smem %s0, 11
  %s23 = sld [smem:[%s22]]
  %s24 = scalar_lea.smem %s0, 12
  %s25 = sld [smem:[%s24]]
  %s26 = scalar_lea.smem %s0, 13
  %s27 = sld [smem:[%s26]]
  %s28 = scalar_lea.smem %s0, 14
  %s29 = sld [smem:[%s28]]
  %s30 = scalar_lea.smem %s0, 15
  %s31 = sld [smem:[%s30]]
  %s32 = scalar_lea.smem %s0, 16
  %s33 = sld [smem:[%s32]]
  %s34 = scalar_lea.smem %s0, 17
  %s35 = sld [smem:[%s34]]
  %s36 = scalar_lea.smem %s0, 18
  %s37 = sld [smem:[%s36]]
  %s38 = scalar_lea.smem %s0, 19
  %s39 = sld [smem:[%s38]]
  %s40 = scalar_lea.smem %s0, 20
  %s41 = sld [smem:[%s40]]
  %s42 = scalar_lea.smem %s0, 21
  %s43 = sld [smem:[%s42]]
  %s44 = scalar_lea.smem %s0, 22
  %s45 = sld [smem:[%s44]]
  %s46 = scalar_lea.smem %s0, 23
  %s47 = sld [smem:[%s46]]
  %s48 = scalar_lea.smem %s0, 24
  %s49 = sld [smem:[%s48]]
  %s50 = scalar_lea.smem %s0, 25
  %s51 = sld [smem:[%s50]]
  %s52 = scalar_lea.smem %s0, 26
  %s53 = sld [smem:[%s52]]
  %s54 = scalar_lea.smem %s0, 27
  %s55 = sld [smem:[%s54]]
  %s56 = scalar_lea.smem %s0, 28
  %s57 = sld [smem:[%s56]]
  %s58 = scalar_lea.smem %s0, 29
  %s59 = sld [smem:[%s58]]
  %s60 = scalar_lea.smem %s0, 30
  %s61 = sld [smem:[%s60]]
  %s62 = scalar_lea.smem %s0, 31
  %s63 = sld [smem:[%s62]]
  %s64 = scalar_lea.smem %s0, 32
  %s65 = sld [smem:[%s64]]
  %s66 = scalar_lea.smem %s0, 33
  %s67 = sld [smem:[%s66]]
  %s68 = scalar_lea.smem %s0, 34
  %s69 = sld [smem:[%s68]]
  %s70 = scalar_lea.smem %s0, 35
  %s71 = sld [smem:[%s70]]
  %s72 = scalar_lea.smem %s0, 36
  %s73 = sld [smem:[%s72]]
  %s74 = scalar_lea.smem %s0, 37
  %s75 = sld [smem:[%s74]]
  %s76 = scalar_lea.smem %s0, 38
  %s77 = sld [smem:[%s76]]
  %s78 = scalar_lea.smem %s0, 39
  %s79 = sld [smem:[%s78]]
  %s80 = scalar_lea.smem %s0, 40
  %s81 = sld [smem:[%s80]]
  %s82 = scalar_lea.smem %s0, 41
  %s83 = sld [smem:[%s82]]
  %s84 = scalar_lea.smem %s0, 42
  %s85 = sld [smem:[%s84]]
  %s86 = scalar_lea.smem %s0, 43
  %s87 = sld [smem:[%s86]]
  %s88 = scalar_lea.smem %s0, 44
  %s89 = sld [smem:[%s88]]
  %s90 = scalar_lea.smem %s0, 45
  %s91 = sld [smem:[%s90]]
  %s92 = scalar_lea.smem %s0, 46
  %s93 = sld [smem:[%s92]]
  %s94 = scalar_lea.smem %s0, 47
  %s95 = sld [smem:[%s94]]
  %s96 = scalar_lea.smem %s0, 48
  %s97 = sld [smem:[%s96]]
  %s98 = scalar_lea.smem %s0, 49
  %s99 = sld [smem:[%s98]]
  %s100 = scalar_lea.smem %s0, 50
  %s101 = sld [smem:[%s100]]
  %s102 = scalar_lea.smem %s0, 51
  %s103 = sld [smem:[%s102]]
  %104 = xla_tuple %s95, %s97, %s99, %s101, %s103
  %s105 = sld [smem:[#allocation0]]
  $region350: #{tpu_custom_call.1} parent=0
    _
  %s107 = ssub.s32 1, %s105
  %s108 = scalar_select 0, %s107, %s105
  %v109 = vstv %s93
  %110 = vst [vmem:[#allocation2] sm:$0x1] %v109
  $region1: #{tpu_custom_call.1} parent=0
    #allocation3 [shape = 'u8[4096]{0}', space=vmem, size = 0x1000, scoped, tag = 'input window, operand 0, single buffered']
    #allocation4 [shape = 's32[1]{0}', space=sflag, size = 0x4, scoped, tag = 'scoped memory for tpu_custom_call.1']
    #allocation5 [shape = 's32[1]{0}', space=sflag, size = 0x4, scoped, tag = 'scoped memory for tpu_custom_call.1']
    #allocation6 [shape = 'u8[1024]{0}', space=vmem, size = 0x400, scoped, tag = 'input window, operand 2, single buffered']
    #allocation7 [shape = 's32[1]{0}', space=sflag, size = 0x4, scoped, tag = 'scoped memory for tpu_custom_call.1']
    #allocation8 [shape = 'u8[512]{0}', space=vmem, size = 0x400, scoped, tag = 'input window, operand 3, single buffered']
    #allocation9 [shape = 'u8[512]{0}', space=vmem, size = 0x400, scoped, tag = 'input window, operand 4, single buffered']
    #allocation10 [shape = 's32[1]{0}', space=sflag, size = 0x4, scoped, tag = 'scoped memory for tpu_custom_call.1']
    #allocation11 [shape = 'u8[512]{0}', space=vmem, size = 0x400, scoped, tag = 'input window, operand 5, single buffered']
    #allocation12 [shape = 'u8[512]{0}', space=vmem, size = 0x400, scoped, tag = 'input window, operand 6, single buffered']
    #allocation13 [shape = 's32[1]{0}', space=sflag, size = 0x4, scoped, tag = 'scoped memory for tpu_custom_call.1']
    #allocation14 [shape = 'u8[512]{0}', space=vmem, size = 0x400, scoped, tag = 'input window, operand 7, single buffered']
    #allocation15 [shape = 'u8[512]{0}', space=vmem, size = 0x400, scoped, tag = 'input window, operand 8, single buffered']
    #allocation16 [shape = 's32[1]{0}', space=sflag, size = 0x4, scoped, tag = 'scoped memory for tpu_custom_call.1']
    #allocation17 [shape = 'u8[512]{0}', space=vmem, size = 0x400, scoped, tag = 'input window, operand 10, single buffered']
    #allocation18 [shape = 'u8[512]{0}', space=vmem, size = 0x400, scoped, tag = 'input window, operand 12, single buffered']
    #allocation19 [shape = 's32[1]{0}', space=sflag, size = 0x4, scoped, tag = 'scoped memory for tpu_custom_call.1']
    #allocation20 [shape = 'u8[512]{0}', space=vmem, size = 0x400, scoped, tag = 'input window, operand 14, single buffered']
    #allocation21 [shape = 'u8[16384]{0}', space=vmem, size = 0x4000, scoped, tag = 'input window, operand 15, single buffered']
    #allocation22 [shape = 's32[1]{0}', space=sflag, size = 0x4, scoped, tag = 'scoped memory for tpu_custom_call.1']
    #allocation23 [shape = 'u8[512]{0}', space=vmem, size = 0x400, scoped, tag = 'input window, operand 16, single buffered']
    #allocation24 [shape = 'u8[512]{0}', space=vmem, size = 0x400, scoped, tag = 'input window, operand 17, single buffered']
    #allocation25 [shape = 's32[1]{0}', space=sflag, size = 0x4, scoped, tag = 'scoped memory for tpu_custom_call.1']
    #allocation26 [shape = 'u8[512]{0}', space=vmem, size = 0x400, scoped, tag = 'input window, operand 18, single buffered']
    #allocation27 [shape = 'u8[512]{0}', space=vmem, size = 0x400, scoped, tag = 'input window, operand 20, single buffered']
    #allocation28 [shape = 's32[1]{0}', space=sflag, size = 0x4, scoped, tag = 'scoped memory for tpu_custom_call.1']
    #allocation29 [shape = 'u8[512]{0}', space=vmem, size = 0x400, scoped, tag = 'input window, operand 21, single buffered']
    #allocation30 [shape = 'u8[512]{0}', space=vmem, size = 0x400, scoped, tag = 'input window, operand 22, single buffered']
    #allocation31 [shape = 's32[1]{0}', space=sflag, size = 0x4, scoped, tag = 'scoped memory for tpu_custom_call.1']
    #allocation32 [shape = 'u8[1024]{0}', space=vmem, size = 0x400, scoped, tag = 'input window, operand 24, single buffered']
    #allocation33 [shape = 'u8[16384]{0}', space=vmem, size = 0x4000, scoped, tag = 'input window, operand 25, single buffered']
    #allocation34 [shape = 's32[1]{0}', space=sflag, size = 0x4, scoped, tag = 'scoped memory for tpu_custom_call.1']
    #allocation35 [shape = 'u8[512]{0}', space=vmem, size = 0x400, scoped, tag = 'input window, operand 26, single buffered']
    #allocation36 [shape = 'u8[512]{0}', space=vmem, size = 0x400, scoped, tag = 'input window, operand 27, single buffered']
    #allocation37 [shape = 's32[1]{0}', space=sflag, size = 0x4, scoped, tag = 'scoped memory for tpu_custom_call.1']
    #allocation38 [shape = 'u8[512]{0}', space=vmem, size = 0x400, scoped, tag = 'input window, operand 28, single buffered']
    #allocation39 [shape = 'u8[512]{0}', space=vmem, size = 0x400, scoped, tag = 'input window, operand 30, single buffered']
    #allocation40 [shape = 's32[1]{0}', space=sflag, size = 0x4, scoped, tag = 'scoped memory for tpu_custom_call.1']
    #allocation41 [shape = 'u8[512]{0}', space=vmem, size = 0x400, scoped, tag = 'input window, operand 32, single buffered']
    #allocation42 [shape = 'u8[512]{0}', space=vmem, size = 0x400, scoped, tag = 'input window, operand 33, single buffered']
    #allocation43 [shape = 's32[1]{0}', space=sflag, size = 0x4, scoped, tag = 'scoped memory for tpu_custom_call.1']
    #allocation44 [shape = 'u8[512]{0}', space=vmem, size = 0x400, scoped, tag = 'input window, operand 34, single buffered']
    #allocation45 [shape = 'u8[32768]{0}', space=vmem, size = 0x8000, scoped, tag = 'input window, operand 37, single buffered']
    #allocation46 [shape = 's32[1]{0}', space=sflag, size = 0x4, scoped, tag = 'scoped memory for tpu_custom_call.1']
    #allocation47 [shape = 'u8[512]{0}', space=vmem, size = 0x400, scoped, tag = 'input window, operand 42, single buffered']
    #allocation48 [shape = 'u8[512]{0}', space=vmem, size = 0x400, scoped, tag = 'input window, operand 44, single buffered']
    #allocation49 [shape = 's32[1]{0}', space=sflag, size = 0x4, scoped, tag = 'scoped memory for tpu_custom_call.1']
    #allocation50 [shape = 'u8[4096]{0}', space=vmem, size = 0x1000, scoped, tag = 'output window, operand 0, single buffered']
    #allocation51 [shape = 'u8[20480]{0}', space=vmem, size = 0x5000, scoped, tag = 'output window, operand 1, single buffered']
    #allocation52 [shape = 's32[1]{0}', space=sflag, size = 0x4, scoped, tag = 'scoped memory for tpu_custom_call.1']
    #allocation53 [shape = 'u8[20480]{0}', space=vmem, size = 0x5000, scoped, tag = 'output window, operand 2, single buffered']
    #allocation54 [shape = 'u8[20480]{0}', space=vmem, size = 0x5000, scoped, tag = 'output window, operand 3, single buffered']
    #allocation55 [shape = 's32[1]{0}', space=sflag, size = 0x4, scoped, tag = 'scoped memory for tpu_custom_call.1']
    #allocation56 [shape = 'u8[4096]{0}', space=vmem, size = 0x1000, scoped, tag = 'output window, operand 4, single buffered']
    %111 = vsyncpa [#allocation4], 0
    %112 = vsyncpa [#allocation7], 0
    %113 = vsyncpa [#allocation10], 0
    %114 = vsyncpa [#allocation13], 0
    %115 = vsyncpa [#allocation16], 0
    %116 = vsyncpa [#allocation19], 0
    %117 = vsyncpa [#allocation22], 0
    %118 = vsyncpa [#allocation25], 0
    %119 = vsyncpa [#allocation28], 0
    %120 = vsyncpa [#allocation31], 0
    %121 = vsyncpa [#allocation34], 0
    %122 = vsyncpa [#allocation37], 0
    %123 = vsyncpa [#allocation40], 0
    %124 = vsyncpa [#allocation43], 0
    %125 = vsyncpa [#allocation46], 0
    %126 = vsyncpa [#allocation49], 0
    %127 = vsyncpa [#allocation5], 0
    %128 = vsyncpa [#allocation52], 0
    %129 = vsyncpa [#allocation55], 0
    // Predicated region
    $region2: #{tpu_custom_call.1} parent=1 // pred_check
      _
    $region3: #{tpu_custom_call.1} parent=1 // pred_check_branch
      %131 = sbr.rel (0) target = $region5
    $region4: #{tpu_custom_call.1} parent=1 // pred_region
      %s133 = ssub.s32 128, 128
      %134 = vsyncadd [#allocation4], %s133
      %s136 = sshll.u32 [#allocation3], 4
      %s137 = int_to_ptr.vmem [resolvable:$true] %s136
      %139 = dma.hbm_to_vmem [thread:$0]  %s1, 128, %s137, [#allocation4]
    $region5: #{tpu_custom_call.1} parent=1 // pred_fallthru
      _
    // Predicated region
    $region6: #{tpu_custom_call.1} parent=1 // pred_check
      _
    $region7: #{tpu_custom_call.1} parent=1 // pred_check_branch
      %141 = sbr.rel (0) target = $region9
    $region8: #{tpu_custom_call.1} parent=1 // pred_region
      _
    $region9: #{tpu_custom_call.1} parent=1 // pred_fallthru
      _
    // Predicated region
    $region10: #{tpu_custom_call.1} parent=1 // pred_check
      _
    $region11: #{tpu_custom_call.1} parent=1 // pred_check_branch
      %143 = sbr.rel (0) target = $region13
    $region12: #{tpu_custom_call.1} parent=1 // pred_region
      %s145 = ssub.s32 32, 32
      %146 = vsyncadd [#allocation7], %s145
      %s148 = sshll.u32 [#allocation6], 4
      %s149 = int_to_ptr.vmem [resolvable:$true] %s148
      %151 = dma.hbm_to_vmem [thread:$0]  %s5, 32, %s149, [#allocation7]
    $region13: #{tpu_custom_call.1} parent=1 // pred_fallthru
      _
    // Predicated region
    $region14: #{tpu_custom_call.1} parent=1 // pred_check
      _
    $region15: #{tpu_custom_call.1} parent=1 // pred_check_branch
      %153 = sbr.rel (0) target = $region17
    $region16: #{tpu_custom_call.1} parent=1 // pred_region
      %s155 = ssub.s32 16, 16
      %156 = vsyncadd [#allocation7], %s155
      %s158 = sshll.u32 [#allocation8], 4
      %s159 = int_to_ptr.vmem [resolvable:$true] %s158
      %161 = dma.hbm_to_vmem [thread:$0]  %s7, 16, %s159, [#allocation7]
    $region17: #{tpu_custom_call.1} parent=1 // pred_fallthru
      _
    // Predicated region
    $region18: #{tpu_custom_call.1} parent=1 // pred_check
      _
    $region19: #{tpu_custom_call.1} parent=1 // pred_check_branch
      %163 = sbr.rel (0) target = $region21
    $region20: #{tpu_custom_call.1} parent=1 // pred_region
      %s165 = ssub.s32 16, 16
      %166 = vsyncadd [#allocation10], %s165
      %s168 = sshll.u32 [#allocation9], 4
      %s169 = int_to_ptr.vmem [resolvable:$true] %s168
      %171 = dma.hbm_to_vmem [thread:$0]  %s9, 16, %s169, [#allocation10]
    $region21: #{tpu_custom_call.1} parent=1 // pred_fallthru
      _
    // Predicated region
    $region22: #{tpu_custom_call.1} parent=1 // pred_check
      _
    $region23: #{tpu_custom_call.1} parent=1 // pred_check_branch
      %173 = sbr.rel (0) target = $region25
    $region24: #{tpu_custom_call.1} parent=1 // pred_region
      %s175 = ssub.s32 16, 16
      %176 = vsyncadd [#allocation10], %s175
      %s178 = sshll.u32 [#allocation11], 4
      %s179 = int_to_ptr.vmem [resolvable:$true] %s178
      %181 = dma.hbm_to_vmem [thread:$0]  %s11, 16, %s179, [#allocation10]
    $region25: #{tpu_custom_call.1} parent=1 // pred_fallthru
      _
    // Predicated region
    $region26: #{tpu_custom_call.1} parent=1 // pred_check
      _
    $region27: #{tpu_custom_call.1} parent=1 // pred_check_branch
      %183 = sbr.rel (0) target = $region29
    $region28: #{tpu_custom_call.1} parent=1 // pred_region
      %s185 = ssub.s32 16, 16
      %186 = vsyncadd [#allocation13], %s185
      %s188 = sshll.u32 [#allocation12], 4
      %s189 = int_to_ptr.vmem [resolvable:$true] %s188
      %191 = dma.hbm_to_vmem [thread:$0]  %s13, 16, %s189, [#allocation13]
    $region29: #{tpu_custom_call.1} parent=1 // pred_fallthru
      _
    // Predicated region
    $region30: #{tpu_custom_call.1} parent=1 // pred_check
      _
    $region31: #{tpu_custom_call.1} parent=1 // pred_check_branch
      %193 = sbr.rel (0) target = $region33
    $region32: #{tpu_custom_call.1} parent=1 // pred_region
      %s195 = ssub.s32 16, 16
      %196 = vsyncadd [#allocation13], %s195
      %s198 = sshll.u32 [#allocation14], 4
      %s199 = int_to_ptr.vmem [resolvable:$true] %s198
      %201 = dma.hbm_to_vmem [thread:$0]  %s15, 16, %s199, [#allocation13]
    $region33: #{tpu_custom_call.1} parent=1 // pred_fallthru
      _
    // Predicated region
    $region34: #{tpu_custom_call.1} parent=1 // pred_check
      _
    $region35: #{tpu_custom_call.1} parent=1 // pred_check_branch
      %203 = sbr.rel (0) target = $region37
    $region36: #{tpu_custom_call.1} parent=1 // pred_region
      %s205 = ssub.s32 16, 16
      %206 = vsyncadd [#allocation16], %s205
      %s208 = sshll.u32 [#allocation15], 4
      %s209 = int_to_ptr.vmem [resolvable:$true] %s208
      %211 = dma.hbm_to_vmem [thread:$0]  %s17, 16, %s209, [#allocation16]
    $region37: #{tpu_custom_call.1} parent=1 // pred_fallthru
      _
    // Predicated region
    $region38: #{tpu_custom_call.1} parent=1 // pred_check
      _
    $region39: #{tpu_custom_call.1} parent=1 // pred_check_branch
      %213 = sbr.rel (0) target = $region41
    $region40: #{tpu_custom_call.1} parent=1 // pred_region
      _
    $region41: #{tpu_custom_call.1} parent=1 // pred_fallthru
      _
    // Predicated region
    $region42: #{tpu_custom_call.1} parent=1 // pred_check
      _
    $region43: #{tpu_custom_call.1} parent=1 // pred_check_branch
      %215 = sbr.rel (0) target = $region45
    $region44: #{tpu_custom_call.1} parent=1 // pred_region
      %s217 = ssub.s32 16, 16
      %218 = vsyncadd [#allocation16], %s217
      %s220 = sshll.u32 [#allocation17], 4
      %s221 = int_to_ptr.vmem [resolvable:$true] %s220
      %223 = dma.hbm_to_vmem [thread:$0]  %s21, 16, %s221, [#allocation16]
    $region45: #{tpu_custom_call.1} parent=1 // pred_fallthru
      _
    // Predicated region
    $region46: #{tpu_custom_call.1} parent=1 // pred_check
      _
    $region47: #{tpu_custom_call.1} parent=1 // pred_check_branch
      %225 = sbr.rel (0) target = $region49
    $region48: #{tpu_custom_call.1} parent=1 // pred_region
      _
    $region49: #{tpu_custom_call.1} parent=1 // pred_fallthru
      _
    // Predicated region
    $region50: #{tpu_custom_call.1} parent=1 // pred_check
      _
    $region51: #{tpu_custom_call.1} parent=1 // pred_check_branch
      %227 = sbr.rel (0) target = $region53
    $region52: #{tpu_custom_call.1} parent=1 // pred_region
      %s229 = ssub.s32 16, 16
      %230 = vsyncadd [#allocation19], %s229
      %s232 = sshll.u32 [#allocation18], 4
      %s233 = int_to_ptr.vmem [resolvable:$true] %s232
      %235 = dma.hbm_to_vmem [thread:$0]  %s25, 16, %s233, [#allocation19]
    $region53: #{tpu_custom_call.1} parent=1 // pred_fallthru
      _
    // Predicated region
    $region54: #{tpu_custom_call.1} parent=1 // pred_check
      _
    $region55: #{tpu_custom_call.1} parent=1 // pred_check_branch
      %237 = sbr.rel (0) target = $region57
    $region56: #{tpu_custom_call.1} parent=1 // pred_region
      _
    $region57: #{tpu_custom_call.1} parent=1 // pred_fallthru
      _
    // Predicated region
    $region58: #{tpu_custom_call.1} parent=1 // pred_check
      _
    $region59: #{tpu_custom_call.1} parent=1 // pred_check_branch
      %239 = sbr.rel (0) target = $region61
    $region60: #{tpu_custom_call.1} parent=1 // pred_region
      %s241 = ssub.s32 16, 16
      %242 = vsyncadd [#allocation19], %s241
      %s244 = sshll.u32 [#allocation20], 4
      %s245 = int_to_ptr.vmem [resolvable:$true] %s244
      %247 = dma.hbm_to_vmem [thread:$0]  %s29, 16, %s245, [#allocation19]
    $region61: #{tpu_custom_call.1} parent=1 // pred_fallthru
      _
    // Predicated region
    $region62: #{tpu_custom_call.1} parent=1 // pred_check
      _
    $region63: #{tpu_custom_call.1} parent=1 // pred_check_branch
      %249 = sbr.rel (0) target = $region65
    $region64: #{tpu_custom_call.1} parent=1 // pred_region
      %s251 = ssub.s32 512, 512
      %252 = vsyncadd [#allocation22], %s251
      %s253 = sshll.u32 [#allocation21], 4
      %s254 = int_to_ptr.vmem [resolvable:$true] %s253
      %259 = dma.hbm_to_vmem [thread:$0]  %s31, 512, %s254, [#allocation22], 128, 128, 8
    $region65: #{tpu_custom_call.1} parent=1 // pred_fallthru
      _
    // Predicated region
    $region66: #{tpu_custom_call.1} parent=1 // pred_check
      _
    $region67: #{tpu_custom_call.1} parent=1 // pred_check_branch
      %261 = sbr.rel (0) target = $region69
    $region68: #{tpu_custom_call.1} parent=1 // pred_region
      %s263 = ssub.s32 16, 16
      %264 = vsyncadd [#allocation22], %s263
      %s266 = sshll.u32 [#allocation23], 4
      %s267 = int_to_ptr.vmem [resolvable:$true] %s266
      %269 = dma.hbm_to_vmem [thread:$0]  %s33, 16, %s267, [#allocation22]
    $region69: #{tpu_custom_call.1} parent=1 // pred_fallthru
      _
    // Predicated region
    $region70: #{tpu_custom_call.1} parent=1 // pred_check
      _
    $region71: #{tpu_custom_call.1} parent=1 // pred_check_branch
      %271 = sbr.rel (0) target = $region73
    $region72: #{tpu_custom_call.1} parent=1 // pred_region
      %s273 = ssub.s32 16, 16
      %274 = vsyncadd [#allocation25], %s273
      %s276 = sshll.u32 [#allocation24], 4
      %s277 = int_to_ptr.vmem [resolvable:$true] %s276
      %279 = dma.hbm_to_vmem [thread:$0]  %s35, 16, %s277, [#allocation25]
    $region73: #{tpu_custom_call.1} parent=1 // pred_fallthru
      _
    // Predicated region
    $region74: #{tpu_custom_call.1} parent=1 // pred_check
      _
    $region75: #{tpu_custom_call.1} parent=1 // pred_check_branch
      %281 = sbr.rel (0) target = $region77
    $region76: #{tpu_custom_call.1} parent=1 // pred_region
      %s283 = ssub.s32 16, 16
      %284 = vsyncadd [#allocation25], %s283
      %s286 = sshll.u32 [#allocation26], 4
      %s287 = int_to_ptr.vmem [resolvable:$true] %s286
      %289 = dma.hbm_to_vmem [thread:$0]  %s37, 16, %s287, [#allocation25]
    $region77: #{tpu_custom_call.1} parent=1 // pred_fallthru
      _
    // Predicated region
    $region78: #{tpu_custom_call.1} parent=1 // pred_check
      _
    $region79: #{tpu_custom_call.1} parent=1 // pred_check_branch
      %291 = sbr.rel (0) target = $region81
    $region80: #{tpu_custom_call.1} parent=1 // pred_region
      _
    $region81: #{tpu_custom_call.1} parent=1 // pred_fallthru
      _
    // Predicated region
    $region82: #{tpu_custom_call.1} parent=1 // pred_check
      _
    $region83: #{tpu_custom_call.1} parent=1 // pred_check_branch
      %293 = sbr.rel (0) target = $region85
    $region84: #{tpu_custom_call.1} parent=1 // pred_region
      %s295 = ssub.s32 16, 16
      %296 = vsyncadd [#allocation28], %s295
      %s298 = sshll.u32 [#allocation27], 4
      %s299 = int_to_ptr.vmem [resolvable:$true] %s298
      %301 = dma.hbm_to_vmem [thread:$0]  %s41, 16, %s299, [#allocation28]
    $region85: #{tpu_custom_call.1} parent=1 // pred_fallthru
      _
    // Predicated region
    $region86: #{tpu_custom_call.1} parent=1 // pred_check
      _
    $region87: #{tpu_custom_call.1} parent=1 // pred_check_branch
      %303 = sbr.rel (0) target = $region89
    $region88: #{tpu_custom_call.1} parent=1 // pred_region
      %s305 = ssub.s32 16, 16
      %306 = vsyncadd [#allocation28], %s305
      %s308 = sshll.u32 [#allocation29], 4
      %s309 = int_to_ptr.vmem [resolvable:$true] %s308
      %311 = dma.hbm_to_vmem [thread:$0]  %s43, 16, %s309, [#allocation28]
    $region89: #{tpu_custom_call.1} parent=1 // pred_fallthru
      _
    // Predicated region
    $region90: #{tpu_custom_call.1} parent=1 // pred_check
      _
    $region91: #{tpu_custom_call.1} parent=1 // pred_check_branch
      %313 = sbr.rel (0) target = $region93
    $region92: #{tpu_custom_call.1} parent=1 // pred_region
      %s315 = ssub.s32 16, 16
      %316 = vsyncadd [#allocation31], %s315
      %s318 = sshll.u32 [#allocation30], 4
      %s319 = int_to_ptr.vmem [resolvable:$true] %s318
      %321 = dma.hbm_to_vmem [thread:$0]  %s45, 16, %s319, [#allocation31]
    $region93: #{tpu_custom_call.1} parent=1 // pred_fallthru
      _
    // Predicated region
    $region94: #{tpu_custom_call.1} parent=1 // pred_check
      _
    $region95: #{tpu_custom_call.1} parent=1 // pred_check_branch
      %323 = sbr.rel (0) target = $region97
    $region96: #{tpu_custom_call.1} parent=1 // pred_region
      _
    $region97: #{tpu_custom_call.1} parent=1 // pred_fallthru
      _
    // Predicated region
    $region98: #{tpu_custom_call.1} parent=1 // pred_check
      _
    $region99: #{tpu_custom_call.1} parent=1 // pred_check_branch
      %325 = sbr.rel (0) target = $region101
    $region100: #{tpu_custom_call.1} parent=1 // pred_region
      %s327 = ssub.s32 32, 32
      %328 = vsyncadd [#allocation31], %s327
      %s330 = sshll.u32 [#allocation32], 4
      %s331 = int_to_ptr.vmem [resolvable:$true] %s330
      %333 = dma.hbm_to_vmem [thread:$0]  %s49, 32, %s331, [#allocation31]
    $region101: #{tpu_custom_call.1} parent=1 // pred_fallthru
      _
    // Predicated region
    $region102: #{tpu_custom_call.1} parent=1 // pred_check
      _
    $region103: #{tpu_custom_call.1} parent=1 // pred_check_branch
      %335 = sbr.rel (0) target = $region105
    $region104: #{tpu_custom_call.1} parent=1 // pred_region
      %s337 = ssub.s32 512, 512
      %338 = vsyncadd [#allocation34], %s337
      %s339 = sshll.u32 [#allocation33], 4
      %s340 = int_to_ptr.vmem [resolvable:$true] %s339
      %345 = dma.hbm_to_vmem [thread:$0]  %s51, 512, %s340, [#allocation34], 128, 128, 8
    $region105: #{tpu_custom_call.1} parent=1 // pred_fallthru
      _
    // Predicated region
    $region106: #{tpu_custom_call.1} parent=1 // pred_check
      _
    $region107: #{tpu_custom_call.1} parent=1 // pred_check_branch
      %347 = sbr.rel (0) target = $region109
    $region108: #{tpu_custom_call.1} parent=1 // pred_region
      %s349 = ssub.s32 16, 16
      %350 = vsyncadd [#allocation34], %s349
      %s352 = sshll.u32 [#allocation35], 4
      %s353 = int_to_ptr.vmem [resolvable:$true] %s352
      %355 = dma.hbm_to_vmem [thread:$0]  %s53, 16, %s353, [#allocation34]
    $region109: #{tpu_custom_call.1} parent=1 // pred_fallthru
      _
    // Predicated region
    $region110: #{tpu_custom_call.1} parent=1 // pred_check
      _
    $region111: #{tpu_custom_call.1} parent=1 // pred_check_branch
      %357 = sbr.rel (0) target = $region113
    $region112: #{tpu_custom_call.1} parent=1 // pred_region
      %s359 = ssub.s32 16, 16
      %360 = vsyncadd [#allocation37], %s359
      %s362 = sshll.u32 [#allocation36], 4
      %s363 = int_to_ptr.vmem [resolvable:$true] %s362
      %365 = dma.hbm_to_vmem [thread:$0]  %s55, 16, %s363, [#allocation37]
    $region113: #{tpu_custom_call.1} parent=1 // pred_fallthru
      _
    // Predicated region
    $region114: #{tpu_custom_call.1} parent=1 // pred_check
      _
    $region115: #{tpu_custom_call.1} parent=1 // pred_check_branch
      %367 = sbr.rel (0) target = $region117
    $region116: #{tpu_custom_call.1} parent=1 // pred_region
      %s369 = ssub.s32 16, 16
      %370 = vsyncadd [#allocation37], %s369
      %s372 = sshll.u32 [#allocation38], 4
      %s373 = int_to_ptr.vmem [resolvable:$true] %s372
      %375 = dma.hbm_to_vmem [thread:$0]  %s57, 16, %s373, [#allocation37]
    $region117: #{tpu_custom_call.1} parent=1 // pred_fallthru
      _
    // Predicated region
    $region118: #{tpu_custom_call.1} parent=1 // pred_check
      _
    $region119: #{tpu_custom_call.1} parent=1 // pred_check_branch
      %377 = sbr.rel (0) target = $region121
    $region120: #{tpu_custom_call.1} parent=1 // pred_region
      _
    $region121: #{tpu_custom_call.1} parent=1 // pred_fallthru
      _
    // Predicated region
    $region122: #{tpu_custom_call.1} parent=1 // pred_check
      _
    $region123: #{tpu_custom_call.1} parent=1 // pred_check_branch
      %379 = sbr.rel (0) target = $region125
    $region124: #{tpu_custom_call.1} parent=1 // pred_region
      %s381 = ssub.s32 16, 16
      %382 = vsyncadd [#allocation40], %s381
      %s384 = sshll.u32 [#allocation39], 4
      %s385 = int_to_ptr.vmem [resolvable:$true] %s384
      %387 = dma.hbm_to_vmem [thread:$0]  %s61, 16, %s385, [#allocation40]
    $region125: #{tpu_custom_call.1} parent=1 // pred_fallthru
      _
    // Predicated region
    $region126: #{tpu_custom_call.1} parent=1 // pred_check
      _
    $region127: #{tpu_custom_call.1} parent=1 // pred_check_branch
      %389 = sbr.rel (0) target = $region129
    $region128: #{tpu_custom_call.1} parent=1 // pred_region
      _
    $region129: #{tpu_custom_call.1} parent=1 // pred_fallthru
      _
    // Predicated region
    $region130: #{tpu_custom_call.1} parent=1 // pred_check
      _
    $region131: #{tpu_custom_call.1} parent=1 // pred_check_branch
      %391 = sbr.rel (0) target = $region133
    $region132: #{tpu_custom_call.1} parent=1 // pred_region
      %s393 = ssub.s32 16, 16
      %394 = vsyncadd [#allocation40], %s393
      %s396 = sshll.u32 [#allocation41], 4
      %s397 = int_to_ptr.vmem [resolvable:$true] %s396
      %399 = dma.hbm_to_vmem [thread:$0]  %s65, 16, %s397, [#allocation40]
    $region133: #{tpu_custom_call.1} parent=1 // pred_fallthru
      _
    // Predicated region
    $region134: #{tpu_custom_call.1} parent=1 // pred_check
      _
    $region135: #{tpu_custom_call.1} parent=1 // pred_check_branch
      %401 = sbr.rel (0) target = $region137
    $region136: #{tpu_custom_call.1} parent=1 // pred_region
      %s403 = ssub.s32 16, 16
      %404 = vsyncadd [#allocation43], %s403
      %s406 = sshll.u32 [#allocation42], 4
      %s407 = int_to_ptr.vmem [resolvable:$true] %s406
      %409 = dma.hbm_to_vmem [thread:$0]  %s67, 16, %s407, [#allocation43]
    $region137: #{tpu_custom_call.1} parent=1 // pred_fallthru
      _
    // Predicated region
    $region138: #{tpu_custom_call.1} parent=1 // pred_check
      _
    $region139: #{tpu_custom_call.1} parent=1 // pred_check_branch
      %411 = sbr.rel (0) target = $region141
    $region140: #{tpu_custom_call.1} parent=1 // pred_region
      %s413 = ssub.s32 16, 16
      %414 = vsyncadd [#allocation43], %s413
      %s416 = sshll.u32 [#allocation44], 4
      %s417 = int_to_ptr.vmem [resolvable:$true] %s416
      %419 = dma.hbm_to_vmem [thread:$0]  %s69, 16, %s417, [#allocation43]
    $region141: #{tpu_custom_call.1} parent=1 // pred_fallthru
      _
    // Predicated region
    $region142: #{tpu_custom_call.1} parent=1 // pred_check
      _
    $region143: #{tpu_custom_call.1} parent=1 // pred_check_branch
      %421 = sbr.rel (0) target = $region145
    $region144: #{tpu_custom_call.1} parent=1 // pred_region
      _
    $region145: #{tpu_custom_call.1} parent=1 // pred_fallthru
      _
    // Predicated region
    $region146: #{tpu_custom_call.1} parent=1 // pred_check
      _
    $region147: #{tpu_custom_call.1} parent=1 // pred_check_branch
      %423 = sbr.rel (0) target = $region149
    $region148: #{tpu_custom_call.1} parent=1 // pred_region
      _
    $region149: #{tpu_custom_call.1} parent=1 // pred_fallthru
      _
    // Predicated region
    $region150: #{tpu_custom_call.1} parent=1 // pred_check
      _
    $region151: #{tpu_custom_call.1} parent=1 // pred_check_branch
      %425 = sbr.rel (0) target = $region153
    $region152: #{tpu_custom_call.1} parent=1 // pred_region
      %s427 = ssub.s32 1024, 1024
      %428 = vsyncadd [#allocation46], %s427
      %s429 = sshll.u32 [#allocation45], 4
      %s430 = int_to_ptr.vmem [resolvable:$true] %s429
      %435 = dma.hbm_to_vmem [thread:$0]  %s75, 1024, %s430, [#allocation46], 128, 128, 8
    $region153: #{tpu_custom_call.1} parent=1 // pred_fallthru
      _
    // Predicated region
    $region154: #{tpu_custom_call.1} parent=1 // pred_check
      _
    $region155: #{tpu_custom_call.1} parent=1 // pred_check_branch
      %437 = sbr.rel (0) target = $region157
    $region156: #{tpu_custom_call.1} parent=1 // pred_region
      _
    $region157: #{tpu_custom_call.1} parent=1 // pred_fallthru
      _
    // Predicated region
    $region158: #{tpu_custom_call.1} parent=1 // pred_check
      _
    $region159: #{tpu_custom_call.1} parent=1 // pred_check_branch
      %439 = sbr.rel (0) target = $region161
    $region160: #{tpu_custom_call.1} parent=1 // pred_region
      _
    $region161: #{tpu_custom_call.1} parent=1 // pred_fallthru
      _
    // Predicated region
    $region162: #{tpu_custom_call.1} parent=1 // pred_check
      _
    $region163: #{tpu_custom_call.1} parent=1 // pred_check_branch
      %441 = sbr.rel (0) target = $region165
    $region164: #{tpu_custom_call.1} parent=1 // pred_region
      _
    $region165: #{tpu_custom_call.1} parent=1 // pred_fallthru
      _
    // Predicated region
    $region166: #{tpu_custom_call.1} parent=1 // pred_check
      _
    $region167: #{tpu_custom_call.1} parent=1 // pred_check_branch
      %443 = sbr.rel (0) target = $region169
    $region168: #{tpu_custom_call.1} parent=1 // pred_region
      _
    $region169: #{tpu_custom_call.1} parent=1 // pred_fallthru
      _
    // Predicated region
    $region170: #{tpu_custom_call.1} parent=1 // pred_check
      _
    $region171: #{tpu_custom_call.1} parent=1 // pred_check_branch
      %445 = sbr.rel (0) target = $region173
    $region172: #{tpu_custom_call.1} parent=1 // pred_region
      %s447 = ssub.s32 16, 16
      %448 = vsyncadd [#allocation46], %s447
      %s450 = sshll.u32 [#allocation47], 4
      %s451 = int_to_ptr.vmem [resolvable:$true] %s450
      %453 = dma.hbm_to_vmem [thread:$0]  %s85, 16, %s451, [#allocation46]
    $region173: #{tpu_custom_call.1} parent=1 // pred_fallthru
      _
    // Predicated region
    $region174: #{tpu_custom_call.1} parent=1 // pred_check
      _
    $region175: #{tpu_custom_call.1} parent=1 // pred_check_branch
      %455 = sbr.rel (0) target = $region177
    $region176: #{tpu_custom_call.1} parent=1 // pred_region
      _
    $region177: #{tpu_custom_call.1} parent=1 // pred_fallthru
      _
    // Predicated region
    $region178: #{tpu_custom_call.1} parent=1 // pred_check
      _
    $region179: #{tpu_custom_call.1} parent=1 // pred_check_branch
      %457 = sbr.rel (0) target = $region181
    $region180: #{tpu_custom_call.1} parent=1 // pred_region
      %s459 = ssub.s32 16, 16
      %460 = vsyncadd [#allocation49], %s459
      %s462 = sshll.u32 [#allocation48], 4
      %s463 = int_to_ptr.vmem [resolvable:$true] %s462
      %465 = dma.hbm_to_vmem [thread:$0]  %s89, 16, %s463, [#allocation49]
    $region181: #{tpu_custom_call.1} parent=1 // pred_fallthru
      _
    // Predicated region
    $region182: #{tpu_custom_call.1} parent=1 // pred_check
      _
    $region183: #{tpu_custom_call.1} parent=1 // pred_check_branch
      %467 = sbr.rel (0) target = $region185
    $region184: #{tpu_custom_call.1} parent=1 // pred_region
      _
    $region185: #{tpu_custom_call.1} parent=1 // pred_fallthru
      _
    // Predicated region
    $region186: #{tpu_custom_call.1} parent=1 // pred_check
      _
    $region187: #{tpu_custom_call.1} parent=1 // pred_check_branch
      %469 = sbr.rel (0) target = $region189
    $region188: #{tpu_custom_call.1} parent=1 // pred_region
      _
    $region189: #{tpu_custom_call.1} parent=1 // pred_fallthru
      _
    // Predicated region
    $region190: #{tpu_custom_call.1} parent=1 // pred_check
      _
    $region191: #{tpu_custom_call.1} parent=1 // pred_check_branch
      %471 = sbr.rel (0) target = $region193
    $region192: #{tpu_custom_call.1} parent=1 // pred_region
      %472 = dma.done [#allocation4], 128
    $region193: #{tpu_custom_call.1} parent=1 // pred_fallthru
      _
    // Predicated region
    $region194: #{tpu_custom_call.1} parent=1 // pred_check
      _
    $region195: #{tpu_custom_call.1} parent=1 // pred_check_branch
      %474 = sbr.rel (0) target = $region197
    $region196: #{tpu_custom_call.1} parent=1 // pred_region
      %475 = dma.done [#allocation7], 32
    $region197: #{tpu_custom_call.1} parent=1 // pred_fallthru
      _
    // Predicated region
    $region198: #{tpu_custom_call.1} parent=1 // pred_check
      _
    $region199: #{tpu_custom_call.1} parent=1 // pred_check_branch
      %477 = sbr.rel (0) target = $region201
    $region200: #{tpu_custom_call.1} parent=1 // pred_region
      %478 = dma.done [#allocation7], 16
    $region201: #{tpu_custom_call.1} parent=1 // pred_fallthru
      _
    // Predicated region
    $region202: #{tpu_custom_call.1} parent=1 // pred_check
      _
    $region203: #{tpu_custom_call.1} parent=1 // pred_check_branch
      %480 = sbr.rel (0) target = $region205
    $region204: #{tpu_custom_call.1} parent=1 // pred_region
      %481 = dma.done [#allocation10], 16
    $region205: #{tpu_custom_call.1} parent=1 // pred_fallthru
      _
    // Predicated region
    $region206: #{tpu_custom_call.1} parent=1 // pred_check
      _
    $region207: #{tpu_custom_call.1} parent=1 // pred_check_branch
      %483 = sbr.rel (0) target = $region209
    $region208: #{tpu_custom_call.1} parent=1 // pred_region
      %484 = dma.done [#allocation10], 16
    $region209: #{tpu_custom_call.1} parent=1 // pred_fallthru
      _
    // Predicated region
    $region210: #{tpu_custom_call.1} parent=1 // pred_check
      _
    $region211: #{tpu_custom_call.1} parent=1 // pred_check_branch
      %486 = sbr.rel (0) target = $region213
    $region212: #{tpu_custom_call.1} parent=1 // pred_region
      %487 = dma.done [#allocation13], 16
    $region213: #{tpu_custom_call.1} parent=1 // pred_fallthru
      _
    // Predicated region
    $region214: #{tpu_custom_call.1} parent=1 // pred_check
      _
    $region215: #{tpu_custom_call.1} parent=1 // pred_check_branch
      %489 = sbr.rel (0) target = $region217
    $region216: #{tpu_custom_call.1} parent=1 // pred_region
      %490 = dma.done [#allocation13], 16
    $region217: #{tpu_custom_call.1} parent=1 // pred_fallthru
      _
    // Predicated region
    $region218: #{tpu_custom_call.1} parent=1 // pred_check
      _
    $region219: #{tpu_custom_call.1} parent=1 // pred_check_branch
      %492 = sbr.rel (0) target = $region221
    $region220: #{tpu_custom_call.1} parent=1 // pred_region
      %493 = dma.done [#allocation16], 16
    $region221: #{tpu_custom_call.1} parent=1 // pred_fallthru
      _
    // Predicated region
    $region222: #{tpu_custom_call.1} parent=1 // pred_check
      _
    $region223: #{tpu_custom_call.1} parent=1 // pred_check_branch
      %495 = sbr.rel (0) target = $region225
    $region224: #{tpu_custom_call.1} parent=1 // pred_region
      %496 = dma.done [#allocation16], 16
    $region225: #{tpu_custom_call.1} parent=1 // pred_fallthru
      _
    // Predicated region
    $region226: #{tpu_custom_call.1} parent=1 // pred_check
      _
    $region227: #{tpu_custom_call.1} parent=1 // pred_check_branch
      %498 = sbr.rel (0) target = $region229
    $region228: #{tpu_custom_call.1} parent=1 // pred_region
      %499 = dma.done [#allocation19], 16
    $region229: #{tpu_custom_call.1} parent=1 // pred_fallthru
      _
    // Predicated region
    $region230: #{tpu_custom_call.1} parent=1 // pred_check
      _
    $region231: #{tpu_custom_call.1} parent=1 // pred_check_branch
      %501 = sbr.rel (0) target = $region233
    $region232: #{tpu_custom_call.1} parent=1 // pred_region
      %502 = dma.done [#allocation19], 16
    $region233: #{tpu_custom_call.1} parent=1 // pred_fallthru
      _
    // Predicated region
    $region234: #{tpu_custom_call.1} parent=1 // pred_check
      _
    $region235: #{tpu_custom_call.1} parent=1 // pred_check_branch
      %504 = sbr.rel (0) target = $region237
    $region236: #{tpu_custom_call.1} parent=1 // pred_region
      %505 = dma.done [#allocation22], 512
    $region237: #{tpu_custom_call.1} parent=1 // pred_fallthru
      _
    // Predicated region
    $region238: #{tpu_custom_call.1} parent=1 // pred_check
      _
    $region239: #{tpu_custom_call.1} parent=1 // pred_check_branch
      %507 = sbr.rel (0) target = $region241
    $region240: #{tpu_custom_call.1} parent=1 // pred_region
      %508 = dma.done [#allocation22], 16
    $region241: #{tpu_custom_call.1} parent=1 // pred_fallthru
      _
    // Predicated region
    $region242: #{tpu_custom_call.1} parent=1 // pred_check
      _
    $region243: #{tpu_custom_call.1} parent=1 // pred_check_branch
      %510 = sbr.rel (0) target = $region245
    $region244: #{tpu_custom_call.1} parent=1 // pred_region
      %511 = dma.done [#allocation25], 16
    $region245: #{tpu_custom_call.1} parent=1 // pred_fallthru
      _
    // Predicated region
    $region246: #{tpu_custom_call.1} parent=1 // pred_check
      _
    $region247: #{tpu_custom_call.1} parent=1 // pred_check_branch
      %513 = sbr.rel (0) target = $region249
    $region248: #{tpu_custom_call.1} parent=1 // pred_region
      %514 = dma.done [#allocation25], 16
    $region249: #{tpu_custom_call.1} parent=1 // pred_fallthru
      _
    // Predicated region
    $region250: #{tpu_custom_call.1} parent=1 // pred_check
      _
    $region251: #{tpu_custom_call.1} parent=1 // pred_check_branch
      %516 = sbr.rel (0) target = $region253
    $region252: #{tpu_custom_call.1} parent=1 // pred_region
      %517 = dma.done [#allocation28], 16
    $region253: #{tpu_custom_call.1} parent=1 // pred_fallthru
      _
    // Predicated region
    $region254: #{tpu_custom_call.1} parent=1 // pred_check
      _
    $region255: #{tpu_custom_call.1} parent=1 // pred_check_branch
      %519 = sbr.rel (0) target = $region257
    $region256: #{tpu_custom_call.1} parent=1 // pred_region
      %520 = dma.done [#allocation28], 16
    $region257: #{tpu_custom_call.1} parent=1 // pred_fallthru
      _
    // Predicated region
    $region258: #{tpu_custom_call.1} parent=1 // pred_check
      _
    $region259: #{tpu_custom_call.1} parent=1 // pred_check_branch
      %522 = sbr.rel (0) target = $region261
    $region260: #{tpu_custom_call.1} parent=1 // pred_region
      %523 = dma.done [#allocation31], 16
    $region261: #{tpu_custom_call.1} parent=1 // pred_fallthru
      _
    // Predicated region
    $region262: #{tpu_custom_call.1} parent=1 // pred_check
      _
    $region263: #{tpu_custom_call.1} parent=1 // pred_check_branch
      %525 = sbr.rel (0) target = $region265
    $region264: #{tpu_custom_call.1} parent=1 // pred_region
      %526 = dma.done [#allocation31], 32
    $region265: #{tpu_custom_call.1} parent=1 // pred_fallthru
      _
    // Predicated region
    $region266: #{tpu_custom_call.1} parent=1 // pred_check
      _
    $region267: #{tpu_custom_call.1} parent=1 // pred_check_branch
      %528 = sbr.rel (0) target = $region269
    $region268: #{tpu_custom_call.1} parent=1 // pred_region
      %529 = dma.done [#allocation34], 512
    $region269: #{tpu_custom_call.1} parent=1 // pred_fallthru
      _
    // Predicated region
    $region270: #{tpu_custom_call.1} parent=1 // pred_check
      _
    $region271: #{tpu_custom_call.1} parent=1 // pred_check_branch
      %531 = sbr.rel (0) target = $region273
    $region272: #{tpu_custom_call.1} parent=1 // pred_region
      %532 = dma.done [#allocation34], 16
    $region273: #{tpu_custom_call.1} parent=1 // pred_fallthru
      _
    // Predicated region
    $region274: #{tpu_custom_call.1} parent=1 // pred_check
      _
    $region275: #{tpu_custom_call.1} parent=1 // pred_check_branch
      %534 = sbr.rel (0) target = $region277
    $region276: #{tpu_custom_call.1} parent=1 // pred_region
      %535 = dma.done [#allocation37], 16
    $region277: #{tpu_custom_call.1} parent=1 // pred_fallthru
      _
    // Predicated region
    $region278: #{tpu_custom_call.1} parent=1 // pred_check
      _
    $region279: #{tpu_custom_call.1} parent=1 // pred_check_branch
      %537 = sbr.rel (0) target = $region281
    $region280: #{tpu_custom_call.1} parent=1 // pred_region
      %538 = dma.done [#allocation37], 16
    $region281: #{tpu_custom_call.1} parent=1 // pred_fallthru
      _
    // Predicated region
    $region282: #{tpu_custom_call.1} parent=1 // pred_check
      _
    $region283: #{tpu_custom_call.1} parent=1 // pred_check_branch
      %540 = sbr.rel (0) target = $region285
    $region284: #{tpu_custom_call.1} parent=1 // pred_region
      %541 = dma.done [#allocation40], 16
    $region285: #{tpu_custom_call.1} parent=1 // pred_fallthru
      _
    // Predicated region
    $region286: #{tpu_custom_call.1} parent=1 // pred_check
      _
    $region287: #{tpu_custom_call.1} parent=1 // pred_check_branch
      %543 = sbr.rel (0) target = $region289
    $region288: #{tpu_custom_call.1} parent=1 // pred_region
      %544 = dma.done [#allocation40], 16
    $region289: #{tpu_custom_call.1} parent=1 // pred_fallthru
      _
    // Predicated region
    $region290: #{tpu_custom_call.1} parent=1 // pred_check
      _
    $region291: #{tpu_custom_call.1} parent=1 // pred_check_branch
      %546 = sbr.rel (0) target = $region293
    $region292: #{tpu_custom_call.1} parent=1 // pred_region
      %547 = dma.done [#allocation43], 16
    $region293: #{tpu_custom_call.1} parent=1 // pred_fallthru
      _
    // Predicated region
    $region294: #{tpu_custom_call.1} parent=1 // pred_check
      _
    $region295: #{tpu_custom_call.1} parent=1 // pred_check_branch
      %549 = sbr.rel (0) target = $region297
    $region296: #{tpu_custom_call.1} parent=1 // pred_region
      %550 = dma.done [#allocation43], 16
    $region297: #{tpu_custom_call.1} parent=1 // pred_fallthru
      _
    // Predicated region
    $region298: #{tpu_custom_call.1} parent=1 // pred_check
      _
    $region299: #{tpu_custom_call.1} parent=1 // pred_check_branch
      %552 = sbr.rel (0) target = $region301
    $region300: #{tpu_custom_call.1} parent=1 // pred_region
      %553 = dma.done [#allocation46], 1024
    $region301: #{tpu_custom_call.1} parent=1 // pred_fallthru
      _
    // Predicated region
    $region302: #{tpu_custom_call.1} parent=1 // pred_check
      _
    $region303: #{tpu_custom_call.1} parent=1 // pred_check_branch
      %555 = sbr.rel (0) target = $region305
    $region304: #{tpu_custom_call.1} parent=1 // pred_region
      %556 = dma.done [#allocation46], 16
    $region305: #{tpu_custom_call.1} parent=1 // pred_fallthru
      _
    // Predicated region
    $region306: #{tpu_custom_call.1} parent=1 // pred_check
      _
    $region307: #{tpu_custom_call.1} parent=1 // pred_check_branch
      %558 = sbr.rel (0) target = $region309
    $region308: #{tpu_custom_call.1} parent=1 // pred_region
      %559 = dma.done [#allocation49], 16
    $region309: #{tpu_custom_call.1} parent=1 // pred_fallthru
      _
    %v560 = vld [vmem:[#allocation3] sm:$0xff]
    %v561 = vld [vmem:[%s3] sm:$0xff]
    %v562 = vld [vmem:[%s3 + $0x8] sm:$0xff]
    %v563 = vld [vmem:[%s3 + $0x10] sm:$0xff]
    %v564 = vld [vmem:[%s3 + $0x18] sm:$0xff]
    %v565 = vld [vmem:[%s3 + $0x20] sm:$0xff]
    %v566 = vld [vmem:[%s3 + $0x28] sm:$0xff]
    %v567 = vld [vmem:[%s3 + $0x30] sm:$0xff]
    %v568 = vld [vmem:[%s3 + $0x38] sm:$0xff]
    %v569 = vld [vmem:[#allocation6] sm:$0x3]
    %v571 = vlaneseq
    %v572 = vshrl.u32 %v571, 7
    %v573 = vsub.s32 0, %v572
    %v574 = vrot.slane %v569, %v573
    %v575 = vlaneseq
    %v576 = vshrl.u32 %v575, 7
    %v577 = vsub.s32 1, %v576
    %v578 = vrot.slane %v569, %v577
    %vm581 = vcmask 261120
    %v583 = vsel %vm581, %v560, 0
    %585 = vmatprep.subr.mxu0 %v562
    %586 = vmatpush1.msra.mxu0 %v561
    %587 = vmatprep.subr.mxu0 %v564
    %588 = vmatpush1.msra.mxu0 %v563
    %589 = vmatprep.subr.mxu0 %v566
    %590 = vmatpush1.msra.mxu0 %v565
    %591 = vmatprep.subr.mxu0 %v568
    %592 = vmatpush1.msra.mxu0 %v567
    %593 = vmatprep.subr.mxu0 0.0
    %594 = vmatpush1.msra.mxu0 0.0
    %595 = vmatprep.subr.mxu0 0.0
    %596 = vmatpush1.msra.mxu0 0.0
    %597 = vmatprep.subr.mxu0 0.0
    %598 = vmatpush1.msra.mxu0 0.0
    %599 = vmatprep.subr.mxu0 0.0
    %600 = vmatpush1.msra.mxu0 0.0
    %601 = vmatprep.subr.mxu0 0.0
    %602 = vmatpush1.msra.mxu0 0.0
    %603 = vmatprep.subr.mxu0 0.0
    %604 = vmatpush1.msra.mxu0 0.0
    %605 = vmatprep.subr.mxu0 0.0
    %606 = vmatpush1.msra.mxu0 0.0
    %607 = vmatprep.subr.mxu0 0.0
    %608 = vmatpush1.msra.mxu0 0.0
    %609 = vmatprep.subr.mxu0 0.0
    %610 = vmatpush1.msra.mxu0 0.0
    %611 = vmatprep.subr.mxu0 0.0
    %612 = vmatpush1.msra.mxu0 0.0
    %613 = vmatprep.subr.mxu0 0.0
    %614 = vmatpush1.msra.mxu0 0.0
    %615 = vmatprep.subr.mxu0 0.0
    %616 = vmatpush1.msra.mxu0 0.0
    %617 = vmatprep.subr.mxu0 0.0
    %618 = vmatpush1.msra.mxu0 0.0
    %619 = vmatprep.subr.mxu0 0.0
    %620 = vmatpush1.msra.mxu0 0.0
    %621 = vmatprep.subr.mxu0 0.0
    %622 = vmatpush1.msra.mxu0 0.0
    %623 = vmatprep.subr.mxu0 0.0
    %624 = vmatpush1.msra.mxu0 0.0
    %625 = vmatprep.subr.mxu0 0.0
    %626 = vmatpush1.msra.mxu0 0.0
    %627 = vmatprep.subr.mxu0 0.0
    %628 = vmatpush1.msra.mxu0 0.0
    %629 = vmatprep.subr.mxu0 0.0
    %630 = vmatpush1.msra.mxu0 0.0
    %631 = vmatprep.subr.mxu0 0.0
    %632 = vmatpush1.msra.mxu0 0.0
    %633 = vmatprep.subr.mxu0 0.0
    %634 = vmatpush1.msra.mxu0 0.0
    %635 = vmatprep.subr.mxu0 0.0
    %636 = vmatpush1.msra.mxu0 0.0
    %637 = vmatprep.subr.mxu0 0.0
    %638 = vmatpush1.msra.mxu0 0.0
    %639 = vmatprep.subr.mxu0 0.0
    %640 = vmatpush1.msra.mxu0 0.0
    %641 = vmatprep.subr.mxu0 0.0
    %642 = vmatpush1.msra.mxu0 0.0
    %643 = vmatprep.subr.mxu0 0.0
    %644 = vmatpush1.msra.mxu0 0.0
    %645 = vmatprep.subr.mxu0 0.0
    %646 = vmatpush1.msra.mxu0 0.0
    %647 = vmatprep.subr.mxu0 0.0
    %648 = vmatpush1.msra.mxu0 0.0
    %649 = vmatprep.mubr.f32.mxu0 0.0
    %650 = vmatmul.mubr.f32.gmra.mrb[0].mxu0 %v583
    %v651 = vpop.f32.mrb[0].mxu0
    %v652 = vadd.f32 %v574, %v651
    %v653 = vpop.f32.mrb[0].mxu0
    %v654 = vadd.f32 %v578, %v653
    %655 = vdwg.mxu0
    %v656 = vld [vmem:[#allocation8] sm:$0x1]
    %v657 = vld [vmem:[#allocation9] sm:$0x1]
    %vm658 = vcmask 523264
    %v659 = vsel %vm658, %v652, 0.0
    %660 = vadd.xlane.f32.xlu0 %v659
    %v661 = vpop.xlane.xlu0 %660
    %v662 = vrcp.pop 64.0
    %v663 = vmul.f32 %v661, %v662
    %v664 = vmul.f32 %v652, %v652
    %v665 = vsel %vm658, %v664, 0.0
    %666 = vadd.xlane.f32.xlu0 %v665
    %v667 = vpop.xlane.xlu0 %666
    %v668 = vmul.f32 %v667, %v662
    %v669 = vmul.f32 %v663, %v663
    %v670 = vsub.f32 %v668, %v669
    %v671 = vmax.f32 %v670, 0.0
    %v672 = vsub.f32 %v652, %v663
    %v673 = vadd.f32 %v671, 1e-05
    %v674 = vrsqrt.pop %v673
    %v675 = vmul.f32 %v672, %v674
    %v677 = vlaneseq
    %v678 = vshrl.u32 %v677, 7
    %v679 = vsub.s32 0, %v678
    %v680 = vrot.slane %v656, %v679
    %v682 = vmul.f32 %v675, %v680
    %v684 = vlaneseq
    %v685 = vshrl.u32 %v684, 7
    %v686 = vsub.s32 0, %v685
    %v687 = vrot.slane %v657, %v686
    %v689 = vadd.f32 %v682, %v687
    %v690 = vmax.f32 %v689, 0.0
    %v691 = vld [vmem:[#allocation11] sm:$0x1]
    %v692 = vld [vmem:[#allocation12] sm:$0x1]
    %694 = vrot.lane.b32.xlu0 %v652, 64
    %v695 = vpop.permute.xlu0 %694
    %v697 = vsel %vm658, %v695, 0.0
    %698 = vadd.xlane.f32.xlu0 %v697
    %v699 = vpop.xlane.xlu0 %698
    %v700 = vmul.f32 %v699, %v662
    %702 = vrot.lane.b32.xlu0 %v664, 64
    %v703 = vpop.permute.xlu0 %702
    %v705 = vsel %vm658, %v703, 0.0
    %706 = vadd.xlane.f32.xlu0 %v705
    %v707 = vpop.xlane.xlu0 %706
    %v708 = vmul.f32 %v707, %v662
    %v709 = vmul.f32 %v700, %v700
    %v710 = vsub.f32 %v708, %v709
    %v711 = vmax.f32 %v710, 0.0
    %v712 = vsub.f32 %v652, %v700
    %v713 = vadd.f32 %v711, 1e-05
    %v714 = vrsqrt.pop %v713
    %v715 = vmul.f32 %v712, %v714
    %v717 = vlaneseq
    %v718 = vshrl.u32 %v717, 7
    %v719 = vsub.s32 0, %v718
    %v720 = vrot.slane %v691, %v719
    %721 = vrot.lane.b32.xlu0 %v720, 64
    %v722 = vpop.permute.xlu0 %721
    %v724 = vmul.f32 %v715, %v722
    %v726 = vlaneseq
    %v727 = vshrl.u32 %v726, 7
    %v728 = vsub.s32 0, %v727
    %v729 = vrot.slane %v692, %v728
    %730 = vrot.lane.b32.xlu0 %v729, 64
    %v731 = vpop.permute.xlu0 %730
    %v733 = vadd.f32 %v724, %v731
    %v734 = vmax.f32 %v733, 0.0
    %v735 = vld [vmem:[#allocation14] sm:$0x1]
    %v736 = vld [vmem:[#allocation15] sm:$0x1]
    %v737 = vsel %vm658, %v654, 0.0
    %738 = vadd.xlane.f32.xlu0 %v737
    %v739 = vpop.xlane.xlu0 %738
    %v740 = vmul.f32 %v739, %v662
    %v741 = vmul.f32 %v654, %v654
    %v742 = vsel %vm658, %v741, 0.0
    %743 = vadd.xlane.f32.xlu0 %v742
    %v744 = vpop.xlane.xlu0 %743
    %v745 = vmul.f32 %v744, %v662
    %v746 = vmul.f32 %v740, %v740
    %v747 = vsub.f32 %v745, %v746
    %v748 = vmax.f32 %v747, 0.0
    %v749 = vsub.f32 %v654, %v740
    %v750 = vadd.f32 %v748, 1e-05
    %v751 = vrsqrt.pop %v750
    %v752 = vmul.f32 %v749, %v751
    %v754 = vlaneseq
    %v755 = vshrl.u32 %v754, 7
    %v756 = vsub.s32 0, %v755
    %v757 = vrot.slane %v735, %v756
    %v759 = vmul.f32 %v752, %v757
    %v761 = vlaneseq
    %v762 = vshrl.u32 %v761, 7
    %v763 = vsub.s32 0, %v762
    %v764 = vrot.slane %v736, %v763
    %v766 = vadd.f32 %v759, %v764
    %v767 = vmax.f32 %v766, 0.0
    %v768 = vld [vmem:[%s19] sm:$0xff]
    %v769 = vld [vmem:[%s19 + $0x8] sm:$0xff]
    %v770 = vld [vmem:[%s19 + $0x10] sm:$0xff]
    %v771 = vld [vmem:[%s19 + $0x18] sm:$0xff]
    %v772 = vld [vmem:[%s19 + $0x20] sm:$0xff]
    %v773 = vld [vmem:[%s19 + $0x28] sm:$0xff]
    %v774 = vld [vmem:[%s19 + $0x30] sm:$0xff]
    %v775 = vld [vmem:[%s19 + $0x38] sm:$0xff]
    %v776 = vld [vmem:[#allocation17] sm:$0x1]
    %v778 = vlaneseq
    %v779 = vshrl.u32 %v778, 7
    %v780 = vsub.s32 0, %v779
    %v781 = vrot.slane %v776, %v780
    %v784 = vsel %vm658, %v690, 0
    %786 = vmatprep.subr.mxu0 0.0
    %787 = vmatpush1.msra.mxu0 %v768
    %788 = vmatprep.subr.mxu0 0.0
    %789 = vmatpush1.msra.mxu0 %v769
    %790 = vmatprep.subr.mxu0 0.0
    %791 = vmatpush1.msra.mxu0 %v770
    %792 = vmatprep.subr.mxu0 0.0
    %793 = vmatpush1.msra.mxu0 %v771
    %794 = vmatprep.subr.mxu0 0.0
    %795 = vmatpush1.msra.mxu0 %v772
    %796 = vmatprep.subr.mxu0 0.0
    %797 = vmatpush1.msra.mxu0 %v773
    %798 = vmatprep.subr.mxu0 0.0
    %799 = vmatpush1.msra.mxu0 %v774
    %800 = vmatprep.subr.mxu0 0.0
    %801 = vmatpush1.msra.mxu0 %v775
    %802 = vmatprep.subr.mxu0 0.0
    %803 = vmatpush1.msra.mxu0 0.0
    %804 = vmatprep.subr.mxu0 0.0
    %805 = vmatpush1.msra.mxu0 0.0
    %806 = vmatprep.subr.mxu0 0.0
    %807 = vmatpush1.msra.mxu0 0.0
    %808 = vmatprep.subr.mxu0 0.0
    %809 = vmatpush1.msra.mxu0 0.0
    %810 = vmatprep.subr.mxu0 0.0
    %811 = vmatpush1.msra.mxu0 0.0
    %812 = vmatprep.subr.mxu0 0.0
    %813 = vmatpush1.msra.mxu0 0.0
    %814 = vmatprep.subr.mxu0 0.0
    %815 = vmatpush1.msra.mxu0 0.0
    %816 = vmatprep.subr.mxu0 0.0
    %817 = vmatpush1.msra.mxu0 0.0
    %818 = vmatprep.subr.mxu0 0.0
    %819 = vmatpush1.msra.mxu0 0.0
    %820 = vmatprep.subr.mxu0 0.0
    %821 = vmatpush1.msra.mxu0 0.0
    %822 = vmatprep.subr.mxu0 0.0
    %823 = vmatpush1.msra.mxu0 0.0
    %824 = vmatprep.subr.mxu0 0.0
    %825 = vmatpush1.msra.mxu0 0.0
    %826 = vmatprep.subr.mxu0 0.0
    %827 = vmatpush1.msra.mxu0 0.0
    %828 = vmatprep.subr.mxu0 0.0
    %829 = vmatpush1.msra.mxu0 0.0
    %830 = vmatprep.subr.mxu0 0.0
    %831 = vmatpush1.msra.mxu0 0.0
    %832 = vmatprep.subr.mxu0 0.0
    %833 = vmatpush1.msra.mxu0 0.0
    %834 = vmatprep.subr.mxu0 0.0
    %835 = vmatpush1.msra.mxu0 0.0
    %836 = vmatprep.subr.mxu0 0.0
    %837 = vmatpush1.msra.mxu0 0.0
    %838 = vmatprep.subr.mxu0 0.0
    %839 = vmatpush1.msra.mxu0 0.0
    %840 = vmatprep.subr.mxu0 0.0
    %841 = vmatpush1.msra.mxu0 0.0
    %842 = vmatprep.subr.mxu0 0.0
    %843 = vmatpush1.msra.mxu0 0.0
    %844 = vmatprep.subr.mxu0 0.0
    %845 = vmatpush1.msra.mxu0 0.0
    %846 = vmatprep.subr.mxu0 0.0
    %847 = vmatpush1.msra.mxu0 0.0
    %848 = vmatprep.subr.mxu0 0.0
    %849 = vmatpush1.msra.mxu0 0.0
    %850 = vmatprep.mubr.f32.mxu0 0.0
    %851 = vmatmul.mubr.f32.gmra.mrb[0].mxu0 %v784
    %v852 = vpop.f32.mrb[0].mxu0
    %v853 = vadd.f32 %v781, %v852
    %v854 = vpop.f32.mrb[0].mxu0
    %855 = vdwg.mxu0
    %v856 = vxor.u32 %v853, 2147483648
    %v857 = vmul.f32 %v856, 1.442695
    %v858 = vpow.pop %v857
    %v859 = vadd.f32 %v858, 1.0
    %v860 = vrcp.pop %v859
    %v861 = vmul.f32 1.0, %v860
    %v862 = vld [vmem:[%s23] sm:$0xff]
    %v863 = vld [vmem:[%s23 + $0x8] sm:$0xff]
    %v864 = vld [vmem:[%s23 + $0x10] sm:$0xff]
    %v865 = vld [vmem:[%s23 + $0x18] sm:$0xff]
    %v866 = vld [vmem:[%s23 + $0x20] sm:$0xff]
    %v867 = vld [vmem:[%s23 + $0x28] sm:$0xff]
    %v868 = vld [vmem:[%s23 + $0x30] sm:$0xff]
    %v869 = vld [vmem:[%s23 + $0x38] sm:$0xff]
    %v870 = vld [vmem:[#allocation18] sm:$0x1]
    %v872 = vlaneseq
    %v873 = vshrl.u32 %v872, 7
    %v874 = vsub.s32 0, %v873
    %v875 = vrot.slane %v870, %v874
    %878 = vrot.lane.b32.xlu0 %v734, 64
    %v879 = vpop.permute.xlu0 %878
    %v880 = vsel %vm658, %v879, 0
    %882 = vmatprep.subr.mxu0 0.0
    %883 = vmatpush1.msra.mxu0 %v862
    %884 = vmatprep.subr.mxu0 0.0
    %885 = vmatpush1.msra.mxu0 %v863
    %886 = vmatprep.subr.mxu0 0.0
    %887 = vmatpush1.msra.mxu0 %v864
    %888 = vmatprep.subr.mxu0 0.0
    %889 = vmatpush1.msra.mxu0 %v865
    %890 = vmatprep.subr.mxu0 0.0
    %891 = vmatpush1.msra.mxu0 %v866
    %892 = vmatprep.subr.mxu0 0.0
    %893 = vmatpush1.msra.mxu0 %v867
    %894 = vmatprep.subr.mxu0 0.0
    %895 = vmatpush1.msra.mxu0 %v868
    %896 = vmatprep.subr.mxu0 0.0
    %897 = vmatpush1.msra.mxu0 %v869
    %898 = vmatprep.subr.mxu0 0.0
    %899 = vmatpush1.msra.mxu0 0.0
    %900 = vmatprep.subr.mxu0 0.0
    %901 = vmatpush1.msra.mxu0 0.0
    %902 = vmatprep.subr.mxu0 0.0
    %903 = vmatpush1.msra.mxu0 0.0
    %904 = vmatprep.subr.mxu0 0.0
    %905 = vmatpush1.msra.mxu0 0.0
    %906 = vmatprep.subr.mxu0 0.0
    %907 = vmatpush1.msra.mxu0 0.0
    %908 = vmatprep.subr.mxu0 0.0
    %909 = vmatpush1.msra.mxu0 0.0
    %910 = vmatprep.subr.mxu0 0.0
    %911 = vmatpush1.msra.mxu0 0.0
    %912 = vmatprep.subr.mxu0 0.0
    %913 = vmatpush1.msra.mxu0 0.0
    %914 = vmatprep.subr.mxu0 0.0
    %915 = vmatpush1.msra.mxu0 0.0
    %916 = vmatprep.subr.mxu0 0.0
    %917 = vmatpush1.msra.mxu0 0.0
    %918 = vmatprep.subr.mxu0 0.0
    %919 = vmatpush1.msra.mxu0 0.0
    %920 = vmatprep.subr.mxu0 0.0
    %921 = vmatpush1.msra.mxu0 0.0
    %922 = vmatprep.subr.mxu0 0.0
    %923 = vmatpush1.msra.mxu0 0.0
    %924 = vmatprep.subr.mxu0 0.0
    %925 = vmatpush1.msra.mxu0 0.0
    %926 = vmatprep.subr.mxu0 0.0
    %927 = vmatpush1.msra.mxu0 0.0
    %928 = vmatprep.subr.mxu0 0.0
    %929 = vmatpush1.msra.mxu0 0.0
    %930 = vmatprep.subr.mxu0 0.0
    %931 = vmatpush1.msra.mxu0 0.0
    %932 = vmatprep.subr.mxu0 0.0
    %933 = vmatpush1.msra.mxu0 0.0
    %934 = vmatprep.subr.mxu0 0.0
    %935 = vmatpush1.msra.mxu0 0.0
    %936 = vmatprep.subr.mxu0 0.0
    %937 = vmatpush1.msra.mxu0 0.0
    %938 = vmatprep.subr.mxu0 0.0
    %939 = vmatpush1.msra.mxu0 0.0
    %940 = vmatprep.subr.mxu0 0.0
    %941 = vmatpush1.msra.mxu0 0.0
    %942 = vmatprep.subr.mxu0 0.0
    %943 = vmatpush1.msra.mxu0 0.0
    %944 = vmatprep.subr.mxu0 0.0
    %945 = vmatpush1.msra.mxu0 0.0
    %946 = vmatprep.mubr.f32.mxu0 0.0
    %947 = vmatmul.mubr.f32.gmra.mrb[0].mxu0 %v880
    %v948 = vpop.f32.mrb[0].mxu0
    %v949 = vadd.f32 %v875, %v948
    %v950 = vpop.f32.mrb[0].mxu0
    %951 = vdwg.mxu0
    %v952 = vxor.u32 %v949, 2147483648
    %v953 = vmul.f32 %v952, 1.442695
    %v954 = vpow.pop %v953
    %v955 = vadd.f32 %v954, 1.0
    %v956 = vrcp.pop %v955
    %v957 = vmul.f32 1.0, %v956
    %958 = vst.msk [vmem:[#allocation50] sm:$0xff] %vm581, %v957
    %v959 = vld [vmem:[%s27] sm:$0xff]
    %v960 = vld [vmem:[%s27 + $0x8] sm:$0xff]
    %v961 = vld [vmem:[%s27 + $0x10] sm:$0xff]
    %v962 = vld [vmem:[%s27 + $0x18] sm:$0xff]
    %v963 = vld [vmem:[%s27 + $0x20] sm:$0xff]
    %v964 = vld [vmem:[%s27 + $0x28] sm:$0xff]
    %v965 = vld [vmem:[%s27 + $0x30] sm:$0xff]
    %v966 = vld [vmem:[%s27 + $0x38] sm:$0xff]
    %v967 = vld [vmem:[#allocation20] sm:$0x1]
    %v969 = vlaneseq
    %v970 = vshrl.u32 %v969, 7
    %v971 = vsub.s32 0, %v970
    %v972 = vrot.slane %v967, %v971
    %v975 = vsel %vm658, %v767, 0
    %977 = vmatprep.subr.mxu0 0.0
    %978 = vmatpush1.msra.mxu0 %v959
    %979 = vmatprep.subr.mxu0 0.0
    %980 = vmatpush1.msra.mxu0 %v960
    %981 = vmatprep.subr.mxu0 0.0
    %982 = vmatpush1.msra.mxu0 %v961
    %983 = vmatprep.subr.mxu0 0.0
    %984 = vmatpush1.msra.mxu0 %v962
    %985 = vmatprep.subr.mxu0 0.0
    %986 = vmatpush1.msra.mxu0 %v963
    %987 = vmatprep.subr.mxu0 0.0
    %988 = vmatpush1.msra.mxu0 %v964
    %989 = vmatprep.subr.mxu0 0.0
    %990 = vmatpush1.msra.mxu0 %v965
    %991 = vmatprep.subr.mxu0 0.0
    %992 = vmatpush1.msra.mxu0 %v966
    %993 = vmatprep.subr.mxu0 0.0
    %994 = vmatpush1.msra.mxu0 0.0
    %995 = vmatprep.subr.mxu0 0.0
    %996 = vmatpush1.msra.mxu0 0.0
    %997 = vmatprep.subr.mxu0 0.0
    %998 = vmatpush1.msra.mxu0 0.0
    %999 = vmatprep.subr.mxu0 0.0
    %1000 = vmatpush1.msra.mxu0 0.0
    %1001 = vmatprep.subr.mxu0 0.0
    %1002 = vmatpush1.msra.mxu0 0.0
    %1003 = vmatprep.subr.mxu0 0.0
    %1004 = vmatpush1.msra.mxu0 0.0
    %1005 = vmatprep.subr.mxu0 0.0
    %1006 = vmatpush1.msra.mxu0 0.0
    %1007 = vmatprep.subr.mxu0 0.0
    %1008 = vmatpush1.msra.mxu0 0.0
    %1009 = vmatprep.subr.mxu0 0.0
    %1010 = vmatpush1.msra.mxu0 0.0
    %1011 = vmatprep.subr.mxu0 0.0
    %1012 = vmatpush1.msra.mxu0 0.0
    %1013 = vmatprep.subr.mxu0 0.0
    %1014 = vmatpush1.msra.mxu0 0.0
    %1015 = vmatprep.subr.mxu0 0.0
    %1016 = vmatpush1.msra.mxu0 0.0
    %1017 = vmatprep.subr.mxu0 0.0
    %1018 = vmatpush1.msra.mxu0 0.0
    %1019 = vmatprep.subr.mxu0 0.0
    %1020 = vmatpush1.msra.mxu0 0.0
    %1021 = vmatprep.subr.mxu0 0.0
    %1022 = vmatpush1.msra.mxu0 0.0
    %1023 = vmatprep.subr.mxu0 0.0
    %1024 = vmatpush1.msra.mxu0 0.0
    %1025 = vmatprep.subr.mxu0 0.0
    %1026 = vmatpush1.msra.mxu0 0.0
    %1027 = vmatprep.subr.mxu0 0.0
    %1028 = vmatpush1.msra.mxu0 0.0
    %1029 = vmatprep.subr.mxu0 0.0
    %1030 = vmatpush1.msra.mxu0 0.0
    %1031 = vmatprep.subr.mxu0 0.0
    %1032 = vmatpush1.msra.mxu0 0.0
    %1033 = vmatprep.subr.mxu0 0.0
    %1034 = vmatpush1.msra.mxu0 0.0
    %1035 = vmatprep.subr.mxu0 0.0
    %1036 = vmatpush1.msra.mxu0 0.0
    %1037 = vmatprep.subr.mxu0 0.0
    %1038 = vmatpush1.msra.mxu0 0.0
    %1039 = vmatprep.subr.mxu0 0.0
    %1040 = vmatpush1.msra.mxu0 0.0
    %1041 = vmatprep.mubr.f32.mxu0 0.0
    %1042 = vmatmul.mubr.f32.gmra.mrb[0].mxu0 %v975
    %v1043 = vpop.f32.mrb[0].mxu0
    %v1044 = vadd.f32 %v972, %v1043
    %v1045 = vpop.f32.mrb[0].mxu0
    %1046 = vdwg.mxu0
    %v1047 = vld [vmem:[#allocation21] sm:$0xff]
    %v1048 = vld [vmem:[#allocation21 + $0x8] sm:$0xff]
    %v1049 = vld [vmem:[#allocation21 + $0x10] sm:$0xff]
    %v1050 = vld [vmem:[#allocation21 + $0x18] sm:$0xff]
    %v1051 = vld [vmem:[#allocation23] sm:$0x1]
    %v1053 = vlaneseq
    %v1054 = vshrl.u32 %v1053, 7
    %v1055 = vsub.s32 0, %v1054
    %v1056 = vrot.slane %v1051, %v1055
    %1058 = vmatprep.subr.mxu0 0.0
    %1059 = vmatpush1.msra.mxu0 %v1047
    %1060 = vmatprep.subr.mxu0 0.0
    %1061 = vmatpush1.msra.mxu0 %v1048
    %1062 = vmatprep.subr.mxu0 0.0
    %1063 = vmatpush1.msra.mxu0 %v1049
    %1064 = vmatprep.subr.mxu0 0.0
    %1065 = vmatpush1.msra.mxu0 %v1050
    %1066 = vmatprep.subr.mxu0 0.0
    %1067 = vmatpush1.msra.mxu0 0.0
    %1068 = vmatprep.subr.mxu0 0.0
    %1069 = vmatpush1.msra.mxu0 0.0
    %1070 = vmatprep.subr.mxu0 0.0
    %1071 = vmatpush1.msra.mxu0 0.0
    %1072 = vmatprep.subr.mxu0 0.0
    %1073 = vmatpush1.msra.mxu0 0.0
    %1074 = vmatprep.subr.mxu0 0.0
    %1075 = vmatpush1.msra.mxu0 0.0
    %1076 = vmatprep.subr.mxu0 0.0
    %1077 = vmatpush1.msra.mxu0 0.0
    %1078 = vmatprep.subr.mxu0 0.0
    %1079 = vmatpush1.msra.mxu0 0.0
    %1080 = vmatprep.subr.mxu0 0.0
    %1081 = vmatpush1.msra.mxu0 0.0
    %1082 = vmatprep.subr.mxu0 0.0
    %1083 = vmatpush1.msra.mxu0 0.0
    %1084 = vmatprep.subr.mxu0 0.0
    %1085 = vmatpush1.msra.mxu0 0.0
    %1086 = vmatprep.subr.mxu0 0.0
    %1087 = vmatpush1.msra.mxu0 0.0
    %1088 = vmatprep.subr.mxu0 0.0
    %1089 = vmatpush1.msra.mxu0 0.0
    %1090 = vmatprep.subr.mxu0 0.0
    %1091 = vmatpush1.msra.mxu0 0.0
    %1092 = vmatprep.subr.mxu0 0.0
    %1093 = vmatpush1.msra.mxu0 0.0
    %1094 = vmatprep.subr.mxu0 0.0
    %1095 = vmatpush1.msra.mxu0 0.0
    %1096 = vmatprep.subr.mxu0 0.0
    %1097 = vmatpush1.msra.mxu0 0.0
    %1098 = vmatprep.subr.mxu0 0.0
    %1099 = vmatpush1.msra.mxu0 0.0
    %1100 = vmatprep.subr.mxu0 0.0
    %1101 = vmatpush1.msra.mxu0 0.0
    %1102 = vmatprep.subr.mxu0 0.0
    %1103 = vmatpush1.msra.mxu0 0.0
    %1104 = vmatprep.subr.mxu0 0.0
    %1105 = vmatpush1.msra.mxu0 0.0
    %1106 = vmatprep.subr.mxu0 0.0
    %1107 = vmatpush1.msra.mxu0 0.0
    %1108 = vmatprep.subr.mxu0 0.0
    %1109 = vmatpush1.msra.mxu0 0.0
    %1110 = vmatprep.subr.mxu0 0.0
    %1111 = vmatpush1.msra.mxu0 0.0
    %1112 = vmatprep.subr.mxu0 0.0
    %1113 = vmatpush1.msra.mxu0 0.0
    %1114 = vmatprep.subr.mxu0 0.0
    %1115 = vmatpush1.msra.mxu0 0.0
    %1116 = vmatprep.subr.mxu0 0.0
    %1117 = vmatpush1.msra.mxu0 0.0
    %1118 = vmatprep.subr.mxu0 0.0
    %1119 = vmatpush1.msra.mxu0 0.0
    %1120 = vmatprep.subr.mxu0 0.0
    %1121 = vmatpush1.msra.mxu0 0.0
    %1122 = vmatprep.mubr.f32.mxu0 0.0
    %1123 = vmatmul.mubr.f32.gmra.mrb[0].mxu0 %v583
    %v1124 = vpop.f32.mrb[0].mxu0
    %v1125 = vadd.f32 %v1056, %v1124
    %v1126 = vpop.f32.mrb[0].mxu0
    %1127 = vdwg.mxu0
    %v1128 = vld [vmem:[#allocation24] sm:$0x1]
    %v1129 = vld [vmem:[#allocation26] sm:$0x1]
    %v1130 = vsel %vm658, %v1125, 0.0
    %1131 = vadd.xlane.f32.xlu0 %v1130
    %v1132 = vpop.xlane.xlu0 %1131
    %v1133 = vmul.f32 %v1132, %v662
    %v1134 = vmul.f32 %v1125, %v1125
    %v1135 = vsel %vm658, %v1134, 0.0
    %1136 = vadd.xlane.f32.xlu0 %v1135
    %v1137 = vpop.xlane.xlu0 %1136
    %v1138 = vmul.f32 %v1137, %v662
    %v1139 = vmul.f32 %v1133, %v1133
    %v1140 = vsub.f32 %v1138, %v1139
    %v1141 = vmax.f32 %v1140, 0.0
    %v1142 = vsub.f32 %v1125, %v1133
    %v1143 = vadd.f32 %v1141, 1e-05
    %v1144 = vrsqrt.pop %v1143
    %v1145 = vmul.f32 %v1142, %v1144
    %v1147 = vlaneseq
    %v1148 = vshrl.u32 %v1147, 7
    %v1149 = vsub.s32 0, %v1148
    %v1150 = vrot.slane %v1128, %v1149
    %v1152 = vmul.f32 %v1145, %v1150
    %v1154 = vlaneseq
    %v1155 = vshrl.u32 %v1154, 7
    %v1156 = vsub.s32 0, %v1155
    %v1157 = vrot.slane %v1129, %v1156
    %v1159 = vadd.f32 %v1152, %v1157
    %v1160 = vmax.f32 %v1159, 0.0
    %v1161 = vld [vmem:[%s39] sm:$0xff]
    %v1162 = vld [vmem:[%s39 + $0x8] sm:$0xff]
    %v1163 = vld [vmem:[%s39 + $0x10] sm:$0xff]
    %v1164 = vld [vmem:[%s39 + $0x18] sm:$0xff]
    %v1165 = vld [vmem:[%s39 + $0x20] sm:$0xff]
    %v1166 = vld [vmem:[%s39 + $0x28] sm:$0xff]
    %v1167 = vld [vmem:[%s39 + $0x30] sm:$0xff]
    %v1168 = vld [vmem:[%s39 + $0x38] sm:$0xff]
    %v1169 = vld [vmem:[#allocation27] sm:$0x1]
    %v1171 = vlaneseq
    %v1172 = vshrl.u32 %v1171, 7
    %v1173 = vsub.s32 0, %v1172
    %v1174 = vrot.slane %v1169, %v1173
    %v1177 = vsel %vm658, %v1160, 0
    %1179 = vmatprep.subr.mxu0 0.0
    %1180 = vmatpush1.msra.mxu0 %v1161
    %1181 = vmatprep.subr.mxu0 0.0
    %1182 = vmatpush1.msra.mxu0 %v1162
    %1183 = vmatprep.subr.mxu0 0.0
    %1184 = vmatpush1.msra.mxu0 %v1163
    %1185 = vmatprep.subr.mxu0 0.0
    %1186 = vmatpush1.msra.mxu0 %v1164
    %1187 = vmatprep.subr.mxu0 0.0
    %1188 = vmatpush1.msra.mxu0 %v1165
    %1189 = vmatprep.subr.mxu0 0.0
    %1190 = vmatpush1.msra.mxu0 %v1166
    %1191 = vmatprep.subr.mxu0 0.0
    %1192 = vmatpush1.msra.mxu0 %v1167
    %1193 = vmatprep.subr.mxu0 0.0
    %1194 = vmatpush1.msra.mxu0 %v1168
    %1195 = vmatprep.subr.mxu0 0.0
    %1196 = vmatpush1.msra.mxu0 0.0
    %1197 = vmatprep.subr.mxu0 0.0
    %1198 = vmatpush1.msra.mxu0 0.0
    %1199 = vmatprep.subr.mxu0 0.0
    %1200 = vmatpush1.msra.mxu0 0.0
    %1201 = vmatprep.subr.mxu0 0.0
    %1202 = vmatpush1.msra.mxu0 0.0
    %1203 = vmatprep.subr.mxu0 0.0
    %1204 = vmatpush1.msra.mxu0 0.0
    %1205 = vmatprep.subr.mxu0 0.0
    %1206 = vmatpush1.msra.mxu0 0.0
    %1207 = vmatprep.subr.mxu0 0.0
    %1208 = vmatpush1.msra.mxu0 0.0
    %1209 = vmatprep.subr.mxu0 0.0
    %1210 = vmatpush1.msra.mxu0 0.0
    %1211 = vmatprep.subr.mxu0 0.0
    %1212 = vmatpush1.msra.mxu0 0.0
    %1213 = vmatprep.subr.mxu0 0.0
    %1214 = vmatpush1.msra.mxu0 0.0
    %1215 = vmatprep.subr.mxu0 0.0
    %1216 = vmatpush1.msra.mxu0 0.0
    %1217 = vmatprep.subr.mxu0 0.0
    %1218 = vmatpush1.msra.mxu0 0.0
    %1219 = vmatprep.subr.mxu0 0.0
    %1220 = vmatpush1.msra.mxu0 0.0
    %1221 = vmatprep.subr.mxu0 0.0
    %1222 = vmatpush1.msra.mxu0 0.0
    %1223 = vmatprep.subr.mxu0 0.0
    %1224 = vmatpush1.msra.mxu0 0.0
    %1225 = vmatprep.subr.mxu0 0.0
    %1226 = vmatpush1.msra.mxu0 0.0
    %1227 = vmatprep.subr.mxu0 0.0
    %1228 = vmatpush1.msra.mxu0 0.0
    %1229 = vmatprep.subr.mxu0 0.0
    %1230 = vmatpush1.msra.mxu0 0.0
    %1231 = vmatprep.subr.mxu0 0.0
    %1232 = vmatpush1.msra.mxu0 0.0
    %1233 = vmatprep.subr.mxu0 0.0
    %1234 = vmatpush1.msra.mxu0 0.0
    %1235 = vmatprep.subr.mxu0 0.0
    %1236 = vmatpush1.msra.mxu0 0.0
    %1237 = vmatprep.subr.mxu0 0.0
    %1238 = vmatpush1.msra.mxu0 0.0
    %1239 = vmatprep.subr.mxu0 0.0
    %1240 = vmatpush1.msra.mxu0 0.0
    %1241 = vmatprep.subr.mxu0 0.0
    %1242 = vmatpush1.msra.mxu0 0.0
    %1243 = vmatprep.mubr.f32.mxu0 0.0
    %1244 = vmatmul.mubr.f32.gmra.mrb[0].mxu0 %v1177
    %v1245 = vpop.f32.mrb[0].mxu0
    %v1246 = vadd.f32 %v1174, %v1245
    %v1247 = vpop.f32.mrb[0].mxu0
    %1248 = vdwg.mxu0
    %v1249 = vld [vmem:[#allocation29] sm:$0x1]
    %v1250 = vld [vmem:[#allocation30] sm:$0x1]
    %v1251 = vsel %vm658, %v1246, 0.0
    %1252 = vadd.xlane.f32.xlu0 %v1251
    %v1253 = vpop.xlane.xlu0 %1252
    %v1254 = vmul.f32 %v1253, %v662
    %v1255 = vmul.f32 %v1246, %v1246
    %v1256 = vsel %vm658, %v1255, 0.0
    %1257 = vadd.xlane.f32.xlu0 %v1256
    %v1258 = vpop.xlane.xlu0 %1257
    %v1259 = vmul.f32 %v1258, %v662
    %v1260 = vmul.f32 %v1254, %v1254
    %v1261 = vsub.f32 %v1259, %v1260
    %v1262 = vmax.f32 %v1261, 0.0
    %v1263 = vsub.f32 %v1246, %v1254
    %v1264 = vadd.f32 %v1262, 1e-05
    %v1265 = vrsqrt.pop %v1264
    %v1266 = vmul.f32 %v1263, %v1265
    %v1268 = vlaneseq
    %v1269 = vshrl.u32 %v1268, 7
    %v1270 = vsub.s32 0, %v1269
    %v1271 = vrot.slane %v1249, %v1270
    %v1273 = vmul.f32 %v1266, %v1271
    %v1275 = vlaneseq
    %v1276 = vshrl.u32 %v1275, 7
    %v1277 = vsub.s32 0, %v1276
    %v1278 = vrot.slane %v1250, %v1277
    %v1280 = vadd.f32 %v1273, %v1278
    %v1281 = vmax.f32 %v1280, 0.0
    %v1282 = vld [vmem:[%s47] sm:$0xff]
    %v1283 = vld [vmem:[%s47 + $0x8] sm:$0xff]
    %v1284 = vld [vmem:[%s47 + $0x10] sm:$0xff]
    %v1285 = vld [vmem:[%s47 + $0x18] sm:$0xff]
    %v1286 = vld [vmem:[%s47 + $0x20] sm:$0xff]
    %v1287 = vld [vmem:[%s47 + $0x28] sm:$0xff]
    %v1288 = vld [vmem:[%s47 + $0x30] sm:$0xff]
    %v1289 = vld [vmem:[%s47 + $0x38] sm:$0xff]
    %v1290 = vld [vmem:[%s47 + $0x40] sm:$0xff]
    %v1291 = vld [vmem:[%s47 + $0x48] sm:$0xff]
    %v1292 = vld [vmem:[%s47 + $0x50] sm:$0xff]
    %v1293 = vld [vmem:[%s47 + $0x58] sm:$0xff]
    %v1294 = vld [vmem:[%s47 + $0x60] sm:$0xff]
    %v1295 = vld [vmem:[%s47 + $0x68] sm:$0xff]
    %v1296 = vld [vmem:[%s47 + $0x70] sm:$0xff]
    %v1297 = vld [vmem:[%s47 + $0x78] sm:$0xff]
    %v1298 = vld [vmem:[#allocation32] sm:$0x3]
    %v1300 = vlaneseq
    %v1301 = vshrl.u32 %v1300, 7
    %v1302 = vsub.s32 0, %v1301
    %v1303 = vrot.slane %v1298, %v1302
    %v1304 = vlaneseq
    %v1305 = vshrl.u32 %v1304, 7
    %v1306 = vsub.s32 1, %v1305
    %v1307 = vrot.slane %v1298, %v1306
    %v1311 = vsel %vm658, %v1281, 0
    %1313 = vmatprep.subr.mxu0 %v1283
    %1314 = vmatpush1.msra.mxu0 %v1282
    %1315 = vmatprep.subr.mxu0 %v1285
    %1316 = vmatpush1.msra.mxu0 %v1284
    %1317 = vmatprep.subr.mxu0 %v1287
    %1318 = vmatpush1.msra.mxu0 %v1286
    %1319 = vmatprep.subr.mxu0 %v1289
    %1320 = vmatpush1.msra.mxu0 %v1288
    %1321 = vmatprep.subr.mxu0 %v1291
    %1322 = vmatpush1.msra.mxu0 %v1290
    %1323 = vmatprep.subr.mxu0 %v1293
    %1324 = vmatpush1.msra.mxu0 %v1292
    %1325 = vmatprep.subr.mxu0 %v1295
    %1326 = vmatpush1.msra.mxu0 %v1294
    %1327 = vmatprep.subr.mxu0 %v1297
    %1328 = vmatpush1.msra.mxu0 %v1296
    %1329 = vmatprep.subr.mxu0 0.0
    %1330 = vmatpush1.msra.mxu0 0.0
    %1331 = vmatprep.subr.mxu0 0.0
    %1332 = vmatpush1.msra.mxu0 0.0
    %1333 = vmatprep.subr.mxu0 0.0
    %1334 = vmatpush1.msra.mxu0 0.0
    %1335 = vmatprep.subr.mxu0 0.0
    %1336 = vmatpush1.msra.mxu0 0.0
    %1337 = vmatprep.subr.mxu0 0.0
    %1338 = vmatpush1.msra.mxu0 0.0
    %1339 = vmatprep.subr.mxu0 0.0
    %1340 = vmatpush1.msra.mxu0 0.0
    %1341 = vmatprep.subr.mxu0 0.0
    %1342 = vmatpush1.msra.mxu0 0.0
    %1343 = vmatprep.subr.mxu0 0.0
    %1344 = vmatpush1.msra.mxu0 0.0
    %1345 = vmatprep.subr.mxu0 0.0
    %1346 = vmatpush1.msra.mxu0 0.0
    %1347 = vmatprep.subr.mxu0 0.0
    %1348 = vmatpush1.msra.mxu0 0.0
    %1349 = vmatprep.subr.mxu0 0.0
    %1350 = vmatpush1.msra.mxu0 0.0
    %1351 = vmatprep.subr.mxu0 0.0
    %1352 = vmatpush1.msra.mxu0 0.0
    %1353 = vmatprep.subr.mxu0 0.0
    %1354 = vmatpush1.msra.mxu0 0.0
    %1355 = vmatprep.subr.mxu0 0.0
    %1356 = vmatpush1.msra.mxu0 0.0
    %1357 = vmatprep.subr.mxu0 0.0
    %1358 = vmatpush1.msra.mxu0 0.0
    %1359 = vmatprep.subr.mxu0 0.0
    %1360 = vmatpush1.msra.mxu0 0.0
    %1361 = vmatprep.subr.mxu0 0.0
    %1362 = vmatpush1.msra.mxu0 0.0
    %1363 = vmatprep.subr.mxu0 0.0
    %1364 = vmatpush1.msra.mxu0 0.0
    %1365 = vmatprep.subr.mxu0 0.0
    %1366 = vmatpush1.msra.mxu0 0.0
    %1367 = vmatprep.subr.mxu0 0.0
    %1368 = vmatpush1.msra.mxu0 0.0
    %1369 = vmatprep.subr.mxu0 0.0
    %1370 = vmatpush1.msra.mxu0 0.0
    %1371 = vmatprep.subr.mxu0 0.0
    %1372 = vmatpush1.msra.mxu0 0.0
    %1373 = vmatprep.subr.mxu0 0.0
    %1374 = vmatpush1.msra.mxu0 0.0
    %1375 = vmatprep.subr.mxu0 0.0
    %1376 = vmatpush1.msra.mxu0 0.0
    %1377 = vmatprep.mubr.f32.mxu0 0.0
    %1378 = vmatmul.mubr.f32.gmra.mrb[0].mxu0 %v1311
    %v1379 = vpop.f32.mrb[0].mxu0
    %v1380 = vadd.f32 %v1303, %v1379
    %v1381 = vpop.f32.mrb[0].mxu0
    %v1382 = vadd.f32 %v1307, %v1381
    %1383 = vdwg.mxu0
    %v1384 = vmul.f32 %v861, %v1380
    %v1385 = vadd.f32 %v560, %v1384
    %1386 = vst.msk [vmem:[#allocation51] sm:$0xff] %vm581, %v1385
    %1388 = vrot.lane.b32.xlu0 %v1380, 96
    %v1389 = vpop.permute.xlu0 %1388
    %v1391 = vmul.f32 %v861, %v1389
    %v1392 = vadd.f32 %v560, %v1391
    %s1393 = scalar_lea.vmem [#allocation51], 8
    %1394 = vst.msk [vmem:[%s1393] sm:$0xff] %vm581, %v1392
    %1395 = vrot.lane.b32.xlu0 %v1380, 64
    %v1396 = vpop.permute.xlu0 %1395
    %v1398 = vmul.f32 %v861, %v1396
    %v1399 = vadd.f32 %v560, %v1398
    %s1400 = scalar_lea.vmem [#allocation51], 16
    %1401 = vst.msk [vmem:[%s1400] sm:$0xff] %vm581, %v1399
    %1402 = vrot.lane.b32.xlu0 %v1380, 32
    %v1403 = vpop.permute.xlu0 %1402
    %v1405 = vmul.f32 %v861, %v1403
    %v1406 = vadd.f32 %v560, %v1405
    %s1407 = scalar_lea.vmem [#allocation51], 24
    %1408 = vst.msk [vmem:[%s1407] sm:$0xff] %vm581, %v1406
    %v1409 = vmul.f32 %v861, %v1382
    %v1410 = vadd.f32 %v560, %v1409
    %s1411 = scalar_lea.vmem [#allocation51], 32
    %1412 = vst.msk [vmem:[%s1411] sm:$0xff] %vm581, %v1410
    %v1413 = vld [vmem:[#allocation33] sm:$0xff]
    %v1414 = vld [vmem:[#allocation33 + $0x8] sm:$0xff]
    %v1415 = vld [vmem:[#allocation33 + $0x10] sm:$0xff]
    %v1416 = vld [vmem:[#allocation33 + $0x18] sm:$0xff]
    %v1417 = vld [vmem:[#allocation35] sm:$0x1]
    %v1419 = vlaneseq
    %v1420 = vshrl.u32 %v1419, 7
    %v1421 = vsub.s32 0, %v1420
    %v1422 = vrot.slane %v1417, %v1421
    %v1425 = vsel %vm581, %v1385, 0
    %v1428 = vsel %vm581, %v1392, 0
    %v1431 = vsel %vm581, %v1399, 0
    %v1434 = vsel %vm581, %v1406, 0
    %v1437 = vsel %vm581, %v1410, 0
    %1439 = vmatprep.subr.mxu0 0.0
    %1440 = vmatpush1.msra.mxu0 %v1413
    %1441 = vmatprep.subr.mxu0 0.0
    %1442 = vmatpush1.msra.mxu0 %v1414
    %1443 = vmatprep.subr.mxu0 0.0
    %1444 = vmatpush1.msra.mxu0 %v1415
    %1445 = vmatprep.subr.mxu0 0.0
    %1446 = vmatpush1.msra.mxu0 %v1416
    %1447 = vmatprep.subr.mxu0 0.0
    %1448 = vmatpush1.msra.mxu0 0.0
    %1449 = vmatprep.subr.mxu0 0.0
    %1450 = vmatpush1.msra.mxu0 0.0
    %1451 = vmatprep.subr.mxu0 0.0
    %1452 = vmatpush1.msra.mxu0 0.0
    %1453 = vmatprep.subr.mxu0 0.0
    %1454 = vmatpush1.msra.mxu0 0.0
    %1455 = vmatprep.subr.mxu0 0.0
    %1456 = vmatpush1.msra.mxu0 0.0
    %1457 = vmatprep.subr.mxu0 0.0
    %1458 = vmatpush1.msra.mxu0 0.0
    %1459 = vmatprep.subr.mxu0 0.0
    %1460 = vmatpush1.msra.mxu0 0.0
    %1461 = vmatprep.subr.mxu0 0.0
    %1462 = vmatpush1.msra.mxu0 0.0
    %1463 = vmatprep.subr.mxu0 0.0
    %1464 = vmatpush1.msra.mxu0 0.0
    %1465 = vmatprep.subr.mxu0 0.0
    %1466 = vmatpush1.msra.mxu0 0.0
    %1467 = vmatprep.subr.mxu0 0.0
    %1468 = vmatpush1.msra.mxu0 0.0
    %1469 = vmatprep.subr.mxu0 0.0
    %1470 = vmatpush1.msra.mxu0 0.0
    %1471 = vmatprep.subr.mxu0 0.0
    %1472 = vmatpush1.msra.mxu0 0.0
    %1473 = vmatprep.subr.mxu0 0.0
    %1474 = vmatpush1.msra.mxu0 0.0
    %1475 = vmatprep.subr.mxu0 0.0
    %1476 = vmatpush1.msra.mxu0 0.0
    %1477 = vmatprep.subr.mxu0 0.0
    %1478 = vmatpush1.msra.mxu0 0.0
    %1479 = vmatprep.subr.mxu0 0.0
    %1480 = vmatpush1.msra.mxu0 0.0
    %1481 = vmatprep.subr.mxu0 0.0
    %1482 = vmatpush1.msra.mxu0 0.0
    %1483 = vmatprep.subr.mxu0 0.0
    %1484 = vmatpush1.msra.mxu0 0.0
    %1485 = vmatprep.subr.mxu0 0.0
    %1486 = vmatpush1.msra.mxu0 0.0
    %1487 = vmatprep.subr.mxu0 0.0
    %1488 = vmatpush1.msra.mxu0 0.0
    %1489 = vmatprep.subr.mxu0 0.0
    %1490 = vmatpush1.msra.mxu0 0.0
    %1491 = vmatprep.subr.mxu0 0.0
    %1492 = vmatpush1.msra.mxu0 0.0
    %1493 = vmatprep.subr.mxu0 0.0
    %1494 = vmatpush1.msra.mxu0 0.0
    %1495 = vmatprep.subr.mxu0 0.0
    %1496 = vmatpush1.msra.mxu0 0.0
    %1497 = vmatprep.subr.mxu0 0.0
    %1498 = vmatpush1.msra.mxu0 0.0
    %1499 = vmatprep.subr.mxu0 0.0
    %1500 = vmatpush1.msra.mxu0 0.0
    %1501 = vmatprep.subr.mxu0 0.0
    %1502 = vmatpush1.msra.mxu0 0.0
    %1503 = vmatprep.mubr.f32.mxu0 0.0
    %1504 = vmatmul.mubr.f32.gmra.mrb[0].mxu0 %v1425
    %v1505 = vpop.f32.mrb[0].mxu0
    %v1506 = vadd.f32 %v1422, %v1505
    %v1507 = vpop.f32.mrb[0].mxu0
    %1508 = vmatprep.mubr.f32.mxu0 0.0
    %1509 = vmatmul.mubr.f32.gmra.mrb[0].mxu0 %v1428
    %v1510 = vpop.f32.mrb[0].mxu0
    %v1511 = vadd.f32 %v1422, %v1510
    %v1512 = vpop.f32.mrb[0].mxu0
    %1513 = vmatprep.mubr.f32.mxu0 0.0
    %1514 = vmatmul.mubr.f32.gmra.mrb[0].mxu0 %v1431
    %v1515 = vpop.f32.mrb[0].mxu0
    %v1516 = vadd.f32 %v1422, %v1515
    %v1517 = vpop.f32.mrb[0].mxu0
    %1518 = vmatprep.mubr.f32.mxu0 0.0
    %1519 = vmatmul.mubr.f32.gmra.mrb[0].mxu0 %v1434
    %v1520 = vpop.f32.mrb[0].mxu0
    %v1521 = vadd.f32 %v1422, %v1520
    %v1522 = vpop.f32.mrb[0].mxu0
    %1523 = vmatprep.mubr.f32.mxu0 0.0
    %1524 = vmatmul.mubr.f32.gmra.mrb[0].mxu0 %v1437
    %v1525 = vpop.f32.mrb[0].mxu0
    %v1526 = vadd.f32 %v1422, %v1525
    %v1527 = vpop.f32.mrb[0].mxu0
    %1528 = vdwg.mxu0
    %v1529 = vld [vmem:[#allocation36] sm:$0x1]
    %v1530 = vld [vmem:[#allocation38] sm:$0x1]
    %v1531 = vsel %vm658, %v1506, 0.0
    %1532 = vadd.xlane.f32.xlu0 %v1531
    %v1533 = vpop.xlane.xlu0 %1532
    %v1534 = vsel %vm658, %v1511, 0.0
    %1535 = vadd.xlane.f32.xlu0 %v1534
    %v1536 = vpop.xlane.xlu0 %1535
    %v1537 = vsel %vm658, %v1516, 0.0
    %1538 = vadd.xlane.f32.xlu0 %v1537
    %v1539 = vpop.xlane.xlu0 %1538
    %v1540 = vsel %vm658, %v1521, 0.0
    %1541 = vadd.xlane.f32.xlu0 %v1540
    %v1542 = vpop.xlane.xlu0 %1541
    %v1543 = vsel %vm658, %v1526, 0.0
    %1544 = vadd.xlane.f32.xlu0 %v1543
    %v1545 = vpop.xlane.xlu0 %1544
    %v1546 = vmul.f32 %v1533, %v662
    %v1547 = vmul.f32 %v1536, %v662
    %v1548 = vmul.f32 %v1539, %v662
    %v1549 = vmul.f32 %v1542, %v662
    %v1550 = vmul.f32 %v1545, %v662
    %v1551 = vmul.f32 %v1506, %v1506
    %v1552 = vmul.f32 %v1511, %v1511
    %v1553 = vmul.f32 %v1516, %v1516
    %v1554 = vmul.f32 %v1521, %v1521
    %v1555 = vmul.f32 %v1526, %v1526
    %v1556 = vsel %vm658, %v1551, 0.0
    %1557 = vadd.xlane.f32.xlu0 %v1556
    %v1558 = vpop.xlane.xlu0 %1557
    %v1559 = vsel %vm658, %v1552, 0.0
    %1560 = vadd.xlane.f32.xlu0 %v1559
    %v1561 = vpop.xlane.xlu0 %1560
    %v1562 = vsel %vm658, %v1553, 0.0
    %1563 = vadd.xlane.f32.xlu0 %v1562
    %v1564 = vpop.xlane.xlu0 %1563
    %v1565 = vsel %vm658, %v1554, 0.0
    %1566 = vadd.xlane.f32.xlu0 %v1565
    %v1567 = vpop.xlane.xlu0 %1566
    %v1568 = vsel %vm658, %v1555, 0.0
    %1569 = vadd.xlane.f32.xlu0 %v1568
    %v1570 = vpop.xlane.xlu0 %1569
    %v1571 = vmul.f32 %v1558, %v662
    %v1572 = vmul.f32 %v1561, %v662
    %v1573 = vmul.f32 %v1564, %v662
    %v1574 = vmul.f32 %v1567, %v662
    %v1575 = vmul.f32 %v1570, %v662
    %v1576 = vmul.f32 %v1546, %v1546
    %v1577 = vmul.f32 %v1547, %v1547
    %v1578 = vmul.f32 %v1548, %v1548
    %v1579 = vmul.f32 %v1549, %v1549
    %v1580 = vmul.f32 %v1550, %v1550
    %v1581 = vsub.f32 %v1571, %v1576
    %v1582 = vsub.f32 %v1572, %v1577
    %v1583 = vsub.f32 %v1573, %v1578
    %v1584 = vsub.f32 %v1574, %v1579
    %v1585 = vsub.f32 %v1575, %v1580
    %v1586 = vmax.f32 %v1581, 0.0
    %v1587 = vmax.f32 %v1582, 0.0
    %v1588 = vmax.f32 %v1583, 0.0
    %v1589 = vmax.f32 %v1584, 0.0
    %v1590 = vmax.f32 %v1585, 0.0
    %v1591 = vsub.f32 %v1506, %v1546
    %v1592 = vsub.f32 %v1511, %v1547
    %v1593 = vsub.f32 %v1516, %v1548
    %v1594 = vsub.f32 %v1521, %v1549
    %v1595 = vsub.f32 %v1526, %v1550
    %v1596 = vadd.f32 %v1586, 1e-05
    %v1597 = vadd.f32 %v1587, 1e-05
    %v1598 = vadd.f32 %v1588, 1e-05
    %v1599 = vadd.f32 %v1589, 1e-05
    %v1600 = vadd.f32 %v1590, 1e-05
    %v1601 = vrsqrt.pop %v1596
    %v1602 = vrsqrt.pop %v1597
    %v1603 = vrsqrt.pop %v1598
    %v1604 = vrsqrt.pop %v1599
    %v1605 = vrsqrt.pop %v1600
    %v1606 = vmul.f32 %v1591, %v1601
    %v1607 = vmul.f32 %v1592, %v1602
    %v1608 = vmul.f32 %v1593, %v1603
    %v1609 = vmul.f32 %v1594, %v1604
    %v1610 = vmul.f32 %v1595, %v1605
    %v1612 = vlaneseq
    %v1613 = vshrl.u32 %v1612, 7
    %v1614 = vsub.s32 0, %v1613
    %v1615 = vrot.slane %v1529, %v1614
    %v1617 = vmul.f32 %v1606, %v1615
    %v1618 = vmul.f32 %v1607, %v1615
    %v1619 = vmul.f32 %v1608, %v1615
    %v1620 = vmul.f32 %v1609, %v1615
    %v1621 = vmul.f32 %v1610, %v1615
    %v1623 = vlaneseq
    %v1624 = vshrl.u32 %v1623, 7
    %v1625 = vsub.s32 0, %v1624
    %v1626 = vrot.slane %v1530, %v1625
    %v1628 = vadd.f32 %v1617, %v1626
    %v1629 = vadd.f32 %v1618, %v1626
    %v1630 = vadd.f32 %v1619, %v1626
    %v1631 = vadd.f32 %v1620, %v1626
    %v1632 = vadd.f32 %v1621, %v1626
    %v1633 = vmax.f32 %v1628, 0.0
    %v1634 = vmax.f32 %v1629, 0.0
    %v1635 = vmax.f32 %v1630, 0.0
    %v1636 = vmax.f32 %v1631, 0.0
    %v1637 = vmax.f32 %v1632, 0.0
    %v1638 = vld [vmem:[%s59] sm:$0xff]
    %v1639 = vld [vmem:[%s59 + $0x8] sm:$0xff]
    %v1640 = vld [vmem:[%s59 + $0x10] sm:$0xff]
    %v1641 = vld [vmem:[%s59 + $0x18] sm:$0xff]
    %v1642 = vld [vmem:[%s59 + $0x20] sm:$0xff]
    %v1643 = vld [vmem:[%s59 + $0x28] sm:$0xff]
    %v1644 = vld [vmem:[%s59 + $0x30] sm:$0xff]
    %v1645 = vld [vmem:[%s59 + $0x38] sm:$0xff]
    %v1646 = vld [vmem:[#allocation39] sm:$0x1]
    %v1648 = vlaneseq
    %v1649 = vshrl.u32 %v1648, 7
    %v1650 = vsub.s32 0, %v1649
    %v1651 = vrot.slane %v1646, %v1650
    %v1654 = vsel %vm658, %v1633, 0
    %v1657 = vsel %vm658, %v1634, 0
    %v1660 = vsel %vm658, %v1635, 0
    %v1663 = vsel %vm658, %v1636, 0
    %v1666 = vsel %vm658, %v1637, 0
    %1668 = vmatprep.subr.mxu0 0.0
    %1669 = vmatpush1.msra.mxu0 %v1638
    %1670 = vmatprep.subr.mxu0 0.0
    %1671 = vmatpush1.msra.mxu0 %v1639
    %1672 = vmatprep.subr.mxu0 0.0
    %1673 = vmatpush1.msra.mxu0 %v1640
    %1674 = vmatprep.subr.mxu0 0.0
    %1675 = vmatpush1.msra.mxu0 %v1641
    %1676 = vmatprep.subr.mxu0 0.0
    %1677 = vmatpush1.msra.mxu0 %v1642
    %1678 = vmatprep.subr.mxu0 0.0
    %1679 = vmatpush1.msra.mxu0 %v1643
    %1680 = vmatprep.subr.mxu0 0.0
    %1681 = vmatpush1.msra.mxu0 %v1644
    %1682 = vmatprep.subr.mxu0 0.0
    %1683 = vmatpush1.msra.mxu0 %v1645
    %1684 = vmatprep.subr.mxu0 0.0
    %1685 = vmatpush1.msra.mxu0 0.0
    %1686 = vmatprep.subr.mxu0 0.0
    %1687 = vmatpush1.msra.mxu0 0.0
    %1688 = vmatprep.subr.mxu0 0.0
    %1689 = vmatpush1.msra.mxu0 0.0
    %1690 = vmatprep.subr.mxu0 0.0
    %1691 = vmatpush1.msra.mxu0 0.0
    %1692 = vmatprep.subr.mxu0 0.0
    %1693 = vmatpush1.msra.mxu0 0.0
    %1694 = vmatprep.subr.mxu0 0.0
    %1695 = vmatpush1.msra.mxu0 0.0
    %1696 = vmatprep.subr.mxu0 0.0
    %1697 = vmatpush1.msra.mxu0 0.0
    %1698 = vmatprep.subr.mxu0 0.0
    %1699 = vmatpush1.msra.mxu0 0.0
    %1700 = vmatprep.subr.mxu0 0.0
    %1701 = vmatpush1.msra.mxu0 0.0
    %1702 = vmatprep.subr.mxu0 0.0
    %1703 = vmatpush1.msra.mxu0 0.0
    %1704 = vmatprep.subr.mxu0 0.0
    %1705 = vmatpush1.msra.mxu0 0.0
    %1706 = vmatprep.subr.mxu0 0.0
    %1707 = vmatpush1.msra.mxu0 0.0
    %1708 = vmatprep.subr.mxu0 0.0
    %1709 = vmatpush1.msra.mxu0 0.0
    %1710 = vmatprep.subr.mxu0 0.0
    %1711 = vmatpush1.msra.mxu0 0.0
    %1712 = vmatprep.subr.mxu0 0.0
    %1713 = vmatpush1.msra.mxu0 0.0
    %1714 = vmatprep.subr.mxu0 0.0
    %1715 = vmatpush1.msra.mxu0 0.0
    %1716 = vmatprep.subr.mxu0 0.0
    %1717 = vmatpush1.msra.mxu0 0.0
    %1718 = vmatprep.subr.mxu0 0.0
    %1719 = vmatpush1.msra.mxu0 0.0
    %1720 = vmatprep.subr.mxu0 0.0
    %1721 = vmatpush1.msra.mxu0 0.0
    %1722 = vmatprep.subr.mxu0 0.0
    %1723 = vmatpush1.msra.mxu0 0.0
    %1724 = vmatprep.subr.mxu0 0.0
    %1725 = vmatpush1.msra.mxu0 0.0
    %1726 = vmatprep.subr.mxu0 0.0
    %1727 = vmatpush1.msra.mxu0 0.0
    %1728 = vmatprep.subr.mxu0 0.0
    %1729 = vmatpush1.msra.mxu0 0.0
    %1730 = vmatprep.subr.mxu0 0.0
    %1731 = vmatpush1.msra.mxu0 0.0
    %1732 = vmatprep.mubr.f32.mxu0 0.0
    %1733 = vmatmul.mubr.f32.gmra.mrb[0].mxu0 %v1654
    %v1734 = vpop.f32.mrb[0].mxu0
    %v1735 = vadd.f32 %v1651, %v1734
    %v1736 = vpop.f32.mrb[0].mxu0
    %1737 = vmatprep.mubr.f32.mxu0 0.0
    %1738 = vmatmul.mubr.f32.gmra.mrb[0].mxu0 %v1657
    %v1739 = vpop.f32.mrb[0].mxu0
    %v1740 = vadd.f32 %v1651, %v1739
    %v1741 = vpop.f32.mrb[0].mxu0
    %1742 = vmatprep.mubr.f32.mxu0 0.0
    %1743 = vmatmul.mubr.f32.gmra.mrb[0].mxu0 %v1660
    %v1744 = vpop.f32.mrb[0].mxu0
    %v1745 = vadd.f32 %v1651, %v1744
    %v1746 = vpop.f32.mrb[0].mxu0
    %1747 = vmatprep.mubr.f32.mxu0 0.0
    %1748 = vmatmul.mubr.f32.gmra.mrb[0].mxu0 %v1663
    %v1749 = vpop.f32.mrb[0].mxu0
    %v1750 = vadd.f32 %v1651, %v1749
    %v1751 = vpop.f32.mrb[0].mxu0
    %1752 = vmatprep.mubr.f32.mxu0 0.0
    %1753 = vmatmul.mubr.f32.gmra.mrb[0].mxu0 %v1666
    %v1754 = vpop.f32.mrb[0].mxu0
    %v1755 = vadd.f32 %v1651, %v1754
    %v1756 = vpop.f32.mrb[0].mxu0
    %1757 = vdwg.mxu0
    %1758 = vst.msk [vmem:[#allocation53] sm:$0xff] %vm581, %v1735
    %s1759 = scalar_lea.vmem [#allocation53], 8
    %1760 = vst.msk [vmem:[%s1759] sm:$0xff] %vm581, %v1740
    %s1761 = scalar_lea.vmem [#allocation53], 16
    %1762 = vst.msk [vmem:[%s1761] sm:$0xff] %vm581, %v1745
    %s1763 = scalar_lea.vmem [#allocation53], 24
    %1764 = vst.msk [vmem:[%s1763] sm:$0xff] %vm581, %v1750
    %s1765 = scalar_lea.vmem [#allocation53], 32
    %1766 = vst.msk [vmem:[%s1765] sm:$0xff] %vm581, %v1755
    %v1767 = vld [vmem:[%s63] sm:$0xff]
    %v1768 = vld [vmem:[%s63 + $0x8] sm:$0xff]
    %v1769 = vld [vmem:[%s63 + $0x10] sm:$0xff]
    %v1770 = vld [vmem:[%s63 + $0x18] sm:$0xff]
    %v1771 = vld [vmem:[%s63 + $0x20] sm:$0xff]
    %v1772 = vld [vmem:[%s63 + $0x28] sm:$0xff]
    %v1773 = vld [vmem:[%s63 + $0x30] sm:$0xff]
    %v1774 = vld [vmem:[%s63 + $0x38] sm:$0xff]
    %v1775 = vld [vmem:[#allocation41] sm:$0x1]
    %v1777 = vlaneseq
    %v1778 = vshrl.u32 %v1777, 7
    %v1779 = vsub.s32 0, %v1778
    %v1780 = vrot.slane %v1775, %v1779
    %v1783 = vsel %vm658, %v1044, 0
    %1785 = vmatprep.subr.mxu0 0.0
    %1786 = vmatpush1.msra.mxu0 %v1767
    %1787 = vmatprep.subr.mxu0 0.0
    %1788 = vmatpush1.msra.mxu0 %v1768
    %1789 = vmatprep.subr.mxu0 0.0
    %1790 = vmatpush1.msra.mxu0 %v1769
    %1791 = vmatprep.subr.mxu0 0.0
    %1792 = vmatpush1.msra.mxu0 %v1770
    %1793 = vmatprep.subr.mxu0 0.0
    %1794 = vmatpush1.msra.mxu0 %v1771
    %1795 = vmatprep.subr.mxu0 0.0
    %1796 = vmatpush1.msra.mxu0 %v1772
    %1797 = vmatprep.subr.mxu0 0.0
    %1798 = vmatpush1.msra.mxu0 %v1773
    %1799 = vmatprep.subr.mxu0 0.0
    %1800 = vmatpush1.msra.mxu0 %v1774
    %1801 = vmatprep.subr.mxu0 0.0
    %1802 = vmatpush1.msra.mxu0 0.0
    %1803 = vmatprep.subr.mxu0 0.0
    %1804 = vmatpush1.msra.mxu0 0.0
    %1805 = vmatprep.subr.mxu0 0.0
    %1806 = vmatpush1.msra.mxu0 0.0
    %1807 = vmatprep.subr.mxu0 0.0
    %1808 = vmatpush1.msra.mxu0 0.0
    %1809 = vmatprep.subr.mxu0 0.0
    %1810 = vmatpush1.msra.mxu0 0.0
    %1811 = vmatprep.subr.mxu0 0.0
    %1812 = vmatpush1.msra.mxu0 0.0
    %1813 = vmatprep.subr.mxu0 0.0
    %1814 = vmatpush1.msra.mxu0 0.0
    %1815 = vmatprep.subr.mxu0 0.0
    %1816 = vmatpush1.msra.mxu0 0.0
    %1817 = vmatprep.subr.mxu0 0.0
    %1818 = vmatpush1.msra.mxu0 0.0
    %1819 = vmatprep.subr.mxu0 0.0
    %1820 = vmatpush1.msra.mxu0 0.0
    %1821 = vmatprep.subr.mxu0 0.0
    %1822 = vmatpush1.msra.mxu0 0.0
    %1823 = vmatprep.subr.mxu0 0.0
    %1824 = vmatpush1.msra.mxu0 0.0
    %1825 = vmatprep.subr.mxu0 0.0
    %1826 = vmatpush1.msra.mxu0 0.0
    %1827 = vmatprep.subr.mxu0 0.0
    %1828 = vmatpush1.msra.mxu0 0.0
    %1829 = vmatprep.subr.mxu0 0.0
    %1830 = vmatpush1.msra.mxu0 0.0
    %1831 = vmatprep.subr.mxu0 0.0
    %1832 = vmatpush1.msra.mxu0 0.0
    %1833 = vmatprep.subr.mxu0 0.0
    %1834 = vmatpush1.msra.mxu0 0.0
    %1835 = vmatprep.subr.mxu0 0.0
    %1836 = vmatpush1.msra.mxu0 0.0
    %1837 = vmatprep.subr.mxu0 0.0
    %1838 = vmatpush1.msra.mxu0 0.0
    %1839 = vmatprep.subr.mxu0 0.0
    %1840 = vmatpush1.msra.mxu0 0.0
    %1841 = vmatprep.subr.mxu0 0.0
    %1842 = vmatpush1.msra.mxu0 0.0
    %1843 = vmatprep.subr.mxu0 0.0
    %1844 = vmatpush1.msra.mxu0 0.0
    %1845 = vmatprep.subr.mxu0 0.0
    %1846 = vmatpush1.msra.mxu0 0.0
    %1847 = vmatprep.subr.mxu0 0.0
    %1848 = vmatpush1.msra.mxu0 0.0
    %1849 = vmatprep.mubr.f32.mxu0 0.0
    %1850 = vmatmul.mubr.f32.gmra.mrb[0].mxu0 %v1783
    %v1851 = vpop.f32.mrb[0].mxu0
    %v1852 = vadd.f32 %v1780, %v1851
    %v1853 = vpop.f32.mrb[0].mxu0
    %1854 = vdwg.mxu0
    %v1855 = vld [vmem:[#allocation42] sm:$0x1]
    %v1856 = vld [vmem:[#allocation44] sm:$0x1]
    %v1857 = vsel %vm658, %v1852, 0.0
    %1858 = vadd.xlane.f32.xlu0 %v1857
    %v1859 = vpop.xlane.xlu0 %1858
    %v1860 = vmul.f32 %v1859, %v662
    %v1861 = vmul.f32 %v1852, %v1852
    %v1862 = vsel %vm658, %v1861, 0.0
    %1863 = vadd.xlane.f32.xlu0 %v1862
    %v1864 = vpop.xlane.xlu0 %1863
    %v1865 = vmul.f32 %v1864, %v662
    %v1866 = vmul.f32 %v1860, %v1860
    %v1867 = vsub.f32 %v1865, %v1866
    %v1868 = vmax.f32 %v1867, 0.0
    %v1869 = vsub.f32 %v1852, %v1860
    %v1870 = vadd.f32 %v1868, 1e-05
    %v1871 = vrsqrt.pop %v1870
    %v1872 = vmul.f32 %v1869, %v1871
    %v1874 = vlaneseq
    %v1875 = vshrl.u32 %v1874, 7
    %v1876 = vsub.s32 0, %v1875
    %v1877 = vrot.slane %v1855, %v1876
    %v1879 = vmul.f32 %v1872, %v1877
    %v1881 = vlaneseq
    %v1882 = vshrl.u32 %v1881, 7
    %v1883 = vsub.s32 0, %v1882
    %v1884 = vrot.slane %v1856, %v1883
    %v1886 = vadd.f32 %v1879, %v1884
    %v1887 = vmax.f32 %v1886, 0.0
    %v1888 = vld [vmem:[%s71] sm:$0xff]
    %v1889 = vld [vmem:[%s71 + $0x8] sm:$0xff]
    %v1890 = vld [vmem:[%s71 + $0x10] sm:$0xff]
    %v1891 = vld [vmem:[%s71 + $0x18] sm:$0xff]
    %v1892 = vld [vmem:[%s71 + $0x20] sm:$0xff]
    %v1893 = vld [vmem:[%s71 + $0x28] sm:$0xff]
    %v1894 = vld [vmem:[%s71 + $0x30] sm:$0xff]
    %v1895 = vld [vmem:[%s71 + $0x38] sm:$0xff]
    %v1896 = vld [vmem:[%s71 + $0x40] sm:$0xff]
    %v1897 = vld [vmem:[%s71 + $0x48] sm:$0xff]
    %v1898 = vld [vmem:[%s71 + $0x50] sm:$0xff]
    %v1899 = vld [vmem:[%s71 + $0x58] sm:$0xff]
    %v1900 = vld [vmem:[%s71 + $0x60] sm:$0xff]
    %v1901 = vld [vmem:[%s71 + $0x68] sm:$0xff]
    %v1902 = vld [vmem:[%s71 + $0x70] sm:$0xff]
    %v1903 = vld [vmem:[%s71 + $0x78] sm:$0xff]
    %v1904 = vld [vmem:[%s71 + $0x80] sm:$0xff]
    %v1905 = vld [vmem:[%s71 + $0x88] sm:$0xff]
    %v1906 = vld [vmem:[%s71 + $0x90] sm:$0xff]
    %v1907 = vld [vmem:[%s71 + $0x98] sm:$0xff]
    %v1908 = vld [vmem:[%s71 + $0xa0] sm:$0xff]
    %v1909 = vld [vmem:[%s71 + $0xa8] sm:$0xff]
    %v1910 = vld [vmem:[%s71 + $0xb0] sm:$0xff]
    %v1911 = vld [vmem:[%s71 + $0xb8] sm:$0xff]
    %v1912 = vld [vmem:[%s73] sm:$0x7]
    %v1914 = vlaneseq
    %v1915 = vshrl.u32 %v1914, 7
    %v1916 = vsub.s32 0, %v1915
    %v1917 = vrot.slane %v1912, %v1916
    %v1918 = vlaneseq
    %v1919 = vshrl.u32 %v1918, 7
    %v1920 = vsub.s32 1, %v1919
    %v1921 = vrot.slane %v1912, %v1920
    %v1922 = vlaneseq
    %v1923 = vshrl.u32 %v1922, 7
    %v1924 = vsub.s32 2, %v1923
    %v1925 = vrot.slane %v1912, %v1924
    %v1930 = vsel %vm658, %v1887, 0
    %1932 = vmatprep.subr.mxu0 %v1889
    %1933 = vmatpush1.msra.mxu0 %v1888
    %1934 = vmatprep.subr.mxu0 %v1892
    %1935 = vmatpush1.msra.mxu0 %v1891
    %1936 = vmatprep.subr.mxu0 %v1895
    %1937 = vmatpush1.msra.mxu0 %v1894
    %1938 = vmatprep.subr.mxu0 %v1898
    %1939 = vmatpush1.msra.mxu0 %v1897
    %1940 = vmatprep.subr.mxu0 %v1901
    %1941 = vmatpush1.msra.mxu0 %v1900
    %1942 = vmatprep.subr.mxu0 %v1904
    %1943 = vmatpush1.msra.mxu0 %v1903
    %1944 = vmatprep.subr.mxu0 %v1907
    %1945 = vmatpush1.msra.mxu0 %v1906
    %1946 = vmatprep.subr.mxu0 %v1910
    %1947 = vmatpush1.msra.mxu0 %v1909
    %1948 = vmatprep.subr.mxu0 0.0
    %1949 = vmatpush1.msra.mxu0 0.0
    %1950 = vmatprep.subr.mxu0 0.0
    %1951 = vmatpush1.msra.mxu0 0.0
    %1952 = vmatprep.subr.mxu0 0.0
    %1953 = vmatpush1.msra.mxu0 0.0
    %1954 = vmatprep.subr.mxu0 0.0
    %1955 = vmatpush1.msra.mxu0 0.0
    %1956 = vmatprep.subr.mxu0 0.0
    %1957 = vmatpush1.msra.mxu0 0.0
    %1958 = vmatprep.subr.mxu0 0.0
    %1959 = vmatpush1.msra.mxu0 0.0
    %1960 = vmatprep.subr.mxu0 0.0
    %1961 = vmatpush1.msra.mxu0 0.0
    %1962 = vmatprep.subr.mxu0 0.0
    %1963 = vmatpush1.msra.mxu0 0.0
    %1964 = vmatprep.subr.mxu0 0.0
    %1965 = vmatpush1.msra.mxu0 0.0
    %1966 = vmatprep.subr.mxu0 0.0
    %1967 = vmatpush1.msra.mxu0 0.0
    %1968 = vmatprep.subr.mxu0 0.0
    %1969 = vmatpush1.msra.mxu0 0.0
    %1970 = vmatprep.subr.mxu0 0.0
    %1971 = vmatpush1.msra.mxu0 0.0
    %1972 = vmatprep.subr.mxu0 0.0
    %1973 = vmatpush1.msra.mxu0 0.0
    %1974 = vmatprep.subr.mxu0 0.0
    %1975 = vmatpush1.msra.mxu0 0.0
    %1976 = vmatprep.subr.mxu0 0.0
    %1977 = vmatpush1.msra.mxu0 0.0
    %1978 = vmatprep.subr.mxu0 0.0
    %1979 = vmatpush1.msra.mxu0 0.0
    %1980 = vmatprep.subr.mxu0 0.0
    %1981 = vmatpush1.msra.mxu0 0.0
    %1982 = vmatprep.subr.mxu0 0.0
    %1983 = vmatpush1.msra.mxu0 0.0
    %1984 = vmatprep.subr.mxu0 0.0
    %1985 = vmatpush1.msra.mxu0 0.0
    %1986 = vmatprep.subr.mxu0 0.0
    %1987 = vmatpush1.msra.mxu0 0.0
    %1988 = vmatprep.subr.mxu0 0.0
    %1989 = vmatpush1.msra.mxu0 0.0
    %1990 = vmatprep.subr.mxu0 0.0
    %1991 = vmatpush1.msra.mxu0 0.0
    %1992 = vmatprep.subr.mxu0 0.0
    %1993 = vmatpush1.msra.mxu0 0.0
    %1994 = vmatprep.subr.mxu0 0.0
    %1995 = vmatpush1.msra.mxu0 0.0
    %1996 = vmatprep.mubr.f32.mxu0 0.0
    %1997 = vmatmul.mubr.f32.gmra.mrb[0].mxu0 %v1930
    %v1998 = vpop.f32.mrb[0].mxu0
    %v1999 = vadd.f32 %v1917, %v1998
    %v2000 = vpop.f32.mrb[0].mxu0
    %v2001 = vadd.f32 %v1921, %v2000
    %2002 = vdwg.mxu0
    %2003 = vmatprep.subr.mxu0 0.0
    %2004 = vmatpush1.msra.mxu0 %v1890
    %2005 = vmatprep.subr.mxu0 0.0
    %2006 = vmatpush1.msra.mxu0 %v1893
    %2007 = vmatprep.subr.mxu0 0.0
    %2008 = vmatpush1.msra.mxu0 %v1896
    %2009 = vmatprep.subr.mxu0 0.0
    %2010 = vmatpush1.msra.mxu0 %v1899
    %2011 = vmatprep.subr.mxu0 0.0
    %2012 = vmatpush1.msra.mxu0 %v1902
    %2013 = vmatprep.subr.mxu0 0.0
    %2014 = vmatpush1.msra.mxu0 %v1905
    %2015 = vmatprep.subr.mxu0 0.0
    %2016 = vmatpush1.msra.mxu0 %v1908
    %2017 = vmatprep.subr.mxu0 0.0
    %2018 = vmatpush1.msra.mxu0 %v1911
    %2019 = vmatprep.subr.mxu0 0.0
    %2020 = vmatpush1.msra.mxu0 0.0
    %2021 = vmatprep.subr.mxu0 0.0
    %2022 = vmatpush1.msra.mxu0 0.0
    %2023 = vmatprep.subr.mxu0 0.0
    %2024 = vmatpush1.msra.mxu0 0.0
    %2025 = vmatprep.subr.mxu0 0.0
    %2026 = vmatpush1.msra.mxu0 0.0
    %2027 = vmatprep.subr.mxu0 0.0
    %2028 = vmatpush1.msra.mxu0 0.0
    %2029 = vmatprep.subr.mxu0 0.0
    %2030 = vmatpush1.msra.mxu0 0.0
    %2031 = vmatprep.subr.mxu0 0.0
    %2032 = vmatpush1.msra.mxu0 0.0
    %2033 = vmatprep.subr.mxu0 0.0
    %2034 = vmatpush1.msra.mxu0 0.0
    %2035 = vmatprep.subr.mxu0 0.0
    %2036 = vmatpush1.msra.mxu0 0.0
    %2037 = vmatprep.subr.mxu0 0.0
    %2038 = vmatpush1.msra.mxu0 0.0
    %2039 = vmatprep.subr.mxu0 0.0
    %2040 = vmatpush1.msra.mxu0 0.0
    %2041 = vmatprep.subr.mxu0 0.0
    %2042 = vmatpush1.msra.mxu0 0.0
    %2043 = vmatprep.subr.mxu0 0.0
    %2044 = vmatpush1.msra.mxu0 0.0
    %2045 = vmatprep.subr.mxu0 0.0
    %2046 = vmatpush1.msra.mxu0 0.0
    %2047 = vmatprep.subr.mxu0 0.0
    %2048 = vmatpush1.msra.mxu0 0.0
    %2049 = vmatprep.subr.mxu0 0.0
    %2050 = vmatpush1.msra.mxu0 0.0
    %2051 = vmatprep.subr.mxu0 0.0
    %2052 = vmatpush1.msra.mxu0 0.0
    %2053 = vmatprep.subr.mxu0 0.0
    %2054 = vmatpush1.msra.mxu0 0.0
    %2055 = vmatprep.subr.mxu0 0.0
    %2056 = vmatpush1.msra.mxu0 0.0
    %2057 = vmatprep.subr.mxu0 0.0
    %2058 = vmatpush1.msra.mxu0 0.0
    %2059 = vmatprep.subr.mxu0 0.0
    %2060 = vmatpush1.msra.mxu0 0.0
    %2061 = vmatprep.subr.mxu0 0.0
    %2062 = vmatpush1.msra.mxu0 0.0
    %2063 = vmatprep.subr.mxu0 0.0
    %2064 = vmatpush1.msra.mxu0 0.0
    %2065 = vmatprep.subr.mxu0 0.0
    %2066 = vmatpush1.msra.mxu0 0.0
    %2067 = vmatprep.mubr.f32.mxu0 0.0
    %2068 = vmatmul.mubr.f32.gmra.mrb[0].mxu0 %v1930
    %v2069 = vpop.f32.mrb[0].mxu0
    %v2070 = vadd.f32 %v1925, %v2069
    %v2071 = vpop.f32.mrb[0].mxu0
    %2072 = vdwg.mxu0
    %2074 = vrot.lane.b32.xlu0 %v1999, 64
    %v2075 = vpop.permute.xlu0 %2074
    %2077 = vrot.lane.b32.xlu0 %v2001, 64
    %v2078 = vpop.permute.xlu0 %2077
    %v2079 = vld [vmem:[#allocation45] sm:$0xff]
    %v2080 = vld [vmem:[#allocation45 + $0x8] sm:$0xff]
    %v2081 = vld [vmem:[#allocation45 + $0x10] sm:$0xff]
    %v2082 = vld [vmem:[#allocation45 + $0x18] sm:$0xff]
    %v2083 = vld [vmem:[#allocation45 + $0x20] sm:$0xff]
    %v2084 = vld [vmem:[#allocation45 + $0x28] sm:$0xff]
    %v2085 = vld [vmem:[#allocation45 + $0x30] sm:$0xff]
    %v2086 = vld [vmem:[#allocation45 + $0x38] sm:$0xff]
    %v2087 = vld [vmem:[%s77] sm:$0x1]
    %v2089 = vlaneseq
    %v2090 = vshrl.u32 %v2089, 7
    %v2091 = vsub.s32 0, %v2090
    %v2092 = vrot.slane %v2087, %v2091
    %v2094 = vsel %vm658, %v1999, 0
    %v2096 = vsel %vm658, %v2075, 0
    %v2098 = vsel %vm658, %v2001, 0
    %v2100 = vsel %vm658, %v2078, 0
    %v2103 = vsel %vm658, %v2070, 0
    %2105 = vmatprep.subr.mxu0 0.0
    %2106 = vmatpush1.msra.mxu0 %v2079
    %2107 = vmatprep.subr.mxu0 0.0
    %2108 = vmatpush1.msra.mxu0 %v2080
    %2109 = vmatprep.subr.mxu0 0.0
    %2110 = vmatpush1.msra.mxu0 %v2081
    %2111 = vmatprep.subr.mxu0 0.0
    %2112 = vmatpush1.msra.mxu0 %v2082
    %2113 = vmatprep.subr.mxu0 0.0
    %2114 = vmatpush1.msra.mxu0 %v2083
    %2115 = vmatprep.subr.mxu0 0.0
    %2116 = vmatpush1.msra.mxu0 %v2084
    %2117 = vmatprep.subr.mxu0 0.0
    %2118 = vmatpush1.msra.mxu0 %v2085
    %2119 = vmatprep.subr.mxu0 0.0
    %2120 = vmatpush1.msra.mxu0 %v2086
    %2121 = vmatprep.subr.mxu0 0.0
    %2122 = vmatpush1.msra.mxu0 0.0
    %2123 = vmatprep.subr.mxu0 0.0
    %2124 = vmatpush1.msra.mxu0 0.0
    %2125 = vmatprep.subr.mxu0 0.0
    %2126 = vmatpush1.msra.mxu0 0.0
    %2127 = vmatprep.subr.mxu0 0.0
    %2128 = vmatpush1.msra.mxu0 0.0
    %2129 = vmatprep.subr.mxu0 0.0
    %2130 = vmatpush1.msra.mxu0 0.0
    %2131 = vmatprep.subr.mxu0 0.0
    %2132 = vmatpush1.msra.mxu0 0.0
    %2133 = vmatprep.subr.mxu0 0.0
    %2134 = vmatpush1.msra.mxu0 0.0
    %2135 = vmatprep.subr.mxu0 0.0
    %2136 = vmatpush1.msra.mxu0 0.0
    %2137 = vmatprep.subr.mxu0 0.0
    %2138 = vmatpush1.msra.mxu0 0.0
    %2139 = vmatprep.subr.mxu0 0.0
    %2140 = vmatpush1.msra.mxu0 0.0
    %2141 = vmatprep.subr.mxu0 0.0
    %2142 = vmatpush1.msra.mxu0 0.0
    %2143 = vmatprep.subr.mxu0 0.0
    %2144 = vmatpush1.msra.mxu0 0.0
    %2145 = vmatprep.subr.mxu0 0.0
    %2146 = vmatpush1.msra.mxu0 0.0
    %2147 = vmatprep.subr.mxu0 0.0
    %2148 = vmatpush1.msra.mxu0 0.0
    %2149 = vmatprep.subr.mxu0 0.0
    %2150 = vmatpush1.msra.mxu0 0.0
    %2151 = vmatprep.subr.mxu0 0.0
    %2152 = vmatpush1.msra.mxu0 0.0
    %2153 = vmatprep.subr.mxu0 0.0
    %2154 = vmatpush1.msra.mxu0 0.0
    %2155 = vmatprep.subr.mxu0 0.0
    %2156 = vmatpush1.msra.mxu0 0.0
    %2157 = vmatprep.subr.mxu0 0.0
    %2158 = vmatpush1.msra.mxu0 0.0
    %2159 = vmatprep.subr.mxu0 0.0
    %2160 = vmatpush1.msra.mxu0 0.0
    %2161 = vmatprep.subr.mxu0 0.0
    %2162 = vmatpush1.msra.mxu0 0.0
    %2163 = vmatprep.subr.mxu0 0.0
    %2164 = vmatpush1.msra.mxu0 0.0
    %2165 = vmatprep.subr.mxu0 0.0
    %2166 = vmatpush1.msra.mxu0 0.0
    %2167 = vmatprep.subr.mxu0 0.0
    %2168 = vmatpush1.msra.mxu0 0.0
    %2169 = vmatprep.mubr.f32.mxu0 0.0
    %2170 = vmatmul.mubr.f32.gmra.mrb[0].mxu0 %v2094
    %v2171 = vpop.f32.mrb[0].mxu0
    %v2172 = vadd.f32 %v2092, %v2171
    %v2173 = vpop.f32.mrb[0].mxu0
    %2174 = vmatprep.mubr.f32.mxu0 0.0
    %2175 = vmatmul.mubr.f32.gmra.mrb[0].mxu0 %v2096
    %v2176 = vpop.f32.mrb[0].mxu0
    %v2177 = vadd.f32 %v2092, %v2176
    %v2178 = vpop.f32.mrb[0].mxu0
    %2179 = vmatprep.mubr.f32.mxu0 0.0
    %2180 = vmatmul.mubr.f32.gmra.mrb[0].mxu0 %v2098
    %v2181 = vpop.f32.mrb[0].mxu0
    %v2182 = vadd.f32 %v2092, %v2181
    %v2183 = vpop.f32.mrb[0].mxu0
    %2184 = vmatprep.mubr.f32.mxu0 0.0
    %2185 = vmatmul.mubr.f32.gmra.mrb[0].mxu0 %v2100
    %v2186 = vpop.f32.mrb[0].mxu0
    %v2187 = vadd.f32 %v2092, %v2186
    %v2188 = vpop.f32.mrb[0].mxu0
    %2189 = vmatprep.mubr.f32.mxu0 0.0
    %2190 = vmatmul.mubr.f32.gmra.mrb[0].mxu0 %v2103
    %v2191 = vpop.f32.mrb[0].mxu0
    %v2192 = vadd.f32 %v2092, %v2191
    %v2193 = vpop.f32.mrb[0].mxu0
    %2194 = vdwg.mxu0
    %v2195 = vld [vmem:[%s79] sm:$0x1]
    %v2196 = vld [vmem:[%s81] sm:$0x1]
    %v2197 = vsel %vm658, %v2172, 0.0
    %2198 = vadd.xlane.f32.xlu0 %v2197
    %v2199 = vpop.xlane.xlu0 %2198
    %v2200 = vsel %vm658, %v2177, 0.0
    %2201 = vadd.xlane.f32.xlu0 %v2200
    %v2202 = vpop.xlane.xlu0 %2201
    %v2203 = vsel %vm658, %v2182, 0.0
    %2204 = vadd.xlane.f32.xlu0 %v2203
    %v2205 = vpop.xlane.xlu0 %2204
    %v2206 = vsel %vm658, %v2187, 0.0
    %2207 = vadd.xlane.f32.xlu0 %v2206
    %v2208 = vpop.xlane.xlu0 %2207
    %v2209 = vsel %vm658, %v2192, 0.0
    %2210 = vadd.xlane.f32.xlu0 %v2209
    %v2211 = vpop.xlane.xlu0 %2210
    %v2212 = vmul.f32 %v2199, %v662
    %v2213 = vmul.f32 %v2202, %v662
    %v2214 = vmul.f32 %v2205, %v662
    %v2215 = vmul.f32 %v2208, %v662
    %v2216 = vmul.f32 %v2211, %v662
    %v2217 = vmul.f32 %v2172, %v2172
    %v2218 = vmul.f32 %v2177, %v2177
    %v2219 = vmul.f32 %v2182, %v2182
    %v2220 = vmul.f32 %v2187, %v2187
    %v2221 = vmul.f32 %v2192, %v2192
    %v2222 = vsel %vm658, %v2217, 0.0
    %2223 = vadd.xlane.f32.xlu0 %v2222
    %v2224 = vpop.xlane.xlu0 %2223
    %v2225 = vsel %vm658, %v2218, 0.0
    %2226 = vadd.xlane.f32.xlu0 %v2225
    %v2227 = vpop.xlane.xlu0 %2226
    %v2228 = vsel %vm658, %v2219, 0.0
    %2229 = vadd.xlane.f32.xlu0 %v2228
    %v2230 = vpop.xlane.xlu0 %2229
    %v2231 = vsel %vm658, %v2220, 0.0
    %2232 = vadd.xlane.f32.xlu0 %v2231
    %v2233 = vpop.xlane.xlu0 %2232
    %v2234 = vsel %vm658, %v2221, 0.0
    %2235 = vadd.xlane.f32.xlu0 %v2234
    %v2236 = vpop.xlane.xlu0 %2235
    %v2237 = vmul.f32 %v2224, %v662
    %v2238 = vmul.f32 %v2227, %v662
    %v2239 = vmul.f32 %v2230, %v662
    %v2240 = vmul.f32 %v2233, %v662
    %v2241 = vmul.f32 %v2236, %v662
    %v2242 = vmul.f32 %v2212, %v2212
    %v2243 = vmul.f32 %v2213, %v2213
    %v2244 = vmul.f32 %v2214, %v2214
    %v2245 = vmul.f32 %v2215, %v2215
    %v2246 = vmul.f32 %v2216, %v2216
    %v2247 = vsub.f32 %v2237, %v2242
    %v2248 = vsub.f32 %v2238, %v2243
    %v2249 = vsub.f32 %v2239, %v2244
    %v2250 = vsub.f32 %v2240, %v2245
    %v2251 = vsub.f32 %v2241, %v2246
    %v2252 = vmax.f32 %v2247, 0.0
    %v2253 = vmax.f32 %v2248, 0.0
    %v2254 = vmax.f32 %v2249, 0.0
    %v2255 = vmax.f32 %v2250, 0.0
    %v2256 = vmax.f32 %v2251, 0.0
    %v2257 = vsub.f32 %v2172, %v2212
    %v2258 = vsub.f32 %v2177, %v2213
    %v2259 = vsub.f32 %v2182, %v2214
    %v2260 = vsub.f32 %v2187, %v2215
    %v2261 = vsub.f32 %v2192, %v2216
    %v2262 = vadd.f32 %v2252, 1e-05
    %v2263 = vadd.f32 %v2253, 1e-05
    %v2264 = vadd.f32 %v2254, 1e-05
    %v2265 = vadd.f32 %v2255, 1e-05
    %v2266 = vadd.f32 %v2256, 1e-05
    %v2267 = vrsqrt.pop %v2262
    %v2268 = vrsqrt.pop %v2263
    %v2269 = vrsqrt.pop %v2264
    %v2270 = vrsqrt.pop %v2265
    %v2271 = vrsqrt.pop %v2266
    %v2272 = vmul.f32 %v2257, %v2267
    %v2273 = vmul.f32 %v2258, %v2268
    %v2274 = vmul.f32 %v2259, %v2269
    %v2275 = vmul.f32 %v2260, %v2270
    %v2276 = vmul.f32 %v2261, %v2271
    %v2278 = vlaneseq
    %v2279 = vshrl.u32 %v2278, 7
    %v2280 = vsub.s32 0, %v2279
    %v2281 = vrot.slane %v2195, %v2280
    %v2283 = vmul.f32 %v2272, %v2281
    %v2284 = vmul.f32 %v2273, %v2281
    %v2285 = vmul.f32 %v2274, %v2281
    %v2286 = vmul.f32 %v2275, %v2281
    %v2287 = vmul.f32 %v2276, %v2281
    %v2289 = vlaneseq
    %v2290 = vshrl.u32 %v2289, 7
    %v2291 = vsub.s32 0, %v2290
    %v2292 = vrot.slane %v2196, %v2291
    %v2294 = vadd.f32 %v2283, %v2292
    %v2295 = vadd.f32 %v2284, %v2292
    %v2296 = vadd.f32 %v2285, %v2292
    %v2297 = vadd.f32 %v2286, %v2292
    %v2298 = vadd.f32 %v2287, %v2292
    %v2299 = vmax.f32 %v2294, 0.0
    %v2300 = vmax.f32 %v2295, 0.0
    %v2301 = vmax.f32 %v2296, 0.0
    %v2302 = vmax.f32 %v2297, 0.0
    %v2303 = vmax.f32 %v2298, 0.0
    %v2304 = vld [vmem:[%s83] sm:$0xff]
    %v2305 = vld [vmem:[%s83 + $0x8] sm:$0xff]
    %v2306 = vld [vmem:[%s83 + $0x10] sm:$0xff]
    %v2307 = vld [vmem:[%s83 + $0x18] sm:$0xff]
    %v2308 = vld [vmem:[%s83 + $0x20] sm:$0xff]
    %v2309 = vld [vmem:[%s83 + $0x28] sm:$0xff]
    %v2310 = vld [vmem:[%s83 + $0x30] sm:$0xff]
    %v2311 = vld [vmem:[%s83 + $0x38] sm:$0xff]
    %v2312 = vld [vmem:[#allocation47] sm:$0x1]
    %v2314 = vlaneseq
    %v2315 = vshrl.u32 %v2314, 7
    %v2316 = vsub.s32 0, %v2315
    %v2317 = vrot.slane %v2312, %v2316
    %v2320 = vsel %vm658, %v2299, 0
    %v2323 = vsel %vm658, %v2300, 0
    %v2326 = vsel %vm658, %v2301, 0
    %v2329 = vsel %vm658, %v2302, 0
    %v2332 = vsel %vm658, %v2303, 0
    %2334 = vmatprep.subr.mxu0 0.0
    %2335 = vmatpush1.msra.mxu0 %v2304
    %2336 = vmatprep.subr.mxu0 0.0
    %2337 = vmatpush1.msra.mxu0 %v2305
    %2338 = vmatprep.subr.mxu0 0.0
    %2339 = vmatpush1.msra.mxu0 %v2306
    %2340 = vmatprep.subr.mxu0 0.0
    %2341 = vmatpush1.msra.mxu0 %v2307
    %2342 = vmatprep.subr.mxu0 0.0
    %2343 = vmatpush1.msra.mxu0 %v2308
    %2344 = vmatprep.subr.mxu0 0.0
    %2345 = vmatpush1.msra.mxu0 %v2309
    %2346 = vmatprep.subr.mxu0 0.0
    %2347 = vmatpush1.msra.mxu0 %v2310
    %2348 = vmatprep.subr.mxu0 0.0
    %2349 = vmatpush1.msra.mxu0 %v2311
    %2350 = vmatprep.subr.mxu0 0.0
    %2351 = vmatpush1.msra.mxu0 0.0
    %2352 = vmatprep.subr.mxu0 0.0
    %2353 = vmatpush1.msra.mxu0 0.0
    %2354 = vmatprep.subr.mxu0 0.0
    %2355 = vmatpush1.msra.mxu0 0.0
    %2356 = vmatprep.subr.mxu0 0.0
    %2357 = vmatpush1.msra.mxu0 0.0
    %2358 = vmatprep.subr.mxu0 0.0
    %2359 = vmatpush1.msra.mxu0 0.0
    %2360 = vmatprep.subr.mxu0 0.0
    %2361 = vmatpush1.msra.mxu0 0.0
    %2362 = vmatprep.subr.mxu0 0.0
    %2363 = vmatpush1.msra.mxu0 0.0
    %2364 = vmatprep.subr.mxu0 0.0
    %2365 = vmatpush1.msra.mxu0 0.0
    %2366 = vmatprep.subr.mxu0 0.0
    %2367 = vmatpush1.msra.mxu0 0.0
    %2368 = vmatprep.subr.mxu0 0.0
    %2369 = vmatpush1.msra.mxu0 0.0
    %2370 = vmatprep.subr.mxu0 0.0
    %2371 = vmatpush1.msra.mxu0 0.0
    %2372 = vmatprep.subr.mxu0 0.0
    %2373 = vmatpush1.msra.mxu0 0.0
    %2374 = vmatprep.subr.mxu0 0.0
    %2375 = vmatpush1.msra.mxu0 0.0
    %2376 = vmatprep.subr.mxu0 0.0
    %2377 = vmatpush1.msra.mxu0 0.0
    %2378 = vmatprep.subr.mxu0 0.0
    %2379 = vmatpush1.msra.mxu0 0.0
    %2380 = vmatprep.subr.mxu0 0.0
    %2381 = vmatpush1.msra.mxu0 0.0
    %2382 = vmatprep.subr.mxu0 0.0
    %2383 = vmatpush1.msra.mxu0 0.0
    %2384 = vmatprep.subr.mxu0 0.0
    %2385 = vmatpush1.msra.mxu0 0.0
    %2386 = vmatprep.subr.mxu0 0.0
    %2387 = vmatpush1.msra.mxu0 0.0
    %2388 = vmatprep.subr.mxu0 0.0
    %2389 = vmatpush1.msra.mxu0 0.0
    %2390 = vmatprep.subr.mxu0 0.0
    %2391 = vmatpush1.msra.mxu0 0.0
    %2392 = vmatprep.subr.mxu0 0.0
    %2393 = vmatpush1.msra.mxu0 0.0
    %2394 = vmatprep.subr.mxu0 0.0
    %2395 = vmatpush1.msra.mxu0 0.0
    %2396 = vmatprep.subr.mxu0 0.0
    %2397 = vmatpush1.msra.mxu0 0.0
    %2398 = vmatprep.mubr.f32.mxu0 0.0
    %2399 = vmatmul.mubr.f32.gmra.mrb[0].mxu0 %v2320
    %v2400 = vpop.f32.mrb[0].mxu0
    %v2401 = vadd.f32 %v2317, %v2400
    %v2402 = vpop.f32.mrb[0].mxu0
    %2403 = vmatprep.mubr.f32.mxu0 0.0
    %2404 = vmatmul.mubr.f32.gmra.mrb[0].mxu0 %v2323
    %v2405 = vpop.f32.mrb[0].mxu0
    %v2406 = vadd.f32 %v2317, %v2405
    %v2407 = vpop.f32.mrb[0].mxu0
    %2408 = vmatprep.mubr.f32.mxu0 0.0
    %2409 = vmatmul.mubr.f32.gmra.mrb[0].mxu0 %v2326
    %v2410 = vpop.f32.mrb[0].mxu0
    %v2411 = vadd.f32 %v2317, %v2410
    %v2412 = vpop.f32.mrb[0].mxu0
    %2413 = vmatprep.mubr.f32.mxu0 0.0
    %2414 = vmatmul.mubr.f32.gmra.mrb[0].mxu0 %v2329
    %v2415 = vpop.f32.mrb[0].mxu0
    %v2416 = vadd.f32 %v2317, %v2415
    %v2417 = vpop.f32.mrb[0].mxu0
    %2418 = vmatprep.mubr.f32.mxu0 0.0
    %2419 = vmatmul.mubr.f32.gmra.mrb[0].mxu0 %v2332
    %v2420 = vpop.f32.mrb[0].mxu0
    %v2421 = vadd.f32 %v2317, %v2420
    %v2422 = vpop.f32.mrb[0].mxu0
    %2423 = vdwg.mxu0
    %2424 = vst.msk [vmem:[#allocation54] sm:$0xff] %vm581, %v2401
    %s2425 = scalar_lea.vmem [#allocation54], 8
    %2426 = vst.msk [vmem:[%s2425] sm:$0xff] %vm581, %v2406
    %s2427 = scalar_lea.vmem [#allocation54], 16
    %2428 = vst.msk [vmem:[%s2427] sm:$0xff] %vm581, %v2411
    %s2429 = scalar_lea.vmem [#allocation54], 24
    %2430 = vst.msk [vmem:[%s2429] sm:$0xff] %vm581, %v2416
    %s2431 = scalar_lea.vmem [#allocation54], 32
    %2432 = vst.msk [vmem:[%s2431] sm:$0xff] %vm581, %v2421
    %v2433 = vld [vmem:[%s87] sm:$0xff]
    %v2434 = vld [vmem:[%s87 + $0x8] sm:$0xff]
    %v2435 = vld [vmem:[%s87 + $0x10] sm:$0xff]
    %v2436 = vld [vmem:[%s87 + $0x18] sm:$0xff]
    %v2437 = vld [vmem:[%s87 + $0x20] sm:$0xff]
    %v2438 = vld [vmem:[%s87 + $0x28] sm:$0xff]
    %v2439 = vld [vmem:[%s87 + $0x30] sm:$0xff]
    %v2440 = vld [vmem:[%s87 + $0x38] sm:$0xff]
    %v2441 = vld [vmem:[#allocation48] sm:$0x1]
    %v2443 = vlaneseq
    %v2444 = vshrl.u32 %v2443, 7
    %v2445 = vsub.s32 0, %v2444
    %v2446 = vrot.slane %v2441, %v2445
    %2448 = vmatprep.subr.mxu0 0.0
    %2449 = vmatpush1.msra.mxu0 %v2433
    %2450 = vmatprep.subr.mxu0 0.0
    %2451 = vmatpush1.msra.mxu0 %v2434
    %2452 = vmatprep.subr.mxu0 0.0
    %2453 = vmatpush1.msra.mxu0 %v2435
    %2454 = vmatprep.subr.mxu0 0.0
    %2455 = vmatpush1.msra.mxu0 %v2436
    %2456 = vmatprep.subr.mxu0 0.0
    %2457 = vmatpush1.msra.mxu0 %v2437
    %2458 = vmatprep.subr.mxu0 0.0
    %2459 = vmatpush1.msra.mxu0 %v2438
    %2460 = vmatprep.subr.mxu0 0.0
    %2461 = vmatpush1.msra.mxu0 %v2439
    %2462 = vmatprep.subr.mxu0 0.0
    %2463 = vmatpush1.msra.mxu0 %v2440
    %2464 = vmatprep.subr.mxu0 0.0
    %2465 = vmatpush1.msra.mxu0 0.0
    %2466 = vmatprep.subr.mxu0 0.0
    %2467 = vmatpush1.msra.mxu0 0.0
    %2468 = vmatprep.subr.mxu0 0.0
    %2469 = vmatpush1.msra.mxu0 0.0
    %2470 = vmatprep.subr.mxu0 0.0
    %2471 = vmatpush1.msra.mxu0 0.0
    %2472 = vmatprep.subr.mxu0 0.0
    %2473 = vmatpush1.msra.mxu0 0.0
    %2474 = vmatprep.subr.mxu0 0.0
    %2475 = vmatpush1.msra.mxu0 0.0
    %2476 = vmatprep.subr.mxu0 0.0
    %2477 = vmatpush1.msra.mxu0 0.0
    %2478 = vmatprep.subr.mxu0 0.0
    %2479 = vmatpush1.msra.mxu0 0.0
    %2480 = vmatprep.subr.mxu0 0.0
    %2481 = vmatpush1.msra.mxu0 0.0
    %2482 = vmatprep.subr.mxu0 0.0
    %2483 = vmatpush1.msra.mxu0 0.0
    %2484 = vmatprep.subr.mxu0 0.0
    %2485 = vmatpush1.msra.mxu0 0.0
    %2486 = vmatprep.subr.mxu0 0.0
    %2487 = vmatpush1.msra.mxu0 0.0
    %2488 = vmatprep.subr.mxu0 0.0
    %2489 = vmatpush1.msra.mxu0 0.0
    %2490 = vmatprep.subr.mxu0 0.0
    %2491 = vmatpush1.msra.mxu0 0.0
    %2492 = vmatprep.subr.mxu0 0.0
    %2493 = vmatpush1.msra.mxu0 0.0
    %2494 = vmatprep.subr.mxu0 0.0
    %2495 = vmatpush1.msra.mxu0 0.0
    %2496 = vmatprep.subr.mxu0 0.0
    %2497 = vmatpush1.msra.mxu0 0.0
    %2498 = vmatprep.subr.mxu0 0.0
    %2499 = vmatpush1.msra.mxu0 0.0
    %2500 = vmatprep.subr.mxu0 0.0
    %2501 = vmatpush1.msra.mxu0 0.0
    %2502 = vmatprep.subr.mxu0 0.0
    %2503 = vmatpush1.msra.mxu0 0.0
    %2504 = vmatprep.subr.mxu0 0.0
    %2505 = vmatpush1.msra.mxu0 0.0
    %2506 = vmatprep.subr.mxu0 0.0
    %2507 = vmatpush1.msra.mxu0 0.0
    %2508 = vmatprep.subr.mxu0 0.0
    %2509 = vmatpush1.msra.mxu0 0.0
    %2510 = vmatprep.subr.mxu0 0.0
    %2511 = vmatpush1.msra.mxu0 0.0
    %2512 = vmatprep.mubr.f32.mxu0 0.0
    %2513 = vmatmul.mubr.f32.gmra.mrb[0].mxu0 %v2094
    %v2514 = vpop.f32.mrb[0].mxu0
    %v2515 = vadd.f32 %v2446, %v2514
    %v2516 = vpop.f32.mrb[0].mxu0
    %2517 = vmatprep.mubr.f32.mxu0 0.0
    %2518 = vmatmul.mubr.f32.gmra.mrb[0].mxu0 %v2096
    %v2519 = vpop.f32.mrb[0].mxu0
    %v2520 = vadd.f32 %v2446, %v2519
    %v2521 = vpop.f32.mrb[0].mxu0
    %2522 = vmatprep.mubr.f32.mxu0 0.0
    %2523 = vmatmul.mubr.f32.gmra.mrb[0].mxu0 %v2098
    %v2524 = vpop.f32.mrb[0].mxu0
    %v2525 = vadd.f32 %v2446, %v2524
    %v2526 = vpop.f32.mrb[0].mxu0
    %2527 = vmatprep.mubr.f32.mxu0 0.0
    %2528 = vmatmul.mubr.f32.gmra.mrb[0].mxu0 %v2100
    %v2529 = vpop.f32.mrb[0].mxu0
    %v2530 = vadd.f32 %v2446, %v2529
    %v2531 = vpop.f32.mrb[0].mxu0
    %2532 = vmatprep.mubr.f32.mxu0 0.0
    %2533 = vmatmul.mubr.f32.gmra.mrb[0].mxu0 %v2103
    %v2534 = vpop.f32.mrb[0].mxu0
    %v2535 = vadd.f32 %v2446, %v2534
    %v2536 = vpop.f32.mrb[0].mxu0
    %2537 = vdwg.mxu0
    %v2538 = vmax.f32 %v2515, 0.0
    %v2539 = vmax.f32 %v2520, 0.0
    %v2540 = vmax.f32 %v2525, 0.0
    %v2541 = vmax.f32 %v2530, 0.0
    %v2542 = vmax.f32 %v2535, 0.0
    %v2543 = vld [vmem:[%s91] sm:$0x1]
    %v2545 = vlaneseq
    %v2546 = vshrl.u32 %v2545, 7
    %v2547 = vsub.s32 0, %v2546
    %v2548 = vrot.slane %v2543, %v2547
    %v2550 = vmul.f32 %v2538, %v2548
    %v2551 = vmul.f32 %v2539, %v2548
    %v2552 = vmul.f32 %v2540, %v2548
    %v2553 = vmul.f32 %v2541, %v2548
    %v2554 = vmul.f32 %v2542, %v2548
    %v2555 = vsel %vm581, %v2550, 0.0
    %2556 = vadd.xlane.f32.xlu0 %v2555
    %v2557 = vpop.xlane.xlu0 %2556
    %v2558 = vsel %vm581, %v2551, 0.0
    %2559 = vadd.xlane.f32.xlu0 %v2558
    %v2560 = vpop.xlane.xlu0 %2559
    %v2561 = vsel %vm581, %v2552, 0.0
    %2562 = vadd.xlane.f32.xlu0 %v2561
    %v2563 = vpop.xlane.xlu0 %2562
    %v2564 = vsel %vm581, %v2553, 0.0
    %2565 = vadd.xlane.f32.xlu0 %v2564
    %v2566 = vpop.xlane.xlu0 %2565
    %v2567 = vsel %vm581, %v2554, 0.0
    %2568 = vadd.xlane.f32.xlu0 %v2567
    %v2569 = vpop.xlane.xlu0 %2568
    %v2570 = vld [vmem:[#allocation2] sm:$0x1]
    %v2572 = vlaneseq
    %v2573 = vshrl.u32 %v2572, 7
    %v2574 = vsub.s32 0, %v2573
    %v2575 = vrot.slane %v2570, %v2574
    %v2577 = vadd.f32 %v2557, %v2575
    %v2578 = vadd.f32 %v2560, %v2575
    %v2579 = vadd.f32 %v2563, %v2575
    %v2580 = vadd.f32 %v2566, %v2575
    %v2581 = vadd.f32 %v2569, %v2575
    %v2582 = vxor.u32 %v2577, 2147483648
    %v2583 = vxor.u32 %v2578, 2147483648
    %v2584 = vxor.u32 %v2579, 2147483648
    %v2585 = vxor.u32 %v2580, 2147483648
    %v2586 = vxor.u32 %v2581, 2147483648
    %v2587 = vmul.f32 %v2582, 1.442695
    %v2588 = vpow.pop %v2587
    %v2589 = vmul.f32 %v2583, 1.442695
    %v2590 = vpow.pop %v2589
    %v2591 = vmul.f32 %v2584, 1.442695
    %v2592 = vpow.pop %v2591
    %v2593 = vmul.f32 %v2585, 1.442695
    %v2594 = vpow.pop %v2593
    %v2595 = vmul.f32 %v2586, 1.442695
    %v2596 = vpow.pop %v2595
    %v2597 = vadd.f32 %v2588, 1.0
    %v2598 = vadd.f32 %v2590, 1.0
    %v2599 = vadd.f32 %v2592, 1.0
    %v2600 = vadd.f32 %v2594, 1.0
    %v2601 = vadd.f32 %v2596, 1.0
    %v2602 = vrcp.pop %v2597
    %v2603 = vmul.f32 1.0, %v2602
    %v2604 = vrcp.pop %v2598
    %v2605 = vmul.f32 1.0, %v2604
    %v2606 = vrcp.pop %v2599
    %v2607 = vmul.f32 1.0, %v2606
    %v2608 = vrcp.pop %v2600
    %v2609 = vmul.f32 1.0, %v2608
    %v2610 = vrcp.pop %v2601
    %v2611 = vmul.f32 1.0, %v2610
    %2613 = vrot.lane.b32.xlu0 %v2605, 1
    %v2614 = vpop.permute.xlu0 %2613
    %2617 = vrot.lane.b32.xlu0 %v2607, 2
    %v2618 = vpop.permute.xlu0 %2617
    %2621 = vrot.lane.b32.xlu0 %v2609, 3
    %v2622 = vpop.permute.xlu0 %2621
    %2625 = vrot.lane.b32.xlu0 %v2611, 4
    %v2626 = vpop.permute.xlu0 %2625
    %vm2628 = vcmask 7168
    %v2629 = vsel %vm2628, %v2603, %v2614
    %vm2630 = vcmask 15360
    %v2631 = vsel %vm2630, %v2629, %v2618
    %vm2632 = vcmask 23552
    %v2633 = vsel %vm2632, %v2631, %v2622
    %vm2634 = vcmask 31744
    %v2635 = vsel %vm2634, %v2633, %v2626
    %vm2636 = vcmask 39936
    %v2637 = vsel %vm2636, %v2635, 0.0
    %2638 = vadd.xlane.f32.xlu0 %v2637
    %v2639 = vpop.xlane.xlu0 %2638
    %v2640 = vrcp.pop %v2639
    %v2641 = vmul.f32 %v2635, %v2640
    %2642 = vst.msk [vmem:[#allocation56] sm:$0xff] %vm2636, %v2641
    // Predicated region
    $region310: #{tpu_custom_call.1} parent=1 // pred_check
      _
    $region311: #{tpu_custom_call.1} parent=1 // pred_check_branch
      %2644 = sbr.rel (0) target = $region313
    $region312: #{tpu_custom_call.1} parent=1 // pred_region
      %s2646 = ssub.s32 128, 128
      %2647 = vsyncadd [#allocation5], %s2646
      %s2649 = sshll.u32 [#allocation50], 4
      %s2650 = int_to_ptr.vmem [resolvable:$true] %s2649
      %2652 = dma.vmem_to_hbm [thread:$0]  %s2650, 128, %s95, [#allocation5]
    $region313: #{tpu_custom_call.1} parent=1 // pred_fallthru
      _
    // Predicated region
    $region314: #{tpu_custom_call.1} parent=1 // pred_check
      _
    $region315: #{tpu_custom_call.1} parent=1 // pred_check_branch
      %2654 = sbr.rel (0) target = $region317
    $region316: #{tpu_custom_call.1} parent=1 // pred_region
      %s2656 = ssub.s32 640, 640
      %2657 = vsyncadd [#allocation52], %s2656
      %s2658 = sshll.u32 [#allocation51], 4
      %s2659 = int_to_ptr.vmem [resolvable:$true] %s2658
      %2664 = dma.vmem_to_hbm [thread:$0]  %s2659, 640, %s97, [#allocation52], 128, 128, 8
    $region317: #{tpu_custom_call.1} parent=1 // pred_fallthru
      _
    // Predicated region
    $region318: #{tpu_custom_call.1} parent=1 // pred_check
      _
    $region319: #{tpu_custom_call.1} parent=1 // pred_check_branch
      %2666 = sbr.rel (0) target = $region321
    $region320: #{tpu_custom_call.1} parent=1 // pred_region
      %s2668 = ssub.s32 640, 640
      %2669 = vsyncadd [#allocation52], %s2668
      %s2670 = sshll.u32 [#allocation53], 4
      %s2671 = int_to_ptr.vmem [resolvable:$true] %s2670
      %2676 = dma.vmem_to_hbm [thread:$0]  %s2671, 640, %s99, [#allocation52], 128, 128, 8
    $region321: #{tpu_custom_call.1} parent=1 // pred_fallthru
      _
    // Predicated region
    $region322: #{tpu_custom_call.1} parent=1 // pred_check
      _
    $region323: #{tpu_custom_call.1} parent=1 // pred_check_branch
      %2678 = sbr.rel (0) target = $region325
    $region324: #{tpu_custom_call.1} parent=1 // pred_region
      %s2680 = ssub.s32 640, 640
      %2681 = vsyncadd [#allocation55], %s2680
      %s2682 = sshll.u32 [#allocation54], 4
      %s2683 = int_to_ptr.vmem [resolvable:$true] %s2682
      %2688 = dma.vmem_to_hbm [thread:$0]  %s2683, 640, %s101, [#allocation55], 128, 128, 8
    $region325: #{tpu_custom_call.1} parent=1 // pred_fallthru
      _
    // Predicated region
    $region326: #{tpu_custom_call.1} parent=1 // pred_check
      _
    $region327: #{tpu_custom_call.1} parent=1 // pred_check_branch
      %2690 = sbr.rel (0) target = $region329
    $region328: #{tpu_custom_call.1} parent=1 // pred_region
      %s2692 = ssub.s32 128, 128
      %2693 = vsyncadd [#allocation55], %s2692
      %s2695 = sshll.u32 [#allocation56], 4
      %s2696 = int_to_ptr.vmem [resolvable:$true] %s2695
      %2698 = dma.vmem_to_hbm [thread:$0]  %s2696, 128, %s103, [#allocation55]
    $region329: #{tpu_custom_call.1} parent=1 // pred_fallthru
      _
    // Predicated region
    $region330: #{tpu_custom_call.1} parent=1 // pred_check
      _
    $region331: #{tpu_custom_call.1} parent=1 // pred_check_branch
      %2700 = sbr.rel (0) target = $region333
    $region332: #{tpu_custom_call.1} parent=1 // pred_region
      %2701 = dma.done [#allocation5], 128
    $region333: #{tpu_custom_call.1} parent=1 // pred_fallthru
      _
    // Predicated region
    $region334: #{tpu_custom_call.1} parent=1 // pred_check
      _
    $region335: #{tpu_custom_call.1} parent=1 // pred_check_branch
      %2703 = sbr.rel (0) target = $region337
    $region336: #{tpu_custom_call.1} parent=1 // pred_region
      %2704 = dma.done [#allocation52], 640
    $region337: #{tpu_custom_call.1} parent=1 // pred_fallthru
      _
    // Predicated region
    $region338: #{tpu_custom_call.1} parent=1 // pred_check
      _
    $region339: #{tpu_custom_call.1} parent=1 // pred_check_branch
      %2706 = sbr.rel (0) target = $region341
    $region340: #{tpu_custom_call.1} parent=1 // pred_region
      %2707 = dma.done [#allocation52], 640
    $region341: #{tpu_custom_call.1} parent=1 // pred_fallthru
      _
    // Predicated region
    $region342: #{tpu_custom_call.1} parent=1 // pred_check
      _
    $region343: #{tpu_custom_call.1} parent=1 // pred_check_branch
      %2709 = sbr.rel (0) target = $region345
    $region344: #{tpu_custom_call.1} parent=1 // pred_region
      %2710 = dma.done [#allocation55], 640
    $region345: #{tpu_custom_call.1} parent=1 // pred_fallthru
      _
    // Predicated region
    $region346: #{tpu_custom_call.1} parent=1 // pred_check
      _
    $region347: #{tpu_custom_call.1} parent=1 // pred_check_branch
      %2712 = sbr.rel (0) target = $region349
    $region348: #{tpu_custom_call.1} parent=1 // pred_region
      %2713 = dma.done [#allocation55], 128
    $region349: #{tpu_custom_call.1} parent=1 // pred_fallthru
      _
    %2714 = vsyncpa [#allocation4], 1
    %2715 = vsyncpa [#allocation7], 1
    %2716 = vsyncpa [#allocation10], 1
    %2717 = vsyncpa [#allocation13], 1
    %2718 = vsyncpa [#allocation16], 1
    %2719 = vsyncpa [#allocation19], 1
    %2720 = vsyncpa [#allocation22], 1
    %2721 = vsyncpa [#allocation25], 1
    %2722 = vsyncpa [#allocation28], 1
    %2723 = vsyncpa [#allocation31], 1
    %2724 = vsyncpa [#allocation34], 1
    %2725 = vsyncpa [#allocation37], 1
    %2726 = vsyncpa [#allocation40], 1
    %2727 = vsyncpa [#allocation43], 1
    %2728 = vsyncpa [#allocation46], 1
    %2729 = vsyncpa [#allocation49], 1
    %2730 = vsyncpa [#allocation5], 1
    %2731 = vsyncpa [#allocation52], 1
    %2732 = vsyncpa [#allocation55], 1

// kernel: tpu_custom_call.1
$region0: #{tpu_custom_call.1}
  #allocation0 [shape = 'u32[]', space=smem, size = 0x4, offset = 0x4, fixed_abs, tag = 'smem constant byte address 0x4 - core index']
  #allocation1 [shape = 'u32[144,128]{1,0:T(1,128)}', space=vmem, size = 0x12000, scoped, tag = 'internal scratch']
  #allocation2 [shape = 'f32[1,1]{1,0:T(1,128)S(1)}', space=vmem, size = 0x200, scoped, tag = 'scoped memory for tpu_custom_call.1']
  %s0 = inlined_call_operand.smem [shape: u32[52], index: -1, kind: input, shape index: {}]
  %s1 = sld [smem:[%s0]]
  %s2 = scalar_lea.smem %s0, 1
  %s3 = sld [smem:[%s2]]
  %s4 = scalar_lea.smem %s0, 2
  %s5 = sld [smem:[%s4]]
  %s6 = scalar_lea.smem %s0, 3
  %s7 = sld [smem:[%s6]]
  %s8 = scalar_lea.smem %s0, 4
  %s9 = sld [smem:[%s8]]
  %s10 = scalar_lea.smem %s0, 5
  %s11 = sld [smem:[%s10]]
  %s12 = scalar_lea.smem %s0, 6
  %s13 = sld [smem:[%s12]]
  %s14 = scalar_lea.smem %s0, 7
  %s15 = sld [smem:[%s14]]
  %s16 = scalar_lea.smem %s0, 8
  %s17 = sld [smem:[%s16]]
  %s18 = scalar_lea.smem %s0, 9
  %s19 = sld [smem:[%s18]]
  %s20 = scalar_lea.smem %s0, 10
  %s21 = sld [smem:[%s20]]
  %s22 = scalar_lea.smem %s0, 11
  %s23 = sld [smem:[%s22]]
  %s24 = scalar_lea.smem %s0, 12
  %s25 = sld [smem:[%s24]]
  %s26 = scalar_lea.smem %s0, 13
  %s27 = sld [smem:[%s26]]
  %s28 = scalar_lea.smem %s0, 14
  %s29 = sld [smem:[%s28]]
  %s30 = scalar_lea.smem %s0, 15
  %s31 = sld [smem:[%s30]]
  %s32 = scalar_lea.smem %s0, 16
  %s33 = sld [smem:[%s32]]
  %s34 = scalar_lea.smem %s0, 17
  %s35 = sld [smem:[%s34]]
  %s36 = scalar_lea.smem %s0, 18
  %s37 = sld [smem:[%s36]]
  %s38 = scalar_lea.smem %s0, 19
  %s39 = sld [smem:[%s38]]
  %s40 = scalar_lea.smem %s0, 20
  %s41 = sld [smem:[%s40]]
  %s42 = scalar_lea.smem %s0, 21
  %s43 = sld [smem:[%s42]]
  %s44 = scalar_lea.smem %s0, 22
  %s45 = sld [smem:[%s44]]
  %s46 = scalar_lea.smem %s0, 23
  %s47 = sld [smem:[%s46]]
  %s48 = scalar_lea.smem %s0, 24
  %s49 = sld [smem:[%s48]]
  %s50 = scalar_lea.smem %s0, 25
  %s51 = sld [smem:[%s50]]
  %s52 = scalar_lea.smem %s0, 26
  %s53 = sld [smem:[%s52]]
  %s54 = scalar_lea.smem %s0, 27
  %s55 = sld [smem:[%s54]]
  %s56 = scalar_lea.smem %s0, 28
  %s57 = sld [smem:[%s56]]
  %s58 = scalar_lea.smem %s0, 29
  %s59 = sld [smem:[%s58]]
  %s60 = scalar_lea.smem %s0, 30
  %s61 = sld [smem:[%s60]]
  %s62 = scalar_lea.smem %s0, 31
  %s63 = sld [smem:[%s62]]
  %s64 = scalar_lea.smem %s0, 32
  %s65 = sld [smem:[%s64]]
  %s66 = scalar_lea.smem %s0, 33
  %s67 = sld [smem:[%s66]]
  %s68 = scalar_lea.smem %s0, 34
  %s69 = sld [smem:[%s68]]
  %s70 = scalar_lea.smem %s0, 35
  %s71 = sld [smem:[%s70]]
  %s72 = scalar_lea.smem %s0, 36
  %s73 = sld [smem:[%s72]]
  %s74 = scalar_lea.smem %s0, 37
  %s75 = sld [smem:[%s74]]
  %s76 = scalar_lea.smem %s0, 38
  %s77 = sld [smem:[%s76]]
  %s78 = scalar_lea.smem %s0, 39
  %s79 = sld [smem:[%s78]]
  %s80 = scalar_lea.smem %s0, 40
  %s81 = sld [smem:[%s80]]
  %s82 = scalar_lea.smem %s0, 41
  %s83 = sld [smem:[%s82]]
  %s84 = scalar_lea.smem %s0, 42
  %s85 = sld [smem:[%s84]]
  %s86 = scalar_lea.smem %s0, 43
  %s87 = sld [smem:[%s86]]
  %s88 = scalar_lea.smem %s0, 44
  %s89 = sld [smem:[%s88]]
  %s90 = scalar_lea.smem %s0, 45
  %s91 = sld [smem:[%s90]]
  %s92 = scalar_lea.smem %s0, 46
  %s93 = sld [smem:[%s92]]
  %s94 = scalar_lea.smem %s0, 47
  %s95 = sld [smem:[%s94]]
  %s96 = scalar_lea.smem %s0, 48
  %s97 = sld [smem:[%s96]]
  %s98 = scalar_lea.smem %s0, 49
  %s99 = sld [smem:[%s98]]
  %s100 = scalar_lea.smem %s0, 50
  %s101 = sld [smem:[%s100]]
  %s102 = scalar_lea.smem %s0, 51
  %s103 = sld [smem:[%s102]]
  %104 = xla_tuple %s95, %s97, %s99, %s101, %s103
  %s105 = sld [smem:[#allocation0]]
  $region350: #{tpu_custom_call.1} parent=0
    _
  %s107 = ssub.s32 1, %s105
  %s108 = scalar_select 0, %s107, %s105
  %v109 = vstv %s93
  %110 = vst [vmem:[#allocation2] sm:$0x1] %v109
  $region1: #{tpu_custom_call.1} parent=0
    #allocation3 [shape = 'u8[4096]{0}', space=vmem, size = 0x1000, scoped, tag = 'input window, operand 0, single buffered']
    #allocation4 [shape = 's32[1]{0}', space=sflag, size = 0x4, scoped, tag = 'scoped memory for tpu_custom_call.1']
    #allocation5 [shape = 's32[1]{0}', space=sflag, size = 0x4, scoped, tag = 'scoped memory for tpu_custom_call.1']
    #allocation6 [shape = 'u8[1024]{0}', space=vmem, size = 0x400, scoped, tag = 'input window, operand 2, single buffered']
    #allocation7 [shape = 's32[1]{0}', space=sflag, size = 0x4, scoped, tag = 'scoped memory for tpu_custom_call.1']
    #allocation8 [shape = 'u8[512]{0}', space=vmem, size = 0x400, scoped, tag = 'input window, operand 3, single buffered']
    #allocation9 [shape = 'u8[512]{0}', space=vmem, size = 0x400, scoped, tag = 'input window, operand 4, single buffered']
    #allocation10 [shape = 's32[1]{0}', space=sflag, size = 0x4, scoped, tag = 'scoped memory for tpu_custom_call.1']
    #allocation11 [shape = 'u8[512]{0}', space=vmem, size = 0x400, scoped, tag = 'input window, operand 5, single buffered']
    #allocation12 [shape = 'u8[512]{0}', space=vmem, size = 0x400, scoped, tag = 'input window, operand 6, single buffered']
    #allocation13 [shape = 's32[1]{0}', space=sflag, size = 0x4, scoped, tag = 'scoped memory for tpu_custom_call.1']
    #allocation14 [shape = 'u8[512]{0}', space=vmem, size = 0x400, scoped, tag = 'input window, operand 7, single buffered']
    #allocation15 [shape = 'u8[512]{0}', space=vmem, size = 0x400, scoped, tag = 'input window, operand 8, single buffered']
    #allocation16 [shape = 's32[1]{0}', space=sflag, size = 0x4, scoped, tag = 'scoped memory for tpu_custom_call.1']
    #allocation17 [shape = 'u8[512]{0}', space=vmem, size = 0x400, scoped, tag = 'input window, operand 10, single buffered']
    #allocation18 [shape = 'u8[512]{0}', space=vmem, size = 0x400, scoped, tag = 'input window, operand 12, single buffered']
    #allocation19 [shape = 's32[1]{0}', space=sflag, size = 0x4, scoped, tag = 'scoped memory for tpu_custom_call.1']
    #allocation20 [shape = 'u8[512]{0}', space=vmem, size = 0x400, scoped, tag = 'input window, operand 14, single buffered']
    #allocation21 [shape = 'u8[16384]{0}', space=vmem, size = 0x4000, scoped, tag = 'input window, operand 15, single buffered']
    #allocation22 [shape = 's32[1]{0}', space=sflag, size = 0x4, scoped, tag = 'scoped memory for tpu_custom_call.1']
    #allocation23 [shape = 'u8[512]{0}', space=vmem, size = 0x400, scoped, tag = 'input window, operand 16, single buffered']
    #allocation24 [shape = 'u8[512]{0}', space=vmem, size = 0x400, scoped, tag = 'input window, operand 17, single buffered']
    #allocation25 [shape = 's32[1]{0}', space=sflag, size = 0x4, scoped, tag = 'scoped memory for tpu_custom_call.1']
    #allocation26 [shape = 'u8[512]{0}', space=vmem, size = 0x400, scoped, tag = 'input window, operand 18, single buffered']
    #allocation27 [shape = 'u8[512]{0}', space=vmem, size = 0x400, scoped, tag = 'input window, operand 20, single buffered']
    #allocation28 [shape = 's32[1]{0}', space=sflag, size = 0x4, scoped, tag = 'scoped memory for tpu_custom_call.1']
    #allocation29 [shape = 'u8[512]{0}', space=vmem, size = 0x400, scoped, tag = 'input window, operand 21, single buffered']
    #allocation30 [shape = 'u8[512]{0}', space=vmem, size = 0x400, scoped, tag = 'input window, operand 22, single buffered']
    #allocation31 [shape = 's32[1]{0}', space=sflag, size = 0x4, scoped, tag = 'scoped memory for tpu_custom_call.1']
    #allocation32 [shape = 'u8[1024]{0}', space=vmem, size = 0x400, scoped, tag = 'input window, operand 24, single buffered']
    #allocation33 [shape = 'u8[16384]{0}', space=vmem, size = 0x4000, scoped, tag = 'input window, operand 25, single buffered']
    #allocation34 [shape = 's32[1]{0}', space=sflag, size = 0x4, scoped, tag = 'scoped memory for tpu_custom_call.1']
    #allocation35 [shape = 'u8[512]{0}', space=vmem, size = 0x400, scoped, tag = 'input window, operand 26, single buffered']
    #allocation36 [shape = 'u8[512]{0}', space=vmem, size = 0x400, scoped, tag = 'input window, operand 27, single buffered']
    #allocation37 [shape = 's32[1]{0}', space=sflag, size = 0x4, scoped, tag = 'scoped memory for tpu_custom_call.1']
    #allocation38 [shape = 'u8[512]{0}', space=vmem, size = 0x400, scoped, tag = 'input window, operand 28, single buffered']
    #allocation39 [shape = 'u8[512]{0}', space=vmem, size = 0x400, scoped, tag = 'input window, operand 30, single buffered']
    #allocation40 [shape = 's32[1]{0}', space=sflag, size = 0x4, scoped, tag = 'scoped memory for tpu_custom_call.1']
    #allocation41 [shape = 'u8[512]{0}', space=vmem, size = 0x400, scoped, tag = 'input window, operand 32, single buffered']
    #allocation42 [shape = 'u8[512]{0}', space=vmem, size = 0x400, scoped, tag = 'input window, operand 33, single buffered']
    #allocation43 [shape = 's32[1]{0}', space=sflag, size = 0x4, scoped, tag = 'scoped memory for tpu_custom_call.1']
    #allocation44 [shape = 'u8[512]{0}', space=vmem, size = 0x400, scoped, tag = 'input window, operand 34, single buffered']
    #allocation45 [shape = 'u8[32768]{0}', space=vmem, size = 0x8000, scoped, tag = 'input window, operand 37, single buffered']
    #allocation46 [shape = 's32[1]{0}', space=sflag, size = 0x4, scoped, tag = 'scoped memory for tpu_custom_call.1']
    #allocation47 [shape = 'u8[512]{0}', space=vmem, size = 0x400, scoped, tag = 'input window, operand 42, single buffered']
    #allocation48 [shape = 'u8[512]{0}', space=vmem, size = 0x400, scoped, tag = 'input window, operand 44, single buffered']
    #allocation49 [shape = 's32[1]{0}', space=sflag, size = 0x4, scoped, tag = 'scoped memory for tpu_custom_call.1']
    #allocation50 [shape = 'u8[4096]{0}', space=vmem, size = 0x1000, scoped, tag = 'output window, operand 0, single buffered']
    #allocation51 [shape = 'u8[20480]{0}', space=vmem, size = 0x5000, scoped, tag = 'output window, operand 1, single buffered']
    #allocation52 [shape = 's32[1]{0}', space=sflag, size = 0x4, scoped, tag = 'scoped memory for tpu_custom_call.1']
    #allocation53 [shape = 'u8[20480]{0}', space=vmem, size = 0x5000, scoped, tag = 'output window, operand 2, single buffered']
    #allocation54 [shape = 'u8[20480]{0}', space=vmem, size = 0x5000, scoped, tag = 'output window, operand 3, single buffered']
    #allocation55 [shape = 's32[1]{0}', space=sflag, size = 0x4, scoped, tag = 'scoped memory for tpu_custom_call.1']
    #allocation56 [shape = 'u8[4096]{0}', space=vmem, size = 0x1000, scoped, tag = 'output window, operand 4, single buffered']
    %111 = vsyncpa [#allocation4], 0
    %112 = vsyncpa [#allocation7], 0
    %113 = vsyncpa [#allocation10], 0
    %114 = vsyncpa [#allocation13], 0
    %115 = vsyncpa [#allocation16], 0
    %116 = vsyncpa [#allocation19], 0
    %117 = vsyncpa [#allocation22], 0
    %118 = vsyncpa [#allocation25], 0
    %119 = vsyncpa [#allocation28], 0
    %120 = vsyncpa [#allocation31], 0
    %121 = vsyncpa [#allocation34], 0
    %122 = vsyncpa [#allocation37], 0
    %123 = vsyncpa [#allocation40], 0
    %124 = vsyncpa [#allocation43], 0
    %125 = vsyncpa [#allocation46], 0
    %126 = vsyncpa [#allocation49], 0
    %127 = vsyncpa [#allocation5], 0
    %128 = vsyncpa [#allocation52], 0
    %129 = vsyncpa [#allocation55], 0
    // Predicated region
    $region2: #{tpu_custom_call.1} parent=1 // pred_check
      _
    $region3: #{tpu_custom_call.1} parent=1 // pred_check_branch
      %131 = sbr.rel (0) target = $region5
    $region4: #{tpu_custom_call.1} parent=1 // pred_region
      %s133 = ssub.s32 128, 128
      %134 = vsyncadd [#allocation4], %s133
      %s136 = sshll.u32 [#allocation3], 4
      %s137 = int_to_ptr.vmem [resolvable:$true] %s136
      %139 = dma.hbm_to_vmem [thread:$0]  %s1, 128, %s137, [#allocation4]
    $region5: #{tpu_custom_call.1} parent=1 // pred_fallthru
      _
    // Predicated region
    $region6: #{tpu_custom_call.1} parent=1 // pred_check
      _
    $region7: #{tpu_custom_call.1} parent=1 // pred_check_branch
      %141 = sbr.rel (0) target = $region9
    $region8: #{tpu_custom_call.1} parent=1 // pred_region
      _
    $region9: #{tpu_custom_call.1} parent=1 // pred_fallthru
      _
    // Predicated region
    $region10: #{tpu_custom_call.1} parent=1 // pred_check
      _
    $region11: #{tpu_custom_call.1} parent=1 // pred_check_branch
      %143 = sbr.rel (0) target = $region13
    $region12: #{tpu_custom_call.1} parent=1 // pred_region
      %s145 = ssub.s32 32, 32
      %146 = vsyncadd [#allocation7], %s145
      %s148 = sshll.u32 [#allocation6], 4
      %s149 = int_to_ptr.vmem [resolvable:$true] %s148
      %151 = dma.hbm_to_vmem [thread:$0]  %s5, 32, %s149, [#allocation7]
    $region13: #{tpu_custom_call.1} parent=1 // pred_fallthru
      _
    // Predicated region
    $region14: #{tpu_custom_call.1} parent=1 // pred_check
      _
    $region15: #{tpu_custom_call.1} parent=1 // pred_check_branch
      %153 = sbr.rel (0) target = $region17
    $region16: #{tpu_custom_call.1} parent=1 // pred_region
      %s155 = ssub.s32 16, 16
      %156 = vsyncadd [#allocation7], %s155
      %s158 = sshll.u32 [#allocation8], 4
      %s159 = int_to_ptr.vmem [resolvable:$true] %s158
      %161 = dma.hbm_to_vmem [thread:$0]  %s7, 16, %s159, [#allocation7]
    $region17: #{tpu_custom_call.1} parent=1 // pred_fallthru
      _
    // Predicated region
    $region18: #{tpu_custom_call.1} parent=1 // pred_check
      _
    $region19: #{tpu_custom_call.1} parent=1 // pred_check_branch
      %163 = sbr.rel (0) target = $region21
    $region20: #{tpu_custom_call.1} parent=1 // pred_region
      %s165 = ssub.s32 16, 16
      %166 = vsyncadd [#allocation10], %s165
      %s168 = sshll.u32 [#allocation9], 4
      %s169 = int_to_ptr.vmem [resolvable:$true] %s168
      %171 = dma.hbm_to_vmem [thread:$0]  %s9, 16, %s169, [#allocation10]
    $region21: #{tpu_custom_call.1} parent=1 // pred_fallthru
      _
    // Predicated region
    $region22: #{tpu_custom_call.1} parent=1 // pred_check
      _
    $region23: #{tpu_custom_call.1} parent=1 // pred_check_branch
      %173 = sbr.rel (0) target = $region25
    $region24: #{tpu_custom_call.1} parent=1 // pred_region
      %s175 = ssub.s32 16, 16
      %176 = vsyncadd [#allocation10], %s175
      %s178 = sshll.u32 [#allocation11], 4
      %s179 = int_to_ptr.vmem [resolvable:$true] %s178
      %181 = dma.hbm_to_vmem [thread:$0]  %s11, 16, %s179, [#allocation10]
    $region25: #{tpu_custom_call.1} parent=1 // pred_fallthru
      _
    // Predicated region
    $region26: #{tpu_custom_call.1} parent=1 // pred_check
      _
    $region27: #{tpu_custom_call.1} parent=1 // pred_check_branch
      %183 = sbr.rel (0) target = $region29
    $region28: #{tpu_custom_call.1} parent=1 // pred_region
      %s185 = ssub.s32 16, 16
      %186 = vsyncadd [#allocation13], %s185
      %s188 = sshll.u32 [#allocation12], 4
      %s189 = int_to_ptr.vmem [resolvable:$true] %s188
      %191 = dma.hbm_to_vmem [thread:$0]  %s13, 16, %s189, [#allocation13]
    $region29: #{tpu_custom_call.1} parent=1 // pred_fallthru
      _
    // Predicated region
    $region30: #{tpu_custom_call.1} parent=1 // pred_check
      _
    $region31: #{tpu_custom_call.1} parent=1 // pred_check_branch
      %193 = sbr.rel (0) target = $region33
    $region32: #{tpu_custom_call.1} parent=1 // pred_region
      %s195 = ssub.s32 16, 16
      %196 = vsyncadd [#allocation13], %s195
      %s198 = sshll.u32 [#allocation14], 4
      %s199 = int_to_ptr.vmem [resolvable:$true] %s198
      %201 = dma.hbm_to_vmem [thread:$0]  %s15, 16, %s199, [#allocation13]
    $region33: #{tpu_custom_call.1} parent=1 // pred_fallthru
      _
    // Predicated region
    $region34: #{tpu_custom_call.1} parent=1 // pred_check
      _
    $region35: #{tpu_custom_call.1} parent=1 // pred_check_branch
      %203 = sbr.rel (0) target = $region37
    $region36: #{tpu_custom_call.1} parent=1 // pred_region
      %s205 = ssub.s32 16, 16
      %206 = vsyncadd [#allocation16], %s205
      %s208 = sshll.u32 [#allocation15], 4
      %s209 = int_to_ptr.vmem [resolvable:$true] %s208
      %211 = dma.hbm_to_vmem [thread:$0]  %s17, 16, %s209, [#allocation16]
    $region37: #{tpu_custom_call.1} parent=1 // pred_fallthru
      _
    // Predicated region
    $region38: #{tpu_custom_call.1} parent=1 // pred_check
      _
    $region39: #{tpu_custom_call.1} parent=1 // pred_check_branch
      %213 = sbr.rel (0) target = $region41
    $region40: #{tpu_custom_call.1} parent=1 // pred_region
      _
    $region41: #{tpu_custom_call.1} parent=1 // pred_fallthru
      _
    // Predicated region
    $region42: #{tpu_custom_call.1} parent=1 // pred_check
      _
    $region43: #{tpu_custom_call.1} parent=1 // pred_check_branch
      %215 = sbr.rel (0) target = $region45
    $region44: #{tpu_custom_call.1} parent=1 // pred_region
      %s217 = ssub.s32 16, 16
      %218 = vsyncadd [#allocation16], %s217
      %s220 = sshll.u32 [#allocation17], 4
      %s221 = int_to_ptr.vmem [resolvable:$true] %s220
      %223 = dma.hbm_to_vmem [thread:$0]  %s21, 16, %s221, [#allocation16]
    $region45: #{tpu_custom_call.1} parent=1 // pred_fallthru
      _
    // Predicated region
    $region46: #{tpu_custom_call.1} parent=1 // pred_check
      _
    $region47: #{tpu_custom_call.1} parent=1 // pred_check_branch
      %225 = sbr.rel (0) target = $region49
    $region48: #{tpu_custom_call.1} parent=1 // pred_region
      _
    $region49: #{tpu_custom_call.1} parent=1 // pred_fallthru
      _
    // Predicated region
    $region50: #{tpu_custom_call.1} parent=1 // pred_check
      _
    $region51: #{tpu_custom_call.1} parent=1 // pred_check_branch
      %227 = sbr.rel (0) target = $region53
    $region52: #{tpu_custom_call.1} parent=1 // pred_region
      %s229 = ssub.s32 16, 16
      %230 = vsyncadd [#allocation19], %s229
      %s232 = sshll.u32 [#allocation18], 4
      %s233 = int_to_ptr.vmem [resolvable:$true] %s232
      %235 = dma.hbm_to_vmem [thread:$0]  %s25, 16, %s233, [#allocation19]
    $region53: #{tpu_custom_call.1} parent=1 // pred_fallthru
      _
    // Predicated region
    $region54: #{tpu_custom_call.1} parent=1 // pred_check
      _
    $region55: #{tpu_custom_call.1} parent=1 // pred_check_branch
      %237 = sbr.rel (0) target = $region57
    $region56: #{tpu_custom_call.1} parent=1 // pred_region
      _
    $region57: #{tpu_custom_call.1} parent=1 // pred_fallthru
      _
    // Predicated region
    $region58: #{tpu_custom_call.1} parent=1 // pred_check
      _
    $region59: #{tpu_custom_call.1} parent=1 // pred_check_branch
      %239 = sbr.rel (0) target = $region61
    $region60: #{tpu_custom_call.1} parent=1 // pred_region
      %s241 = ssub.s32 16, 16
      %242 = vsyncadd [#allocation19], %s241
      %s244 = sshll.u32 [#allocation20], 4
      %s245 = int_to_ptr.vmem [resolvable:$true] %s244
      %247 = dma.hbm_to_vmem [thread:$0]  %s29, 16, %s245, [#allocation19]
    $region61: #{tpu_custom_call.1} parent=1 // pred_fallthru
      _
    // Predicated region
    $region62: #{tpu_custom_call.1} parent=1 // pred_check
      _
    $region63: #{tpu_custom_call.1} parent=1 // pred_check_branch
      %249 = sbr.rel (0) target = $region65
    $region64: #{tpu_custom_call.1} parent=1 // pred_region
      %s251 = ssub.s32 512, 512
      %252 = vsyncadd [#allocation22], %s251
      %s253 = sshll.u32 [#allocation21], 4
      %s254 = int_to_ptr.vmem [resolvable:$true] %s253
      %259 = dma.hbm_to_vmem [thread:$0]  %s31, 512, %s254, [#allocation22], 128, 128, 8
    $region65: #{tpu_custom_call.1} parent=1 // pred_fallthru
      _
    // Predicated region
    $region66: #{tpu_custom_call.1} parent=1 // pred_check
      _
    $region67: #{tpu_custom_call.1} parent=1 // pred_check_branch
      %261 = sbr.rel (0) target = $region69
    $region68: #{tpu_custom_call.1} parent=1 // pred_region
      %s263 = ssub.s32 16, 16
      %264 = vsyncadd [#allocation22], %s263
      %s266 = sshll.u32 [#allocation23], 4
      %s267 = int_to_ptr.vmem [resolvable:$true] %s266
      %269 = dma.hbm_to_vmem [thread:$0]  %s33, 16, %s267, [#allocation22]
    $region69: #{tpu_custom_call.1} parent=1 // pred_fallthru
      _
    // Predicated region
    $region70: #{tpu_custom_call.1} parent=1 // pred_check
      _
    $region71: #{tpu_custom_call.1} parent=1 // pred_check_branch
      %271 = sbr.rel (0) target = $region73
    $region72: #{tpu_custom_call.1} parent=1 // pred_region
      %s273 = ssub.s32 16, 16
      %274 = vsyncadd [#allocation25], %s273
      %s276 = sshll.u32 [#allocation24], 4
      %s277 = int_to_ptr.vmem [resolvable:$true] %s276
      %279 = dma.hbm_to_vmem [thread:$0]  %s35, 16, %s277, [#allocation25]
    $region73: #{tpu_custom_call.1} parent=1 // pred_fallthru
      _
    // Predicated region
    $region74: #{tpu_custom_call.1} parent=1 // pred_check
      _
    $region75: #{tpu_custom_call.1} parent=1 // pred_check_branch
      %281 = sbr.rel (0) target = $region77
    $region76: #{tpu_custom_call.1} parent=1 // pred_region
      %s283 = ssub.s32 16, 16
      %284 = vsyncadd [#allocation25], %s283
      %s286 = sshll.u32 [#allocation26], 4
      %s287 = int_to_ptr.vmem [resolvable:$true] %s286
      %289 = dma.hbm_to_vmem [thread:$0]  %s37, 16, %s287, [#allocation25]
    $region77: #{tpu_custom_call.1} parent=1 // pred_fallthru
      _
    // Predicated region
    $region78: #{tpu_custom_call.1} parent=1 // pred_check
      _
    $region79: #{tpu_custom_call.1} parent=1 // pred_check_branch
      %291 = sbr.rel (0) target = $region81
    $region80: #{tpu_custom_call.1} parent=1 // pred_region
      _
    $region81: #{tpu_custom_call.1} parent=1 // pred_fallthru
      _
    // Predicated region
    $region82: #{tpu_custom_call.1} parent=1 // pred_check
      _
    $region83: #{tpu_custom_call.1} parent=1 // pred_check_branch
      %293 = sbr.rel (0) target = $region85
    $region84: #{tpu_custom_call.1} parent=1 // pred_region
      %s295 = ssub.s32 16, 16
      %296 = vsyncadd [#allocation28], %s295
      %s298 = sshll.u32 [#allocation27], 4
      %s299 = int_to_ptr.vmem [resolvable:$true] %s298
      %301 = dma.hbm_to_vmem [thread:$0]  %s41, 16, %s299, [#allocation28]
    $region85: #{tpu_custom_call.1} parent=1 // pred_fallthru
      _
    // Predicated region
    $region86: #{tpu_custom_call.1} parent=1 // pred_check
      _
    $region87: #{tpu_custom_call.1} parent=1 // pred_check_branch
      %303 = sbr.rel (0) target = $region89
    $region88: #{tpu_custom_call.1} parent=1 // pred_region
      %s305 = ssub.s32 16, 16
      %306 = vsyncadd [#allocation28], %s305
      %s308 = sshll.u32 [#allocation29], 4
      %s309 = int_to_ptr.vmem [resolvable:$true] %s308
      %311 = dma.hbm_to_vmem [thread:$0]  %s43, 16, %s309, [#allocation28]
    $region89: #{tpu_custom_call.1} parent=1 // pred_fallthru
      _
    // Predicated region
    $region90: #{tpu_custom_call.1} parent=1 // pred_check
      _
    $region91: #{tpu_custom_call.1} parent=1 // pred_check_branch
      %313 = sbr.rel (0) target = $region93
    $region92: #{tpu_custom_call.1} parent=1 // pred_region
      %s315 = ssub.s32 16, 16
      %316 = vsyncadd [#allocation31], %s315
      %s318 = sshll.u32 [#allocation30], 4
      %s319 = int_to_ptr.vmem [resolvable:$true] %s318
      %321 = dma.hbm_to_vmem [thread:$0]  %s45, 16, %s319, [#allocation31]
    $region93: #{tpu_custom_call.1} parent=1 // pred_fallthru
      _
    // Predicated region
    $region94: #{tpu_custom_call.1} parent=1 // pred_check
      _
    $region95: #{tpu_custom_call.1} parent=1 // pred_check_branch
      %323 = sbr.rel (0) target = $region97
    $region96: #{tpu_custom_call.1} parent=1 // pred_region
      _
    $region97: #{tpu_custom_call.1} parent=1 // pred_fallthru
      _
    // Predicated region
    $region98: #{tpu_custom_call.1} parent=1 // pred_check
      _
    $region99: #{tpu_custom_call.1} parent=1 // pred_check_branch
      %325 = sbr.rel (0) target = $region101
    $region100: #{tpu_custom_call.1} parent=1 // pred_region
      %s327 = ssub.s32 32, 32
      %328 = vsyncadd [#allocation31], %s327
      %s330 = sshll.u32 [#allocation32], 4
      %s331 = int_to_ptr.vmem [resolvable:$true] %s330
      %333 = dma.hbm_to_vmem [thread:$0]  %s49, 32, %s331, [#allocation31]
    $region101: #{tpu_custom_call.1} parent=1 // pred_fallthru
      _
    // Predicated region
    $region102: #{tpu_custom_call.1} parent=1 // pred_check
      _
    $region103: #{tpu_custom_call.1} parent=1 // pred_check_branch
      %335 = sbr.rel (0) target = $region105
    $region104: #{tpu_custom_call.1} parent=1 // pred_region
      %s337 = ssub.s32 512, 512
      %338 = vsyncadd [#allocation34], %s337
      %s339 = sshll.u32 [#allocation33], 4
      %s340 = int_to_ptr.vmem [resolvable:$true] %s339
      %345 = dma.hbm_to_vmem [thread:$0]  %s51, 512, %s340, [#allocation34], 128, 128, 8
    $region105: #{tpu_custom_call.1} parent=1 // pred_fallthru
      _
    // Predicated region
    $region106: #{tpu_custom_call.1} parent=1 // pred_check
      _
    $region107: #{tpu_custom_call.1} parent=1 // pred_check_branch
      %347 = sbr.rel (0) target = $region109
    $region108: #{tpu_custom_call.1} parent=1 // pred_region
      %s349 = ssub.s32 16, 16
      %350 = vsyncadd [#allocation34], %s349
      %s352 = sshll.u32 [#allocation35], 4
      %s353 = int_to_ptr.vmem [resolvable:$true] %s352
      %355 = dma.hbm_to_vmem [thread:$0]  %s53, 16, %s353, [#allocation34]
    $region109: #{tpu_custom_call.1} parent=1 // pred_fallthru
      _
    // Predicated region
    $region110: #{tpu_custom_call.1} parent=1 // pred_check
      _
    $region111: #{tpu_custom_call.1} parent=1 // pred_check_branch
      %357 = sbr.rel (0) target = $region113
    $region112: #{tpu_custom_call.1} parent=1 // pred_region
      %s359 = ssub.s32 16, 16
      %360 = vsyncadd [#allocation37], %s359
      %s362 = sshll.u32 [#allocation36], 4
      %s363 = int_to_ptr.vmem [resolvable:$true] %s362
      %365 = dma.hbm_to_vmem [thread:$0]  %s55, 16, %s363, [#allocation37]
    $region113: #{tpu_custom_call.1} parent=1 // pred_fallthru
      _
    // Predicated region
    $region114: #{tpu_custom_call.1} parent=1 // pred_check
      _
    $region115: #{tpu_custom_call.1} parent=1 // pred_check_branch
      %367 = sbr.rel (0) target = $region117
    $region116: #{tpu_custom_call.1} parent=1 // pred_region
      %s369 = ssub.s32 16, 16
      %370 = vsyncadd [#allocation37], %s369
      %s372 = sshll.u32 [#allocation38], 4
      %s373 = int_to_ptr.vmem [resolvable:$true] %s372
      %375 = dma.hbm_to_vmem [thread:$0]  %s57, 16, %s373, [#allocation37]
    $region117: #{tpu_custom_call.1} parent=1 // pred_fallthru
      _
    // Predicated region
    $region118: #{tpu_custom_call.1} parent=1 // pred_check
      _
    $region119: #{tpu_custom_call.1} parent=1 // pred_check_branch
      %377 = sbr.rel (0) target = $region121
    $region120: #{tpu_custom_call.1} parent=1 // pred_region
      _
    $region121: #{tpu_custom_call.1} parent=1 // pred_fallthru
      _
    // Predicated region
    $region122: #{tpu_custom_call.1} parent=1 // pred_check
      _
    $region123: #{tpu_custom_call.1} parent=1 // pred_check_branch
      %379 = sbr.rel (0) target = $region125
    $region124: #{tpu_custom_call.1} parent=1 // pred_region
      %s381 = ssub.s32 16, 16
      %382 = vsyncadd [#allocation40], %s381
      %s384 = sshll.u32 [#allocation39], 4
      %s385 = int_to_ptr.vmem [resolvable:$true] %s384
      %387 = dma.hbm_to_vmem [thread:$0]  %s61, 16, %s385, [#allocation40]
    $region125: #{tpu_custom_call.1} parent=1 // pred_fallthru
      _
    // Predicated region
    $region126: #{tpu_custom_call.1} parent=1 // pred_check
      _
    $region127: #{tpu_custom_call.1} parent=1 // pred_check_branch
      %389 = sbr.rel (0) target = $region129
    $region128: #{tpu_custom_call.1} parent=1 // pred_region
      _
    $region129: #{tpu_custom_call.1} parent=1 // pred_fallthru
      _
    // Predicated region
    $region130: #{tpu_custom_call.1} parent=1 // pred_check
      _
    $region131: #{tpu_custom_call.1} parent=1 // pred_check_branch
      %391 = sbr.rel (0) target = $region133
    $region132: #{tpu_custom_call.1} parent=1 // pred_region
      %s393 = ssub.s32 16, 16
      %394 = vsyncadd [#allocation40], %s393
      %s396 = sshll.u32 [#allocation41], 4
      %s397 = int_to_ptr.vmem [resolvable:$true] %s396
      %399 = dma.hbm_to_vmem [thread:$0]  %s65, 16, %s397, [#allocation40]
    $region133: #{tpu_custom_call.1} parent=1 // pred_fallthru
      _
    // Predicated region
    $region134: #{tpu_custom_call.1} parent=1 // pred_check
      _
    $region135: #{tpu_custom_call.1} parent=1 // pred_check_branch
      %401 = sbr.rel (0) target = $region137
    $region136: #{tpu_custom_call.1} parent=1 // pred_region
      %s403 = ssub.s32 16, 16
      %404 = vsyncadd [#allocation43], %s403
      %s406 = sshll.u32 [#allocation42], 4
      %s407 = int_to_ptr.vmem [resolvable:$true] %s406
      %409 = dma.hbm_to_vmem [thread:$0]  %s67, 16, %s407, [#allocation43]
    $region137: #{tpu_custom_call.1} parent=1 // pred_fallthru
      _
    // Predicated region
    $region138: #{tpu_custom_call.1} parent=1 // pred_check
      _
    $region139: #{tpu_custom_call.1} parent=1 // pred_check_branch
      %411 = sbr.rel (0) target = $region141
    $region140: #{tpu_custom_call.1} parent=1 // pred_region
      %s413 = ssub.s32 16, 16
      %414 = vsyncadd [#allocation43], %s413
      %s416 = sshll.u32 [#allocation44], 4
      %s417 = int_to_ptr.vmem [resolvable:$true] %s416
      %419 = dma.hbm_to_vmem [thread:$0]  %s69, 16, %s417, [#allocation43]
    $region141: #{tpu_custom_call.1} parent=1 // pred_fallthru
      _
    // Predicated region
    $region142: #{tpu_custom_call.1} parent=1 // pred_check
      _
    $region143: #{tpu_custom_call.1} parent=1 // pred_check_branch
      %421 = sbr.rel (0) target = $region145
    $region144: #{tpu_custom_call.1} parent=1 // pred_region
      _
    $region145: #{tpu_custom_call.1} parent=1 // pred_fallthru
      _
    // Predicated region
    $region146: #{tpu_custom_call.1} parent=1 // pred_check
      _
    $region147: #{tpu_custom_call.1} parent=1 // pred_check_branch
      %423 = sbr.rel (0) target = $region149
    $region148: #{tpu_custom_call.1} parent=1 // pred_region
      _
    $region149: #{tpu_custom_call.1} parent=1 // pred_fallthru
      _
    // Predicated region
    $region150: #{tpu_custom_call.1} parent=1 // pred_check
      _
    $region151: #{tpu_custom_call.1} parent=1 // pred_check_branch
      %425 = sbr.rel (0) target = $region153
    $region152: #{tpu_custom_call.1} parent=1 // pred_region
      %s427 = ssub.s32 1024, 1024
      %428 = vsyncadd [#allocation46], %s427
      %s429 = sshll.u32 [#allocation45], 4
      %s430 = int_to_ptr.vmem [resolvable:$true] %s429
      %435 = dma.hbm_to_vmem [thread:$0]  %s75, 1024, %s430, [#allocation46], 128, 128, 8
    $region153: #{tpu_custom_call.1} parent=1 // pred_fallthru
      _
    // Predicated region
    $region154: #{tpu_custom_call.1} parent=1 // pred_check
      _
    $region155: #{tpu_custom_call.1} parent=1 // pred_check_branch
      %437 = sbr.rel (0) target = $region157
    $region156: #{tpu_custom_call.1} parent=1 // pred_region
      _
    $region157: #{tpu_custom_call.1} parent=1 // pred_fallthru
      _
    // Predicated region
    $region158: #{tpu_custom_call.1} parent=1 // pred_check
      _
    $region159: #{tpu_custom_call.1} parent=1 // pred_check_branch
      %439 = sbr.rel (0) target = $region161
    $region160: #{tpu_custom_call.1} parent=1 // pred_region
      _
    $region161: #{tpu_custom_call.1} parent=1 // pred_fallthru
      _
    // Predicated region
    $region162: #{tpu_custom_call.1} parent=1 // pred_check
      _
    $region163: #{tpu_custom_call.1} parent=1 // pred_check_branch
      %441 = sbr.rel (0) target = $region165
    $region164: #{tpu_custom_call.1} parent=1 // pred_region
      _
    $region165: #{tpu_custom_call.1} parent=1 // pred_fallthru
      _
    // Predicated region
    $region166: #{tpu_custom_call.1} parent=1 // pred_check
      _
    $region167: #{tpu_custom_call.1} parent=1 // pred_check_branch
      %443 = sbr.rel (0) target = $region169
    $region168: #{tpu_custom_call.1} parent=1 // pred_region
      _
    $region169: #{tpu_custom_call.1} parent=1 // pred_fallthru
      _
    // Predicated region
    $region170: #{tpu_custom_call.1} parent=1 // pred_check
      _
    $region171: #{tpu_custom_call.1} parent=1 // pred_check_branch
      %445 = sbr.rel (0) target = $region173
    $region172: #{tpu_custom_call.1} parent=1 // pred_region
      %s447 = ssub.s32 16, 16
      %448 = vsyncadd [#allocation46], %s447
      %s450 = sshll.u32 [#allocation47], 4
      %s451 = int_to_ptr.vmem [resolvable:$true] %s450
      %453 = dma.hbm_to_vmem [thread:$0]  %s85, 16, %s451, [#allocation46]
    $region173: #{tpu_custom_call.1} parent=1 // pred_fallthru
      _
    // Predicated region
    $region174: #{tpu_custom_call.1} parent=1 // pred_check
      _
    $region175: #{tpu_custom_call.1} parent=1 // pred_check_branch
      %455 = sbr.rel (0) target = $region177
    $region176: #{tpu_custom_call.1} parent=1 // pred_region
      _
    $region177: #{tpu_custom_call.1} parent=1 // pred_fallthru
      _
    // Predicated region
    $region178: #{tpu_custom_call.1} parent=1 // pred_check
      _
    $region179: #{tpu_custom_call.1} parent=1 // pred_check_branch
      %457 = sbr.rel (0) target = $region181
    $region180: #{tpu_custom_call.1} parent=1 // pred_region
      %s459 = ssub.s32 16, 16
      %460 = vsyncadd [#allocation49], %s459
      %s462 = sshll.u32 [#allocation48], 4
      %s463 = int_to_ptr.vmem [resolvable:$true] %s462
      %465 = dma.hbm_to_vmem [thread:$0]  %s89, 16, %s463, [#allocation49]
    $region181: #{tpu_custom_call.1} parent=1 // pred_fallthru
      _
    // Predicated region
    $region182: #{tpu_custom_call.1} parent=1 // pred_check
      _
    $region183: #{tpu_custom_call.1} parent=1 // pred_check_branch
      %467 = sbr.rel (0) target = $region185
    $region184: #{tpu_custom_call.1} parent=1 // pred_region
      _
    $region185: #{tpu_custom_call.1} parent=1 // pred_fallthru
      _
    // Predicated region
    $region186: #{tpu_custom_call.1} parent=1 // pred_check
      _
    $region187: #{tpu_custom_call.1} parent=1 // pred_check_branch
      %469 = sbr.rel (0) target = $region189
    $region188: #{tpu_custom_call.1} parent=1 // pred_region
      _
    $region189: #{tpu_custom_call.1} parent=1 // pred_fallthru
      _
    // Predicated region
    $region190: #{tpu_custom_call.1} parent=1 // pred_check
      _
    $region191: #{tpu_custom_call.1} parent=1 // pred_check_branch
      %471 = sbr.rel (0) target = $region193
    $region192: #{tpu_custom_call.1} parent=1 // pred_region
      %472 = dma.done [#allocation4], 128
    $region193: #{tpu_custom_call.1} parent=1 // pred_fallthru
      _
    // Predicated region
    $region194: #{tpu_custom_call.1} parent=1 // pred_check
      _
    $region195: #{tpu_custom_call.1} parent=1 // pred_check_branch
      %474 = sbr.rel (0) target = $region197
    $region196: #{tpu_custom_call.1} parent=1 // pred_region
      %475 = dma.done [#allocation7], 32
    $region197: #{tpu_custom_call.1} parent=1 // pred_fallthru
      _
    // Predicated region
    $region198: #{tpu_custom_call.1} parent=1 // pred_check
      _
    $region199: #{tpu_custom_call.1} parent=1 // pred_check_branch
      %477 = sbr.rel (0) target = $region201
    $region200: #{tpu_custom_call.1} parent=1 // pred_region
      %478 = dma.done [#allocation7], 16
    $region201: #{tpu_custom_call.1} parent=1 // pred_fallthru
      _
    // Predicated region
    $region202: #{tpu_custom_call.1} parent=1 // pred_check
      _
    $region203: #{tpu_custom_call.1} parent=1 // pred_check_branch
      %480 = sbr.rel (0) target = $region205
    $region204: #{tpu_custom_call.1} parent=1 // pred_region
      %481 = dma.done [#allocation10], 16
    $region205: #{tpu_custom_call.1} parent=1 // pred_fallthru
      _
    // Predicated region
    $region206: #{tpu_custom_call.1} parent=1 // pred_check
      _
    $region207: #{tpu_custom_call.1} parent=1 // pred_check_branch
      %483 = sbr.rel (0) target = $region209
    $region208: #{tpu_custom_call.1} parent=1 // pred_region
      %484 = dma.done [#allocation10], 16
    $region209: #{tpu_custom_call.1} parent=1 // pred_fallthru
      _
    // Predicated region
    $region210: #{tpu_custom_call.1} parent=1 // pred_check
      _
    $region211: #{tpu_custom_call.1} parent=1 // pred_check_branch
      %486 = sbr.rel (0) target = $region213
    $region212: #{tpu_custom_call.1} parent=1 // pred_region
      %487 = dma.done [#allocation13], 16
    $region213: #{tpu_custom_call.1} parent=1 // pred_fallthru
      _
    // Predicated region
    $region214: #{tpu_custom_call.1} parent=1 // pred_check
      _
    $region215: #{tpu_custom_call.1} parent=1 // pred_check_branch
      %489 = sbr.rel (0) target = $region217
    $region216: #{tpu_custom_call.1} parent=1 // pred_region
      %490 = dma.done [#allocation13], 16
    $region217: #{tpu_custom_call.1} parent=1 // pred_fallthru
      _
    // Predicated region
    $region218: #{tpu_custom_call.1} parent=1 // pred_check
      _
    $region219: #{tpu_custom_call.1} parent=1 // pred_check_branch
      %492 = sbr.rel (0) target = $region221
    $region220: #{tpu_custom_call.1} parent=1 // pred_region
      %493 = dma.done [#allocation16], 16
    $region221: #{tpu_custom_call.1} parent=1 // pred_fallthru
      _
    // Predicated region
    $region222: #{tpu_custom_call.1} parent=1 // pred_check
      _
    $region223: #{tpu_custom_call.1} parent=1 // pred_check_branch
      %495 = sbr.rel (0) target = $region225
    $region224: #{tpu_custom_call.1} parent=1 // pred_region
      %496 = dma.done [#allocation16], 16
    $region225: #{tpu_custom_call.1} parent=1 // pred_fallthru
      _
    // Predicated region
    $region226: #{tpu_custom_call.1} parent=1 // pred_check
      _
    $region227: #{tpu_custom_call.1} parent=1 // pred_check_branch
      %498 = sbr.rel (0) target = $region229
    $region228: #{tpu_custom_call.1} parent=1 // pred_region
      %499 = dma.done [#allocation19], 16
    $region229: #{tpu_custom_call.1} parent=1 // pred_fallthru
      _
    // Predicated region
    $region230: #{tpu_custom_call.1} parent=1 // pred_check
      _
    $region231: #{tpu_custom_call.1} parent=1 // pred_check_branch
      %501 = sbr.rel (0) target = $region233
    $region232: #{tpu_custom_call.1} parent=1 // pred_region
      %502 = dma.done [#allocation19], 16
    $region233: #{tpu_custom_call.1} parent=1 // pred_fallthru
      _
    // Predicated region
    $region234: #{tpu_custom_call.1} parent=1 // pred_check
      _
    $region235: #{tpu_custom_call.1} parent=1 // pred_check_branch
      %504 = sbr.rel (0) target = $region237
    $region236: #{tpu_custom_call.1} parent=1 // pred_region
      %505 = dma.done [#allocation22], 512
    $region237: #{tpu_custom_call.1} parent=1 // pred_fallthru
      _
    // Predicated region
    $region238: #{tpu_custom_call.1} parent=1 // pred_check
      _
    $region239: #{tpu_custom_call.1} parent=1 // pred_check_branch
      %507 = sbr.rel (0) target = $region241
    $region240: #{tpu_custom_call.1} parent=1 // pred_region
      %508 = dma.done [#allocation22], 16
    $region241: #{tpu_custom_call.1} parent=1 // pred_fallthru
      _
    // Predicated region
    $region242: #{tpu_custom_call.1} parent=1 // pred_check
      _
    $region243: #{tpu_custom_call.1} parent=1 // pred_check_branch
      %510 = sbr.rel (0) target = $region245
    $region244: #{tpu_custom_call.1} parent=1 // pred_region
      %511 = dma.done [#allocation25], 16
    $region245: #{tpu_custom_call.1} parent=1 // pred_fallthru
      _
    // Predicated region
    $region246: #{tpu_custom_call.1} parent=1 // pred_check
      _
    $region247: #{tpu_custom_call.1} parent=1 // pred_check_branch
      %513 = sbr.rel (0) target = $region249
    $region248: #{tpu_custom_call.1} parent=1 // pred_region
      %514 = dma.done [#allocation25], 16
    $region249: #{tpu_custom_call.1} parent=1 // pred_fallthru
      _
    // Predicated region
    $region250: #{tpu_custom_call.1} parent=1 // pred_check
      _
    $region251: #{tpu_custom_call.1} parent=1 // pred_check_branch
      %516 = sbr.rel (0) target = $region253
    $region252: #{tpu_custom_call.1} parent=1 // pred_region
      %517 = dma.done [#allocation28], 16
    $region253: #{tpu_custom_call.1} parent=1 // pred_fallthru
      _
    // Predicated region
    $region254: #{tpu_custom_call.1} parent=1 // pred_check
      _
    $region255: #{tpu_custom_call.1} parent=1 // pred_check_branch
      %519 = sbr.rel (0) target = $region257
    $region256: #{tpu_custom_call.1} parent=1 // pred_region
      %520 = dma.done [#allocation28], 16
    $region257: #{tpu_custom_call.1} parent=1 // pred_fallthru
      _
    // Predicated region
    $region258: #{tpu_custom_call.1} parent=1 // pred_check
      _
    $region259: #{tpu_custom_call.1} parent=1 // pred_check_branch
      %522 = sbr.rel (0) target = $region261
    $region260: #{tpu_custom_call.1} parent=1 // pred_region
      %523 = dma.done [#allocation31], 16
    $region261: #{tpu_custom_call.1} parent=1 // pred_fallthru
      _
    // Predicated region
    $region262: #{tpu_custom_call.1} parent=1 // pred_check
      _
    $region263: #{tpu_custom_call.1} parent=1 // pred_check_branch
      %525 = sbr.rel (0) target = $region265
    $region264: #{tpu_custom_call.1} parent=1 // pred_region
      %526 = dma.done [#allocation31], 32
    $region265: #{tpu_custom_call.1} parent=1 // pred_fallthru
      _
    // Predicated region
    $region266: #{tpu_custom_call.1} parent=1 // pred_check
      _
    $region267: #{tpu_custom_call.1} parent=1 // pred_check_branch
      %528 = sbr.rel (0) target = $region269
    $region268: #{tpu_custom_call.1} parent=1 // pred_region
      %529 = dma.done [#allocation34], 512
    $region269: #{tpu_custom_call.1} parent=1 // pred_fallthru
      _
    // Predicated region
    $region270: #{tpu_custom_call.1} parent=1 // pred_check
      _
    $region271: #{tpu_custom_call.1} parent=1 // pred_check_branch
      %531 = sbr.rel (0) target = $region273
    $region272: #{tpu_custom_call.1} parent=1 // pred_region
      %532 = dma.done [#allocation34], 16
    $region273: #{tpu_custom_call.1} parent=1 // pred_fallthru
      _
    // Predicated region
    $region274: #{tpu_custom_call.1} parent=1 // pred_check
      _
    $region275: #{tpu_custom_call.1} parent=1 // pred_check_branch
      %534 = sbr.rel (0) target = $region277
    $region276: #{tpu_custom_call.1} parent=1 // pred_region
      %535 = dma.done [#allocation37], 16
    $region277: #{tpu_custom_call.1} parent=1 // pred_fallthru
      _
    // Predicated region
    $region278: #{tpu_custom_call.1} parent=1 // pred_check
      _
    $region279: #{tpu_custom_call.1} parent=1 // pred_check_branch
      %537 = sbr.rel (0) target = $region281
    $region280: #{tpu_custom_call.1} parent=1 // pred_region
      %538 = dma.done [#allocation37], 16
    $region281: #{tpu_custom_call.1} parent=1 // pred_fallthru
      _
    // Predicated region
    $region282: #{tpu_custom_call.1} parent=1 // pred_check
      _
    $region283: #{tpu_custom_call.1} parent=1 // pred_check_branch
      %540 = sbr.rel (0) target = $region285
    $region284: #{tpu_custom_call.1} parent=1 // pred_region
      %541 = dma.done [#allocation40], 16
    $region285: #{tpu_custom_call.1} parent=1 // pred_fallthru
      _
    // Predicated region
    $region286: #{tpu_custom_call.1} parent=1 // pred_check
      _
    $region287: #{tpu_custom_call.1} parent=1 // pred_check_branch
      %543 = sbr.rel (0) target = $region289
    $region288: #{tpu_custom_call.1} parent=1 // pred_region
      %544 = dma.done [#allocation40], 16
    $region289: #{tpu_custom_call.1} parent=1 // pred_fallthru
      _
    // Predicated region
    $region290: #{tpu_custom_call.1} parent=1 // pred_check
      _
    $region291: #{tpu_custom_call.1} parent=1 // pred_check_branch
      %546 = sbr.rel (0) target = $region293
    $region292: #{tpu_custom_call.1} parent=1 // pred_region
      %547 = dma.done [#allocation43], 16
    $region293: #{tpu_custom_call.1} parent=1 // pred_fallthru
      _
    // Predicated region
    $region294: #{tpu_custom_call.1} parent=1 // pred_check
      _
    $region295: #{tpu_custom_call.1} parent=1 // pred_check_branch
      %549 = sbr.rel (0) target = $region297
    $region296: #{tpu_custom_call.1} parent=1 // pred_region
      %550 = dma.done [#allocation43], 16
    $region297: #{tpu_custom_call.1} parent=1 // pred_fallthru
      _
    // Predicated region
    $region298: #{tpu_custom_call.1} parent=1 // pred_check
      _
    $region299: #{tpu_custom_call.1} parent=1 // pred_check_branch
      %552 = sbr.rel (0) target = $region301
    $region300: #{tpu_custom_call.1} parent=1 // pred_region
      %553 = dma.done [#allocation46], 1024
    $region301: #{tpu_custom_call.1} parent=1 // pred_fallthru
      _
    // Predicated region
    $region302: #{tpu_custom_call.1} parent=1 // pred_check
      _
    $region303: #{tpu_custom_call.1} parent=1 // pred_check_branch
      %555 = sbr.rel (0) target = $region305
    $region304: #{tpu_custom_call.1} parent=1 // pred_region
      %556 = dma.done [#allocation46], 16
    $region305: #{tpu_custom_call.1} parent=1 // pred_fallthru
      _
    // Predicated region
    $region306: #{tpu_custom_call.1} parent=1 // pred_check
      _
    $region307: #{tpu_custom_call.1} parent=1 // pred_check_branch
      %558 = sbr.rel (0) target = $region309
    $region308: #{tpu_custom_call.1} parent=1 // pred_region
      %559 = dma.done [#allocation49], 16
    $region309: #{tpu_custom_call.1} parent=1 // pred_fallthru
      _
    %v560 = vld [vmem:[#allocation3] sm:$0xff]
    %v561 = vld [vmem:[%s3] sm:$0xff]
    %v562 = vld [vmem:[%s3 + $0x8] sm:$0xff]
    %v563 = vld [vmem:[%s3 + $0x10] sm:$0xff]
    %v564 = vld [vmem:[%s3 + $0x18] sm:$0xff]
    %v565 = vld [vmem:[%s3 + $0x20] sm:$0xff]
    %v566 = vld [vmem:[%s3 + $0x28] sm:$0xff]
    %v567 = vld [vmem:[%s3 + $0x30] sm:$0xff]
    %v568 = vld [vmem:[%s3 + $0x38] sm:$0xff]
    %v569 = vld [vmem:[#allocation6] sm:$0x3]
    %v571 = vlaneseq
    %v572 = vshrl.u32 %v571, 7
    %v573 = vsub.s32 0, %v572
    %v574 = vrot.slane %v569, %v573
    %v575 = vlaneseq
    %v576 = vshrl.u32 %v575, 7
    %v577 = vsub.s32 1, %v576
    %v578 = vrot.slane %v569, %v577
    %vm581 = vcmask 261120
    %v583 = vsel %vm581, %v560, 0
    %585 = vmatprep.subr.mxu0 %v562
    %586 = vmatpush1.msra.mxu0 %v561
    %587 = vmatprep.subr.mxu0 %v564
    %588 = vmatpush1.msra.mxu0 %v563
    %589 = vmatprep.subr.mxu0 %v566
    %590 = vmatpush1.msra.mxu0 %v565
    %591 = vmatprep.subr.mxu0 %v568
    %592 = vmatpush1.msra.mxu0 %v567
    %593 = vmatprep.subr.mxu0 0.0
    %594 = vmatpush1.msra.mxu0 0.0
    %595 = vmatprep.subr.mxu0 0.0
    %596 = vmatpush1.msra.mxu0 0.0
    %597 = vmatprep.subr.mxu0 0.0
    %598 = vmatpush1.msra.mxu0 0.0
    %599 = vmatprep.subr.mxu0 0.0
    %600 = vmatpush1.msra.mxu0 0.0
    %601 = vmatprep.subr.mxu0 0.0
    %602 = vmatpush1.msra.mxu0 0.0
    %603 = vmatprep.subr.mxu0 0.0
    %604 = vmatpush1.msra.mxu0 0.0
    %605 = vmatprep.subr.mxu0 0.0
    %606 = vmatpush1.msra.mxu0 0.0
    %607 = vmatprep.subr.mxu0 0.0
    %608 = vmatpush1.msra.mxu0 0.0
    %609 = vmatprep.subr.mxu0 0.0
    %610 = vmatpush1.msra.mxu0 0.0
    %611 = vmatprep.subr.mxu0 0.0
    %612 = vmatpush1.msra.mxu0 0.0
    %613 = vmatprep.subr.mxu0 0.0
    %614 = vmatpush1.msra.mxu0 0.0
    %615 = vmatprep.subr.mxu0 0.0
    %616 = vmatpush1.msra.mxu0 0.0
    %617 = vmatprep.subr.mxu0 0.0
    %618 = vmatpush1.msra.mxu0 0.0
    %619 = vmatprep.subr.mxu0 0.0
    %620 = vmatpush1.msra.mxu0 0.0
    %621 = vmatprep.subr.mxu0 0.0
    %622 = vmatpush1.msra.mxu0 0.0
    %623 = vmatprep.subr.mxu0 0.0
    %624 = vmatpush1.msra.mxu0 0.0
    %625 = vmatprep.subr.mxu0 0.0
    %626 = vmatpush1.msra.mxu0 0.0
    %627 = vmatprep.subr.mxu0 0.0
    %628 = vmatpush1.msra.mxu0 0.0
    %629 = vmatprep.subr.mxu0 0.0
    %630 = vmatpush1.msra.mxu0 0.0
    %631 = vmatprep.subr.mxu0 0.0
    %632 = vmatpush1.msra.mxu0 0.0
    %633 = vmatprep.subr.mxu0 0.0
    %634 = vmatpush1.msra.mxu0 0.0
    %635 = vmatprep.subr.mxu0 0.0
    %636 = vmatpush1.msra.mxu0 0.0
    %637 = vmatprep.subr.mxu0 0.0
    %638 = vmatpush1.msra.mxu0 0.0
    %639 = vmatprep.subr.mxu0 0.0
    %640 = vmatpush1.msra.mxu0 0.0
    %641 = vmatprep.subr.mxu0 0.0
    %642 = vmatpush1.msra.mxu0 0.0
    %643 = vmatprep.subr.mxu0 0.0
    %644 = vmatpush1.msra.mxu0 0.0
    %645 = vmatprep.subr.mxu0 0.0
    %646 = vmatpush1.msra.mxu0 0.0
    %647 = vmatprep.subr.mxu0 0.0
    %648 = vmatpush1.msra.mxu0 0.0
    %649 = vmatprep.mubr.f32.mxu0 0.0
    %650 = vmatmul.mubr.f32.gmra.mrb[0].mxu0 %v583
    %v651 = vpop.f32.mrb[0].mxu0
    %v652 = vadd.f32 %v574, %v651
    %v653 = vpop.f32.mrb[0].mxu0
    %v654 = vadd.f32 %v578, %v653
    %655 = vdwg.mxu0
    %v656 = vld [vmem:[#allocation8] sm:$0x1]
    %v657 = vld [vmem:[#allocation9] sm:$0x1]
    %vm658 = vcmask 523264
    %v659 = vsel %vm658, %v652, 0.0
    %660 = vadd.xlane.f32.xlu0 %v659
    %v661 = vpop.xlane.xlu0 %660
    %v662 = vrcp.pop 64.0
    %v663 = vmul.f32 %v661, %v662
    %v664 = vmul.f32 %v652, %v652
    %v665 = vsel %vm658, %v664, 0.0
    %666 = vadd.xlane.f32.xlu0 %v665
    %v667 = vpop.xlane.xlu0 %666
    %v668 = vmul.f32 %v667, %v662
    %v669 = vmul.f32 %v663, %v663
    %v670 = vsub.f32 %v668, %v669
    %v671 = vmax.f32 %v670, 0.0
    %v672 = vsub.f32 %v652, %v663
    %v673 = vadd.f32 %v671, 1e-05
    %v674 = vrsqrt.pop %v673
    %v675 = vmul.f32 %v672, %v674
    %v677 = vlaneseq
    %v678 = vshrl.u32 %v677, 7
    %v679 = vsub.s32 0, %v678
    %v680 = vrot.slane %v656, %v679
    %v682 = vmul.f32 %v675, %v680
    %v684 = vlaneseq
    %v685 = vshrl.u32 %v684, 7
    %v686 = vsub.s32 0, %v685
    %v687 = vrot.slane %v657, %v686
    %v689 = vadd.f32 %v682, %v687
    %v690 = vmax.f32 %v689, 0.0
    %v691 = vld [vmem:[#allocation11] sm:$0x1]
    %v692 = vld [vmem:[#allocation12] sm:$0x1]
    %694 = vrot.lane.b32.xlu0 %v652, 64
    %v695 = vpop.permute.xlu0 %694
    %v697 = vsel %vm658, %v695, 0.0
    %698 = vadd.xlane.f32.xlu0 %v697
    %v699 = vpop.xlane.xlu0 %698
    %v700 = vmul.f32 %v699, %v662
    %702 = vrot.lane.b32.xlu0 %v664, 64
    %v703 = vpop.permute.xlu0 %702
    %v705 = vsel %vm658, %v703, 0.0
    %706 = vadd.xlane.f32.xlu0 %v705
    %v707 = vpop.xlane.xlu0 %706
    %v708 = vmul.f32 %v707, %v662
    %v709 = vmul.f32 %v700, %v700
    %v710 = vsub.f32 %v708, %v709
    %v711 = vmax.f32 %v710, 0.0
    %v712 = vsub.f32 %v652, %v700
    %v713 = vadd.f32 %v711, 1e-05
    %v714 = vrsqrt.pop %v713
    %v715 = vmul.f32 %v712, %v714
    %v717 = vlaneseq
    %v718 = vshrl.u32 %v717, 7
    %v719 = vsub.s32 0, %v718
    %v720 = vrot.slane %v691, %v719
    %721 = vrot.lane.b32.xlu0 %v720, 64
    %v722 = vpop.permute.xlu0 %721
    %v724 = vmul.f32 %v715, %v722
    %v726 = vlaneseq
    %v727 = vshrl.u32 %v726, 7
    %v728 = vsub.s32 0, %v727
    %v729 = vrot.slane %v692, %v728
    %730 = vrot.lane.b32.xlu0 %v729, 64
    %v731 = vpop.permute.xlu0 %730
    %v733 = vadd.f32 %v724, %v731
    %v734 = vmax.f32 %v733, 0.0
    %v735 = vld [vmem:[#allocation14] sm:$0x1]
    %v736 = vld [vmem:[#allocation15] sm:$0x1]
    %v737 = vsel %vm658, %v654, 0.0
    %738 = vadd.xlane.f32.xlu0 %v737
    %v739 = vpop.xlane.xlu0 %738
    %v740 = vmul.f32 %v739, %v662
    %v741 = vmul.f32 %v654, %v654
    %v742 = vsel %vm658, %v741, 0.0
    %743 = vadd.xlane.f32.xlu0 %v742
    %v744 = vpop.xlane.xlu0 %743
    %v745 = vmul.f32 %v744, %v662
    %v746 = vmul.f32 %v740, %v740
    %v747 = vsub.f32 %v745, %v746
    %v748 = vmax.f32 %v747, 0.0
    %v749 = vsub.f32 %v654, %v740
    %v750 = vadd.f32 %v748, 1e-05
    %v751 = vrsqrt.pop %v750
    %v752 = vmul.f32 %v749, %v751
    %v754 = vlaneseq
    %v755 = vshrl.u32 %v754, 7
    %v756 = vsub.s32 0, %v755
    %v757 = vrot.slane %v735, %v756
    %v759 = vmul.f32 %v752, %v757
    %v761 = vlaneseq
    %v762 = vshrl.u32 %v761, 7
    %v763 = vsub.s32 0, %v762
    %v764 = vrot.slane %v736, %v763
    %v766 = vadd.f32 %v759, %v764
    %v767 = vmax.f32 %v766, 0.0
    %v768 = vld [vmem:[%s19] sm:$0xff]
    %v769 = vld [vmem:[%s19 + $0x8] sm:$0xff]
    %v770 = vld [vmem:[%s19 + $0x10] sm:$0xff]
    %v771 = vld [vmem:[%s19 + $0x18] sm:$0xff]
    %v772 = vld [vmem:[%s19 + $0x20] sm:$0xff]
    %v773 = vld [vmem:[%s19 + $0x28] sm:$0xff]
    %v774 = vld [vmem:[%s19 + $0x30] sm:$0xff]
    %v775 = vld [vmem:[%s19 + $0x38] sm:$0xff]
    %v776 = vld [vmem:[#allocation17] sm:$0x1]
    %v778 = vlaneseq
    %v779 = vshrl.u32 %v778, 7
    %v780 = vsub.s32 0, %v779
    %v781 = vrot.slane %v776, %v780
    %v784 = vsel %vm658, %v690, 0
    %786 = vmatprep.subr.mxu0 0.0
    %787 = vmatpush1.msra.mxu0 %v768
    %788 = vmatprep.subr.mxu0 0.0
    %789 = vmatpush1.msra.mxu0 %v769
    %790 = vmatprep.subr.mxu0 0.0
    %791 = vmatpush1.msra.mxu0 %v770
    %792 = vmatprep.subr.mxu0 0.0
    %793 = vmatpush1.msra.mxu0 %v771
    %794 = vmatprep.subr.mxu0 0.0
    %795 = vmatpush1.msra.mxu0 %v772
    %796 = vmatprep.subr.mxu0 0.0
    %797 = vmatpush1.msra.mxu0 %v773
    %798 = vmatprep.subr.mxu0 0.0
    %799 = vmatpush1.msra.mxu0 %v774
    %800 = vmatprep.subr.mxu0 0.0
    %801 = vmatpush1.msra.mxu0 %v775
    %802 = vmatprep.subr.mxu0 0.0
    %803 = vmatpush1.msra.mxu0 0.0
    %804 = vmatprep.subr.mxu0 0.0
    %805 = vmatpush1.msra.mxu0 0.0
    %806 = vmatprep.subr.mxu0 0.0
    %807 = vmatpush1.msra.mxu0 0.0
    %808 = vmatprep.subr.mxu0 0.0
    %809 = vmatpush1.msra.mxu0 0.0
    %810 = vmatprep.subr.mxu0 0.0
    %811 = vmatpush1.msra.mxu0 0.0
    %812 = vmatprep.subr.mxu0 0.0
    %813 = vmatpush1.msra.mxu0 0.0
    %814 = vmatprep.subr.mxu0 0.0
    %815 = vmatpush1.msra.mxu0 0.0
    %816 = vmatprep.subr.mxu0 0.0
    %817 = vmatpush1.msra.mxu0 0.0
    %818 = vmatprep.subr.mxu0 0.0
    %819 = vmatpush1.msra.mxu0 0.0
    %820 = vmatprep.subr.mxu0 0.0
    %821 = vmatpush1.msra.mxu0 0.0
    %822 = vmatprep.subr.mxu0 0.0
    %823 = vmatpush1.msra.mxu0 0.0
    %824 = vmatprep.subr.mxu0 0.0
    %825 = vmatpush1.msra.mxu0 0.0
    %826 = vmatprep.subr.mxu0 0.0
    %827 = vmatpush1.msra.mxu0 0.0
    %828 = vmatprep.subr.mxu0 0.0
    %829 = vmatpush1.msra.mxu0 0.0
    %830 = vmatprep.subr.mxu0 0.0
    %831 = vmatpush1.msra.mxu0 0.0
    %832 = vmatprep.subr.mxu0 0.0
    %833 = vmatpush1.msra.mxu0 0.0
    %834 = vmatprep.subr.mxu0 0.0
    %835 = vmatpush1.msra.mxu0 0.0
    %836 = vmatprep.subr.mxu0 0.0
    %837 = vmatpush1.msra.mxu0 0.0
    %838 = vmatprep.subr.mxu0 0.0
    %839 = vmatpush1.msra.mxu0 0.0
    %840 = vmatprep.subr.mxu0 0.0
    %841 = vmatpush1.msra.mxu0 0.0
    %842 = vmatprep.subr.mxu0 0.0
    %843 = vmatpush1.msra.mxu0 0.0
    %844 = vmatprep.subr.mxu0 0.0
    %845 = vmatpush1.msra.mxu0 0.0
    %846 = vmatprep.subr.mxu0 0.0
    %847 = vmatpush1.msra.mxu0 0.0
    %848 = vmatprep.subr.mxu0 0.0
    %849 = vmatpush1.msra.mxu0 0.0
    %850 = vmatprep.mubr.f32.mxu0 0.0
    %851 = vmatmul.mubr.f32.gmra.mrb[0].mxu0 %v784
    %v852 = vpop.f32.mrb[0].mxu0
    %v853 = vadd.f32 %v781, %v852
    %v854 = vpop.f32.mrb[0].mxu0
    %855 = vdwg.mxu0
    %v856 = vxor.u32 %v853, 2147483648
    %v857 = vmul.f32 %v856, 1.442695
    %v858 = vpow.pop %v857
    %v859 = vadd.f32 %v858, 1.0
    %v860 = vrcp.pop %v859
    %v861 = vmul.f32 1.0, %v860
    %v862 = vld [vmem:[%s23] sm:$0xff]
    %v863 = vld [vmem:[%s23 + $0x8] sm:$0xff]
    %v864 = vld [vmem:[%s23 + $0x10] sm:$0xff]
    %v865 = vld [vmem:[%s23 + $0x18] sm:$0xff]
    %v866 = vld [vmem:[%s23 + $0x20] sm:$0xff]
    %v867 = vld [vmem:[%s23 + $0x28] sm:$0xff]
    %v868 = vld [vmem:[%s23 + $0x30] sm:$0xff]
    %v869 = vld [vmem:[%s23 + $0x38] sm:$0xff]
    %v870 = vld [vmem:[#allocation18] sm:$0x1]
    %v872 = vlaneseq
    %v873 = vshrl.u32 %v872, 7
    %v874 = vsub.s32 0, %v873
    %v875 = vrot.slane %v870, %v874
    %878 = vrot.lane.b32.xlu0 %v734, 64
    %v879 = vpop.permute.xlu0 %878
    %v880 = vsel %vm658, %v879, 0
    %882 = vmatprep.subr.mxu0 0.0
    %883 = vmatpush1.msra.mxu0 %v862
    %884 = vmatprep.subr.mxu0 0.0
    %885 = vmatpush1.msra.mxu0 %v863
    %886 = vmatprep.subr.mxu0 0.0
    %887 = vmatpush1.msra.mxu0 %v864
    %888 = vmatprep.subr.mxu0 0.0
    %889 = vmatpush1.msra.mxu0 %v865
    %890 = vmatprep.subr.mxu0 0.0
    %891 = vmatpush1.msra.mxu0 %v866
    %892 = vmatprep.subr.mxu0 0.0
    %893 = vmatpush1.msra.mxu0 %v867
    %894 = vmatprep.subr.mxu0 0.0
    %895 = vmatpush1.msra.mxu0 %v868
    %896 = vmatprep.subr.mxu0 0.0
    %897 = vmatpush1.msra.mxu0 %v869
    %898 = vmatprep.subr.mxu0 0.0
    %899 = vmatpush1.msra.mxu0 0.0
    %900 = vmatprep.subr.mxu0 0.0
    %901 = vmatpush1.msra.mxu0 0.0
    %902 = vmatprep.subr.mxu0 0.0
    %903 = vmatpush1.msra.mxu0 0.0
    %904 = vmatprep.subr.mxu0 0.0
    %905 = vmatpush1.msra.mxu0 0.0
    %906 = vmatprep.subr.mxu0 0.0
    %907 = vmatpush1.msra.mxu0 0.0
    %908 = vmatprep.subr.mxu0 0.0
    %909 = vmatpush1.msra.mxu0 0.0
    %910 = vmatprep.subr.mxu0 0.0
    %911 = vmatpush1.msra.mxu0 0.0
    %912 = vmatprep.subr.mxu0 0.0
    %913 = vmatpush1.msra.mxu0 0.0
    %914 = vmatprep.subr.mxu0 0.0
    %915 = vmatpush1.msra.mxu0 0.0
    %916 = vmatprep.subr.mxu0 0.0
    %917 = vmatpush1.msra.mxu0 0.0
    %918 = vmatprep.subr.mxu0 0.0
    %919 = vmatpush1.msra.mxu0 0.0
    %920 = vmatprep.subr.mxu0 0.0
    %921 = vmatpush1.msra.mxu0 0.0
    %922 = vmatprep.subr.mxu0 0.0
    %923 = vmatpush1.msra.mxu0 0.0
    %924 = vmatprep.subr.mxu0 0.0
    %925 = vmatpush1.msra.mxu0 0.0
    %926 = vmatprep.subr.mxu0 0.0
    %927 = vmatpush1.msra.mxu0 0.0
    %928 = vmatprep.subr.mxu0 0.0
    %929 = vmatpush1.msra.mxu0 0.0
    %930 = vmatprep.subr.mxu0 0.0
    %931 = vmatpush1.msra.mxu0 0.0
    %932 = vmatprep.subr.mxu0 0.0
    %933 = vmatpush1.msra.mxu0 0.0
    %934 = vmatprep.subr.mxu0 0.0
    %935 = vmatpush1.msra.mxu0 0.0
    %936 = vmatprep.subr.mxu0 0.0
    %937 = vmatpush1.msra.mxu0 0.0
    %938 = vmatprep.subr.mxu0 0.0
    %939 = vmatpush1.msra.mxu0 0.0
    %940 = vmatprep.subr.mxu0 0.0
    %941 = vmatpush1.msra.mxu0 0.0
    %942 = vmatprep.subr.mxu0 0.0
    %943 = vmatpush1.msra.mxu0 0.0
    %944 = vmatprep.subr.mxu0 0.0
    %945 = vmatpush1.msra.mxu0 0.0
    %946 = vmatprep.mubr.f32.mxu0 0.0
    %947 = vmatmul.mubr.f32.gmra.mrb[0].mxu0 %v880
    %v948 = vpop.f32.mrb[0].mxu0
    %v949 = vadd.f32 %v875, %v948
    %v950 = vpop.f32.mrb[0].mxu0
    %951 = vdwg.mxu0
    %v952 = vxor.u32 %v949, 2147483648
    %v953 = vmul.f32 %v952, 1.442695
    %v954 = vpow.pop %v953
    %v955 = vadd.f32 %v954, 1.0
    %v956 = vrcp.pop %v955
    %v957 = vmul.f32 1.0, %v956
    %958 = vst.msk [vmem:[#allocation50] sm:$0xff] %vm581, %v957
    %v959 = vld [vmem:[%s27] sm:$0xff]
    %v960 = vld [vmem:[%s27 + $0x8] sm:$0xff]
    %v961 = vld [vmem:[%s27 + $0x10] sm:$0xff]
    %v962 = vld [vmem:[%s27 + $0x18] sm:$0xff]
    %v963 = vld [vmem:[%s27 + $0x20] sm:$0xff]
    %v964 = vld [vmem:[%s27 + $0x28] sm:$0xff]
    %v965 = vld [vmem:[%s27 + $0x30] sm:$0xff]
    %v966 = vld [vmem:[%s27 + $0x38] sm:$0xff]
    %v967 = vld [vmem:[#allocation20] sm:$0x1]
    %v969 = vlaneseq
    %v970 = vshrl.u32 %v969, 7
    %v971 = vsub.s32 0, %v970
    %v972 = vrot.slane %v967, %v971
    %v975 = vsel %vm658, %v767, 0
    %977 = vmatprep.subr.mxu0 0.0
    %978 = vmatpush1.msra.mxu0 %v959
    %979 = vmatprep.subr.mxu0 0.0
    %980 = vmatpush1.msra.mxu0 %v960
    %981 = vmatprep.subr.mxu0 0.0
    %982 = vmatpush1.msra.mxu0 %v961
    %983 = vmatprep.subr.mxu0 0.0
    %984 = vmatpush1.msra.mxu0 %v962
    %985 = vmatprep.subr.mxu0 0.0
    %986 = vmatpush1.msra.mxu0 %v963
    %987 = vmatprep.subr.mxu0 0.0
    %988 = vmatpush1.msra.mxu0 %v964
    %989 = vmatprep.subr.mxu0 0.0
    %990 = vmatpush1.msra.mxu0 %v965
    %991 = vmatprep.subr.mxu0 0.0
    %992 = vmatpush1.msra.mxu0 %v966
    %993 = vmatprep.subr.mxu0 0.0
    %994 = vmatpush1.msra.mxu0 0.0
    %995 = vmatprep.subr.mxu0 0.0
    %996 = vmatpush1.msra.mxu0 0.0
    %997 = vmatprep.subr.mxu0 0.0
    %998 = vmatpush1.msra.mxu0 0.0
    %999 = vmatprep.subr.mxu0 0.0
    %1000 = vmatpush1.msra.mxu0 0.0
    %1001 = vmatprep.subr.mxu0 0.0
    %1002 = vmatpush1.msra.mxu0 0.0
    %1003 = vmatprep.subr.mxu0 0.0
    %1004 = vmatpush1.msra.mxu0 0.0
    %1005 = vmatprep.subr.mxu0 0.0
    %1006 = vmatpush1.msra.mxu0 0.0
    %1007 = vmatprep.subr.mxu0 0.0
    %1008 = vmatpush1.msra.mxu0 0.0
    %1009 = vmatprep.subr.mxu0 0.0
    %1010 = vmatpush1.msra.mxu0 0.0
    %1011 = vmatprep.subr.mxu0 0.0
    %1012 = vmatpush1.msra.mxu0 0.0
    %1013 = vmatprep.subr.mxu0 0.0
    %1014 = vmatpush1.msra.mxu0 0.0
    %1015 = vmatprep.subr.mxu0 0.0
    %1016 = vmatpush1.msra.mxu0 0.0
    %1017 = vmatprep.subr.mxu0 0.0
    %1018 = vmatpush1.msra.mxu0 0.0
    %1019 = vmatprep.subr.mxu0 0.0
    %1020 = vmatpush1.msra.mxu0 0.0
    %1021 = vmatprep.subr.mxu0 0.0
    %1022 = vmatpush1.msra.mxu0 0.0
    %1023 = vmatprep.subr.mxu0 0.0
    %1024 = vmatpush1.msra.mxu0 0.0
    %1025 = vmatprep.subr.mxu0 0.0
    %1026 = vmatpush1.msra.mxu0 0.0
    %1027 = vmatprep.subr.mxu0 0.0
    %1028 = vmatpush1.msra.mxu0 0.0
    %1029 = vmatprep.subr.mxu0 0.0
    %1030 = vmatpush1.msra.mxu0 0.0
    %1031 = vmatprep.subr.mxu0 0.0
    %1032 = vmatpush1.msra.mxu0 0.0
    %1033 = vmatprep.subr.mxu0 0.0
    %1034 = vmatpush1.msra.mxu0 0.0
    %1035 = vmatprep.subr.mxu0 0.0
    %1036 = vmatpush1.msra.mxu0 0.0
    %1037 = vmatprep.subr.mxu0 0.0
    %1038 = vmatpush1.msra.mxu0 0.0
    %1039 = vmatprep.subr.mxu0 0.0
    %1040 = vmatpush1.msra.mxu0 0.0
    %1041 = vmatprep.mubr.f32.mxu0 0.0
    %1042 = vmatmul.mubr.f32.gmra.mrb[0].mxu0 %v975
    %v1043 = vpop.f32.mrb[0].mxu0
    %v1044 = vadd.f32 %v972, %v1043
    %v1045 = vpop.f32.mrb[0].mxu0
    %1046 = vdwg.mxu0
    %v1047 = vld [vmem:[#allocation21] sm:$0xff]
    %v1048 = vld [vmem:[#allocation21 + $0x8] sm:$0xff]
    %v1049 = vld [vmem:[#allocation21 + $0x10] sm:$0xff]
    %v1050 = vld [vmem:[#allocation21 + $0x18] sm:$0xff]
    %v1051 = vld [vmem:[#allocation23] sm:$0x1]
    %v1053 = vlaneseq
    %v1054 = vshrl.u32 %v1053, 7
    %v1055 = vsub.s32 0, %v1054
    %v1056 = vrot.slane %v1051, %v1055
    %1058 = vmatprep.subr.mxu0 0.0
    %1059 = vmatpush1.msra.mxu0 %v1047
    %1060 = vmatprep.subr.mxu0 0.0
    %1061 = vmatpush1.msra.mxu0 %v1048
    %1062 = vmatprep.subr.mxu0 0.0
    %1063 = vmatpush1.msra.mxu0 %v1049
    %1064 = vmatprep.subr.mxu0 0.0
    %1065 = vmatpush1.msra.mxu0 %v1050
    %1066 = vmatprep.subr.mxu0 0.0
    %1067 = vmatpush1.msra.mxu0 0.0
    %1068 = vmatprep.subr.mxu0 0.0
    %1069 = vmatpush1.msra.mxu0 0.0
    %1070 = vmatprep.subr.mxu0 0.0
    %1071 = vmatpush1.msra.mxu0 0.0
    %1072 = vmatprep.subr.mxu0 0.0
    %1073 = vmatpush1.msra.mxu0 0.0
    %1074 = vmatprep.subr.mxu0 0.0
    %1075 = vmatpush1.msra.mxu0 0.0
    %1076 = vmatprep.subr.mxu0 0.0
    %1077 = vmatpush1.msra.mxu0 0.0
    %1078 = vmatprep.subr.mxu0 0.0
    %1079 = vmatpush1.msra.mxu0 0.0
    %1080 = vmatprep.subr.mxu0 0.0
    %1081 = vmatpush1.msra.mxu0 0.0
    %1082 = vmatprep.subr.mxu0 0.0
    %1083 = vmatpush1.msra.mxu0 0.0
    %1084 = vmatprep.subr.mxu0 0.0
    %1085 = vmatpush1.msra.mxu0 0.0
    %1086 = vmatprep.subr.mxu0 0.0
    %1087 = vmatpush1.msra.mxu0 0.0
    %1088 = vmatprep.subr.mxu0 0.0
    %1089 = vmatpush1.msra.mxu0 0.0
    %1090 = vmatprep.subr.mxu0 0.0
    %1091 = vmatpush1.msra.mxu0 0.0
    %1092 = vmatprep.subr.mxu0 0.0
    %1093 = vmatpush1.msra.mxu0 0.0
    %1094 = vmatprep.subr.mxu0 0.0
    %1095 = vmatpush1.msra.mxu0 0.0
    %1096 = vmatprep.subr.mxu0 0.0
    %1097 = vmatpush1.msra.mxu0 0.0
    %1098 = vmatprep.subr.mxu0 0.0
    %1099 = vmatpush1.msra.mxu0 0.0
    %1100 = vmatprep.subr.mxu0 0.0
    %1101 = vmatpush1.msra.mxu0 0.0
    %1102 = vmatprep.subr.mxu0 0.0
    %1103 = vmatpush1.msra.mxu0 0.0
    %1104 = vmatprep.subr.mxu0 0.0
    %1105 = vmatpush1.msra.mxu0 0.0
    %1106 = vmatprep.subr.mxu0 0.0
    %1107 = vmatpush1.msra.mxu0 0.0
    %1108 = vmatprep.subr.mxu0 0.0
    %1109 = vmatpush1.msra.mxu0 0.0
    %1110 = vmatprep.subr.mxu0 0.0
    %1111 = vmatpush1.msra.mxu0 0.0
    %1112 = vmatprep.subr.mxu0 0.0
    %1113 = vmatpush1.msra.mxu0 0.0
    %1114 = vmatprep.subr.mxu0 0.0
    %1115 = vmatpush1.msra.mxu0 0.0
    %1116 = vmatprep.subr.mxu0 0.0
    %1117 = vmatpush1.msra.mxu0 0.0
    %1118 = vmatprep.subr.mxu0 0.0
    %1119 = vmatpush1.msra.mxu0 0.0
    %1120 = vmatprep.subr.mxu0 0.0
    %1121 = vmatpush1.msra.mxu0 0.0
    %1122 = vmatprep.mubr.f32.mxu0 0.0
    %1123 = vmatmul.mubr.f32.gmra.mrb[0].mxu0 %v583
    %v1124 = vpop.f32.mrb[0].mxu0
    %v1125 = vadd.f32 %v1056, %v1124
    %v1126 = vpop.f32.mrb[0].mxu0
    %1127 = vdwg.mxu0
    %v1128 = vld [vmem:[#allocation24] sm:$0x1]
    %v1129 = vld [vmem:[#allocation26] sm:$0x1]
    %v1130 = vsel %vm658, %v1125, 0.0
    %1131 = vadd.xlane.f32.xlu0 %v1130
    %v1132 = vpop.xlane.xlu0 %1131
    %v1133 = vmul.f32 %v1132, %v662
    %v1134 = vmul.f32 %v1125, %v1125
    %v1135 = vsel %vm658, %v1134, 0.0
    %1136 = vadd.xlane.f32.xlu0 %v1135
    %v1137 = vpop.xlane.xlu0 %1136
    %v1138 = vmul.f32 %v1137, %v662
    %v1139 = vmul.f32 %v1133, %v1133
    %v1140 = vsub.f32 %v1138, %v1139
    %v1141 = vmax.f32 %v1140, 0.0
    %v1142 = vsub.f32 %v1125, %v1133
    %v1143 = vadd.f32 %v1141, 1e-05
    %v1144 = vrsqrt.pop %v1143
    %v1145 = vmul.f32 %v1142, %v1144
    %v1147 = vlaneseq
    %v1148 = vshrl.u32 %v1147, 7
    %v1149 = vsub.s32 0, %v1148
    %v1150 = vrot.slane %v1128, %v1149
    %v1152 = vmul.f32 %v1145, %v1150
    %v1154 = vlaneseq
    %v1155 = vshrl.u32 %v1154, 7
    %v1156 = vsub.s32 0, %v1155
    %v1157 = vrot.slane %v1129, %v1156
    %v1159 = vadd.f32 %v1152, %v1157
    %v1160 = vmax.f32 %v1159, 0.0
    %v1161 = vld [vmem:[%s39] sm:$0xff]
    %v1162 = vld [vmem:[%s39 + $0x8] sm:$0xff]
    %v1163 = vld [vmem:[%s39 + $0x10] sm:$0xff]
    %v1164 = vld [vmem:[%s39 + $0x18] sm:$0xff]
    %v1165 = vld [vmem:[%s39 + $0x20] sm:$0xff]
    %v1166 = vld [vmem:[%s39 + $0x28] sm:$0xff]
    %v1167 = vld [vmem:[%s39 + $0x30] sm:$0xff]
    %v1168 = vld [vmem:[%s39 + $0x38] sm:$0xff]
    %v1169 = vld [vmem:[#allocation27] sm:$0x1]
    %v1171 = vlaneseq
    %v1172 = vshrl.u32 %v1171, 7
    %v1173 = vsub.s32 0, %v1172
    %v1174 = vrot.slane %v1169, %v1173
    %v1177 = vsel %vm658, %v1160, 0
    %1179 = vmatprep.subr.mxu0 0.0
    %1180 = vmatpush1.msra.mxu0 %v1161
    %1181 = vmatprep.subr.mxu0 0.0
    %1182 = vmatpush1.msra.mxu0 %v1162
    %1183 = vmatprep.subr.mxu0 0.0
    %1184 = vmatpush1.msra.mxu0 %v1163
    %1185 = vmatprep.subr.mxu0 0.0
    %1186 = vmatpush1.msra.mxu0 %v1164
    %1187 = vmatprep.subr.mxu0 0.0
    %1188 = vmatpush1.msra.mxu0 %v1165
    %1189 = vmatprep.subr.mxu0 0.0
    %1190 = vmatpush1.msra.mxu0 %v1166
    %1191 = vmatprep.subr.mxu0 0.0
    %1192 = vmatpush1.msra.mxu0 %v1167
    %1193 = vmatprep.subr.mxu0 0.0
    %1194 = vmatpush1.msra.mxu0 %v1168
    %1195 = vmatprep.subr.mxu0 0.0
    %1196 = vmatpush1.msra.mxu0 0.0
    %1197 = vmatprep.subr.mxu0 0.0
    %1198 = vmatpush1.msra.mxu0 0.0
    %1199 = vmatprep.subr.mxu0 0.0
    %1200 = vmatpush1.msra.mxu0 0.0
    %1201 = vmatprep.subr.mxu0 0.0
    %1202 = vmatpush1.msra.mxu0 0.0
    %1203 = vmatprep.subr.mxu0 0.0
    %1204 = vmatpush1.msra.mxu0 0.0
    %1205 = vmatprep.subr.mxu0 0.0
    %1206 = vmatpush1.msra.mxu0 0.0
    %1207 = vmatprep.subr.mxu0 0.0
    %1208 = vmatpush1.msra.mxu0 0.0
    %1209 = vmatprep.subr.mxu0 0.0
    %1210 = vmatpush1.msra.mxu0 0.0
    %1211 = vmatprep.subr.mxu0 0.0
    %1212 = vmatpush1.msra.mxu0 0.0
    %1213 = vmatprep.subr.mxu0 0.0
    %1214 = vmatpush1.msra.mxu0 0.0
    %1215 = vmatprep.subr.mxu0 0.0
    %1216 = vmatpush1.msra.mxu0 0.0
    %1217 = vmatprep.subr.mxu0 0.0
    %1218 = vmatpush1.msra.mxu0 0.0
    %1219 = vmatprep.subr.mxu0 0.0
    %1220 = vmatpush1.msra.mxu0 0.0
    %1221 = vmatprep.subr.mxu0 0.0
    %1222 = vmatpush1.msra.mxu0 0.0
    %1223 = vmatprep.subr.mxu0 0.0
    %1224 = vmatpush1.msra.mxu0 0.0
    %1225 = vmatprep.subr.mxu0 0.0
    %1226 = vmatpush1.msra.mxu0 0.0
    %1227 = vmatprep.subr.mxu0 0.0
    %1228 = vmatpush1.msra.mxu0 0.0
    %1229 = vmatprep.subr.mxu0 0.0
    %1230 = vmatpush1.msra.mxu0 0.0
    %1231 = vmatprep.subr.mxu0 0.0
    %1232 = vmatpush1.msra.mxu0 0.0
    %1233 = vmatprep.subr.mxu0 0.0
    %1234 = vmatpush1.msra.mxu0 0.0
    %1235 = vmatprep.subr.mxu0 0.0
    %1236 = vmatpush1.msra.mxu0 0.0
    %1237 = vmatprep.subr.mxu0 0.0
    %1238 = vmatpush1.msra.mxu0 0.0
    %1239 = vmatprep.subr.mxu0 0.0
    %1240 = vmatpush1.msra.mxu0 0.0
    %1241 = vmatprep.subr.mxu0 0.0
    %1242 = vmatpush1.msra.mxu0 0.0
    %1243 = vmatprep.mubr.f32.mxu0 0.0
    %1244 = vmatmul.mubr.f32.gmra.mrb[0].mxu0 %v1177
    %v1245 = vpop.f32.mrb[0].mxu0
    %v1246 = vadd.f32 %v1174, %v1245
    %v1247 = vpop.f32.mrb[0].mxu0
    %1248 = vdwg.mxu0
    %v1249 = vld [vmem:[#allocation29] sm:$0x1]
    %v1250 = vld [vmem:[#allocation30] sm:$0x1]
    %v1251 = vsel %vm658, %v1246, 0.0
    %1252 = vadd.xlane.f32.xlu0 %v1251
    %v1253 = vpop.xlane.xlu0 %1252
    %v1254 = vmul.f32 %v1253, %v662
    %v1255 = vmul.f32 %v1246, %v1246
    %v1256 = vsel %vm658, %v1255, 0.0
    %1257 = vadd.xlane.f32.xlu0 %v1256
    %v1258 = vpop.xlane.xlu0 %1257
    %v1259 = vmul.f32 %v1258, %v662
    %v1260 = vmul.f32 %v1254, %v1254
    %v1261 = vsub.f32 %v1259, %v1260
    %v1262 = vmax.f32 %v1261, 0.0
    %v1263 = vsub.f32 %v1246, %v1254
    %v1264 = vadd.f32 %v1262, 1e-05
    %v1265 = vrsqrt.pop %v1264
    %v1266 = vmul.f32 %v1263, %v1265
    %v1268 = vlaneseq
    %v1269 = vshrl.u32 %v1268, 7
    %v1270 = vsub.s32 0, %v1269
    %v1271 = vrot.slane %v1249, %v1270
    %v1273 = vmul.f32 %v1266, %v1271
    %v1275 = vlaneseq
    %v1276 = vshrl.u32 %v1275, 7
    %v1277 = vsub.s32 0, %v1276
    %v1278 = vrot.slane %v1250, %v1277
    %v1280 = vadd.f32 %v1273, %v1278
    %v1281 = vmax.f32 %v1280, 0.0
    %v1282 = vld [vmem:[%s47] sm:$0xff]
    %v1283 = vld [vmem:[%s47 + $0x8] sm:$0xff]
    %v1284 = vld [vmem:[%s47 + $0x10] sm:$0xff]
    %v1285 = vld [vmem:[%s47 + $0x18] sm:$0xff]
    %v1286 = vld [vmem:[%s47 + $0x20] sm:$0xff]
    %v1287 = vld [vmem:[%s47 + $0x28] sm:$0xff]
    %v1288 = vld [vmem:[%s47 + $0x30] sm:$0xff]
    %v1289 = vld [vmem:[%s47 + $0x38] sm:$0xff]
    %v1290 = vld [vmem:[%s47 + $0x40] sm:$0xff]
    %v1291 = vld [vmem:[%s47 + $0x48] sm:$0xff]
    %v1292 = vld [vmem:[%s47 + $0x50] sm:$0xff]
    %v1293 = vld [vmem:[%s47 + $0x58] sm:$0xff]
    %v1294 = vld [vmem:[%s47 + $0x60] sm:$0xff]
    %v1295 = vld [vmem:[%s47 + $0x68] sm:$0xff]
    %v1296 = vld [vmem:[%s47 + $0x70] sm:$0xff]
    %v1297 = vld [vmem:[%s47 + $0x78] sm:$0xff]
    %v1298 = vld [vmem:[#allocation32] sm:$0x3]
    %v1300 = vlaneseq
    %v1301 = vshrl.u32 %v1300, 7
    %v1302 = vsub.s32 0, %v1301
    %v1303 = vrot.slane %v1298, %v1302
    %v1304 = vlaneseq
    %v1305 = vshrl.u32 %v1304, 7
    %v1306 = vsub.s32 1, %v1305
    %v1307 = vrot.slane %v1298, %v1306
    %v1311 = vsel %vm658, %v1281, 0
    %1313 = vmatprep.subr.mxu0 %v1283
    %1314 = vmatpush1.msra.mxu0 %v1282
    %1315 = vmatprep.subr.mxu0 %v1285
    %1316 = vmatpush1.msra.mxu0 %v1284
    %1317 = vmatprep.subr.mxu0 %v1287
    %1318 = vmatpush1.msra.mxu0 %v1286
    %1319 = vmatprep.subr.mxu0 %v1289
    %1320 = vmatpush1.msra.mxu0 %v1288
    %1321 = vmatprep.subr.mxu0 %v1291
    %1322 = vmatpush1.msra.mxu0 %v1290
    %1323 = vmatprep.subr.mxu0 %v1293
    %1324 = vmatpush1.msra.mxu0 %v1292
    %1325 = vmatprep.subr.mxu0 %v1295
    %1326 = vmatpush1.msra.mxu0 %v1294
    %1327 = vmatprep.subr.mxu0 %v1297
    %1328 = vmatpush1.msra.mxu0 %v1296
    %1329 = vmatprep.subr.mxu0 0.0
    %1330 = vmatpush1.msra.mxu0 0.0
    %1331 = vmatprep.subr.mxu0 0.0
    %1332 = vmatpush1.msra.mxu0 0.0
    %1333 = vmatprep.subr.mxu0 0.0
    %1334 = vmatpush1.msra.mxu0 0.0
    %1335 = vmatprep.subr.mxu0 0.0
    %1336 = vmatpush1.msra.mxu0 0.0
    %1337 = vmatprep.subr.mxu0 0.0
    %1338 = vmatpush1.msra.mxu0 0.0
    %1339 = vmatprep.subr.mxu0 0.0
    %1340 = vmatpush1.msra.mxu0 0.0
    %1341 = vmatprep.subr.mxu0 0.0
    %1342 = vmatpush1.msra.mxu0 0.0
    %1343 = vmatprep.subr.mxu0 0.0
    %1344 = vmatpush1.msra.mxu0 0.0
    %1345 = vmatprep.subr.mxu0 0.0
    %1346 = vmatpush1.msra.mxu0 0.0
    %1347 = vmatprep.subr.mxu0 0.0
    %1348 = vmatpush1.msra.mxu0 0.0
    %1349 = vmatprep.subr.mxu0 0.0
    %1350 = vmatpush1.msra.mxu0 0.0
    %1351 = vmatprep.subr.mxu0 0.0
    %1352 = vmatpush1.msra.mxu0 0.0
    %1353 = vmatprep.subr.mxu0 0.0
    %1354 = vmatpush1.msra.mxu0 0.0
    %1355 = vmatprep.subr.mxu0 0.0
    %1356 = vmatpush1.msra.mxu0 0.0
    %1357 = vmatprep.subr.mxu0 0.0
    %1358 = vmatpush1.msra.mxu0 0.0
    %1359 = vmatprep.subr.mxu0 0.0
    %1360 = vmatpush1.msra.mxu0 0.0
    %1361 = vmatprep.subr.mxu0 0.0
    %1362 = vmatpush1.msra.mxu0 0.0
    %1363 = vmatprep.subr.mxu0 0.0
    %1364 = vmatpush1.msra.mxu0 0.0
    %1365 = vmatprep.subr.mxu0 0.0
    %1366 = vmatpush1.msra.mxu0 0.0
    %1367 = vmatprep.subr.mxu0 0.0
    %1368 = vmatpush1.msra.mxu0 0.0
    %1369 = vmatprep.subr.mxu0 0.0
    %1370 = vmatpush1.msra.mxu0 0.0
    %1371 = vmatprep.subr.mxu0 0.0
    %1372 = vmatpush1.msra.mxu0 0.0
    %1373 = vmatprep.subr.mxu0 0.0
    %1374 = vmatpush1.msra.mxu0 0.0
    %1375 = vmatprep.subr.mxu0 0.0
    %1376 = vmatpush1.msra.mxu0 0.0
    %1377 = vmatprep.mubr.f32.mxu0 0.0
    %1378 = vmatmul.mubr.f32.gmra.mrb[0].mxu0 %v1311
    %v1379 = vpop.f32.mrb[0].mxu0
    %v1380 = vadd.f32 %v1303, %v1379
    %v1381 = vpop.f32.mrb[0].mxu0
    %v1382 = vadd.f32 %v1307, %v1381
    %1383 = vdwg.mxu0
    %v1384 = vmul.f32 %v861, %v1380
    %v1385 = vadd.f32 %v560, %v1384
    %1386 = vst.msk [vmem:[#allocation51] sm:$0xff] %vm581, %v1385
    %1388 = vrot.lane.b32.xlu0 %v1380, 96
    %v1389 = vpop.permute.xlu0 %1388
    %v1391 = vmul.f32 %v861, %v1389
    %v1392 = vadd.f32 %v560, %v1391
    %s1393 = scalar_lea.vmem [#allocation51], 8
    %1394 = vst.msk [vmem:[%s1393] sm:$0xff] %vm581, %v1392
    %1395 = vrot.lane.b32.xlu0 %v1380, 64
    %v1396 = vpop.permute.xlu0 %1395
    %v1398 = vmul.f32 %v861, %v1396
    %v1399 = vadd.f32 %v560, %v1398
    %s1400 = scalar_lea.vmem [#allocation51], 16
    %1401 = vst.msk [vmem:[%s1400] sm:$0xff] %vm581, %v1399
    %1402 = vrot.lane.b32.xlu0 %v1380, 32
    %v1403 = vpop.permute.xlu0 %1402
    %v1405 = vmul.f32 %v861, %v1403
    %v1406 = vadd.f32 %v560, %v1405
    %s1407 = scalar_lea.vmem [#allocation51], 24
    %1408 = vst.msk [vmem:[%s1407] sm:$0xff] %vm581, %v1406
    %v1409 = vmul.f32 %v861, %v1382
    %v1410 = vadd.f32 %v560, %v1409
    %s1411 = scalar_lea.vmem [#allocation51], 32
    %1412 = vst.msk [vmem:[%s1411] sm:$0xff] %vm581, %v1410
    %v1413 = vld [vmem:[#allocation33] sm:$0xff]
    %v1414 = vld [vmem:[#allocation33 + $0x8] sm:$0xff]
    %v1415 = vld [vmem:[#allocation33 + $0x10] sm:$0xff]
    %v1416 = vld [vmem:[#allocation33 + $0x18] sm:$0xff]
    %v1417 = vld [vmem:[#allocation35] sm:$0x1]
    %v1419 = vlaneseq
    %v1420 = vshrl.u32 %v1419, 7
    %v1421 = vsub.s32 0, %v1420
    %v1422 = vrot.slane %v1417, %v1421
    %v1425 = vsel %vm581, %v1385, 0
    %v1428 = vsel %vm581, %v1392, 0
    %v1431 = vsel %vm581, %v1399, 0
    %v1434 = vsel %vm581, %v1406, 0
    %v1437 = vsel %vm581, %v1410, 0
    %1439 = vmatprep.subr.mxu0 0.0
    %1440 = vmatpush1.msra.mxu0 %v1413
    %1441 = vmatprep.subr.mxu0 0.0
    %1442 = vmatpush1.msra.mxu0 %v1414
    %1443 = vmatprep.subr.mxu0 0.0
    %1444 = vmatpush1.msra.mxu0 %v1415
    %1445 = vmatprep.subr.mxu0 0.0
    %1446 = vmatpush1.msra.mxu0 %v1416
    %1447 = vmatprep.subr.mxu0 0.0
    %1448 = vmatpush1.msra.mxu0 0.0
    %1449 = vmatprep.subr.mxu0 0.0
    %1450 = vmatpush1.msra.mxu0 0.0
    %1451 = vmatprep.subr.mxu0 0.0
    %1452 = vmatpush1.msra.mxu0 0.0
    %1453 = vmatprep.subr.mxu0 0.0
    %1454 = vmatpush1.msra.mxu0 0.0
    %1455 = vmatprep.subr.mxu0 0.0
    %1456 = vmatpush1.msra.mxu0 0.0
    %1457 = vmatprep.subr.mxu0 0.0
    %1458 = vmatpush1.msra.mxu0 0.0
    %1459 = vmatprep.subr.mxu0 0.0
    %1460 = vmatpush1.msra.mxu0 0.0
    %1461 = vmatprep.subr.mxu0 0.0
    %1462 = vmatpush1.msra.mxu0 0.0
    %1463 = vmatprep.subr.mxu0 0.0
    %1464 = vmatpush1.msra.mxu0 0.0
    %1465 = vmatprep.subr.mxu0 0.0
    %1466 = vmatpush1.msra.mxu0 0.0
    %1467 = vmatprep.subr.mxu0 0.0
    %1468 = vmatpush1.msra.mxu0 0.0
    %1469 = vmatprep.subr.mxu0 0.0
    %1470 = vmatpush1.msra.mxu0 0.0
    %1471 = vmatprep.subr.mxu0 0.0
    %1472 = vmatpush1.msra.mxu0 0.0
    %1473 = vmatprep.subr.mxu0 0.0
    %1474 = vmatpush1.msra.mxu0 0.0
    %1475 = vmatprep.subr.mxu0 0.0
    %1476 = vmatpush1.msra.mxu0 0.0
    %1477 = vmatprep.subr.mxu0 0.0
    %1478 = vmatpush1.msra.mxu0 0.0
    %1479 = vmatprep.subr.mxu0 0.0
    %1480 = vmatpush1.msra.mxu0 0.0
    %1481 = vmatprep.subr.mxu0 0.0
    %1482 = vmatpush1.msra.mxu0 0.0
    %1483 = vmatprep.subr.mxu0 0.0
    %1484 = vmatpush1.msra.mxu0 0.0
    %1485 = vmatprep.subr.mxu0 0.0
    %1486 = vmatpush1.msra.mxu0 0.0
    %1487 = vmatprep.subr.mxu0 0.0
    %1488 = vmatpush1.msra.mxu0 0.0
    %1489 = vmatprep.subr.mxu0 0.0
    %1490 = vmatpush1.msra.mxu0 0.0
    %1491 = vmatprep.subr.mxu0 0.0
    %1492 = vmatpush1.msra.mxu0 0.0
    %1493 = vmatprep.subr.mxu0 0.0
    %1494 = vmatpush1.msra.mxu0 0.0
    %1495 = vmatprep.subr.mxu0 0.0
    %1496 = vmatpush1.msra.mxu0 0.0
    %1497 = vmatprep.subr.mxu0 0.0
    %1498 = vmatpush1.msra.mxu0 0.0
    %1499 = vmatprep.subr.mxu0 0.0
    %1500 = vmatpush1.msra.mxu0 0.0
    %1501 = vmatprep.subr.mxu0 0.0
    %1502 = vmatpush1.msra.mxu0 0.0
    %1503 = vmatprep.mubr.f32.mxu0 0.0
    %1504 = vmatmul.mubr.f32.gmra.mrb[0].mxu0 %v1425
    %v1505 = vpop.f32.mrb[0].mxu0
    %v1506 = vadd.f32 %v1422, %v1505
    %v1507 = vpop.f32.mrb[0].mxu0
    %1508 = vmatprep.mubr.f32.mxu0 0.0
    %1509 = vmatmul.mubr.f32.gmra.mrb[0].mxu0 %v1428
    %v1510 = vpop.f32.mrb[0].mxu0
    %v1511 = vadd.f32 %v1422, %v1510
    %v1512 = vpop.f32.mrb[0].mxu0
    %1513 = vmatprep.mubr.f32.mxu0 0.0
    %1514 = vmatmul.mubr.f32.gmra.mrb[0].mxu0 %v1431
    %v1515 = vpop.f32.mrb[0].mxu0
    %v1516 = vadd.f32 %v1422, %v1515
    %v1517 = vpop.f32.mrb[0].mxu0
    %1518 = vmatprep.mubr.f32.mxu0 0.0
    %1519 = vmatmul.mubr.f32.gmra.mrb[0].mxu0 %v1434
    %v1520 = vpop.f32.mrb[0].mxu0
    %v1521 = vadd.f32 %v1422, %v1520
    %v1522 = vpop.f32.mrb[0].mxu0
    %1523 = vmatprep.mubr.f32.mxu0 0.0
    %1524 = vmatmul.mubr.f32.gmra.mrb[0].mxu0 %v1437
    %v1525 = vpop.f32.mrb[0].mxu0
    %v1526 = vadd.f32 %v1422, %v1525
    %v1527 = vpop.f32.mrb[0].mxu0
    %1528 = vdwg.mxu0
    %v1529 = vld [vmem:[#allocation36] sm:$0x1]
    %v1530 = vld [vmem:[#allocation38] sm:$0x1]
    %v1531 = vsel %vm658, %v1506, 0.0
    %1532 = vadd.xlane.f32.xlu0 %v1531
    %v1533 = vpop.xlane.xlu0 %1532
    %v1534 = vsel %vm658, %v1511, 0.0
    %1535 = vadd.xlane.f32.xlu0 %v1534
    %v1536 = vpop.xlane.xlu0 %1535
    %v1537 = vsel %vm658, %v1516, 0.0
    %1538 = vadd.xlane.f32.xlu0 %v1537
    %v1539 = vpop.xlane.xlu0 %1538
    %v1540 = vsel %vm658, %v1521, 0.0
    %1541 = vadd.xlane.f32.xlu0 %v1540
    %v1542 = vpop.xlane.xlu0 %1541
    %v1543 = vsel %vm658, %v1526, 0.0
    %1544 = vadd.xlane.f32.xlu0 %v1543
    %v1545 = vpop.xlane.xlu0 %1544
    %v1546 = vmul.f32 %v1533, %v662
    %v1547 = vmul.f32 %v1536, %v662
    %v1548 = vmul.f32 %v1539, %v662
    %v1549 = vmul.f32 %v1542, %v662
    %v1550 = vmul.f32 %v1545, %v662
    %v1551 = vmul.f32 %v1506, %v1506
    %v1552 = vmul.f32 %v1511, %v1511
    %v1553 = vmul.f32 %v1516, %v1516
    %v1554 = vmul.f32 %v1521, %v1521
    %v1555 = vmul.f32 %v1526, %v1526
    %v1556 = vsel %vm658, %v1551, 0.0
    %1557 = vadd.xlane.f32.xlu0 %v1556
    %v1558 = vpop.xlane.xlu0 %1557
    %v1559 = vsel %vm658, %v1552, 0.0
    %1560 = vadd.xlane.f32.xlu0 %v1559
    %v1561 = vpop.xlane.xlu0 %1560
    %v1562 = vsel %vm658, %v1553, 0.0
    %1563 = vadd.xlane.f32.xlu0 %v1562
    %v1564 = vpop.xlane.xlu0 %1563
    %v1565 = vsel %vm658, %v1554, 0.0
    %1566 = vadd.xlane.f32.xlu0 %v1565
    %v1567 = vpop.xlane.xlu0 %1566
    %v1568 = vsel %vm658, %v1555, 0.0
    %1569 = vadd.xlane.f32.xlu0 %v1568
    %v1570 = vpop.xlane.xlu0 %1569
    %v1571 = vmul.f32 %v1558, %v662
    %v1572 = vmul.f32 %v1561, %v662
    %v1573 = vmul.f32 %v1564, %v662
    %v1574 = vmul.f32 %v1567, %v662
    %v1575 = vmul.f32 %v1570, %v662
    %v1576 = vmul.f32 %v1546, %v1546
    %v1577 = vmul.f32 %v1547, %v1547
    %v1578 = vmul.f32 %v1548, %v1548
    %v1579 = vmul.f32 %v1549, %v1549
    %v1580 = vmul.f32 %v1550, %v1550
    %v1581 = vsub.f32 %v1571, %v1576
    %v1582 = vsub.f32 %v1572, %v1577
    %v1583 = vsub.f32 %v1573, %v1578
    %v1584 = vsub.f32 %v1574, %v1579
    %v1585 = vsub.f32 %v1575, %v1580
    %v1586 = vmax.f32 %v1581, 0.0
    %v1587 = vmax.f32 %v1582, 0.0
    %v1588 = vmax.f32 %v1583, 0.0
    %v1589 = vmax.f32 %v1584, 0.0
    %v1590 = vmax.f32 %v1585, 0.0
    %v1591 = vsub.f32 %v1506, %v1546
    %v1592 = vsub.f32 %v1511, %v1547
    %v1593 = vsub.f32 %v1516, %v1548
    %v1594 = vsub.f32 %v1521, %v1549
    %v1595 = vsub.f32 %v1526, %v1550
    %v1596 = vadd.f32 %v1586, 1e-05
    %v1597 = vadd.f32 %v1587, 1e-05
    %v1598 = vadd.f32 %v1588, 1e-05
    %v1599 = vadd.f32 %v1589, 1e-05
    %v1600 = vadd.f32 %v1590, 1e-05
    %v1601 = vrsqrt.pop %v1596
    %v1602 = vrsqrt.pop %v1597
    %v1603 = vrsqrt.pop %v1598
    %v1604 = vrsqrt.pop %v1599
    %v1605 = vrsqrt.pop %v1600
    %v1606 = vmul.f32 %v1591, %v1601
    %v1607 = vmul.f32 %v1592, %v1602
    %v1608 = vmul.f32 %v1593, %v1603
    %v1609 = vmul.f32 %v1594, %v1604
    %v1610 = vmul.f32 %v1595, %v1605
    %v1612 = vlaneseq
    %v1613 = vshrl.u32 %v1612, 7
    %v1614 = vsub.s32 0, %v1613
    %v1615 = vrot.slane %v1529, %v1614
    %v1617 = vmul.f32 %v1606, %v1615
    %v1618 = vmul.f32 %v1607, %v1615
    %v1619 = vmul.f32 %v1608, %v1615
    %v1620 = vmul.f32 %v1609, %v1615
    %v1621 = vmul.f32 %v1610, %v1615
    %v1623 = vlaneseq
    %v1624 = vshrl.u32 %v1623, 7
    %v1625 = vsub.s32 0, %v1624
    %v1626 = vrot.slane %v1530, %v1625
    %v1628 = vadd.f32 %v1617, %v1626
    %v1629 = vadd.f32 %v1618, %v1626
    %v1630 = vadd.f32 %v1619, %v1626
    %v1631 = vadd.f32 %v1620, %v1626
    %v1632 = vadd.f32 %v1621, %v1626
    %v1633 = vmax.f32 %v1628, 0.0
    %v1634 = vmax.f32 %v1629, 0.0
    %v1635 = vmax.f32 %v1630, 0.0
    %v1636 = vmax.f32 %v1631, 0.0
    %v1637 = vmax.f32 %v1632, 0.0
    %v1638 = vld [vmem:[%s59] sm:$0xff]
    %v1639 = vld [vmem:[%s59 + $0x8] sm:$0xff]
    %v1640 = vld [vmem:[%s59 + $0x10] sm:$0xff]
    %v1641 = vld [vmem:[%s59 + $0x18] sm:$0xff]
    %v1642 = vld [vmem:[%s59 + $0x20] sm:$0xff]
    %v1643 = vld [vmem:[%s59 + $0x28] sm:$0xff]
    %v1644 = vld [vmem:[%s59 + $0x30] sm:$0xff]
    %v1645 = vld [vmem:[%s59 + $0x38] sm:$0xff]
    %v1646 = vld [vmem:[#allocation39] sm:$0x1]
    %v1648 = vlaneseq
    %v1649 = vshrl.u32 %v1648, 7
    %v1650 = vsub.s32 0, %v1649
    %v1651 = vrot.slane %v1646, %v1650
    %v1654 = vsel %vm658, %v1633, 0
    %v1657 = vsel %vm658, %v1634, 0
    %v1660 = vsel %vm658, %v1635, 0
    %v1663 = vsel %vm658, %v1636, 0
    %v1666 = vsel %vm658, %v1637, 0
    %1668 = vmatprep.subr.mxu0 0.0
    %1669 = vmatpush1.msra.mxu0 %v1638
    %1670 = vmatprep.subr.mxu0 0.0
    %1671 = vmatpush1.msra.mxu0 %v1639
    %1672 = vmatprep.subr.mxu0 0.0
    %1673 = vmatpush1.msra.mxu0 %v1640
    %1674 = vmatprep.subr.mxu0 0.0
    %1675 = vmatpush1.msra.mxu0 %v1641
    %1676 = vmatprep.subr.mxu0 0.0
    %1677 = vmatpush1.msra.mxu0 %v1642
    %1678 = vmatprep.subr.mxu0 0.0
    %1679 = vmatpush1.msra.mxu0 %v1643
    %1680 = vmatprep.subr.mxu0 0.0
    %1681 = vmatpush1.msra.mxu0 %v1644
    %1682 = vmatprep.subr.mxu0 0.0
    %1683 = vmatpush1.msra.mxu0 %v1645
    %1684 = vmatprep.subr.mxu0 0.0
    %1685 = vmatpush1.msra.mxu0 0.0
    %1686 = vmatprep.subr.mxu0 0.0
    %1687 = vmatpush1.msra.mxu0 0.0
    %1688 = vmatprep.subr.mxu0 0.0
    %1689 = vmatpush1.msra.mxu0 0.0
    %1690 = vmatprep.subr.mxu0 0.0
    %1691 = vmatpush1.msra.mxu0 0.0
    %1692 = vmatprep.subr.mxu0 0.0
    %1693 = vmatpush1.msra.mxu0 0.0
    %1694 = vmatprep.subr.mxu0 0.0
    %1695 = vmatpush1.msra.mxu0 0.0
    %1696 = vmatprep.subr.mxu0 0.0
    %1697 = vmatpush1.msra.mxu0 0.0
    %1698 = vmatprep.subr.mxu0 0.0
    %1699 = vmatpush1.msra.mxu0 0.0
    %1700 = vmatprep.subr.mxu0 0.0
    %1701 = vmatpush1.msra.mxu0 0.0
    %1702 = vmatprep.subr.mxu0 0.0
    %1703 = vmatpush1.msra.mxu0 0.0
    %1704 = vmatprep.subr.mxu0 0.0
    %1705 = vmatpush1.msra.mxu0 0.0
    %1706 = vmatprep.subr.mxu0 0.0
    %1707 = vmatpush1.msra.mxu0 0.0
    %1708 = vmatprep.subr.mxu0 0.0
    %1709 = vmatpush1.msra.mxu0 0.0
    %1710 = vmatprep.subr.mxu0 0.0
    %1711 = vmatpush1.msra.mxu0 0.0
    %1712 = vmatprep.subr.mxu0 0.0
    %1713 = vmatpush1.msra.mxu0 0.0
    %1714 = vmatprep.subr.mxu0 0.0
    %1715 = vmatpush1.msra.mxu0 0.0
    %1716 = vmatprep.subr.mxu0 0.0
    %1717 = vmatpush1.msra.mxu0 0.0
    %1718 = vmatprep.subr.mxu0 0.0
    %1719 = vmatpush1.msra.mxu0 0.0
    %1720 = vmatprep.subr.mxu0 0.0
    %1721 = vmatpush1.msra.mxu0 0.0
    %1722 = vmatprep.subr.mxu0 0.0
    %1723 = vmatpush1.msra.mxu0 0.0
    %1724 = vmatprep.subr.mxu0 0.0
    %1725 = vmatpush1.msra.mxu0 0.0
    %1726 = vmatprep.subr.mxu0 0.0
    %1727 = vmatpush1.msra.mxu0 0.0
    %1728 = vmatprep.subr.mxu0 0.0
    %1729 = vmatpush1.msra.mxu0 0.0
    %1730 = vmatprep.subr.mxu0 0.0
    %1731 = vmatpush1.msra.mxu0 0.0
    %1732 = vmatprep.mubr.f32.mxu0 0.0
    %1733 = vmatmul.mubr.f32.gmra.mrb[0].mxu0 %v1654
    %v1734 = vpop.f32.mrb[0].mxu0
    %v1735 = vadd.f32 %v1651, %v1734
    %v1736 = vpop.f32.mrb[0].mxu0
    %1737 = vmatprep.mubr.f32.mxu0 0.0
    %1738 = vmatmul.mubr.f32.gmra.mrb[0].mxu0 %v1657
    %v1739 = vpop.f32.mrb[0].mxu0
    %v1740 = vadd.f32 %v1651, %v1739
    %v1741 = vpop.f32.mrb[0].mxu0
    %1742 = vmatprep.mubr.f32.mxu0 0.0
    %1743 = vmatmul.mubr.f32.gmra.mrb[0].mxu0 %v1660
    %v1744 = vpop.f32.mrb[0].mxu0
    %v1745 = vadd.f32 %v1651, %v1744
    %v1746 = vpop.f32.mrb[0].mxu0
    %1747 = vmatprep.mubr.f32.mxu0 0.0
    %1748 = vmatmul.mubr.f32.gmra.mrb[0].mxu0 %v1663
    %v1749 = vpop.f32.mrb[0].mxu0
    %v1750 = vadd.f32 %v1651, %v1749
    %v1751 = vpop.f32.mrb[0].mxu0
    %1752 = vmatprep.mubr.f32.mxu0 0.0
    %1753 = vmatmul.mubr.f32.gmra.mrb[0].mxu0 %v1666
    %v1754 = vpop.f32.mrb[0].mxu0
    %v1755 = vadd.f32 %v1651, %v1754
    %v1756 = vpop.f32.mrb[0].mxu0
    %1757 = vdwg.mxu0
    %1758 = vst.msk [vmem:[#allocation53] sm:$0xff] %vm581, %v1735
    %s1759 = scalar_lea.vmem [#allocation53], 8
    %1760 = vst.msk [vmem:[%s1759] sm:$0xff] %vm581, %v1740
    %s1761 = scalar_lea.vmem [#allocation53], 16
    %1762 = vst.msk [vmem:[%s1761] sm:$0xff] %vm581, %v1745
    %s1763 = scalar_lea.vmem [#allocation53], 24
    %1764 = vst.msk [vmem:[%s1763] sm:$0xff] %vm581, %v1750
    %s1765 = scalar_lea.vmem [#allocation53], 32
    %1766 = vst.msk [vmem:[%s1765] sm:$0xff] %vm581, %v1755
    %v1767 = vld [vmem:[%s63] sm:$0xff]
    %v1768 = vld [vmem:[%s63 + $0x8] sm:$0xff]
    %v1769 = vld [vmem:[%s63 + $0x10] sm:$0xff]
    %v1770 = vld [vmem:[%s63 + $0x18] sm:$0xff]
    %v1771 = vld [vmem:[%s63 + $0x20] sm:$0xff]
    %v1772 = vld [vmem:[%s63 + $0x28] sm:$0xff]
    %v1773 = vld [vmem:[%s63 + $0x30] sm:$0xff]
    %v1774 = vld [vmem:[%s63 + $0x38] sm:$0xff]
    %v1775 = vld [vmem:[#allocation41] sm:$0x1]
    %v1777 = vlaneseq
    %v1778 = vshrl.u32 %v1777, 7
    %v1779 = vsub.s32 0, %v1778
    %v1780 = vrot.slane %v1775, %v1779
    %v1783 = vsel %vm658, %v1044, 0
    %1785 = vmatprep.subr.mxu0 0.0
    %1786 = vmatpush1.msra.mxu0 %v1767
    %1787 = vmatprep.subr.mxu0 0.0
    %1788 = vmatpush1.msra.mxu0 %v1768
    %1789 = vmatprep.subr.mxu0 0.0
    %1790 = vmatpush1.msra.mxu0 %v1769
    %1791 = vmatprep.subr.mxu0 0.0
    %1792 = vmatpush1.msra.mxu0 %v1770
    %1793 = vmatprep.subr.mxu0 0.0
    %1794 = vmatpush1.msra.mxu0 %v1771
    %1795 = vmatprep.subr.mxu0 0.0
    %1796 = vmatpush1.msra.mxu0 %v1772
    %1797 = vmatprep.subr.mxu0 0.0
    %1798 = vmatpush1.msra.mxu0 %v1773
    %1799 = vmatprep.subr.mxu0 0.0
    %1800 = vmatpush1.msra.mxu0 %v1774
    %1801 = vmatprep.subr.mxu0 0.0
    %1802 = vmatpush1.msra.mxu0 0.0
    %1803 = vmatprep.subr.mxu0 0.0
    %1804 = vmatpush1.msra.mxu0 0.0
    %1805 = vmatprep.subr.mxu0 0.0
    %1806 = vmatpush1.msra.mxu0 0.0
    %1807 = vmatprep.subr.mxu0 0.0
    %1808 = vmatpush1.msra.mxu0 0.0
    %1809 = vmatprep.subr.mxu0 0.0
    %1810 = vmatpush1.msra.mxu0 0.0
    %1811 = vmatprep.subr.mxu0 0.0
    %1812 = vmatpush1.msra.mxu0 0.0
    %1813 = vmatprep.subr.mxu0 0.0
    %1814 = vmatpush1.msra.mxu0 0.0
    %1815 = vmatprep.subr.mxu0 0.0
    %1816 = vmatpush1.msra.mxu0 0.0
    %1817 = vmatprep.subr.mxu0 0.0
    %1818 = vmatpush1.msra.mxu0 0.0
    %1819 = vmatprep.subr.mxu0 0.0
    %1820 = vmatpush1.msra.mxu0 0.0
    %1821 = vmatprep.subr.mxu0 0.0
    %1822 = vmatpush1.msra.mxu0 0.0
    %1823 = vmatprep.subr.mxu0 0.0
    %1824 = vmatpush1.msra.mxu0 0.0
    %1825 = vmatprep.subr.mxu0 0.0
    %1826 = vmatpush1.msra.mxu0 0.0
    %1827 = vmatprep.subr.mxu0 0.0
    %1828 = vmatpush1.msra.mxu0 0.0
    %1829 = vmatprep.subr.mxu0 0.0
    %1830 = vmatpush1.msra.mxu0 0.0
    %1831 = vmatprep.subr.mxu0 0.0
    %1832 = vmatpush1.msra.mxu0 0.0
    %1833 = vmatprep.subr.mxu0 0.0
    %1834 = vmatpush1.msra.mxu0 0.0
    %1835 = vmatprep.subr.mxu0 0.0
    %1836 = vmatpush1.msra.mxu0 0.0
    %1837 = vmatprep.subr.mxu0 0.0
    %1838 = vmatpush1.msra.mxu0 0.0
    %1839 = vmatprep.subr.mxu0 0.0
    %1840 = vmatpush1.msra.mxu0 0.0
    %1841 = vmatprep.subr.mxu0 0.0
    %1842 = vmatpush1.msra.mxu0 0.0
    %1843 = vmatprep.subr.mxu0 0.0
    %1844 = vmatpush1.msra.mxu0 0.0
    %1845 = vmatprep.subr.mxu0 0.0
    %1846 = vmatpush1.msra.mxu0 0.0
    %1847 = vmatprep.subr.mxu0 0.0
    %1848 = vmatpush1.msra.mxu0 0.0
    %1849 = vmatprep.mubr.f32.mxu0 0.0
    %1850 = vmatmul.mubr.f32.gmra.mrb[0].mxu0 %v1783
    %v1851 = vpop.f32.mrb[0].mxu0
    %v1852 = vadd.f32 %v1780, %v1851
    %v1853 = vpop.f32.mrb[0].mxu0
    %1854 = vdwg.mxu0
    %v1855 = vld [vmem:[#allocation42] sm:$0x1]
    %v1856 = vld [vmem:[#allocation44] sm:$0x1]
    %v1857 = vsel %vm658, %v1852, 0.0
    %1858 = vadd.xlane.f32.xlu0 %v1857
    %v1859 = vpop.xlane.xlu0 %1858
    %v1860 = vmul.f32 %v1859, %v662
    %v1861 = vmul.f32 %v1852, %v1852
    %v1862 = vsel %vm658, %v1861, 0.0
    %1863 = vadd.xlane.f32.xlu0 %v1862
    %v1864 = vpop.xlane.xlu0 %1863
    %v1865 = vmul.f32 %v1864, %v662
    %v1866 = vmul.f32 %v1860, %v1860
    %v1867 = vsub.f32 %v1865, %v1866
    %v1868 = vmax.f32 %v1867, 0.0
    %v1869 = vsub.f32 %v1852, %v1860
    %v1870 = vadd.f32 %v1868, 1e-05
    %v1871 = vrsqrt.pop %v1870
    %v1872 = vmul.f32 %v1869, %v1871
    %v1874 = vlaneseq
    %v1875 = vshrl.u32 %v1874, 7
    %v1876 = vsub.s32 0, %v1875
    %v1877 = vrot.slane %v1855, %v1876
    %v1879 = vmul.f32 %v1872, %v1877
    %v1881 = vlaneseq
    %v1882 = vshrl.u32 %v1881, 7
    %v1883 = vsub.s32 0, %v1882
    %v1884 = vrot.slane %v1856, %v1883
    %v1886 = vadd.f32 %v1879, %v1884
    %v1887 = vmax.f32 %v1886, 0.0
    %v1888 = vld [vmem:[%s71] sm:$0xff]
    %v1889 = vld [vmem:[%s71 + $0x8] sm:$0xff]
    %v1890 = vld [vmem:[%s71 + $0x10] sm:$0xff]
    %v1891 = vld [vmem:[%s71 + $0x18] sm:$0xff]
    %v1892 = vld [vmem:[%s71 + $0x20] sm:$0xff]
    %v1893 = vld [vmem:[%s71 + $0x28] sm:$0xff]
    %v1894 = vld [vmem:[%s71 + $0x30] sm:$0xff]
    %v1895 = vld [vmem:[%s71 + $0x38] sm:$0xff]
    %v1896 = vld [vmem:[%s71 + $0x40] sm:$0xff]
    %v1897 = vld [vmem:[%s71 + $0x48] sm:$0xff]
    %v1898 = vld [vmem:[%s71 + $0x50] sm:$0xff]
    %v1899 = vld [vmem:[%s71 + $0x58] sm:$0xff]
    %v1900 = vld [vmem:[%s71 + $0x60] sm:$0xff]
    %v1901 = vld [vmem:[%s71 + $0x68] sm:$0xff]
    %v1902 = vld [vmem:[%s71 + $0x70] sm:$0xff]
    %v1903 = vld [vmem:[%s71 + $0x78] sm:$0xff]
    %v1904 = vld [vmem:[%s71 + $0x80] sm:$0xff]
    %v1905 = vld [vmem:[%s71 + $0x88] sm:$0xff]
    %v1906 = vld [vmem:[%s71 + $0x90] sm:$0xff]
    %v1907 = vld [vmem:[%s71 + $0x98] sm:$0xff]
    %v1908 = vld [vmem:[%s71 + $0xa0] sm:$0xff]
    %v1909 = vld [vmem:[%s71 + $0xa8] sm:$0xff]
    %v1910 = vld [vmem:[%s71 + $0xb0] sm:$0xff]
    %v1911 = vld [vmem:[%s71 + $0xb8] sm:$0xff]
    %v1912 = vld [vmem:[%s73] sm:$0x7]
    %v1914 = vlaneseq
    %v1915 = vshrl.u32 %v1914, 7
    %v1916 = vsub.s32 0, %v1915
    %v1917 = vrot.slane %v1912, %v1916
    %v1918 = vlaneseq
    %v1919 = vshrl.u32 %v1918, 7
    %v1920 = vsub.s32 1, %v1919
    %v1921 = vrot.slane %v1912, %v1920
    %v1922 = vlaneseq
    %v1923 = vshrl.u32 %v1922, 7
    %v1924 = vsub.s32 2, %v1923
    %v1925 = vrot.slane %v1912, %v1924
    %v1930 = vsel %vm658, %v1887, 0
    %1932 = vmatprep.subr.mxu0 %v1889
    %1933 = vmatpush1.msra.mxu0 %v1888
    %1934 = vmatprep.subr.mxu0 %v1892
    %1935 = vmatpush1.msra.mxu0 %v1891
    %1936 = vmatprep.subr.mxu0 %v1895
    %1937 = vmatpush1.msra.mxu0 %v1894
    %1938 = vmatprep.subr.mxu0 %v1898
    %1939 = vmatpush1.msra.mxu0 %v1897
    %1940 = vmatprep.subr.mxu0 %v1901
    %1941 = vmatpush1.msra.mxu0 %v1900
    %1942 = vmatprep.subr.mxu0 %v1904
    %1943 = vmatpush1.msra.mxu0 %v1903
    %1944 = vmatprep.subr.mxu0 %v1907
    %1945 = vmatpush1.msra.mxu0 %v1906
    %1946 = vmatprep.subr.mxu0 %v1910
    %1947 = vmatpush1.msra.mxu0 %v1909
    %1948 = vmatprep.subr.mxu0 0.0
    %1949 = vmatpush1.msra.mxu0 0.0
    %1950 = vmatprep.subr.mxu0 0.0
    %1951 = vmatpush1.msra.mxu0 0.0
    %1952 = vmatprep.subr.mxu0 0.0
    %1953 = vmatpush1.msra.mxu0 0.0
    %1954 = vmatprep.subr.mxu0 0.0
    %1955 = vmatpush1.msra.mxu0 0.0
    %1956 = vmatprep.subr.mxu0 0.0
    %1957 = vmatpush1.msra.mxu0 0.0
    %1958 = vmatprep.subr.mxu0 0.0
    %1959 = vmatpush1.msra.mxu0 0.0
    %1960 = vmatprep.subr.mxu0 0.0
    %1961 = vmatpush1.msra.mxu0 0.0
    %1962 = vmatprep.subr.mxu0 0.0
    %1963 = vmatpush1.msra.mxu0 0.0
    %1964 = vmatprep.subr.mxu0 0.0
    %1965 = vmatpush1.msra.mxu0 0.0
    %1966 = vmatprep.subr.mxu0 0.0
    %1967 = vmatpush1.msra.mxu0 0.0
    %1968 = vmatprep.subr.mxu0 0.0
    %1969 = vmatpush1.msra.mxu0 0.0
    %1970 = vmatprep.subr.mxu0 0.0
    %1971 = vmatpush1.msra.mxu0 0.0
    %1972 = vmatprep.subr.mxu0 0.0
    %1973 = vmatpush1.msra.mxu0 0.0
    %1974 = vmatprep.subr.mxu0 0.0
    %1975 = vmatpush1.msra.mxu0 0.0
    %1976 = vmatprep.subr.mxu0 0.0
    %1977 = vmatpush1.msra.mxu0 0.0
    %1978 = vmatprep.subr.mxu0 0.0
    %1979 = vmatpush1.msra.mxu0 0.0
    %1980 = vmatprep.subr.mxu0 0.0
    %1981 = vmatpush1.msra.mxu0 0.0
    %1982 = vmatprep.subr.mxu0 0.0
    %1983 = vmatpush1.msra.mxu0 0.0
    %1984 = vmatprep.subr.mxu0 0.0
    %1985 = vmatpush1.msra.mxu0 0.0
    %1986 = vmatprep.subr.mxu0 0.0
    %1987 = vmatpush1.msra.mxu0 0.0
    %1988 = vmatprep.subr.mxu0 0.0
    %1989 = vmatpush1.msra.mxu0 0.0
    %1990 = vmatprep.subr.mxu0 0.0
    %1991 = vmatpush1.msra.mxu0 0.0
    %1992 = vmatprep.subr.mxu0 0.0
    %1993 = vmatpush1.msra.mxu0 0.0
    %1994 = vmatprep.subr.mxu0 0.0
    %1995 = vmatpush1.msra.mxu0 0.0
    %1996 = vmatprep.mubr.f32.mxu0 0.0
    %1997 = vmatmul.mubr.f32.gmra.mrb[0].mxu0 %v1930
    %v1998 = vpop.f32.mrb[0].mxu0
    %v1999 = vadd.f32 %v1917, %v1998
    %v2000 = vpop.f32.mrb[0].mxu0
    %v2001 = vadd.f32 %v1921, %v2000
    %2002 = vdwg.mxu0
    %2003 = vmatprep.subr.mxu0 0.0
    %2004 = vmatpush1.msra.mxu0 %v1890
    %2005 = vmatprep.subr.mxu0 0.0
    %2006 = vmatpush1.msra.mxu0 %v1893
    %2007 = vmatprep.subr.mxu0 0.0
    %2008 = vmatpush1.msra.mxu0 %v1896
    %2009 = vmatprep.subr.mxu0 0.0
    %2010 = vmatpush1.msra.mxu0 %v1899
    %2011 = vmatprep.subr.mxu0 0.0
    %2012 = vmatpush1.msra.mxu0 %v1902
    %2013 = vmatprep.subr.mxu0 0.0
    %2014 = vmatpush1.msra.mxu0 %v1905
    %2015 = vmatprep.subr.mxu0 0.0
    %2016 = vmatpush1.msra.mxu0 %v1908
    %2017 = vmatprep.subr.mxu0 0.0
    %2018 = vmatpush1.msra.mxu0 %v1911
    %2019 = vmatprep.subr.mxu0 0.0
    %2020 = vmatpush1.msra.mxu0 0.0
    %2021 = vmatprep.subr.mxu0 0.0
    %2022 = vmatpush1.msra.mxu0 0.0
    %2023 = vmatprep.subr.mxu0 0.0
    %2024 = vmatpush1.msra.mxu0 0.0
    %2025 = vmatprep.subr.mxu0 0.0
    %2026 = vmatpush1.msra.mxu0 0.0
    %2027 = vmatprep.subr.mxu0 0.0
    %2028 = vmatpush1.msra.mxu0 0.0
    %2029 = vmatprep.subr.mxu0 0.0
    %2030 = vmatpush1.msra.mxu0 0.0
    %2031 = vmatprep.subr.mxu0 0.0
    %2032 = vmatpush1.msra.mxu0 0.0
    %2033 = vmatprep.subr.mxu0 0.0
    %2034 = vmatpush1.msra.mxu0 0.0
    %2035 = vmatprep.subr.mxu0 0.0
    %2036 = vmatpush1.msra.mxu0 0.0
    %2037 = vmatprep.subr.mxu0 0.0
    %2038 = vmatpush1.msra.mxu0 0.0
    %2039 = vmatprep.subr.mxu0 0.0
    %2040 = vmatpush1.msra.mxu0 0.0
    %2041 = vmatprep.subr.mxu0 0.0
    %2042 = vmatpush1.msra.mxu0 0.0
    %2043 = vmatprep.subr.mxu0 0.0
    %2044 = vmatpush1.msra.mxu0 0.0
    %2045 = vmatprep.subr.mxu0 0.0
    %2046 = vmatpush1.msra.mxu0 0.0
    %2047 = vmatprep.subr.mxu0 0.0
    %2048 = vmatpush1.msra.mxu0 0.0
    %2049 = vmatprep.subr.mxu0 0.0
    %2050 = vmatpush1.msra.mxu0 0.0
    %2051 = vmatprep.subr.mxu0 0.0
    %2052 = vmatpush1.msra.mxu0 0.0
    %2053 = vmatprep.subr.mxu0 0.0
    %2054 = vmatpush1.msra.mxu0 0.0
    %2055 = vmatprep.subr.mxu0 0.0
    %2056 = vmatpush1.msra.mxu0 0.0
    %2057 = vmatprep.subr.mxu0 0.0
    %2058 = vmatpush1.msra.mxu0 0.0
    %2059 = vmatprep.subr.mxu0 0.0
    %2060 = vmatpush1.msra.mxu0 0.0
    %2061 = vmatprep.subr.mxu0 0.0
    %2062 = vmatpush1.msra.mxu0 0.0
    %2063 = vmatprep.subr.mxu0 0.0
    %2064 = vmatpush1.msra.mxu0 0.0
    %2065 = vmatprep.subr.mxu0 0.0
    %2066 = vmatpush1.msra.mxu0 0.0
    %2067 = vmatprep.mubr.f32.mxu0 0.0
    %2068 = vmatmul.mubr.f32.gmra.mrb[0].mxu0 %v1930
    %v2069 = vpop.f32.mrb[0].mxu0
    %v2070 = vadd.f32 %v1925, %v2069
    %v2071 = vpop.f32.mrb[0].mxu0
    %2072 = vdwg.mxu0
    %2074 = vrot.lane.b32.xlu0 %v1999, 64
    %v2075 = vpop.permute.xlu0 %2074
    %2077 = vrot.lane.b32.xlu0 %v2001, 64
    %v2078 = vpop.permute.xlu0 %2077
    %v2079 = vld [vmem:[#allocation45] sm:$0xff]
    %v2080 = vld [vmem:[#allocation45 + $0x8] sm:$0xff]
    %v2081 = vld [vmem:[#allocation45 + $0x10] sm:$0xff]
    %v2082 = vld [vmem:[#allocation45 + $0x18] sm:$0xff]
    %v2083 = vld [vmem:[#allocation45 + $0x20] sm:$0xff]
    %v2084 = vld [vmem:[#allocation45 + $0x28] sm:$0xff]
    %v2085 = vld [vmem:[#allocation45 + $0x30] sm:$0xff]
    %v2086 = vld [vmem:[#allocation45 + $0x38] sm:$0xff]
    %v2087 = vld [vmem:[%s77] sm:$0x1]
    %v2089 = vlaneseq
    %v2090 = vshrl.u32 %v2089, 7
    %v2091 = vsub.s32 0, %v2090
    %v2092 = vrot.slane %v2087, %v2091
    %v2094 = vsel %vm658, %v1999, 0
    %v2096 = vsel %vm658, %v2075, 0
    %v2098 = vsel %vm658, %v2001, 0
    %v2100 = vsel %vm658, %v2078, 0
    %v2103 = vsel %vm658, %v2070, 0
    %2105 = vmatprep.subr.mxu0 0.0
    %2106 = vmatpush1.msra.mxu0 %v2079
    %2107 = vmatprep.subr.mxu0 0.0
    %2108 = vmatpush1.msra.mxu0 %v2080
    %2109 = vmatprep.subr.mxu0 0.0
    %2110 = vmatpush1.msra.mxu0 %v2081
    %2111 = vmatprep.subr.mxu0 0.0
    %2112 = vmatpush1.msra.mxu0 %v2082
    %2113 = vmatprep.subr.mxu0 0.0
    %2114 = vmatpush1.msra.mxu0 %v2083
    %2115 = vmatprep.subr.mxu0 0.0
    %2116 = vmatpush1.msra.mxu0 %v2084
    %2117 = vmatprep.subr.mxu0 0.0
    %2118 = vmatpush1.msra.mxu0 %v2085
    %2119 = vmatprep.subr.mxu0 0.0
    %2120 = vmatpush1.msra.mxu0 %v2086
    %2121 = vmatprep.subr.mxu0 0.0
    %2122 = vmatpush1.msra.mxu0 0.0
    %2123 = vmatprep.subr.mxu0 0.0
    %2124 = vmatpush1.msra.mxu0 0.0
    %2125 = vmatprep.subr.mxu0 0.0
    %2126 = vmatpush1.msra.mxu0 0.0
    %2127 = vmatprep.subr.mxu0 0.0
    %2128 = vmatpush1.msra.mxu0 0.0
    %2129 = vmatprep.subr.mxu0 0.0
    %2130 = vmatpush1.msra.mxu0 0.0
    %2131 = vmatprep.subr.mxu0 0.0
    %2132 = vmatpush1.msra.mxu0 0.0
    %2133 = vmatprep.subr.mxu0 0.0
    %2134 = vmatpush1.msra.mxu0 0.0
    %2135 = vmatprep.subr.mxu0 0.0
    %2136 = vmatpush1.msra.mxu0 0.0
    %2137 = vmatprep.subr.mxu0 0.0
    %2138 = vmatpush1.msra.mxu0 0.0
    %2139 = vmatprep.subr.mxu0 0.0
    %2140 = vmatpush1.msra.mxu0 0.0
    %2141 = vmatprep.subr.mxu0 0.0
    %2142 = vmatpush1.msra.mxu0 0.0
    %2143 = vmatprep.subr.mxu0 0.0
    %2144 = vmatpush1.msra.mxu0 0.0
    %2145 = vmatprep.subr.mxu0 0.0
    %2146 = vmatpush1.msra.mxu0 0.0
    %2147 = vmatprep.subr.mxu0 0.0
    %2148 = vmatpush1.msra.mxu0 0.0
    %2149 = vmatprep.subr.mxu0 0.0
    %2150 = vmatpush1.msra.mxu0 0.0
    %2151 = vmatprep.subr.mxu0 0.0
    %2152 = vmatpush1.msra.mxu0 0.0
    %2153 = vmatprep.subr.mxu0 0.0
    %2154 = vmatpush1.msra.mxu0 0.0
    %2155 = vmatprep.subr.mxu0 0.0
    %2156 = vmatpush1.msra.mxu0 0.0
    %2157 = vmatprep.subr.mxu0 0.0
    %2158 = vmatpush1.msra.mxu0 0.0
    %2159 = vmatprep.subr.mxu0 0.0
    %2160 = vmatpush1.msra.mxu0 0.0
    %2161 = vmatprep.subr.mxu0 0.0
    %2162 = vmatpush1.msra.mxu0 0.0
    %2163 = vmatprep.subr.mxu0 0.0
    %2164 = vmatpush1.msra.mxu0 0.0
    %2165 = vmatprep.subr.mxu0 0.0
    %2166 = vmatpush1.msra.mxu0 0.0
    %2167 = vmatprep.subr.mxu0 0.0
    %2168 = vmatpush1.msra.mxu0 0.0
    %2169 = vmatprep.mubr.f32.mxu0 0.0
    %2170 = vmatmul.mubr.f32.gmra.mrb[0].mxu0 %v2094
    %v2171 = vpop.f32.mrb[0].mxu0
    %v2172 = vadd.f32 %v2092, %v2171
    %v2173 = vpop.f32.mrb[0].mxu0
    %2174 = vmatprep.mubr.f32.mxu0 0.0
    %2175 = vmatmul.mubr.f32.gmra.mrb[0].mxu0 %v2096
    %v2176 = vpop.f32.mrb[0].mxu0
    %v2177 = vadd.f32 %v2092, %v2176
    %v2178 = vpop.f32.mrb[0].mxu0
    %2179 = vmatprep.mubr.f32.mxu0 0.0
    %2180 = vmatmul.mubr.f32.gmra.mrb[0].mxu0 %v2098
    %v2181 = vpop.f32.mrb[0].mxu0
    %v2182 = vadd.f32 %v2092, %v2181
    %v2183 = vpop.f32.mrb[0].mxu0
    %2184 = vmatprep.mubr.f32.mxu0 0.0
    %2185 = vmatmul.mubr.f32.gmra.mrb[0].mxu0 %v2100
    %v2186 = vpop.f32.mrb[0].mxu0
    %v2187 = vadd.f32 %v2092, %v2186
    %v2188 = vpop.f32.mrb[0].mxu0
    %2189 = vmatprep.mubr.f32.mxu0 0.0
    %2190 = vmatmul.mubr.f32.gmra.mrb[0].mxu0 %v2103
    %v2191 = vpop.f32.mrb[0].mxu0
    %v2192 = vadd.f32 %v2092, %v2191
    %v2193 = vpop.f32.mrb[0].mxu0
    %2194 = vdwg.mxu0
    %v2195 = vld [vmem:[%s79] sm:$0x1]
    %v2196 = vld [vmem:[%s81] sm:$0x1]
    %v2197 = vsel %vm658, %v2172, 0.0
    %2198 = vadd.xlane.f32.xlu0 %v2197
    %v2199 = vpop.xlane.xlu0 %2198
    %v2200 = vsel %vm658, %v2177, 0.0
    %2201 = vadd.xlane.f32.xlu0 %v2200
    %v2202 = vpop.xlane.xlu0 %2201
    %v2203 = vsel %vm658, %v2182, 0.0
    %2204 = vadd.xlane.f32.xlu0 %v2203
    %v2205 = vpop.xlane.xlu0 %2204
    %v2206 = vsel %vm658, %v2187, 0.0
    %2207 = vadd.xlane.f32.xlu0 %v2206
    %v2208 = vpop.xlane.xlu0 %2207
    %v2209 = vsel %vm658, %v2192, 0.0
    %2210 = vadd.xlane.f32.xlu0 %v2209
    %v2211 = vpop.xlane.xlu0 %2210
    %v2212 = vmul.f32 %v2199, %v662
    %v2213 = vmul.f32 %v2202, %v662
    %v2214 = vmul.f32 %v2205, %v662
    %v2215 = vmul.f32 %v2208, %v662
    %v2216 = vmul.f32 %v2211, %v662
    %v2217 = vmul.f32 %v2172, %v2172
    %v2218 = vmul.f32 %v2177, %v2177
    %v2219 = vmul.f32 %v2182, %v2182
    %v2220 = vmul.f32 %v2187, %v2187
    %v2221 = vmul.f32 %v2192, %v2192
    %v2222 = vsel %vm658, %v2217, 0.0
    %2223 = vadd.xlane.f32.xlu0 %v2222
    %v2224 = vpop.xlane.xlu0 %2223
    %v2225 = vsel %vm658, %v2218, 0.0
    %2226 = vadd.xlane.f32.xlu0 %v2225
    %v2227 = vpop.xlane.xlu0 %2226
    %v2228 = vsel %vm658, %v2219, 0.0
    %2229 = vadd.xlane.f32.xlu0 %v2228
    %v2230 = vpop.xlane.xlu0 %2229
    %v2231 = vsel %vm658, %v2220, 0.0
    %2232 = vadd.xlane.f32.xlu0 %v2231
    %v2233 = vpop.xlane.xlu0 %2232
    %v2234 = vsel %vm658, %v2221, 0.0
    %2235 = vadd.xlane.f32.xlu0 %v2234
    %v2236 = vpop.xlane.xlu0 %2235
    %v2237 = vmul.f32 %v2224, %v662
    %v2238 = vmul.f32 %v2227, %v662
    %v2239 = vmul.f32 %v2230, %v662
    %v2240 = vmul.f32 %v2233, %v662
    %v2241 = vmul.f32 %v2236, %v662
    %v2242 = vmul.f32 %v2212, %v2212
    %v2243 = vmul.f32 %v2213, %v2213
    %v2244 = vmul.f32 %v2214, %v2214
    %v2245 = vmul.f32 %v2215, %v2215
    %v2246 = vmul.f32 %v2216, %v2216
    %v2247 = vsub.f32 %v2237, %v2242
    %v2248 = vsub.f32 %v2238, %v2243
    %v2249 = vsub.f32 %v2239, %v2244
    %v2250 = vsub.f32 %v2240, %v2245
    %v2251 = vsub.f32 %v2241, %v2246
    %v2252 = vmax.f32 %v2247, 0.0
    %v2253 = vmax.f32 %v2248, 0.0
    %v2254 = vmax.f32 %v2249, 0.0
    %v2255 = vmax.f32 %v2250, 0.0
    %v2256 = vmax.f32 %v2251, 0.0
    %v2257 = vsub.f32 %v2172, %v2212
    %v2258 = vsub.f32 %v2177, %v2213
    %v2259 = vsub.f32 %v2182, %v2214
    %v2260 = vsub.f32 %v2187, %v2215
    %v2261 = vsub.f32 %v2192, %v2216
    %v2262 = vadd.f32 %v2252, 1e-05
    %v2263 = vadd.f32 %v2253, 1e-05
    %v2264 = vadd.f32 %v2254, 1e-05
    %v2265 = vadd.f32 %v2255, 1e-05
    %v2266 = vadd.f32 %v2256, 1e-05
    %v2267 = vrsqrt.pop %v2262
    %v2268 = vrsqrt.pop %v2263
    %v2269 = vrsqrt.pop %v2264
    %v2270 = vrsqrt.pop %v2265
    %v2271 = vrsqrt.pop %v2266
    %v2272 = vmul.f32 %v2257, %v2267
    %v2273 = vmul.f32 %v2258, %v2268
    %v2274 = vmul.f32 %v2259, %v2269
    %v2275 = vmul.f32 %v2260, %v2270
    %v2276 = vmul.f32 %v2261, %v2271
    %v2278 = vlaneseq
    %v2279 = vshrl.u32 %v2278, 7
    %v2280 = vsub.s32 0, %v2279
    %v2281 = vrot.slane %v2195, %v2280
    %v2283 = vmul.f32 %v2272, %v2281
    %v2284 = vmul.f32 %v2273, %v2281
    %v2285 = vmul.f32 %v2274, %v2281
    %v2286 = vmul.f32 %v2275, %v2281
    %v2287 = vmul.f32 %v2276, %v2281
    %v2289 = vlaneseq
    %v2290 = vshrl.u32 %v2289, 7
    %v2291 = vsub.s32 0, %v2290
    %v2292 = vrot.slane %v2196, %v2291
    %v2294 = vadd.f32 %v2283, %v2292
    %v2295 = vadd.f32 %v2284, %v2292
    %v2296 = vadd.f32 %v2285, %v2292
    %v2297 = vadd.f32 %v2286, %v2292
    %v2298 = vadd.f32 %v2287, %v2292
    %v2299 = vmax.f32 %v2294, 0.0
    %v2300 = vmax.f32 %v2295, 0.0
    %v2301 = vmax.f32 %v2296, 0.0
    %v2302 = vmax.f32 %v2297, 0.0
    %v2303 = vmax.f32 %v2298, 0.0
    %v2304 = vld [vmem:[%s83] sm:$0xff]
    %v2305 = vld [vmem:[%s83 + $0x8] sm:$0xff]
    %v2306 = vld [vmem:[%s83 + $0x10] sm:$0xff]
    %v2307 = vld [vmem:[%s83 + $0x18] sm:$0xff]
    %v2308 = vld [vmem:[%s83 + $0x20] sm:$0xff]
    %v2309 = vld [vmem:[%s83 + $0x28] sm:$0xff]
    %v2310 = vld [vmem:[%s83 + $0x30] sm:$0xff]
    %v2311 = vld [vmem:[%s83 + $0x38] sm:$0xff]
    %v2312 = vld [vmem:[#allocation47] sm:$0x1]
    %v2314 = vlaneseq
    %v2315 = vshrl.u32 %v2314, 7
    %v2316 = vsub.s32 0, %v2315
    %v2317 = vrot.slane %v2312, %v2316
    %v2320 = vsel %vm658, %v2299, 0
    %v2323 = vsel %vm658, %v2300, 0
    %v2326 = vsel %vm658, %v2301, 0
    %v2329 = vsel %vm658, %v2302, 0
    %v2332 = vsel %vm658, %v2303, 0
    %2334 = vmatprep.subr.mxu0 0.0
    %2335 = vmatpush1.msra.mxu0 %v2304
    %2336 = vmatprep.subr.mxu0 0.0
    %2337 = vmatpush1.msra.mxu0 %v2305
    %2338 = vmatprep.subr.mxu0 0.0
    %2339 = vmatpush1.msra.mxu0 %v2306
    %2340 = vmatprep.subr.mxu0 0.0
    %2341 = vmatpush1.msra.mxu0 %v2307
    %2342 = vmatprep.subr.mxu0 0.0
    %2343 = vmatpush1.msra.mxu0 %v2308
    %2344 = vmatprep.subr.mxu0 0.0
    %2345 = vmatpush1.msra.mxu0 %v2309
    %2346 = vmatprep.subr.mxu0 0.0
    %2347 = vmatpush1.msra.mxu0 %v2310
    %2348 = vmatprep.subr.mxu0 0.0
    %2349 = vmatpush1.msra.mxu0 %v2311
    %2350 = vmatprep.subr.mxu0 0.0
    %2351 = vmatpush1.msra.mxu0 0.0
    %2352 = vmatprep.subr.mxu0 0.0
    %2353 = vmatpush1.msra.mxu0 0.0
    %2354 = vmatprep.subr.mxu0 0.0
    %2355 = vmatpush1.msra.mxu0 0.0
    %2356 = vmatprep.subr.mxu0 0.0
    %2357 = vmatpush1.msra.mxu0 0.0
    %2358 = vmatprep.subr.mxu0 0.0
    %2359 = vmatpush1.msra.mxu0 0.0
    %2360 = vmatprep.subr.mxu0 0.0
    %2361 = vmatpush1.msra.mxu0 0.0
    %2362 = vmatprep.subr.mxu0 0.0
    %2363 = vmatpush1.msra.mxu0 0.0
    %2364 = vmatprep.subr.mxu0 0.0
    %2365 = vmatpush1.msra.mxu0 0.0
    %2366 = vmatprep.subr.mxu0 0.0
    %2367 = vmatpush1.msra.mxu0 0.0
    %2368 = vmatprep.subr.mxu0 0.0
    %2369 = vmatpush1.msra.mxu0 0.0
    %2370 = vmatprep.subr.mxu0 0.0
    %2371 = vmatpush1.msra.mxu0 0.0
    %2372 = vmatprep.subr.mxu0 0.0
    %2373 = vmatpush1.msra.mxu0 0.0
    %2374 = vmatprep.subr.mxu0 0.0
    %2375 = vmatpush1.msra.mxu0 0.0
    %2376 = vmatprep.subr.mxu0 0.0
    %2377 = vmatpush1.msra.mxu0 0.0
    %2378 = vmatprep.subr.mxu0 0.0
    %2379 = vmatpush1.msra.mxu0 0.0
    %2380 = vmatprep.subr.mxu0 0.0
    %2381 = vmatpush1.msra.mxu0 0.0
    %2382 = vmatprep.subr.mxu0 0.0
    %2383 = vmatpush1.msra.mxu0 0.0
    %2384 = vmatprep.subr.mxu0 0.0
    %2385 = vmatpush1.msra.mxu0 0.0
    %2386 = vmatprep.subr.mxu0 0.0
    %2387 = vmatpush1.msra.mxu0 0.0
    %2388 = vmatprep.subr.mxu0 0.0
    %2389 = vmatpush1.msra.mxu0 0.0
    %2390 = vmatprep.subr.mxu0 0.0
    %2391 = vmatpush1.msra.mxu0 0.0
    %2392 = vmatprep.subr.mxu0 0.0
    %2393 = vmatpush1.msra.mxu0 0.0
    %2394 = vmatprep.subr.mxu0 0.0
    %2395 = vmatpush1.msra.mxu0 0.0
    %2396 = vmatprep.subr.mxu0 0.0
    %2397 = vmatpush1.msra.mxu0 0.0
    %2398 = vmatprep.mubr.f32.mxu0 0.0
    %2399 = vmatmul.mubr.f32.gmra.mrb[0].mxu0 %v2320
    %v2400 = vpop.f32.mrb[0].mxu0
    %v2401 = vadd.f32 %v2317, %v2400
    %v2402 = vpop.f32.mrb[0].mxu0
    %2403 = vmatprep.mubr.f32.mxu0 0.0
    %2404 = vmatmul.mubr.f32.gmra.mrb[0].mxu0 %v2323
    %v2405 = vpop.f32.mrb[0].mxu0
    %v2406 = vadd.f32 %v2317, %v2405
    %v2407 = vpop.f32.mrb[0].mxu0
    %2408 = vmatprep.mubr.f32.mxu0 0.0
    %2409 = vmatmul.mubr.f32.gmra.mrb[0].mxu0 %v2326
    %v2410 = vpop.f32.mrb[0].mxu0
    %v2411 = vadd.f32 %v2317, %v2410
    %v2412 = vpop.f32.mrb[0].mxu0
    %2413 = vmatprep.mubr.f32.mxu0 0.0
    %2414 = vmatmul.mubr.f32.gmra.mrb[0].mxu0 %v2329
    %v2415 = vpop.f32.mrb[0].mxu0
    %v2416 = vadd.f32 %v2317, %v2415
    %v2417 = vpop.f32.mrb[0].mxu0
    %2418 = vmatprep.mubr.f32.mxu0 0.0
    %2419 = vmatmul.mubr.f32.gmra.mrb[0].mxu0 %v2332
    %v2420 = vpop.f32.mrb[0].mxu0
    %v2421 = vadd.f32 %v2317, %v2420
    %v2422 = vpop.f32.mrb[0].mxu0
    %2423 = vdwg.mxu0
    %2424 = vst.msk [vmem:[#allocation54] sm:$0xff] %vm581, %v2401
    %s2425 = scalar_lea.vmem [#allocation54], 8
    %2426 = vst.msk [vmem:[%s2425] sm:$0xff] %vm581, %v2406
    %s2427 = scalar_lea.vmem [#allocation54], 16
    %2428 = vst.msk [vmem:[%s2427] sm:$0xff] %vm581, %v2411
    %s2429 = scalar_lea.vmem [#allocation54], 24
    %2430 = vst.msk [vmem:[%s2429] sm:$0xff] %vm581, %v2416
    %s2431 = scalar_lea.vmem [#allocation54], 32
    %2432 = vst.msk [vmem:[%s2431] sm:$0xff] %vm581, %v2421
    %v2433 = vld [vmem:[%s87] sm:$0xff]
    %v2434 = vld [vmem:[%s87 + $0x8] sm:$0xff]
    %v2435 = vld [vmem:[%s87 + $0x10] sm:$0xff]
    %v2436 = vld [vmem:[%s87 + $0x18] sm:$0xff]
    %v2437 = vld [vmem:[%s87 + $0x20] sm:$0xff]
    %v2438 = vld [vmem:[%s87 + $0x28] sm:$0xff]
    %v2439 = vld [vmem:[%s87 + $0x30] sm:$0xff]
    %v2440 = vld [vmem:[%s87 + $0x38] sm:$0xff]
    %v2441 = vld [vmem:[#allocation48] sm:$0x1]
    %v2443 = vlaneseq
    %v2444 = vshrl.u32 %v2443, 7
    %v2445 = vsub.s32 0, %v2444
    %v2446 = vrot.slane %v2441, %v2445
    %2448 = vmatprep.subr.mxu0 0.0
    %2449 = vmatpush1.msra.mxu0 %v2433
    %2450 = vmatprep.subr.mxu0 0.0
    %2451 = vmatpush1.msra.mxu0 %v2434
    %2452 = vmatprep.subr.mxu0 0.0
    %2453 = vmatpush1.msra.mxu0 %v2435
    %2454 = vmatprep.subr.mxu0 0.0
    %2455 = vmatpush1.msra.mxu0 %v2436
    %2456 = vmatprep.subr.mxu0 0.0
    %2457 = vmatpush1.msra.mxu0 %v2437
    %2458 = vmatprep.subr.mxu0 0.0
    %2459 = vmatpush1.msra.mxu0 %v2438
    %2460 = vmatprep.subr.mxu0 0.0
    %2461 = vmatpush1.msra.mxu0 %v2439
    %2462 = vmatprep.subr.mxu0 0.0
    %2463 = vmatpush1.msra.mxu0 %v2440
    %2464 = vmatprep.subr.mxu0 0.0
    %2465 = vmatpush1.msra.mxu0 0.0
    %2466 = vmatprep.subr.mxu0 0.0
    %2467 = vmatpush1.msra.mxu0 0.0
    %2468 = vmatprep.subr.mxu0 0.0
    %2469 = vmatpush1.msra.mxu0 0.0
    %2470 = vmatprep.subr.mxu0 0.0
    %2471 = vmatpush1.msra.mxu0 0.0
    %2472 = vmatprep.subr.mxu0 0.0
    %2473 = vmatpush1.msra.mxu0 0.0
    %2474 = vmatprep.subr.mxu0 0.0
    %2475 = vmatpush1.msra.mxu0 0.0
    %2476 = vmatprep.subr.mxu0 0.0
    %2477 = vmatpush1.msra.mxu0 0.0
    %2478 = vmatprep.subr.mxu0 0.0
    %2479 = vmatpush1.msra.mxu0 0.0
    %2480 = vmatprep.subr.mxu0 0.0
    %2481 = vmatpush1.msra.mxu0 0.0
    %2482 = vmatprep.subr.mxu0 0.0
    %2483 = vmatpush1.msra.mxu0 0.0
    %2484 = vmatprep.subr.mxu0 0.0
    %2485 = vmatpush1.msra.mxu0 0.0
    %2486 = vmatprep.subr.mxu0 0.0
    %2487 = vmatpush1.msra.mxu0 0.0
    %2488 = vmatprep.subr.mxu0 0.0
    %2489 = vmatpush1.msra.mxu0 0.0
    %2490 = vmatprep.subr.mxu0 0.0
    %2491 = vmatpush1.msra.mxu0 0.0
    %2492 = vmatprep.subr.mxu0 0.0
    %2493 = vmatpush1.msra.mxu0 0.0
    %2494 = vmatprep.subr.mxu0 0.0
    %2495 = vmatpush1.msra.mxu0 0.0
    %2496 = vmatprep.subr.mxu0 0.0
    %2497 = vmatpush1.msra.mxu0 0.0
    %2498 = vmatprep.subr.mxu0 0.0
    %2499 = vmatpush1.msra.mxu0 0.0
    %2500 = vmatprep.subr.mxu0 0.0
    %2501 = vmatpush1.msra.mxu0 0.0
    %2502 = vmatprep.subr.mxu0 0.0
    %2503 = vmatpush1.msra.mxu0 0.0
    %2504 = vmatprep.subr.mxu0 0.0
    %2505 = vmatpush1.msra.mxu0 0.0
    %2506 = vmatprep.subr.mxu0 0.0
    %2507 = vmatpush1.msra.mxu0 0.0
    %2508 = vmatprep.subr.mxu0 0.0
    %2509 = vmatpush1.msra.mxu0 0.0
    %2510 = vmatprep.subr.mxu0 0.0
    %2511 = vmatpush1.msra.mxu0 0.0
    %2512 = vmatprep.mubr.f32.mxu0 0.0
    %2513 = vmatmul.mubr.f32.gmra.mrb[0].mxu0 %v2094
    %v2514 = vpop.f32.mrb[0].mxu0
    %v2515 = vadd.f32 %v2446, %v2514
    %v2516 = vpop.f32.mrb[0].mxu0
    %2517 = vmatprep.mubr.f32.mxu0 0.0
    %2518 = vmatmul.mubr.f32.gmra.mrb[0].mxu0 %v2096
    %v2519 = vpop.f32.mrb[0].mxu0
    %v2520 = vadd.f32 %v2446, %v2519
    %v2521 = vpop.f32.mrb[0].mxu0
    %2522 = vmatprep.mubr.f32.mxu0 0.0
    %2523 = vmatmul.mubr.f32.gmra.mrb[0].mxu0 %v2098
    %v2524 = vpop.f32.mrb[0].mxu0
    %v2525 = vadd.f32 %v2446, %v2524
    %v2526 = vpop.f32.mrb[0].mxu0
    %2527 = vmatprep.mubr.f32.mxu0 0.0
    %2528 = vmatmul.mubr.f32.gmra.mrb[0].mxu0 %v2100
    %v2529 = vpop.f32.mrb[0].mxu0
    %v2530 = vadd.f32 %v2446, %v2529
    %v2531 = vpop.f32.mrb[0].mxu0
    %2532 = vmatprep.mubr.f32.mxu0 0.0
    %2533 = vmatmul.mubr.f32.gmra.mrb[0].mxu0 %v2103
    %v2534 = vpop.f32.mrb[0].mxu0
    %v2535 = vadd.f32 %v2446, %v2534
    %v2536 = vpop.f32.mrb[0].mxu0
    %2537 = vdwg.mxu0
    %v2538 = vmax.f32 %v2515, 0.0
    %v2539 = vmax.f32 %v2520, 0.0
    %v2540 = vmax.f32 %v2525, 0.0
    %v2541 = vmax.f32 %v2530, 0.0
    %v2542 = vmax.f32 %v2535, 0.0
    %v2543 = vld [vmem:[%s91] sm:$0x1]
    %v2545 = vlaneseq
    %v2546 = vshrl.u32 %v2545, 7
    %v2547 = vsub.s32 0, %v2546
    %v2548 = vrot.slane %v2543, %v2547
    %v2550 = vmul.f32 %v2538, %v2548
    %v2551 = vmul.f32 %v2539, %v2548
    %v2552 = vmul.f32 %v2540, %v2548
    %v2553 = vmul.f32 %v2541, %v2548
    %v2554 = vmul.f32 %v2542, %v2548
    %v2555 = vsel %vm581, %v2550, 0.0
    %2556 = vadd.xlane.f32.xlu0 %v2555
    %v2557 = vpop.xlane.xlu0 %2556
    %v2558 = vsel %vm581, %v2551, 0.0
    %2559 = vadd.xlane.f32.xlu0 %v2558
    %v2560 = vpop.xlane.xlu0 %2559
    %v2561 = vsel %vm581, %v2552, 0.0
    %2562 = vadd.xlane.f32.xlu0 %v2561
    %v2563 = vpop.xlane.xlu0 %2562
    %v2564 = vsel %vm581, %v2553, 0.0
    %2565 = vadd.xlane.f32.xlu0 %v2564
    %v2566 = vpop.xlane.xlu0 %2565
    %v2567 = vsel %vm581, %v2554, 0.0
    %2568 = vadd.xlane.f32.xlu0 %v2567
    %v2569 = vpop.xlane.xlu0 %2568
    %v2570 = vld [vmem:[#allocation2] sm:$0x1]
    %v2572 = vlaneseq
    %v2573 = vshrl.u32 %v2572, 7
    %v2574 = vsub.s32 0, %v2573
    %v2575 = vrot.slane %v2570, %v2574
    %v2577 = vadd.f32 %v2557, %v2575
    %v2578 = vadd.f32 %v2560, %v2575
    %v2579 = vadd.f32 %v2563, %v2575
    %v2580 = vadd.f32 %v2566, %v2575
    %v2581 = vadd.f32 %v2569, %v2575
    %v2582 = vxor.u32 %v2577, 2147483648
    %v2583 = vxor.u32 %v2578, 2147483648
    %v2584 = vxor.u32 %v2579, 2147483648
    %v2585 = vxor.u32 %v2580, 2147483648
    %v2586 = vxor.u32 %v2581, 2147483648
    %v2587 = vmul.f32 %v2582, 1.442695
    %v2588 = vpow.pop %v2587
    %v2589 = vmul.f32 %v2583, 1.442695
    %v2590 = vpow.pop %v2589
    %v2591 = vmul.f32 %v2584, 1.442695
    %v2592 = vpow.pop %v2591
    %v2593 = vmul.f32 %v2585, 1.442695
    %v2594 = vpow.pop %v2593
    %v2595 = vmul.f32 %v2586, 1.442695
    %v2596 = vpow.pop %v2595
    %v2597 = vadd.f32 %v2588, 1.0
    %v2598 = vadd.f32 %v2590, 1.0
    %v2599 = vadd.f32 %v2592, 1.0
    %v2600 = vadd.f32 %v2594, 1.0
    %v2601 = vadd.f32 %v2596, 1.0
    %v2602 = vrcp.pop %v2597
    %v2603 = vmul.f32 1.0, %v2602
    %v2604 = vrcp.pop %v2598
    %v2605 = vmul.f32 1.0, %v2604
    %v2606 = vrcp.pop %v2599
    %v2607 = vmul.f32 1.0, %v2606
    %v2608 = vrcp.pop %v2600
    %v2609 = vmul.f32 1.0, %v2608
    %v2610 = vrcp.pop %v2601
    %v2611 = vmul.f32 1.0, %v2610
    %2613 = vrot.lane.b32.xlu0 %v2605, 1
    %v2614 = vpop.permute.xlu0 %2613
    %2617 = vrot.lane.b32.xlu0 %v2607, 2
    %v2618 = vpop.permute.xlu0 %2617
    %2621 = vrot.lane.b32.xlu0 %v2609, 3
    %v2622 = vpop.permute.xlu0 %2621
    %2625 = vrot.lane.b32.xlu0 %v2611, 4
    %v2626 = vpop.permute.xlu0 %2625
    %vm2628 = vcmask 7168
    %v2629 = vsel %vm2628, %v2603, %v2614
    %vm2630 = vcmask 15360
    %v2631 = vsel %vm2630, %v2629, %v2618
    %vm2632 = vcmask 23552
    %v2633 = vsel %vm2632, %v2631, %v2622
    %vm2634 = vcmask 31744
    %v2635 = vsel %vm2634, %v2633, %v2626
    %vm2636 = vcmask 39936
    %v2637 = vsel %vm2636, %v2635, 0.0
    %2638 = vadd.xlane.f32.xlu0 %v2637
    %v2639 = vpop.xlane.xlu0 %2638
    %v2640 = vrcp.pop %v2639
    %v2641 = vmul.f32 %v2635, %v2640
    %2642 = vst.msk [vmem:[#allocation56] sm:$0xff] %vm2636, %v2641
    // Predicated region
    $region310: #{tpu_custom_call.1} parent=1 // pred_check
      _
    $region311: #{tpu_custom_call.1} parent=1 // pred_check_branch
      %2644 = sbr.rel (0) target = $region313
    $region312: #{tpu_custom_call.1} parent=1 // pred_region
      %s2646 = ssub.s32 128, 128
      %2647 = vsyncadd [#allocation5], %s2646
      %s2649 = sshll.u32 [#allocation50], 4
      %s2650 = int_to_ptr.vmem [resolvable:$true] %s2649
      %2652 = dma.vmem_to_hbm [thread:$0]  %s2650, 128, %s95, [#allocation5]
    $region313: #{tpu_custom_call.1} parent=1 // pred_fallthru
      _
    // Predicated region
    $region314: #{tpu_custom_call.1} parent=1 // pred_check
      _
    $region315: #{tpu_custom_call.1} parent=1 // pred_check_branch
      %2654 = sbr.rel (0) target = $region317
    $region316: #{tpu_custom_call.1} parent=1 // pred_region
      %s2656 = ssub.s32 640, 640
      %2657 = vsyncadd [#allocation52], %s2656
      %s2658 = sshll.u32 [#allocation51], 4
      %s2659 = int_to_ptr.vmem [resolvable:$true] %s2658
      %2664 = dma.vmem_to_hbm [thread:$0]  %s2659, 640, %s97, [#allocation52], 128, 128, 8
    $region317: #{tpu_custom_call.1} parent=1 // pred_fallthru
      _
    // Predicated region
    $region318: #{tpu_custom_call.1} parent=1 // pred_check
      _
    $region319: #{tpu_custom_call.1} parent=1 // pred_check_branch
      %2666 = sbr.rel (0) target = $region321
    $region320: #{tpu_custom_call.1} parent=1 // pred_region
      %s2668 = ssub.s32 640, 640
      %2669 = vsyncadd [#allocation52], %s2668
      %s2670 = sshll.u32 [#allocation53], 4
      %s2671 = int_to_ptr.vmem [resolvable:$true] %s2670
      %2676 = dma.vmem_to_hbm [thread:$0]  %s2671, 640, %s99, [#allocation52], 128, 128, 8
    $region321: #{tpu_custom_call.1} parent=1 // pred_fallthru
      _
    // Predicated region
    $region322: #{tpu_custom_call.1} parent=1 // pred_check
      _
    $region323: #{tpu_custom_call.1} parent=1 // pred_check_branch
      %2678 = sbr.rel (0) target = $region325
    $region324: #{tpu_custom_call.1} parent=1 // pred_region
      %s2680 = ssub.s32 640, 640
      %2681 = vsyncadd [#allocation55], %s2680
      %s2682 = sshll.u32 [#allocation54], 4
      %s2683 = int_to_ptr.vmem [resolvable:$true] %s2682
      %2688 = dma.vmem_to_hbm [thread:$0]  %s2683, 640, %s101, [#allocation55], 128, 128, 8
    $region325: #{tpu_custom_call.1} parent=1 // pred_fallthru
      _
    // Predicated region
    $region326: #{tpu_custom_call.1} parent=1 // pred_check
      _
    $region327: #{tpu_custom_call.1} parent=1 // pred_check_branch
      %2690 = sbr.rel (0) target = $region329
    $region328: #{tpu_custom_call.1} parent=1 // pred_region
      %s2692 = ssub.s32 128, 128
      %2693 = vsyncadd [#allocation55], %s2692
      %s2695 = sshll.u32 [#allocation56], 4
      %s2696 = int_to_ptr.vmem [resolvable:$true] %s2695
      %2698 = dma.vmem_to_hbm [thread:$0]  %s2696, 128, %s103, [#allocation55]
    $region329: #{tpu_custom_call.1} parent=1 // pred_fallthru
      _
    // Predicated region
    $region330: #{tpu_custom_call.1} parent=1 // pred_check
      _
    $region331: #{tpu_custom_call.1} parent=1 // pred_check_branch
      %2700 = sbr.rel (0) target = $region333
    $region332: #{tpu_custom_call.1} parent=1 // pred_region
      %2701 = dma.done [#allocation5], 128
    $region333: #{tpu_custom_call.1} parent=1 // pred_fallthru
      _
    // Predicated region
    $region334: #{tpu_custom_call.1} parent=1 // pred_check
      _
    $region335: #{tpu_custom_call.1} parent=1 // pred_check_branch
      %2703 = sbr.rel (0) target = $region337
    $region336: #{tpu_custom_call.1} parent=1 // pred_region
      %2704 = dma.done [#allocation52], 640
    $region337: #{tpu_custom_call.1} parent=1 // pred_fallthru
      _
    // Predicated region
    $region338: #{tpu_custom_call.1} parent=1 // pred_check
      _
    $region339: #{tpu_custom_call.1} parent=1 // pred_check_branch
      %2706 = sbr.rel (0) target = $region341
    $region340: #{tpu_custom_call.1} parent=1 // pred_region
      %2707 = dma.done [#allocation52], 640
    $region341: #{tpu_custom_call.1} parent=1 // pred_fallthru
      _
    // Predicated region
    $region342: #{tpu_custom_call.1} parent=1 // pred_check
      _
    $region343: #{tpu_custom_call.1} parent=1 // pred_check_branch
      %2709 = sbr.rel (0) target = $region345
    $region344: #{tpu_custom_call.1} parent=1 // pred_region
      %2710 = dma.done [#allocation55], 640
    $region345: #{tpu_custom_call.1} parent=1 // pred_fallthru
      _
    // Predicated region
    $region346: #{tpu_custom_call.1} parent=1 // pred_check
      _
    $region347: #{tpu_custom_call.1} parent=1 // pred_check_branch
      %2712 = sbr.rel (0) target = $region349
    $region348: #{tpu_custom_call.1} parent=1 // pred_region
      %2713 = dma.done [#allocation55], 128
    $region349: #{tpu_custom_call.1} parent=1 // pred_fallthru
      _
    %2714 = vsyncpa [#allocation4], 1
    %2715 = vsyncpa [#allocation7], 1
    %2716 = vsyncpa [#allocation10], 1
    %2717 = vsyncpa [#allocation13], 1
    %2718 = vsyncpa [#allocation16], 1
    %2719 = vsyncpa [#allocation19], 1
    %2720 = vsyncpa [#allocation22], 1
    %2721 = vsyncpa [#allocation25], 1
    %2722 = vsyncpa [#allocation28], 1
    %2723 = vsyncpa [#allocation31], 1
    %2724 = vsyncpa [#allocation34], 1
    %2725 = vsyncpa [#allocation37], 1
    %2726 = vsyncpa [#allocation40], 1
    %2727 = vsyncpa [#allocation43], 1
    %2728 = vsyncpa [#allocation46], 1
    %2729 = vsyncpa [#allocation49], 1
    %2730 = vsyncpa [#allocation5], 1
    %2731 = vsyncpa [#allocation52], 1
    %2732 = vsyncpa [#allocation55], 1

</llo_original>
